<compile_context>
chip_gen: v5e
topology: v5e:2x2
jax: 0.10.0
libtpu: 0.0.40
codegen_flags: <defaults>
</compile_context>

<pallas_src>
import jax
import jax.numpy as jnp
from jax.experimental import pallas as pl
from jax.experimental.pallas import tpu as pltpu


# --------------------------------------------------------------------------
# Init-time (register_buffer-style) constants.
# --------------------------------------------------------------------------
def _deinterleave_matrix(d):
    """(D, D) 0/1 matrix with (x @ E) = concat([x[0::2], x[1::2]], -1)."""
    half = d // 2
    rows = jnp.arange(d)
    cols = jnp.where(rows % 2 == 0, rows // 2, half + rows // 2)
    return jax.nn.one_hot(cols, d, dtype=jnp.float32)


def init_rotary_params(head_dim, max_seq_len=2048):
    """Precompute all RoPE buffers once (matches the PyTorch __init__)."""
    inv_freq = 1.0 / (10000.0 ** (jnp.arange(0, head_dim, 2, dtype=jnp.float32)
                                  / head_dim))
    t = jnp.arange(max_seq_len, dtype=jnp.float32)
    freqs = jnp.einsum("i,j->ij", t, inv_freq)          # (max_seq_len, D/2)
    cos = jnp.cos(freqs)
    sin = jnp.sin(freqs)
    # Lane-dense packed tables in the de-interleaved output layout.
    t1 = jnp.concatenate([cos, cos], axis=-1)           # (max_seq_len, D)
    t2 = jnp.concatenate([-sin, sin], axis=-1)          # (max_seq_len, D)
    # 0/1 de-interleave matrix; bf16 entries are exact, so a DEFAULT-precision
    # single-pass MXU matmul with it is an exact lane permutation of bf16 data.
    em = _deinterleave_matrix(head_dim).astype(jnp.bfloat16)
    return {"cos": cos, "sin": sin, "t1": t1, "t2": t2, "em": em,
            "max_seq_len": max_seq_len}


# --------------------------------------------------------------------------
# Kernel.
# --------------------------------------------------------------------------
def _rope_kernel(t1_ref, t2_ref, e_ref, q_ref, k_ref, qo_ref, ko_ref):
    """Apply RoPE to one (G, TS, D) tile of q and of k.

    t1_ref: (TS, D) packed table [cos | cos]          (constant over inner axis)
    t2_ref: (TS, D) packed table [-sin | sin]         (constant over inner axis)
    e_ref:  (D, D)  bf16 0/1 de-interleave matrix     (fetched once)
    q_ref, k_ref:   (G, TS, D) input tiles
    qo_ref, ko_ref: (G, TS, D) output tiles
    """
    g, ts, d = q_ref.shape
    half = d // 2

    t1 = t1_ref[...]
    t2 = t2_ref[...]
    em = e_ref[...]

    def deinterleave(x_ref):
        # Merge the G heads into the row axis so the permutation is one big
        # matmul per piece (free reshape: only major dims are merged).
        if g == 1:
            xb = x_ref[0]
        else:
            xb = x_ref[...].reshape(g * ts, d)

        if xb.dtype == jnp.bfloat16:
            # bf16 data: one DEFAULT-precision pass is already exact.
            return jnp.dot(xb, em, preferred_element_type=jnp.float32)

        # f32 data: split x into three bf16 pieces (x == hi + mid + lo up to
        # <= 1 ulp).  E is exactly bf16, so only x needs splitting: three
        # one-pass bf16 matmuls reproduce x @ E to ~2^-24 relative error —
        # same accuracy as Precision.HIGHEST at half the MXU pushes.
        x = xb.astype(jnp.float32)
        hi = x.astype(jnp.bfloat16)
        r1 = x - hi.astype(jnp.float32)
        mid = r1.astype(jnp.bfloat16)
        lo = (r1 - mid.astype(jnp.float32)).astype(jnp.bfloat16)
        xd = jnp.dot(hi, em, preferred_element_type=jnp.float32)
        xd = xd + jnp.dot(mid, em, preferred_element_type=jnp.float32)
        xd = xd + jnp.dot(lo, em, preferred_element_type=jnp.float32)
        return xd

    def rotate(x_ref, o_ref):
        xd = deinterleave(x_ref)                       # (G*TS, D): [x_even | x_odd]
        # [x_odd | x_even] via a half-width lane rotation (XLU slot).
        xr = pltpu.roll(xd, shift=half, axis=1)
        # Per-head elementwise combine; tables are reused as-is for every head
        # (no broadcast materialization), each store is full-lane-width.
        for gi in range(g):
            a = xd[gi * ts:(gi + 1) * ts]
            b = xr[gi * ts:(gi + 1) * ts]
            o_ref[gi] = (a * t1 + b * t2).astype(o_ref.dtype)

    rotate(q_ref, qo_ref)
    rotate(k_ref, ko_ref)


# --------------------------------------------------------------------------
# Wrapper.
# --------------------------------------------------------------------------
def apply_rotary(q, k, t1, t2, em, *, seq_block=1024, head_block=None,
                 in_place=True, vmem_limit_bytes=40 * 1024 * 1024):
    """Apply RoPE to q and k. q, k: (B, H, S, D)."""
    b, h, s, d = q.shape
    assert k.shape == q.shape, (q.shape, k.shape)
    assert d % 2 == 0
    if s > t1.shape[0]:
        raise ValueError(f"seq_len={s} exceeds max_seq_len={t1.shape[0]}")
    assert t1.shape[1] == d and t2.shape == t1.shape and em.shape == (d, d)

    bh = b * h
    qf = q.reshape(bh, s, d)                            # free reshape
    kf = k.reshape(bh, s, d)

    ts = min(s, seq_block)
    # Head-group blocking: amortize per-step pipeline overhead and reuse the
    # in-VMEM tables across G heads.  Cap G*TS at 2048 rows so double-buffered
    # in/out blocks + matmul temporaries fit v7x's 32 MiB scoped VMEM.
    if head_block is None:
        g = 1
        if ts % 8 == 0:             # merged (G*TS, D) view needs sublane-aligned TS
            for cand in (8, 4, 2):
                if bh % cand == 0 and cand * ts <= 2048:
                    g = cand
                    break
    else:
        g = head_block
        assert bh % g == 0

    grid = (pl.cdiv(s, ts), bh // g)

    # Table block index depends only on the OUTER (seq) axis -> Pallas skips
    # the table DMA across the whole inner head loop.  E is fetched once.
    table_spec = pl.BlockSpec((ts, d), lambda si, hi: (si, 0))
    e_spec = pl.BlockSpec((d, d), lambda si, hi: (0, 0))
    qk_spec = pl.BlockSpec((g, ts, d), lambda si, hi: (hi, si, 0))

    # q -> q_rot, k -> k_rot in place (XLA copies only if not donatable).
    aliases = {3: 0, 4: 1} if in_place else {}

    q_rot, k_rot = pl.pallas_call(
        _rope_kernel,
        out_shape=(
            jax.ShapeDtypeStruct((bh, s, d), q.dtype),
            jax.ShapeDtypeStruct((bh, s, d), k.dtype),
        ),
        grid_spec=pltpu.PrefetchScalarGridSpec(
            num_scalar_prefetch=0,
            grid=grid,
            in_specs=[table_spec, table_spec, e_spec, qk_spec, qk_spec],
            out_specs=[qk_spec, qk_spec],
        ),
        compiler_params=pltpu.CompilerParams(
            dimension_semantics=("parallel", "parallel"),
            vmem_limit_bytes=vmem_limit_bytes),
        input_output_aliases=aliases,
    )(t1, t2, em, qf, kf)

    return q_rot.reshape(b, h, s, d), k_rot.reshape(b, h, s, d)


# --------------------------------------------------------------------------
# Pure-JAX reference matching the PyTorch forward exactly.
# --------------------------------------------------------------------------
def _rope_reference(q, k, cos_table, sin_table):
    s = q.shape[2]
    cos = cos_table[:s, :][None, None]                  # (1,1,S,D/2)
    sin = sin_table[:s, :][None, None]
    q1, q2 = q[..., 0::2], q[..., 1::2]
    k1, k2 = k[..., 0::2], k[..., 1::2]
    q_rot = jnp.concatenate([q1 * cos - q2 * sin, q1 * sin + q2 * cos], axis=-1)
    k_rot = jnp.concatenate([k1 * cos - k2 * sin, k1 * sin + k2 * cos], axis=-1)
    return q_rot, k_rot


if __name__ == "__main__":
    # Small but tile-realistic shapes (S and D at the (8,128) tile size so the
    # lowering path exercised here matches production shapes).
    B, H, S, D = 2, 4, 128, 128
    MAX_SEQ = 256

    key = jax.random.PRNGKey(0)
    kq, kk = jax.random.split(key)
    q = jax.random.normal(kq, (B, H, S, D), dtype=jnp.float32)
    k = jax.random.normal(kk, (B, H, S, D), dtype=jnp.float32)

    params = init_rotary_params(D, MAX_SEQ)             # module-init style, once

    rope = jax.jit(apply_rotary)
    q_rot, k_rot = rope(q, k, params["t1"], params["t2"], params["em"])
    q_rot, k_rot = jax.block_until_ready((q_rot, k_rot))

    q_ref, k_ref = _rope_reference(q, k, params["cos"], params["sin"])
    assert jnp.allclose(q_rot, q_ref, atol=1e-5, rtol=1e-5), \
        float(jnp.max(jnp.abs(q_rot - q_ref)))
    assert jnp.allclose(k_rot, k_ref, atol=1e-5, rtol=1e-5), \
        float(jnp.max(jnp.abs(k_rot - k_ref)))

    print("KERNEL_OK")
</pallas_src>

<mosaic_0001>
module attributes {stable_mosaic.version = 11 : i64} {
  func.func @_rope_kernel(%arg0: i32, %arg1: i32, %arg2: memref<128x128xf32, #tpu.memory_space<vmem>>, %arg3: memref<128x128xf32, #tpu.memory_space<vmem>>, %arg4: memref<128x128xbf16, #tpu.memory_space<vmem>>, %arg5: memref<8x128x128xf32, #tpu.memory_space<vmem>>, %arg6: memref<8x128x128xf32, #tpu.memory_space<vmem>>, %arg7: memref<8x128x128xf32, #tpu.memory_space<vmem>>, %arg8: memref<8x128x128xf32, #tpu.memory_space<vmem>>) attributes {dimension_semantics = [#tpu.dimension_semantics<parallel>, #tpu.dimension_semantics<parallel>], iteration_bounds = array<i64: 1, 1>, scalar_prefetch = 0 : i64, scratch_operands = 0 : i64, tpu.core_type = #tpu.core_type<tc>, window_params = [{transform_indices = @transform_0, window_bounds = array<i64: 128, 128>}, {transform_indices = @transform_1, window_bounds = array<i64: 128, 128>}, {pipeline_mode = #tpu.pipeline_mode<synchronous>, transform_indices = @transform_2, window_bounds = array<i64: 128, 128>}, {transform_indices = @transform_3, window_bounds = array<i64: 8, 128, 128>}, {transform_indices = @transform_4, window_bounds = array<i64: 8, 128, 128>}, {transform_indices = @transform_5, window_bounds = array<i64: 8, 128, 128>}, {transform_indices = @transform_6, window_bounds = array<i64: 8, 128, 128>}]} {
    %c0 = arith.constant 0 : index
    %c0_0 = arith.constant 0 : index
    %0 = vector.load %arg2[%c0, %c0_0] : memref<128x128xf32, #tpu.memory_space<vmem>>, vector<128x128xf32>
    %c0_1 = arith.constant 0 : index
    %c0_2 = arith.constant 0 : index
    %1 = vector.load %arg3[%c0_1, %c0_2] : memref<128x128xf32, #tpu.memory_space<vmem>>, vector<128x128xf32>
    %c0_3 = arith.constant 0 : index
    %c0_4 = arith.constant 0 : index
    %2 = vector.load %arg4[%c0_3, %c0_4] : memref<128x128xbf16, #tpu.memory_space<vmem>>, vector<128x128xbf16>
    %c0_5 = arith.constant 0 : index
    %c0_6 = arith.constant 0 : index
    %c0_7 = arith.constant 0 : index
    %3 = vector.load %arg5[%c0_5, %c0_6, %c0_7] : memref<8x128x128xf32, #tpu.memory_space<vmem>>, vector<8x128x128xf32>
    %4 = vector.shape_cast %3 : vector<8x128x128xf32> to vector<1024x128xf32>
    %5 = arith.truncf %4 : vector<1024x128xf32> to vector<1024x128xbf16>
    %6 = arith.extf %5 : vector<1024x128xbf16> to vector<1024x128xf32>
    %7 = arith.subf %4, %6 : vector<1024x128xf32>
    %8 = arith.truncf %7 : vector<1024x128xf32> to vector<1024x128xbf16>
    %9 = arith.extf %8 : vector<1024x128xbf16> to vector<1024x128xf32>
    %10 = arith.subf %7, %9 : vector<1024x128xf32>
    %11 = arith.truncf %10 : vector<1024x128xf32> to vector<1024x128xbf16>
    %cst = arith.constant dense<0.000000e+00> : vector<1024x128xf32>
    %12 = tpu.matmul %5, %2, %cst {dimension_numbers = #tpu.dot_dimension_numbers<[1], [0], [0], [1], [0, 0, 1, 1], [], []>} : vector<1024x128xbf16>, vector<128x128xbf16>, vector<1024x128xf32> -> vector<1024x128xf32>
    %cst_8 = arith.constant dense<0.000000e+00> : vector<1024x128xf32>
    %13 = tpu.matmul %8, %2, %cst_8 {dimension_numbers = #tpu.dot_dimension_numbers<[1], [0], [0], [1], [0, 0, 1, 1], [], []>} : vector<1024x128xbf16>, vector<128x128xbf16>, vector<1024x128xf32> -> vector<1024x128xf32>
    %14 = arith.addf %12, %13 : vector<1024x128xf32>
    %cst_9 = arith.constant dense<0.000000e+00> : vector<1024x128xf32>
    %15 = tpu.matmul %11, %2, %cst_9 {dimension_numbers = #tpu.dot_dimension_numbers<[1], [0], [0], [1], [0, 0, 1, 1], [], []>} : vector<1024x128xbf16>, vector<128x128xbf16>, vector<1024x128xf32> -> vector<1024x128xf32>
    %16 = arith.addf %14, %15 : vector<1024x128xf32>
    %c64_i32 = arith.constant 64 : i32
    %17 = tpu.dynamic_rotate %16 by %c64_i32 dim 1 : vector<1024x128xf32>, i32 -> vector<1024x128xf32>
    %18 = vector.extract_strided_slice %16 {offsets = [0, 0], sizes = [128, 128], strides = [1, 1]} : vector<1024x128xf32> to vector<128x128xf32>
    %19 = vector.extract_strided_slice %17 {offsets = [0, 0], sizes = [128, 128], strides = [1, 1]} : vector<1024x128xf32> to vector<128x128xf32>
    %20 = arith.mulf %18, %0 : vector<128x128xf32>
    %21 = arith.mulf %19, %1 : vector<128x128xf32>
    %22 = arith.addf %20, %21 : vector<128x128xf32>
    %c0_10 = arith.constant 0 : index
    %c0_11 = arith.constant 0 : index
    %c0_12 = arith.constant 0 : index
    %23 = vector.load %arg7[%c0_10, %c0_11, %c0_12] : memref<8x128x128xf32, #tpu.memory_space<vmem>>, vector<1x128x128xf32>
    %24 = vector.shape_cast %23 : vector<1x128x128xf32> to vector<128x128xf32>
    %25 = vector.shape_cast %22 : vector<128x128xf32> to vector<1x128x128xf32>
    tpu.vector_store %arg7[%c0_10, %c0_11, %c0_12], %25 {strides = array<i32>} : memref<8x128x128xf32, #tpu.memory_space<vmem>>, vector<1x128x128xf32>,
    %26 = vector.extract_strided_slice %16 {offsets = [128, 0], sizes = [128, 128], strides = [1, 1]} : vector<1024x128xf32> to vector<128x128xf32>
    %27 = vector.extract_strided_slice %17 {offsets = [128, 0], sizes = [128, 128], strides = [1, 1]} : vector<1024x128xf32> to vector<128x128xf32>
    %28 = arith.mulf %26, %0 : vector<128x128xf32>
    %29 = arith.mulf %27, %1 : vector<128x128xf32>
    %30 = arith.addf %28, %29 : vector<128x128xf32>
    %c1 = arith.constant 1 : index
    %c0_13 = arith.constant 0 : index
    %c0_14 = arith.constant 0 : index
    %31 = vector.load %arg7[%c1, %c0_13, %c0_14] : memref<8x128x128xf32, #tpu.memory_space<vmem>>, vector<1x128x128xf32>
    %32 = vector.shape_cast %31 : vector<1x128x128xf32> to vector<128x128xf32>
    %33 = vector.shape_cast %30 : vector<128x128xf32> to vector<1x128x128xf32>
    tpu.vector_store %arg7[%c1, %c0_13, %c0_14], %33 {strides = array<i32>} : memref<8x128x128xf32, #tpu.memory_space<vmem>>, vector<1x128x128xf32>,
    %34 = vector.extract_strided_slice %16 {offsets = [256, 0], sizes = [128, 128], strides = [1, 1]} : vector<1024x128xf32> to vector<128x128xf32>
    %35 = vector.extract_strided_slice %17 {offsets = [256, 0], sizes = [128, 128], strides = [1, 1]} : vector<1024x128xf32> to vector<128x128xf32>
    %36 = arith.mulf %34, %0 : vector<128x128xf32>
    %37 = arith.mulf %35, %1 : vector<128x128xf32>
    %38 = arith.addf %36, %37 : vector<128x128xf32>
    %c2 = arith.constant 2 : index
    %c0_15 = arith.constant 0 : index
    %c0_16 = arith.constant 0 : index
    %39 = vector.load %arg7[%c2, %c0_15, %c0_16] : memref<8x128x128xf32, #tpu.memory_space<vmem>>, vector<1x128x128xf32>
    %40 = vector.shape_cast %39 : vector<1x128x128xf32> to vector<128x128xf32>
    %41 = vector.shape_cast %38 : vector<128x128xf32> to vector<1x128x128xf32>
    tpu.vector_store %arg7[%c2, %c0_15, %c0_16], %41 {strides = array<i32>} : memref<8x128x128xf32, #tpu.memory_space<vmem>>, vector<1x128x128xf32>,
    %42 = vector.extract_strided_slice %16 {offsets = [384, 0], sizes = [128, 128], strides = [1, 1]} : vector<1024x128xf32> to vector<128x128xf32>
    %43 = vector.extract_strided_slice %17 {offsets = [384, 0], sizes = [128, 128], strides = [1, 1]} : vector<1024x128xf32> to vector<128x128xf32>
    %44 = arith.mulf %42, %0 : vector<128x128xf32>
    %45 = arith.mulf %43, %1 : vector<128x128xf32>
    %46 = arith.addf %44, %45 : vector<128x128xf32>
    %c3 = arith.constant 3 : index
    %c0_17 = arith.constant 0 : index
    %c0_18 = arith.constant 0 : index
    %47 = vector.load %arg7[%c3, %c0_17, %c0_18] : memref<8x128x128xf32, #tpu.memory_space<vmem>>, vector<1x128x128xf32>
    %48 = vector.shape_cast %47 : vector<1x128x128xf32> to vector<128x128xf32>
    %49 = vector.shape_cast %46 : vector<128x128xf32> to vector<1x128x128xf32>
    tpu.vector_store %arg7[%c3, %c0_17, %c0_18], %49 {strides = array<i32>} : memref<8x128x128xf32, #tpu.memory_space<vmem>>, vector<1x128x128xf32>,
    %50 = vector.extract_strided_slice %16 {offsets = [512, 0], sizes = [128, 128], strides = [1, 1]} : vector<1024x128xf32> to vector<128x128xf32>
    %51 = vector.extract_strided_slice %17 {offsets = [512, 0], sizes = [128, 128], strides = [1, 1]} : vector<1024x128xf32> to vector<128x128xf32>
    %52 = arith.mulf %50, %0 : vector<128x128xf32>
    %53 = arith.mulf %51, %1 : vector<128x128xf32>
    %54 = arith.addf %52, %53 : vector<128x128xf32>
    %c4 = arith.constant 4 : index
    %c0_19 = arith.constant 0 : index
    %c0_20 = arith.constant 0 : index
    %55 = vector.load %arg7[%c4, %c0_19, %c0_20] : memref<8x128x128xf32, #tpu.memory_space<vmem>>, vector<1x128x128xf32>
    %56 = vector.shape_cast %55 : vector<1x128x128xf32> to vector<128x128xf32>
    %57 = vector.shape_cast %54 : vector<128x128xf32> to vector<1x128x128xf32>
    tpu.vector_store %arg7[%c4, %c0_19, %c0_20], %57 {strides = array<i32>} : memref<8x128x128xf32, #tpu.memory_space<vmem>>, vector<1x128x128xf32>,
    %58 = vector.extract_strided_slice %16 {offsets = [640, 0], sizes = [128, 128], strides = [1, 1]} : vector<1024x128xf32> to vector<128x128xf32>
    %59 = vector.extract_strided_slice %17 {offsets = [640, 0], sizes = [128, 128], strides = [1, 1]} : vector<1024x128xf32> to vector<128x128xf32>
    %60 = arith.mulf %58, %0 : vector<128x128xf32>
    %61 = arith.mulf %59, %1 : vector<128x128xf32>
    %62 = arith.addf %60, %61 : vector<128x128xf32>
    %c5 = arith.constant 5 : index
    %c0_21 = arith.constant 0 : index
    %c0_22 = arith.constant 0 : index
    %63 = vector.load %arg7[%c5, %c0_21, %c0_22] : memref<8x128x128xf32, #tpu.memory_space<vmem>>, vector<1x128x128xf32>
    %64 = vector.shape_cast %63 : vector<1x128x128xf32> to vector<128x128xf32>
    %65 = vector.shape_cast %62 : vector<128x128xf32> to vector<1x128x128xf32>
    tpu.vector_store %arg7[%c5, %c0_21, %c0_22], %65 {strides = array<i32>} : memref<8x128x128xf32, #tpu.memory_space<vmem>>, vector<1x128x128xf32>,
    %66 = vector.extract_strided_slice %16 {offsets = [768, 0], sizes = [128, 128], strides = [1, 1]} : vector<1024x128xf32> to vector<128x128xf32>
    %67 = vector.extract_strided_slice %17 {offsets = [768, 0], sizes = [128, 128], strides = [1, 1]} : vector<1024x128xf32> to vector<128x128xf32>
    %68 = arith.mulf %66, %0 : vector<128x128xf32>
    %69 = arith.mulf %67, %1 : vector<128x128xf32>
    %70 = arith.addf %68, %69 : vector<128x128xf32>
    %c6 = arith.constant 6 : index
    %c0_23 = arith.constant 0 : index
    %c0_24 = arith.constant 0 : index
    %71 = vector.load %arg7[%c6, %c0_23, %c0_24] : memref<8x128x128xf32, #tpu.memory_space<vmem>>, vector<1x128x128xf32>
    %72 = vector.shape_cast %71 : vector<1x128x128xf32> to vector<128x128xf32>
    %73 = vector.shape_cast %70 : vector<128x128xf32> to vector<1x128x128xf32>
    tpu.vector_store %arg7[%c6, %c0_23, %c0_24], %73 {strides = array<i32>} : memref<8x128x128xf32, #tpu.memory_space<vmem>>, vector<1x128x128xf32>,
    %74 = vector.extract_strided_slice %16 {offsets = [896, 0], sizes = [128, 128], strides = [1, 1]} : vector<1024x128xf32> to vector<128x128xf32>
    %75 = vector.extract_strided_slice %17 {offsets = [896, 0], sizes = [128, 128], strides = [1, 1]} : vector<1024x128xf32> to vector<128x128xf32>
    %76 = arith.mulf %74, %0 : vector<128x128xf32>
    %77 = arith.mulf %75, %1 : vector<128x128xf32>
    %78 = arith.addf %76, %77 : vector<128x128xf32>
    %c7 = arith.constant 7 : index
    %c0_25 = arith.constant 0 : index
    %c0_26 = arith.constant 0 : index
    %79 = vector.load %arg7[%c7, %c0_25, %c0_26] : memref<8x128x128xf32, #tpu.memory_space<vmem>>, vector<1x128x128xf32>
    %80 = vector.shape_cast %79 : vector<1x128x128xf32> to vector<128x128xf32>
    %81 = vector.shape_cast %78 : vector<128x128xf32> to vector<1x128x128xf32>
    tpu.vector_store %arg7[%c7, %c0_25, %c0_26], %81 {strides = array<i32>} : memref<8x128x128xf32, #tpu.memory_space<vmem>>, vector<1x128x128xf32>,
    %c0_27 = arith.constant 0 : index
    %c0_28 = arith.constant 0 : index
    %c0_29 = arith.constant 0 : index
    %82 = vector.load %arg6[%c0_27, %c0_28, %c0_29] : memref<8x128x128xf32, #tpu.memory_space<vmem>>, vector<8x128x128xf32>
    %83 = vector.shape_cast %82 : vector<8x128x128xf32> to vector<1024x128xf32>
    %84 = arith.truncf %83 : vector<1024x128xf32> to vector<1024x128xbf16>
    %85 = arith.extf %84 : vector<1024x128xbf16> to vector<1024x128xf32>
    %86 = arith.subf %83, %85 : vector<1024x128xf32>
    %87 = arith.truncf %86 : vector<1024x128xf32> to vector<1024x128xbf16>
    %88 = arith.extf %87 : vector<1024x128xbf16> to vector<1024x128xf32>
    %89 = arith.subf %86, %88 : vector<1024x128xf32>
    %90 = arith.truncf %89 : vector<1024x128xf32> to vector<1024x128xbf16>
    %cst_30 = arith.constant dense<0.000000e+00> : vector<1024x128xf32>
    %91 = tpu.matmul %84, %2, %cst_30 {dimension_numbers = #tpu.dot_dimension_numbers<[1], [0], [0], [1], [0, 0, 1, 1], [], []>} : vector<1024x128xbf16>, vector<128x128xbf16>, vector<1024x128xf32> -> vector<1024x128xf32>
    %cst_31 = arith.constant dense<0.000000e+00> : vector<1024x128xf32>
    %92 = tpu.matmul %87, %2, %cst_31 {dimension_numbers = #tpu.dot_dimension_numbers<[1], [0], [0], [1], [0, 0, 1, 1], [], []>} : vector<1024x128xbf16>, vector<128x128xbf16>, vector<1024x128xf32> -> vector<1024x128xf32>
    %93 = arith.addf %91, %92 : vector<1024x128xf32>
    %cst_32 = arith.constant dense<0.000000e+00> : vector<1024x128xf32>
    %94 = tpu.matmul %90, %2, %cst_32 {dimension_numbers = #tpu.dot_dimension_numbers<[1], [0], [0], [1], [0, 0, 1, 1], [], []>} : vector<1024x128xbf16>, vector<128x128xbf16>, vector<1024x128xf32> -> vector<1024x128xf32>
    %95 = arith.addf %93, %94 : vector<1024x128xf32>
    %c64_i32_33 = arith.constant 64 : i32
    %96 = tpu.dynamic_rotate %95 by %c64_i32_33 dim 1 : vector<1024x128xf32>, i32 -> vector<1024x128xf32>
    %97 = vector.extract_strided_slice %95 {offsets = [0, 0], sizes = [128, 128], strides = [1, 1]} : vector<1024x128xf32> to vector<128x128xf32>
    %98 = vector.extract_strided_slice %96 {offsets = [0, 0], sizes = [128, 128], strides = [1, 1]} : vector<1024x128xf32> to vector<128x128xf32>
    %99 = arith.mulf %97, %0 : vector<128x128xf32>
    %100 = arith.mulf %98, %1 : vector<128x128xf32>
    %101 = arith.addf %99, %100 : vector<128x128xf32>
    %c0_34 = arith.constant 0 : index
    %c0_35 = arith.constant 0 : index
    %c0_36 = arith.constant 0 : index
    %102 = vector.load %arg8[%c0_34, %c0_35, %c0_36] : memref<8x128x128xf32, #tpu.memory_space<vmem>>, vector<1x128x128xf32>
    %103 = vector.shape_cast %102 : vector<1x128x128xf32> to vector<128x128xf32>
    %104 = vector.shape_cast %101 : vector<128x128xf32> to vector<1x128x128xf32>
    tpu.vector_store %arg8[%c0_34, %c0_35, %c0_36], %104 {strides = array<i32>} : memref<8x128x128xf32, #tpu.memory_space<vmem>>, vector<1x128x128xf32>,
    %105 = vector.extract_strided_slice %95 {offsets = [128, 0], sizes = [128, 128], strides = [1, 1]} : vector<1024x128xf32> to vector<128x128xf32>
    %106 = vector.extract_strided_slice %96 {offsets = [128, 0], sizes = [128, 128], strides = [1, 1]} : vector<1024x128xf32> to vector<128x128xf32>
    %107 = arith.mulf %105, %0 : vector<128x128xf32>
    %108 = arith.mulf %106, %1 : vector<128x128xf32>
    %109 = arith.addf %107, %108 : vector<128x128xf32>
    %c1_37 = arith.constant 1 : index
    %c0_38 = arith.constant 0 : index
    %c0_39 = arith.constant 0 : index
    %110 = vector.load %arg8[%c1_37, %c0_38, %c0_39] : memref<8x128x128xf32, #tpu.memory_space<vmem>>, vector<1x128x128xf32>
    %111 = vector.shape_cast %110 : vector<1x128x128xf32> to vector<128x128xf32>
    %112 = vector.shape_cast %109 : vector<128x128xf32> to vector<1x128x128xf32>
    tpu.vector_store %arg8[%c1_37, %c0_38, %c0_39], %112 {strides = array<i32>} : memref<8x128x128xf32, #tpu.memory_space<vmem>>, vector<1x128x128xf32>,
    %113 = vector.extract_strided_slice %95 {offsets = [256, 0], sizes = [128, 128], strides = [1, 1]} : vector<1024x128xf32> to vector<128x128xf32>
    %114 = vector.extract_strided_slice %96 {offsets = [256, 0], sizes = [128, 128], strides = [1, 1]} : vector<1024x128xf32> to vector<128x128xf32>
    %115 = arith.mulf %113, %0 : vector<128x128xf32>
    %116 = arith.mulf %114, %1 : vector<128x128xf32>
    %117 = arith.addf %115, %116 : vector<128x128xf32>
    %c2_40 = arith.constant 2 : index
    %c0_41 = arith.constant 0 : index
    %c0_42 = arith.constant 0 : index
    %118 = vector.load %arg8[%c2_40, %c0_41, %c0_42] : memref<8x128x128xf32, #tpu.memory_space<vmem>>, vector<1x128x128xf32>
    %119 = vector.shape_cast %118 : vector<1x128x128xf32> to vector<128x128xf32>
    %120 = vector.shape_cast %117 : vector<128x128xf32> to vector<1x128x128xf32>
    tpu.vector_store %arg8[%c2_40, %c0_41, %c0_42], %120 {strides = array<i32>} : memref<8x128x128xf32, #tpu.memory_space<vmem>>, vector<1x128x128xf32>,
    %121 = vector.extract_strided_slice %95 {offsets = [384, 0], sizes = [128, 128], strides = [1, 1]} : vector<1024x128xf32> to vector<128x128xf32>
    %122 = vector.extract_strided_slice %96 {offsets = [384, 0], sizes = [128, 128], strides = [1, 1]} : vector<1024x128xf32> to vector<128x128xf32>
    %123 = arith.mulf %121, %0 : vector<128x128xf32>
    %124 = arith.mulf %122, %1 : vector<128x128xf32>
    %125 = arith.addf %123, %124 : vector<128x128xf32>
    %c3_43 = arith.constant 3 : index
    %c0_44 = arith.constant 0 : index
    %c0_45 = arith.constant 0 : index
    %126 = vector.load %arg8[%c3_43, %c0_44, %c0_45] : memref<8x128x128xf32, #tpu.memory_space<vmem>>, vector<1x128x128xf32>
    %127 = vector.shape_cast %126 : vector<1x128x128xf32> to vector<128x128xf32>
    %128 = vector.shape_cast %125 : vector<128x128xf32> to vector<1x128x128xf32>
    tpu.vector_store %arg8[%c3_43, %c0_44, %c0_45], %128 {strides = array<i32>} : memref<8x128x128xf32, #tpu.memory_space<vmem>>, vector<1x128x128xf32>,
    %129 = vector.extract_strided_slice %95 {offsets = [512, 0], sizes = [128, 128], strides = [1, 1]} : vector<1024x128xf32> to vector<128x128xf32>
    %130 = vector.extract_strided_slice %96 {offsets = [512, 0], sizes = [128, 128], strides = [1, 1]} : vector<1024x128xf32> to vector<128x128xf32>
    %131 = arith.mulf %129, %0 : vector<128x128xf32>
    %132 = arith.mulf %130, %1 : vector<128x128xf32>
    %133 = arith.addf %131, %132 : vector<128x128xf32>
    %c4_46 = arith.constant 4 : index
    %c0_47 = arith.constant 0 : index
    %c0_48 = arith.constant 0 : index
    %134 = vector.load %arg8[%c4_46, %c0_47, %c0_48] : memref<8x128x128xf32, #tpu.memory_space<vmem>>, vector<1x128x128xf32>
    %135 = vector.shape_cast %134 : vector<1x128x128xf32> to vector<128x128xf32>
    %136 = vector.shape_cast %133 : vector<128x128xf32> to vector<1x128x128xf32>
    tpu.vector_store %arg8[%c4_46, %c0_47, %c0_48], %136 {strides = array<i32>} : memref<8x128x128xf32, #tpu.memory_space<vmem>>, vector<1x128x128xf32>,
    %137 = vector.extract_strided_slice %95 {offsets = [640, 0], sizes = [128, 128], strides = [1, 1]} : vector<1024x128xf32> to vector<128x128xf32>
    %138 = vector.extract_strided_slice %96 {offsets = [640, 0], sizes = [128, 128], strides = [1, 1]} : vector<1024x128xf32> to vector<128x128xf32>
    %139 = arith.mulf %137, %0 : vector<128x128xf32>
    %140 = arith.mulf %138, %1 : vector<128x128xf32>
    %141 = arith.addf %139, %140 : vector<128x128xf32>
    %c5_49 = arith.constant 5 : index
    %c0_50 = arith.constant 0 : index
    %c0_51 = arith.constant 0 : index
    %142 = vector.load %arg8[%c5_49, %c0_50, %c0_51] : memref<8x128x128xf32, #tpu.memory_space<vmem>>, vector<1x128x128xf32>
    %143 = vector.shape_cast %142 : vector<1x128x128xf32> to vector<128x128xf32>
    %144 = vector.shape_cast %141 : vector<128x128xf32> to vector<1x128x128xf32>
    tpu.vector_store %arg8[%c5_49, %c0_50, %c0_51], %144 {strides = array<i32>} : memref<8x128x128xf32, #tpu.memory_space<vmem>>, vector<1x128x128xf32>,
    %145 = vector.extract_strided_slice %95 {offsets = [768, 0], sizes = [128, 128], strides = [1, 1]} : vector<1024x128xf32> to vector<128x128xf32>
    %146 = vector.extract_strided_slice %96 {offsets = [768, 0], sizes = [128, 128], strides = [1, 1]} : vector<1024x128xf32> to vector<128x128xf32>
    %147 = arith.mulf %145, %0 : vector<128x128xf32>
    %148 = arith.mulf %146, %1 : vector<128x128xf32>
    %149 = arith.addf %147, %148 : vector<128x128xf32>
    %c6_52 = arith.constant 6 : index
    %c0_53 = arith.constant 0 : index
    %c0_54 = arith.constant 0 : index
    %150 = vector.load %arg8[%c6_52, %c0_53, %c0_54] : memref<8x128x128xf32, #tpu.memory_space<vmem>>, vector<1x128x128xf32>
    %151 = vector.shape_cast %150 : vector<1x128x128xf32> to vector<128x128xf32>
    %152 = vector.shape_cast %149 : vector<128x128xf32> to vector<1x128x128xf32>
    tpu.vector_store %arg8[%c6_52, %c0_53, %c0_54], %152 {strides = array<i32>} : memref<8x128x128xf32, #tpu.memory_space<vmem>>, vector<1x128x128xf32>,
    %153 = vector.extract_strided_slice %95 {offsets = [896, 0], sizes = [128, 128], strides = [1, 1]} : vector<1024x128xf32> to vector<128x128xf32>
    %154 = vector.extract_strided_slice %96 {offsets = [896, 0], sizes = [128, 128], strides = [1, 1]} : vector<1024x128xf32> to vector<128x128xf32>
    %155 = arith.mulf %153, %0 : vector<128x128xf32>
    %156 = arith.mulf %154, %1 : vector<128x128xf32>
    %157 = arith.addf %155, %156 : vector<128x128xf32>
    %c7_55 = arith.constant 7 : index
    %c0_56 = arith.constant 0 : index
    %c0_57 = arith.constant 0 : index
    %158 = vector.load %arg8[%c7_55, %c0_56, %c0_57] : memref<8x128x128xf32, #tpu.memory_space<vmem>>, vector<1x128x128xf32>
    %159 = vector.shape_cast %158 : vector<1x128x128xf32> to vector<128x128xf32>
    %160 = vector.shape_cast %157 : vector<128x128xf32> to vector<1x128x128xf32>
    tpu.vector_store %arg8[%c7_55, %c0_56, %c0_57], %160 {strides = array<i32>} : memref<8x128x128xf32, #tpu.memory_space<vmem>>, vector<1x128x128xf32>,
    return
  }
  func.func @transform_0(%arg0: i32, %arg1: i32) -> (i32, i32) {
    %c0_i32 = arith.constant 0 : i32
    %c0_i32_0 = arith.constant 0 : i32
    return %arg0, %c0_i32 : i32, i32
  }
  func.func @transform_1(%arg0: i32, %arg1: i32) -> (i32, i32) {
    %c0_i32 = arith.constant 0 : i32
    %c0_i32_0 = arith.constant 0 : i32
    return %arg0, %c0_i32 : i32, i32
  }
  func.func @transform_2(%arg0: i32, %arg1: i32) -> (i32, i32) {
    %c0_i32 = arith.constant 0 : i32
    %c0_i32_0 = arith.constant 0 : i32
    %c0_i32_1 = arith.constant 0 : i32
    return %c0_i32, %c0_i32_0 : i32, i32
  }
  func.func @transform_3(%arg0: i32, %arg1: i32) -> (i32, i32, i32) {
    %c0_i32 = arith.constant 0 : i32
    %c0_i32_0 = arith.constant 0 : i32
    return %arg1, %arg0, %c0_i32 : i32, i32, i32
  }
  func.func @transform_4(%arg0: i32, %arg1: i32) -> (i32, i32, i32) {
    %c0_i32 = arith.constant 0 : i32
    %c0_i32_0 = arith.constant 0 : i32
    return %arg1, %arg0, %c0_i32 : i32, i32, i32
  }
  func.func @transform_5(%arg0: i32, %arg1: i32) -> (i32, i32, i32) {
    %c0_i32 = arith.constant 0 : i32
    %c0_i32_0 = arith.constant 0 : i32
    return %arg1, %arg0, %c0_i32 : i32, i32, i32
  }
  func.func @transform_6(%arg0: i32, %arg1: i32) -> (i32, i32, i32) {
    %c0_i32 = arith.constant 0 : i32
    %c0_i32_0 = arith.constant 0 : i32
    return %arg1, %arg0, %c0_i32 : i32, i32, i32
  }
}

</mosaic_0001>

<llo_original>
// kernel: apply_rotary.1
$region0: #{apply_rotary.1}
  #allocation0 [shape = 'u32[]', space=smem, size = 0x4, offset = 0x4, fixed_abs, tag = 'smem constant byte address 0x4 - core index']
  #allocation1 [shape = 'u32[72,128]{1,0:T(1,128)}', space=vmem, size = 0x9000, scoped, tag = 'internal scratch']
  %s0 = inlined_call_operand.vmem [shape: f32[256,128], index: 0, kind: input, shape index: {}]
  %s1 = inlined_call_operand.vmem [shape: f32[256,128], index: 1, kind: input, shape index: {}]
  %s2 = inlined_call_operand.vmem [shape: bf16[128,128], index: 2, kind: input, shape index: {}]
  %s3 = inlined_call_operand.vmem [shape: f32[8,128,128], index: 3, kind: input, shape index: {}, may-alias: {3,5}]
  %s4 = inlined_call_operand.vmem [shape: f32[8,128,128], index: 4, kind: input, shape index: {}, may-alias: {4,6}]
  %s5 = inlined_call_operand.vmem [shape: f32[8,128,128], index: 5, kind: output, shape index: {0}, may-alias: {3,5}]
  %s6 = inlined_call_operand.vmem [shape: f32[8,128,128], index: 6, kind: output, shape index: {1}, may-alias: {4,6}]
  %7 = xla_tuple %s5, %s6
  %s8 = sld [smem:[#allocation0]]
  $region38: #{apply_rotary.1} parent=0
    _
  %s10 = ssub.s32 1, %s8
  %s11 = scalar_select 0, %s10, %s8
  // Predicated region
  $region2: #{apply_rotary.1} parent=0 // pred_check
    _
  $region3: #{apply_rotary.1} parent=0 // pred_check_branch
    %13 = sbr.rel (0) target = $region5
  $region4: #{apply_rotary.1} parent=0 // pred_region
    _
  $region5: #{apply_rotary.1} parent=0 // pred_fallthru
    _
  // Predicated region
  $region6: #{apply_rotary.1} parent=0 // pred_check
    _
  $region7: #{apply_rotary.1} parent=0 // pred_check_branch
    %15 = sbr.rel (0) target = $region9
  $region8: #{apply_rotary.1} parent=0 // pred_region
    _
  $region9: #{apply_rotary.1} parent=0 // pred_fallthru
    _
  // Predicated region
  $region10: #{apply_rotary.1} parent=0 // pred_check
    _
  $region11: #{apply_rotary.1} parent=0 // pred_check_branch
    %17 = sbr.rel (0) target = $region13
  $region12: #{apply_rotary.1} parent=0 // pred_region
    _
  $region13: #{apply_rotary.1} parent=0 // pred_fallthru
    _
  // Predicated region
  $region14: #{apply_rotary.1} parent=0 // pred_check
    _
  $region15: #{apply_rotary.1} parent=0 // pred_check_branch
    %19 = sbr.rel (0) target = $region17
  $region16: #{apply_rotary.1} parent=0 // pred_region
    _
  $region17: #{apply_rotary.1} parent=0 // pred_fallthru
    _
  // Predicated region
  $region18: #{apply_rotary.1} parent=0 // pred_check
    _
  $region19: #{apply_rotary.1} parent=0 // pred_check_branch
    %21 = sbr.rel (0) target = $region21
  $region20: #{apply_rotary.1} parent=0 // pred_region
    _
  $region21: #{apply_rotary.1} parent=0 // pred_fallthru
    _
  %v22 = vld [vmem:[%s0] sm:$0xff]
  %v23 = vld [vmem:[%s0 + $0x8] sm:$0xff]
  %v24 = vld [vmem:[%s0 + $0x10] sm:$0xff]
  %v25 = vld [vmem:[%s0 + $0x18] sm:$0xff]
  %v26 = vld [vmem:[%s0 + $0x20] sm:$0xff]
  %v27 = vld [vmem:[%s0 + $0x28] sm:$0xff]
  %v28 = vld [vmem:[%s0 + $0x30] sm:$0xff]
  %v29 = vld [vmem:[%s0 + $0x38] sm:$0xff]
  %v30 = vld [vmem:[%s0 + $0x40] sm:$0xff]
  %v31 = vld [vmem:[%s0 + $0x48] sm:$0xff]
  %v32 = vld [vmem:[%s0 + $0x50] sm:$0xff]
  %v33 = vld [vmem:[%s0 + $0x58] sm:$0xff]
  %v34 = vld [vmem:[%s0 + $0x60] sm:$0xff]
  %v35 = vld [vmem:[%s0 + $0x68] sm:$0xff]
  %v36 = vld [vmem:[%s0 + $0x70] sm:$0xff]
  %v37 = vld [vmem:[%s0 + $0x78] sm:$0xff]
  %v38 = vld [vmem:[%s1] sm:$0xff]
  %v39 = vld [vmem:[%s1 + $0x8] sm:$0xff]
  %v40 = vld [vmem:[%s1 + $0x10] sm:$0xff]
  %v41 = vld [vmem:[%s1 + $0x18] sm:$0xff]
  %v42 = vld [vmem:[%s1 + $0x20] sm:$0xff]
  %v43 = vld [vmem:[%s1 + $0x28] sm:$0xff]
  %v44 = vld [vmem:[%s1 + $0x30] sm:$0xff]
  %v45 = vld [vmem:[%s1 + $0x38] sm:$0xff]
  %v46 = vld [vmem:[%s1 + $0x40] sm:$0xff]
  %v47 = vld [vmem:[%s1 + $0x48] sm:$0xff]
  %v48 = vld [vmem:[%s1 + $0x50] sm:$0xff]
  %v49 = vld [vmem:[%s1 + $0x58] sm:$0xff]
  %v50 = vld [vmem:[%s1 + $0x60] sm:$0xff]
  %v51 = vld [vmem:[%s1 + $0x68] sm:$0xff]
  %v52 = vld [vmem:[%s1 + $0x70] sm:$0xff]
  %v53 = vld [vmem:[%s1 + $0x78] sm:$0xff]
  %v54 = vld [vmem:[%s2] sm:$0xf]
  %v55 = vld [vmem:[%s2 + $0x4] sm:$0xf]
  %v56 = vld [vmem:[%s2 + $0x8] sm:$0xf]
  %v57 = vld [vmem:[%s2 + $0xc] sm:$0xf]
  %v58 = vld [vmem:[%s2 + $0x10] sm:$0xf]
  %v59 = vld [vmem:[%s2 + $0x14] sm:$0xf]
  %v60 = vld [vmem:[%s2 + $0x18] sm:$0xf]
  %v61 = vld [vmem:[%s2 + $0x1c] sm:$0xf]
  %v62 = vld [vmem:[%s2 + $0x20] sm:$0xf]
  %v63 = vld [vmem:[%s2 + $0x24] sm:$0xf]
  %v64 = vld [vmem:[%s2 + $0x28] sm:$0xf]
  %v65 = vld [vmem:[%s2 + $0x2c] sm:$0xf]
  %v66 = vld [vmem:[%s2 + $0x30] sm:$0xf]
  %v67 = vld [vmem:[%s2 + $0x34] sm:$0xf]
  %v68 = vld [vmem:[%s2 + $0x38] sm:$0xf]
  %v69 = vld [vmem:[%s2 + $0x3c] sm:$0xf]
  %v70 = vld [vmem:[%s3] sm:$0xff]
  %v71 = vld [vmem:[%s3 + $0x8] sm:$0xff]
  %v72 = vld [vmem:[%s3 + $0x10] sm:$0xff]
  %v73 = vld [vmem:[%s3 + $0x18] sm:$0xff]
  %v74 = vld [vmem:[%s3 + $0x20] sm:$0xff]
  %v75 = vld [vmem:[%s3 + $0x28] sm:$0xff]
  %v76 = vld [vmem:[%s3 + $0x30] sm:$0xff]
  %v77 = vld [vmem:[%s3 + $0x38] sm:$0xff]
  %v78 = vld [vmem:[%s3 + $0x40] sm:$0xff]
  %v79 = vld [vmem:[%s3 + $0x48] sm:$0xff]
  %v80 = vld [vmem:[%s3 + $0x50] sm:$0xff]
  %v81 = vld [vmem:[%s3 + $0x58] sm:$0xff]
  %v82 = vld [vmem:[%s3 + $0x60] sm:$0xff]
  %v83 = vld [vmem:[%s3 + $0x68] sm:$0xff]
  %v84 = vld [vmem:[%s3 + $0x70] sm:$0xff]
  %v85 = vld [vmem:[%s3 + $0x78] sm:$0xff]
  %v86 = vld [vmem:[%s3 + $0x80] sm:$0xff]
  %v87 = vld [vmem:[%s3 + $0x88] sm:$0xff]
  %v88 = vld [vmem:[%s3 + $0x90] sm:$0xff]
  %v89 = vld [vmem:[%s3 + $0x98] sm:$0xff]
  %v90 = vld [vmem:[%s3 + $0xa0] sm:$0xff]
  %v91 = vld [vmem:[%s3 + $0xa8] sm:$0xff]
  %v92 = vld [vmem:[%s3 + $0xb0] sm:$0xff]
  %v93 = vld [vmem:[%s3 + $0xb8] sm:$0xff]
  %v94 = vld [vmem:[%s3 + $0xc0] sm:$0xff]
  %v95 = vld [vmem:[%s3 + $0xc8] sm:$0xff]
  %v96 = vld [vmem:[%s3 + $0xd0] sm:$0xff]
  %v97 = vld [vmem:[%s3 + $0xd8] sm:$0xff]
  %v98 = vld [vmem:[%s3 + $0xe0] sm:$0xff]
  %v99 = vld [vmem:[%s3 + $0xe8] sm:$0xff]
  %v100 = vld [vmem:[%s3 + $0xf0] sm:$0xff]
  %v101 = vld [vmem:[%s3 + $0xf8] sm:$0xff]
  %v102 = vld [vmem:[%s3 + $0x100] sm:$0xff]
  %v103 = vld [vmem:[%s3 + $0x108] sm:$0xff]
  %v104 = vld [vmem:[%s3 + $0x110] sm:$0xff]
  %v105 = vld [vmem:[%s3 + $0x118] sm:$0xff]
  %v106 = vld [vmem:[%s3 + $0x120] sm:$0xff]
  %v107 = vld [vmem:[%s3 + $0x128] sm:$0xff]
  %v108 = vld [vmem:[%s3 + $0x130] sm:$0xff]
  %v109 = vld [vmem:[%s3 + $0x138] sm:$0xff]
  %v110 = vld [vmem:[%s3 + $0x140] sm:$0xff]
  %v111 = vld [vmem:[%s3 + $0x148] sm:$0xff]
  %v112 = vld [vmem:[%s3 + $0x150] sm:$0xff]
  %v113 = vld [vmem:[%s3 + $0x158] sm:$0xff]
  %v114 = vld [vmem:[%s3 + $0x160] sm:$0xff]
  %v115 = vld [vmem:[%s3 + $0x168] sm:$0xff]
  %v116 = vld [vmem:[%s3 + $0x170] sm:$0xff]
  %v117 = vld [vmem:[%s3 + $0x178] sm:$0xff]
  %v118 = vld [vmem:[%s3 + $0x180] sm:$0xff]
  %v119 = vld [vmem:[%s3 + $0x188] sm:$0xff]
  %v120 = vld [vmem:[%s3 + $0x190] sm:$0xff]
  %v121 = vld [vmem:[%s3 + $0x198] sm:$0xff]
  %v122 = vld [vmem:[%s3 + $0x1a0] sm:$0xff]
  %v123 = vld [vmem:[%s3 + $0x1a8] sm:$0xff]
  %v124 = vld [vmem:[%s3 + $0x1b0] sm:$0xff]
  %v125 = vld [vmem:[%s3 + $0x1b8] sm:$0xff]
  %v126 = vld [vmem:[%s3 + $0x1c0] sm:$0xff]
  %v127 = vld [vmem:[%s3 + $0x1c8] sm:$0xff]
  %v128 = vld [vmem:[%s3 + $0x1d0] sm:$0xff]
  %v129 = vld [vmem:[%s3 + $0x1d8] sm:$0xff]
  %v130 = vld [vmem:[%s3 + $0x1e0] sm:$0xff]
  %v131 = vld [vmem:[%s3 + $0x1e8] sm:$0xff]
  %v132 = vld [vmem:[%s3 + $0x1f0] sm:$0xff]
  %v133 = vld [vmem:[%s3 + $0x1f8] sm:$0xff]
  %v134 = vld [vmem:[%s3 + $0x200] sm:$0xff]
  %v135 = vld [vmem:[%s3 + $0x208] sm:$0xff]
  %v136 = vld [vmem:[%s3 + $0x210] sm:$0xff]
  %v137 = vld [vmem:[%s3 + $0x218] sm:$0xff]
  %v138 = vld [vmem:[%s3 + $0x220] sm:$0xff]
  %v139 = vld [vmem:[%s3 + $0x228] sm:$0xff]
  %v140 = vld [vmem:[%s3 + $0x230] sm:$0xff]
  %v141 = vld [vmem:[%s3 + $0x238] sm:$0xff]
  %v142 = vld [vmem:[%s3 + $0x240] sm:$0xff]
  %v143 = vld [vmem:[%s3 + $0x248] sm:$0xff]
  %v144 = vld [vmem:[%s3 + $0x250] sm:$0xff]
  %v145 = vld [vmem:[%s3 + $0x258] sm:$0xff]
  %v146 = vld [vmem:[%s3 + $0x260] sm:$0xff]
  %v147 = vld [vmem:[%s3 + $0x268] sm:$0xff]
  %v148 = vld [vmem:[%s3 + $0x270] sm:$0xff]
  %v149 = vld [vmem:[%s3 + $0x278] sm:$0xff]
  %v150 = vld [vmem:[%s3 + $0x280] sm:$0xff]
  %v151 = vld [vmem:[%s3 + $0x288] sm:$0xff]
  %v152 = vld [vmem:[%s3 + $0x290] sm:$0xff]
  %v153 = vld [vmem:[%s3 + $0x298] sm:$0xff]
  %v154 = vld [vmem:[%s3 + $0x2a0] sm:$0xff]
  %v155 = vld [vmem:[%s3 + $0x2a8] sm:$0xff]
  %v156 = vld [vmem:[%s3 + $0x2b0] sm:$0xff]
  %v157 = vld [vmem:[%s3 + $0x2b8] sm:$0xff]
  %v158 = vld [vmem:[%s3 + $0x2c0] sm:$0xff]
  %v159 = vld [vmem:[%s3 + $0x2c8] sm:$0xff]
  %v160 = vld [vmem:[%s3 + $0x2d0] sm:$0xff]
  %v161 = vld [vmem:[%s3 + $0x2d8] sm:$0xff]
  %v162 = vld [vmem:[%s3 + $0x2e0] sm:$0xff]
  %v163 = vld [vmem:[%s3 + $0x2e8] sm:$0xff]
  %v164 = vld [vmem:[%s3 + $0x2f0] sm:$0xff]
  %v165 = vld [vmem:[%s3 + $0x2f8] sm:$0xff]
  %v166 = vld [vmem:[%s3 + $0x300] sm:$0xff]
  %v167 = vld [vmem:[%s3 + $0x308] sm:$0xff]
  %v168 = vld [vmem:[%s3 + $0x310] sm:$0xff]
  %v169 = vld [vmem:[%s3 + $0x318] sm:$0xff]
  %v170 = vld [vmem:[%s3 + $0x320] sm:$0xff]
  %v171 = vld [vmem:[%s3 + $0x328] sm:$0xff]
  %v172 = vld [vmem:[%s3 + $0x330] sm:$0xff]
  %v173 = vld [vmem:[%s3 + $0x338] sm:$0xff]
  %v174 = vld [vmem:[%s3 + $0x340] sm:$0xff]
  %v175 = vld [vmem:[%s3 + $0x348] sm:$0xff]
  %v176 = vld [vmem:[%s3 + $0x350] sm:$0xff]
  %v177 = vld [vmem:[%s3 + $0x358] sm:$0xff]
  %v178 = vld [vmem:[%s3 + $0x360] sm:$0xff]
  %v179 = vld [vmem:[%s3 + $0x368] sm:$0xff]
  %v180 = vld [vmem:[%s3 + $0x370] sm:$0xff]
  %v181 = vld [vmem:[%s3 + $0x378] sm:$0xff]
  %v182 = vld [vmem:[%s3 + $0x380] sm:$0xff]
  %v183 = vld [vmem:[%s3 + $0x388] sm:$0xff]
  %v184 = vld [vmem:[%s3 + $0x390] sm:$0xff]
  %v185 = vld [vmem:[%s3 + $0x398] sm:$0xff]
  %v186 = vld [vmem:[%s3 + $0x3a0] sm:$0xff]
  %v187 = vld [vmem:[%s3 + $0x3a8] sm:$0xff]
  %v188 = vld [vmem:[%s3 + $0x3b0] sm:$0xff]
  %v189 = vld [vmem:[%s3 + $0x3b8] sm:$0xff]
  %v190 = vld [vmem:[%s3 + $0x3c0] sm:$0xff]
  %v191 = vld [vmem:[%s3 + $0x3c8] sm:$0xff]
  %v192 = vld [vmem:[%s3 + $0x3d0] sm:$0xff]
  %v193 = vld [vmem:[%s3 + $0x3d8] sm:$0xff]
  %v194 = vld [vmem:[%s3 + $0x3e0] sm:$0xff]
  %v195 = vld [vmem:[%s3 + $0x3e8] sm:$0xff]
  %v196 = vld [vmem:[%s3 + $0x3f0] sm:$0xff]
  %v197 = vld [vmem:[%s3 + $0x3f8] sm:$0xff]
  %v198 = vpack.c.bf16 %v70, %v70
  %v199 = vpack.c.bf16 %v71, %v71
  %v200 = vpack.c.bf16 %v72, %v72
  %v201 = vpack.c.bf16 %v73, %v73
  %v202 = vpack.c.bf16 %v74, %v74
  %v203 = vpack.c.bf16 %v75, %v75
  %v204 = vpack.c.bf16 %v76, %v76
  %v205 = vpack.c.bf16 %v77, %v77
  %v206 = vpack.c.bf16 %v78, %v78
  %v207 = vpack.c.bf16 %v79, %v79
  %v208 = vpack.c.bf16 %v80, %v80
  %v209 = vpack.c.bf16 %v81, %v81
  %v210 = vpack.c.bf16 %v82, %v82
  %v211 = vpack.c.bf16 %v83, %v83
  %v212 = vpack.c.bf16 %v84, %v84
  %v213 = vpack.c.bf16 %v85, %v85
  %v214 = vpack.c.bf16 %v86, %v86
  %v215 = vpack.c.bf16 %v87, %v87
  %v216 = vpack.c.bf16 %v88, %v88
  %v217 = vpack.c.bf16 %v89, %v89
  %v218 = vpack.c.bf16 %v90, %v90
  %v219 = vpack.c.bf16 %v91, %v91
  %v220 = vpack.c.bf16 %v92, %v92
  %v221 = vpack.c.bf16 %v93, %v93
  %v222 = vpack.c.bf16 %v94, %v94
  %v223 = vpack.c.bf16 %v95, %v95
  %v224 = vpack.c.bf16 %v96, %v96
  %v225 = vpack.c.bf16 %v97, %v97
  %v226 = vpack.c.bf16 %v98, %v98
  %v227 = vpack.c.bf16 %v99, %v99
  %v228 = vpack.c.bf16 %v100, %v100
  %v229 = vpack.c.bf16 %v101, %v101
  %v230 = vpack.c.bf16 %v102, %v102
  %v231 = vpack.c.bf16 %v103, %v103
  %v232 = vpack.c.bf16 %v104, %v104
  %v233 = vpack.c.bf16 %v105, %v105
  %v234 = vpack.c.bf16 %v106, %v106
  %v235 = vpack.c.bf16 %v107, %v107
  %v236 = vpack.c.bf16 %v108, %v108
  %v237 = vpack.c.bf16 %v109, %v109
  %v238 = vpack.c.bf16 %v110, %v110
  %v239 = vpack.c.bf16 %v111, %v111
  %v240 = vpack.c.bf16 %v112, %v112
  %v241 = vpack.c.bf16 %v113, %v113
  %v242 = vpack.c.bf16 %v114, %v114
  %v243 = vpack.c.bf16 %v115, %v115
  %v244 = vpack.c.bf16 %v116, %v116
  %v245 = vpack.c.bf16 %v117, %v117
  %v246 = vpack.c.bf16 %v118, %v118
  %v247 = vpack.c.bf16 %v119, %v119
  %v248 = vpack.c.bf16 %v120, %v120
  %v249 = vpack.c.bf16 %v121, %v121
  %v250 = vpack.c.bf16 %v122, %v122
  %v251 = vpack.c.bf16 %v123, %v123
  %v252 = vpack.c.bf16 %v124, %v124
  %v253 = vpack.c.bf16 %v125, %v125
  %v254 = vpack.c.bf16 %v126, %v126
  %v255 = vpack.c.bf16 %v127, %v127
  %v256 = vpack.c.bf16 %v128, %v128
  %v257 = vpack.c.bf16 %v129, %v129
  %v258 = vpack.c.bf16 %v130, %v130
  %v259 = vpack.c.bf16 %v131, %v131
  %v260 = vpack.c.bf16 %v132, %v132
  %v261 = vpack.c.bf16 %v133, %v133
  %v262 = vpack.c.bf16 %v134, %v134
  %v263 = vpack.c.bf16 %v135, %v135
  %v264 = vpack.c.bf16 %v136, %v136
  %v265 = vpack.c.bf16 %v137, %v137
  %v266 = vpack.c.bf16 %v138, %v138
  %v267 = vpack.c.bf16 %v139, %v139
  %v268 = vpack.c.bf16 %v140, %v140
  %v269 = vpack.c.bf16 %v141, %v141
  %v270 = vpack.c.bf16 %v142, %v142
  %v271 = vpack.c.bf16 %v143, %v143
  %v272 = vpack.c.bf16 %v144, %v144
  %v273 = vpack.c.bf16 %v145, %v145
  %v274 = vpack.c.bf16 %v146, %v146
  %v275 = vpack.c.bf16 %v147, %v147
  %v276 = vpack.c.bf16 %v148, %v148
  %v277 = vpack.c.bf16 %v149, %v149
  %v278 = vpack.c.bf16 %v150, %v150
  %v279 = vpack.c.bf16 %v151, %v151
  %v280 = vpack.c.bf16 %v152, %v152
  %v281 = vpack.c.bf16 %v153, %v153
  %v282 = vpack.c.bf16 %v154, %v154
  %v283 = vpack.c.bf16 %v155, %v155
  %v284 = vpack.c.bf16 %v156, %v156
  %v285 = vpack.c.bf16 %v157, %v157
  %v286 = vpack.c.bf16 %v158, %v158
  %v287 = vpack.c.bf16 %v159, %v159
  %v288 = vpack.c.bf16 %v160, %v160
  %v289 = vpack.c.bf16 %v161, %v161
  %v290 = vpack.c.bf16 %v162, %v162
  %v291 = vpack.c.bf16 %v163, %v163
  %v292 = vpack.c.bf16 %v164, %v164
  %v293 = vpack.c.bf16 %v165, %v165
  %v294 = vpack.c.bf16 %v166, %v166
  %v295 = vpack.c.bf16 %v167, %v167
  %v296 = vpack.c.bf16 %v168, %v168
  %v297 = vpack.c.bf16 %v169, %v169
  %v298 = vpack.c.bf16 %v170, %v170
  %v299 = vpack.c.bf16 %v171, %v171
  %v300 = vpack.c.bf16 %v172, %v172
  %v301 = vpack.c.bf16 %v173, %v173
  %v302 = vpack.c.bf16 %v174, %v174
  %v303 = vpack.c.bf16 %v175, %v175
  %v304 = vpack.c.bf16 %v176, %v176
  %v305 = vpack.c.bf16 %v177, %v177
  %v306 = vpack.c.bf16 %v178, %v178
  %v307 = vpack.c.bf16 %v179, %v179
  %v308 = vpack.c.bf16 %v180, %v180
  %v309 = vpack.c.bf16 %v181, %v181
  %v310 = vpack.c.bf16 %v182, %v182
  %v311 = vpack.c.bf16 %v183, %v183
  %v312 = vpack.c.bf16 %v184, %v184
  %v313 = vpack.c.bf16 %v185, %v185
  %v314 = vpack.c.bf16 %v186, %v186
  %v315 = vpack.c.bf16 %v187, %v187
  %v316 = vpack.c.bf16 %v188, %v188
  %v317 = vpack.c.bf16 %v189, %v189
  %v318 = vpack.c.bf16 %v190, %v190
  %v319 = vpack.c.bf16 %v191, %v191
  %v320 = vpack.c.bf16 %v192, %v192
  %v321 = vpack.c.bf16 %v193, %v193
  %v322 = vpack.c.bf16 %v194, %v194
  %v323 = vpack.c.bf16 %v195, %v195
  %v324 = vpack.c.bf16 %v196, %v196
  %v325 = vpack.c.bf16 %v197, %v197
  %v326 = vunpack.c.l.bf16 %v198
  %v327 = vunpack.c.l.bf16 %v199
  %v328 = vunpack.c.l.bf16 %v200
  %v329 = vunpack.c.l.bf16 %v201
  %v330 = vunpack.c.l.bf16 %v202
  %v331 = vunpack.c.l.bf16 %v203
  %v332 = vunpack.c.l.bf16 %v204
  %v333 = vunpack.c.l.bf16 %v205
  %v334 = vunpack.c.l.bf16 %v206
  %v335 = vunpack.c.l.bf16 %v207
  %v336 = vunpack.c.l.bf16 %v208
  %v337 = vunpack.c.l.bf16 %v209
  %v338 = vunpack.c.l.bf16 %v210
  %v339 = vunpack.c.l.bf16 %v211
  %v340 = vunpack.c.l.bf16 %v212
  %v341 = vunpack.c.l.bf16 %v213
  %v342 = vunpack.c.l.bf16 %v214
  %v343 = vunpack.c.l.bf16 %v215
  %v344 = vunpack.c.l.bf16 %v216
  %v345 = vunpack.c.l.bf16 %v217
  %v346 = vunpack.c.l.bf16 %v218
  %v347 = vunpack.c.l.bf16 %v219
  %v348 = vunpack.c.l.bf16 %v220
  %v349 = vunpack.c.l.bf16 %v221
  %v350 = vunpack.c.l.bf16 %v222
  %v351 = vunpack.c.l.bf16 %v223
  %v352 = vunpack.c.l.bf16 %v224
  %v353 = vunpack.c.l.bf16 %v225
  %v354 = vunpack.c.l.bf16 %v226
  %v355 = vunpack.c.l.bf16 %v227
  %v356 = vunpack.c.l.bf16 %v228
  %v357 = vunpack.c.l.bf16 %v229
  %v358 = vunpack.c.l.bf16 %v230
  %v359 = vunpack.c.l.bf16 %v231
  %v360 = vunpack.c.l.bf16 %v232
  %v361 = vunpack.c.l.bf16 %v233
  %v362 = vunpack.c.l.bf16 %v234
  %v363 = vunpack.c.l.bf16 %v235
  %v364 = vunpack.c.l.bf16 %v236
  %v365 = vunpack.c.l.bf16 %v237
  %v366 = vunpack.c.l.bf16 %v238
  %v367 = vunpack.c.l.bf16 %v239
  %v368 = vunpack.c.l.bf16 %v240
  %v369 = vunpack.c.l.bf16 %v241
  %v370 = vunpack.c.l.bf16 %v242
  %v371 = vunpack.c.l.bf16 %v243
  %v372 = vunpack.c.l.bf16 %v244
  %v373 = vunpack.c.l.bf16 %v245
  %v374 = vunpack.c.l.bf16 %v246
  %v375 = vunpack.c.l.bf16 %v247
  %v376 = vunpack.c.l.bf16 %v248
  %v377 = vunpack.c.l.bf16 %v249
  %v378 = vunpack.c.l.bf16 %v250
  %v379 = vunpack.c.l.bf16 %v251
  %v380 = vunpack.c.l.bf16 %v252
  %v381 = vunpack.c.l.bf16 %v253
  %v382 = vunpack.c.l.bf16 %v254
  %v383 = vunpack.c.l.bf16 %v255
  %v384 = vunpack.c.l.bf16 %v256
  %v385 = vunpack.c.l.bf16 %v257
  %v386 = vunpack.c.l.bf16 %v258
  %v387 = vunpack.c.l.bf16 %v259
  %v388 = vunpack.c.l.bf16 %v260
  %v389 = vunpack.c.l.bf16 %v261
  %v390 = vunpack.c.l.bf16 %v262
  %v391 = vunpack.c.l.bf16 %v263
  %v392 = vunpack.c.l.bf16 %v264
  %v393 = vunpack.c.l.bf16 %v265
  %v394 = vunpack.c.l.bf16 %v266
  %v395 = vunpack.c.l.bf16 %v267
  %v396 = vunpack.c.l.bf16 %v268
  %v397 = vunpack.c.l.bf16 %v269
  %v398 = vunpack.c.l.bf16 %v270
  %v399 = vunpack.c.l.bf16 %v271
  %v400 = vunpack.c.l.bf16 %v272
  %v401 = vunpack.c.l.bf16 %v273
  %v402 = vunpack.c.l.bf16 %v274
  %v403 = vunpack.c.l.bf16 %v275
  %v404 = vunpack.c.l.bf16 %v276
  %v405 = vunpack.c.l.bf16 %v277
  %v406 = vunpack.c.l.bf16 %v278
  %v407 = vunpack.c.l.bf16 %v279
  %v408 = vunpack.c.l.bf16 %v280
  %v409 = vunpack.c.l.bf16 %v281
  %v410 = vunpack.c.l.bf16 %v282
  %v411 = vunpack.c.l.bf16 %v283
  %v412 = vunpack.c.l.bf16 %v284
  %v413 = vunpack.c.l.bf16 %v285
  %v414 = vunpack.c.l.bf16 %v286
  %v415 = vunpack.c.l.bf16 %v287
  %v416 = vunpack.c.l.bf16 %v288
  %v417 = vunpack.c.l.bf16 %v289
  %v418 = vunpack.c.l.bf16 %v290
  %v419 = vunpack.c.l.bf16 %v291
  %v420 = vunpack.c.l.bf16 %v292
  %v421 = vunpack.c.l.bf16 %v293
  %v422 = vunpack.c.l.bf16 %v294
  %v423 = vunpack.c.l.bf16 %v295
  %v424 = vunpack.c.l.bf16 %v296
  %v425 = vunpack.c.l.bf16 %v297
  %v426 = vunpack.c.l.bf16 %v298
  %v427 = vunpack.c.l.bf16 %v299
  %v428 = vunpack.c.l.bf16 %v300
  %v429 = vunpack.c.l.bf16 %v301
  %v430 = vunpack.c.l.bf16 %v302
  %v431 = vunpack.c.l.bf16 %v303
  %v432 = vunpack.c.l.bf16 %v304
  %v433 = vunpack.c.l.bf16 %v305
  %v434 = vunpack.c.l.bf16 %v306
  %v435 = vunpack.c.l.bf16 %v307
  %v436 = vunpack.c.l.bf16 %v308
  %v437 = vunpack.c.l.bf16 %v309
  %v438 = vunpack.c.l.bf16 %v310
  %v439 = vunpack.c.l.bf16 %v311
  %v440 = vunpack.c.l.bf16 %v312
  %v441 = vunpack.c.l.bf16 %v313
  %v442 = vunpack.c.l.bf16 %v314
  %v443 = vunpack.c.l.bf16 %v315
  %v444 = vunpack.c.l.bf16 %v316
  %v445 = vunpack.c.l.bf16 %v317
  %v446 = vunpack.c.l.bf16 %v318
  %v447 = vunpack.c.l.bf16 %v319
  %v448 = vunpack.c.l.bf16 %v320
  %v449 = vunpack.c.l.bf16 %v321
  %v450 = vunpack.c.l.bf16 %v322
  %v451 = vunpack.c.l.bf16 %v323
  %v452 = vunpack.c.l.bf16 %v324
  %v453 = vunpack.c.l.bf16 %v325
  %v454 = vsub.f32 %v70, %v326
  %v455 = vsub.f32 %v71, %v327
  %v456 = vsub.f32 %v72, %v328
  %v457 = vsub.f32 %v73, %v329
  %v458 = vsub.f32 %v74, %v330
  %v459 = vsub.f32 %v75, %v331
  %v460 = vsub.f32 %v76, %v332
  %v461 = vsub.f32 %v77, %v333
  %v462 = vsub.f32 %v78, %v334
  %v463 = vsub.f32 %v79, %v335
  %v464 = vsub.f32 %v80, %v336
  %v465 = vsub.f32 %v81, %v337
  %v466 = vsub.f32 %v82, %v338
  %v467 = vsub.f32 %v83, %v339
  %v468 = vsub.f32 %v84, %v340
  %v469 = vsub.f32 %v85, %v341
  %v470 = vsub.f32 %v86, %v342
  %v471 = vsub.f32 %v87, %v343
  %v472 = vsub.f32 %v88, %v344
  %v473 = vsub.f32 %v89, %v345
  %v474 = vsub.f32 %v90, %v346
  %v475 = vsub.f32 %v91, %v347
  %v476 = vsub.f32 %v92, %v348
  %v477 = vsub.f32 %v93, %v349
  %v478 = vsub.f32 %v94, %v350
  %v479 = vsub.f32 %v95, %v351
  %v480 = vsub.f32 %v96, %v352
  %v481 = vsub.f32 %v97, %v353
  %v482 = vsub.f32 %v98, %v354
  %v483 = vsub.f32 %v99, %v355
  %v484 = vsub.f32 %v100, %v356
  %v485 = vsub.f32 %v101, %v357
  %v486 = vsub.f32 %v102, %v358
  %v487 = vsub.f32 %v103, %v359
  %v488 = vsub.f32 %v104, %v360
  %v489 = vsub.f32 %v105, %v361
  %v490 = vsub.f32 %v106, %v362
  %v491 = vsub.f32 %v107, %v363
  %v492 = vsub.f32 %v108, %v364
  %v493 = vsub.f32 %v109, %v365
  %v494 = vsub.f32 %v110, %v366
  %v495 = vsub.f32 %v111, %v367
  %v496 = vsub.f32 %v112, %v368
  %v497 = vsub.f32 %v113, %v369
  %v498 = vsub.f32 %v114, %v370
  %v499 = vsub.f32 %v115, %v371
  %v500 = vsub.f32 %v116, %v372
  %v501 = vsub.f32 %v117, %v373
  %v502 = vsub.f32 %v118, %v374
  %v503 = vsub.f32 %v119, %v375
  %v504 = vsub.f32 %v120, %v376
  %v505 = vsub.f32 %v121, %v377
  %v506 = vsub.f32 %v122, %v378
  %v507 = vsub.f32 %v123, %v379
  %v508 = vsub.f32 %v124, %v380
  %v509 = vsub.f32 %v125, %v381
  %v510 = vsub.f32 %v126, %v382
  %v511 = vsub.f32 %v127, %v383
  %v512 = vsub.f32 %v128, %v384
  %v513 = vsub.f32 %v129, %v385
  %v514 = vsub.f32 %v130, %v386
  %v515 = vsub.f32 %v131, %v387
  %v516 = vsub.f32 %v132, %v388
  %v517 = vsub.f32 %v133, %v389
  %v518 = vsub.f32 %v134, %v390
  %v519 = vsub.f32 %v135, %v391
  %v520 = vsub.f32 %v136, %v392
  %v521 = vsub.f32 %v137, %v393
  %v522 = vsub.f32 %v138, %v394
  %v523 = vsub.f32 %v139, %v395
  %v524 = vsub.f32 %v140, %v396
  %v525 = vsub.f32 %v141, %v397
  %v526 = vsub.f32 %v142, %v398
  %v527 = vsub.f32 %v143, %v399
  %v528 = vsub.f32 %v144, %v400
  %v529 = vsub.f32 %v145, %v401
  %v530 = vsub.f32 %v146, %v402
  %v531 = vsub.f32 %v147, %v403
  %v532 = vsub.f32 %v148, %v404
  %v533 = vsub.f32 %v149, %v405
  %v534 = vsub.f32 %v150, %v406
  %v535 = vsub.f32 %v151, %v407
  %v536 = vsub.f32 %v152, %v408
  %v537 = vsub.f32 %v153, %v409
  %v538 = vsub.f32 %v154, %v410
  %v539 = vsub.f32 %v155, %v411
  %v540 = vsub.f32 %v156, %v412
  %v541 = vsub.f32 %v157, %v413
  %v542 = vsub.f32 %v158, %v414
  %v543 = vsub.f32 %v159, %v415
  %v544 = vsub.f32 %v160, %v416
  %v545 = vsub.f32 %v161, %v417
  %v546 = vsub.f32 %v162, %v418
  %v547 = vsub.f32 %v163, %v419
  %v548 = vsub.f32 %v164, %v420
  %v549 = vsub.f32 %v165, %v421
  %v550 = vsub.f32 %v166, %v422
  %v551 = vsub.f32 %v167, %v423
  %v552 = vsub.f32 %v168, %v424
  %v553 = vsub.f32 %v169, %v425
  %v554 = vsub.f32 %v170, %v426
  %v555 = vsub.f32 %v171, %v427
  %v556 = vsub.f32 %v172, %v428
  %v557 = vsub.f32 %v173, %v429
  %v558 = vsub.f32 %v174, %v430
  %v559 = vsub.f32 %v175, %v431
  %v560 = vsub.f32 %v176, %v432
  %v561 = vsub.f32 %v177, %v433
  %v562 = vsub.f32 %v178, %v434
  %v563 = vsub.f32 %v179, %v435
  %v564 = vsub.f32 %v180, %v436
  %v565 = vsub.f32 %v181, %v437
  %v566 = vsub.f32 %v182, %v438
  %v567 = vsub.f32 %v183, %v439
  %v568 = vsub.f32 %v184, %v440
  %v569 = vsub.f32 %v185, %v441
  %v570 = vsub.f32 %v186, %v442
  %v571 = vsub.f32 %v187, %v443
  %v572 = vsub.f32 %v188, %v444
  %v573 = vsub.f32 %v189, %v445
  %v574 = vsub.f32 %v190, %v446
  %v575 = vsub.f32 %v191, %v447
  %v576 = vsub.f32 %v192, %v448
  %v577 = vsub.f32 %v193, %v449
  %v578 = vsub.f32 %v194, %v450
  %v579 = vsub.f32 %v195, %v451
  %v580 = vsub.f32 %v196, %v452
  %v581 = vsub.f32 %v197, %v453
  %v582 = vpack.c.bf16 %v454, %v454
  %v583 = vpack.c.bf16 %v455, %v455
  %v584 = vpack.c.bf16 %v456, %v456
  %v585 = vpack.c.bf16 %v457, %v457
  %v586 = vpack.c.bf16 %v458, %v458
  %v587 = vpack.c.bf16 %v459, %v459
  %v588 = vpack.c.bf16 %v460, %v460
  %v589 = vpack.c.bf16 %v461, %v461
  %v590 = vpack.c.bf16 %v462, %v462
  %v591 = vpack.c.bf16 %v463, %v463
  %v592 = vpack.c.bf16 %v464, %v464
  %v593 = vpack.c.bf16 %v465, %v465
  %v594 = vpack.c.bf16 %v466, %v466
  %v595 = vpack.c.bf16 %v467, %v467
  %v596 = vpack.c.bf16 %v468, %v468
  %v597 = vpack.c.bf16 %v469, %v469
  %v598 = vpack.c.bf16 %v470, %v470
  %v599 = vpack.c.bf16 %v471, %v471
  %v600 = vpack.c.bf16 %v472, %v472
  %v601 = vpack.c.bf16 %v473, %v473
  %v602 = vpack.c.bf16 %v474, %v474
  %v603 = vpack.c.bf16 %v475, %v475
  %v604 = vpack.c.bf16 %v476, %v476
  %v605 = vpack.c.bf16 %v477, %v477
  %v606 = vpack.c.bf16 %v478, %v478
  %v607 = vpack.c.bf16 %v479, %v479
  %v608 = vpack.c.bf16 %v480, %v480
  %v609 = vpack.c.bf16 %v481, %v481
  %v610 = vpack.c.bf16 %v482, %v482
  %v611 = vpack.c.bf16 %v483, %v483
  %v612 = vpack.c.bf16 %v484, %v484
  %v613 = vpack.c.bf16 %v485, %v485
  %v614 = vpack.c.bf16 %v486, %v486
  %v615 = vpack.c.bf16 %v487, %v487
  %v616 = vpack.c.bf16 %v488, %v488
  %v617 = vpack.c.bf16 %v489, %v489
  %v618 = vpack.c.bf16 %v490, %v490
  %v619 = vpack.c.bf16 %v491, %v491
  %v620 = vpack.c.bf16 %v492, %v492
  %v621 = vpack.c.bf16 %v493, %v493
  %v622 = vpack.c.bf16 %v494, %v494
  %v623 = vpack.c.bf16 %v495, %v495
  %v624 = vpack.c.bf16 %v496, %v496
  %v625 = vpack.c.bf16 %v497, %v497
  %v626 = vpack.c.bf16 %v498, %v498
  %v627 = vpack.c.bf16 %v499, %v499
  %v628 = vpack.c.bf16 %v500, %v500
  %v629 = vpack.c.bf16 %v501, %v501
  %v630 = vpack.c.bf16 %v502, %v502
  %v631 = vpack.c.bf16 %v503, %v503
  %v632 = vpack.c.bf16 %v504, %v504
  %v633 = vpack.c.bf16 %v505, %v505
  %v634 = vpack.c.bf16 %v506, %v506
  %v635 = vpack.c.bf16 %v507, %v507
  %v636 = vpack.c.bf16 %v508, %v508
  %v637 = vpack.c.bf16 %v509, %v509
  %v638 = vpack.c.bf16 %v510, %v510
  %v639 = vpack.c.bf16 %v511, %v511
  %v640 = vpack.c.bf16 %v512, %v512
  %v641 = vpack.c.bf16 %v513, %v513
  %v642 = vpack.c.bf16 %v514, %v514
  %v643 = vpack.c.bf16 %v515, %v515
  %v644 = vpack.c.bf16 %v516, %v516
  %v645 = vpack.c.bf16 %v517, %v517
  %v646 = vpack.c.bf16 %v518, %v518
  %v647 = vpack.c.bf16 %v519, %v519
  %v648 = vpack.c.bf16 %v520, %v520
  %v649 = vpack.c.bf16 %v521, %v521
  %v650 = vpack.c.bf16 %v522, %v522
  %v651 = vpack.c.bf16 %v523, %v523
  %v652 = vpack.c.bf16 %v524, %v524
  %v653 = vpack.c.bf16 %v525, %v525
  %v654 = vpack.c.bf16 %v526, %v526
  %v655 = vpack.c.bf16 %v527, %v527
  %v656 = vpack.c.bf16 %v528, %v528
  %v657 = vpack.c.bf16 %v529, %v529
  %v658 = vpack.c.bf16 %v530, %v530
  %v659 = vpack.c.bf16 %v531, %v531
  %v660 = vpack.c.bf16 %v532, %v532
  %v661 = vpack.c.bf16 %v533, %v533
  %v662 = vpack.c.bf16 %v534, %v534
  %v663 = vpack.c.bf16 %v535, %v535
  %v664 = vpack.c.bf16 %v536, %v536
  %v665 = vpack.c.bf16 %v537, %v537
  %v666 = vpack.c.bf16 %v538, %v538
  %v667 = vpack.c.bf16 %v539, %v539
  %v668 = vpack.c.bf16 %v540, %v540
  %v669 = vpack.c.bf16 %v541, %v541
  %v670 = vpack.c.bf16 %v542, %v542
  %v671 = vpack.c.bf16 %v543, %v543
  %v672 = vpack.c.bf16 %v544, %v544
  %v673 = vpack.c.bf16 %v545, %v545
  %v674 = vpack.c.bf16 %v546, %v546
  %v675 = vpack.c.bf16 %v547, %v547
  %v676 = vpack.c.bf16 %v548, %v548
  %v677 = vpack.c.bf16 %v549, %v549
  %v678 = vpack.c.bf16 %v550, %v550
  %v679 = vpack.c.bf16 %v551, %v551
  %v680 = vpack.c.bf16 %v552, %v552
  %v681 = vpack.c.bf16 %v553, %v553
  %v682 = vpack.c.bf16 %v554, %v554
  %v683 = vpack.c.bf16 %v555, %v555
  %v684 = vpack.c.bf16 %v556, %v556
  %v685 = vpack.c.bf16 %v557, %v557
  %v686 = vpack.c.bf16 %v558, %v558
  %v687 = vpack.c.bf16 %v559, %v559
  %v688 = vpack.c.bf16 %v560, %v560
  %v689 = vpack.c.bf16 %v561, %v561
  %v690 = vpack.c.bf16 %v562, %v562
  %v691 = vpack.c.bf16 %v563, %v563
  %v692 = vpack.c.bf16 %v564, %v564
  %v693 = vpack.c.bf16 %v565, %v565
  %v694 = vpack.c.bf16 %v566, %v566
  %v695 = vpack.c.bf16 %v567, %v567
  %v696 = vpack.c.bf16 %v568, %v568
  %v697 = vpack.c.bf16 %v569, %v569
  %v698 = vpack.c.bf16 %v570, %v570
  %v699 = vpack.c.bf16 %v571, %v571
  %v700 = vpack.c.bf16 %v572, %v572
  %v701 = vpack.c.bf16 %v573, %v573
  %v702 = vpack.c.bf16 %v574, %v574
  %v703 = vpack.c.bf16 %v575, %v575
  %v704 = vpack.c.bf16 %v576, %v576
  %v705 = vpack.c.bf16 %v577, %v577
  %v706 = vpack.c.bf16 %v578, %v578
  %v707 = vpack.c.bf16 %v579, %v579
  %v708 = vpack.c.bf16 %v580, %v580
  %v709 = vpack.c.bf16 %v581, %v581
  %v710 = vunpack.c.l.bf16 %v582
  %v711 = vunpack.c.l.bf16 %v583
  %v712 = vunpack.c.l.bf16 %v584
  %v713 = vunpack.c.l.bf16 %v585
  %v714 = vunpack.c.l.bf16 %v586
  %v715 = vunpack.c.l.bf16 %v587
  %v716 = vunpack.c.l.bf16 %v588
  %v717 = vunpack.c.l.bf16 %v589
  %v718 = vunpack.c.l.bf16 %v590
  %v719 = vunpack.c.l.bf16 %v591
  %v720 = vunpack.c.l.bf16 %v592
  %v721 = vunpack.c.l.bf16 %v593
  %v722 = vunpack.c.l.bf16 %v594
  %v723 = vunpack.c.l.bf16 %v595
  %v724 = vunpack.c.l.bf16 %v596
  %v725 = vunpack.c.l.bf16 %v597
  %v726 = vunpack.c.l.bf16 %v598
  %v727 = vunpack.c.l.bf16 %v599
  %v728 = vunpack.c.l.bf16 %v600
  %v729 = vunpack.c.l.bf16 %v601
  %v730 = vunpack.c.l.bf16 %v602
  %v731 = vunpack.c.l.bf16 %v603
  %v732 = vunpack.c.l.bf16 %v604
  %v733 = vunpack.c.l.bf16 %v605
  %v734 = vunpack.c.l.bf16 %v606
  %v735 = vunpack.c.l.bf16 %v607
  %v736 = vunpack.c.l.bf16 %v608
  %v737 = vunpack.c.l.bf16 %v609
  %v738 = vunpack.c.l.bf16 %v610
  %v739 = vunpack.c.l.bf16 %v611
  %v740 = vunpack.c.l.bf16 %v612
  %v741 = vunpack.c.l.bf16 %v613
  %v742 = vunpack.c.l.bf16 %v614
  %v743 = vunpack.c.l.bf16 %v615
  %v744 = vunpack.c.l.bf16 %v616
  %v745 = vunpack.c.l.bf16 %v617
  %v746 = vunpack.c.l.bf16 %v618
  %v747 = vunpack.c.l.bf16 %v619
  %v748 = vunpack.c.l.bf16 %v620
  %v749 = vunpack.c.l.bf16 %v621
  %v750 = vunpack.c.l.bf16 %v622
  %v751 = vunpack.c.l.bf16 %v623
  %v752 = vunpack.c.l.bf16 %v624
  %v753 = vunpack.c.l.bf16 %v625
  %v754 = vunpack.c.l.bf16 %v626
  %v755 = vunpack.c.l.bf16 %v627
  %v756 = vunpack.c.l.bf16 %v628
  %v757 = vunpack.c.l.bf16 %v629
  %v758 = vunpack.c.l.bf16 %v630
  %v759 = vunpack.c.l.bf16 %v631
  %v760 = vunpack.c.l.bf16 %v632
  %v761 = vunpack.c.l.bf16 %v633
  %v762 = vunpack.c.l.bf16 %v634
  %v763 = vunpack.c.l.bf16 %v635
  %v764 = vunpack.c.l.bf16 %v636
  %v765 = vunpack.c.l.bf16 %v637
  %v766 = vunpack.c.l.bf16 %v638
  %v767 = vunpack.c.l.bf16 %v639
  %v768 = vunpack.c.l.bf16 %v640
  %v769 = vunpack.c.l.bf16 %v641
  %v770 = vunpack.c.l.bf16 %v642
  %v771 = vunpack.c.l.bf16 %v643
  %v772 = vunpack.c.l.bf16 %v644
  %v773 = vunpack.c.l.bf16 %v645
  %v774 = vunpack.c.l.bf16 %v646
  %v775 = vunpack.c.l.bf16 %v647
  %v776 = vunpack.c.l.bf16 %v648
  %v777 = vunpack.c.l.bf16 %v649
  %v778 = vunpack.c.l.bf16 %v650
  %v779 = vunpack.c.l.bf16 %v651
  %v780 = vunpack.c.l.bf16 %v652
  %v781 = vunpack.c.l.bf16 %v653
  %v782 = vunpack.c.l.bf16 %v654
  %v783 = vunpack.c.l.bf16 %v655
  %v784 = vunpack.c.l.bf16 %v656
  %v785 = vunpack.c.l.bf16 %v657
  %v786 = vunpack.c.l.bf16 %v658
  %v787 = vunpack.c.l.bf16 %v659
  %v788 = vunpack.c.l.bf16 %v660
  %v789 = vunpack.c.l.bf16 %v661
  %v790 = vunpack.c.l.bf16 %v662
  %v791 = vunpack.c.l.bf16 %v663
  %v792 = vunpack.c.l.bf16 %v664
  %v793 = vunpack.c.l.bf16 %v665
  %v794 = vunpack.c.l.bf16 %v666
  %v795 = vunpack.c.l.bf16 %v667
  %v796 = vunpack.c.l.bf16 %v668
  %v797 = vunpack.c.l.bf16 %v669
  %v798 = vunpack.c.l.bf16 %v670
  %v799 = vunpack.c.l.bf16 %v671
  %v800 = vunpack.c.l.bf16 %v672
  %v801 = vunpack.c.l.bf16 %v673
  %v802 = vunpack.c.l.bf16 %v674
  %v803 = vunpack.c.l.bf16 %v675
  %v804 = vunpack.c.l.bf16 %v676
  %v805 = vunpack.c.l.bf16 %v677
  %v806 = vunpack.c.l.bf16 %v678
  %v807 = vunpack.c.l.bf16 %v679
  %v808 = vunpack.c.l.bf16 %v680
  %v809 = vunpack.c.l.bf16 %v681
  %v810 = vunpack.c.l.bf16 %v682
  %v811 = vunpack.c.l.bf16 %v683
  %v812 = vunpack.c.l.bf16 %v684
  %v813 = vunpack.c.l.bf16 %v685
  %v814 = vunpack.c.l.bf16 %v686
  %v815 = vunpack.c.l.bf16 %v687
  %v816 = vunpack.c.l.bf16 %v688
  %v817 = vunpack.c.l.bf16 %v689
  %v818 = vunpack.c.l.bf16 %v690
  %v819 = vunpack.c.l.bf16 %v691
  %v820 = vunpack.c.l.bf16 %v692
  %v821 = vunpack.c.l.bf16 %v693
  %v822 = vunpack.c.l.bf16 %v694
  %v823 = vunpack.c.l.bf16 %v695
  %v824 = vunpack.c.l.bf16 %v696
  %v825 = vunpack.c.l.bf16 %v697
  %v826 = vunpack.c.l.bf16 %v698
  %v827 = vunpack.c.l.bf16 %v699
  %v828 = vunpack.c.l.bf16 %v700
  %v829 = vunpack.c.l.bf16 %v701
  %v830 = vunpack.c.l.bf16 %v702
  %v831 = vunpack.c.l.bf16 %v703
  %v832 = vunpack.c.l.bf16 %v704
  %v833 = vunpack.c.l.bf16 %v705
  %v834 = vunpack.c.l.bf16 %v706
  %v835 = vunpack.c.l.bf16 %v707
  %v836 = vunpack.c.l.bf16 %v708
  %v837 = vunpack.c.l.bf16 %v709
  %v838 = vsub.f32 %v454, %v710
  %v839 = vsub.f32 %v455, %v711
  %v840 = vsub.f32 %v456, %v712
  %v841 = vsub.f32 %v457, %v713
  %v842 = vsub.f32 %v458, %v714
  %v843 = vsub.f32 %v459, %v715
  %v844 = vsub.f32 %v460, %v716
  %v845 = vsub.f32 %v461, %v717
  %v846 = vsub.f32 %v462, %v718
  %v847 = vsub.f32 %v463, %v719
  %v848 = vsub.f32 %v464, %v720
  %v849 = vsub.f32 %v465, %v721
  %v850 = vsub.f32 %v466, %v722
  %v851 = vsub.f32 %v467, %v723
  %v852 = vsub.f32 %v468, %v724
  %v853 = vsub.f32 %v469, %v725
  %v854 = vsub.f32 %v470, %v726
  %v855 = vsub.f32 %v471, %v727
  %v856 = vsub.f32 %v472, %v728
  %v857 = vsub.f32 %v473, %v729
  %v858 = vsub.f32 %v474, %v730
  %v859 = vsub.f32 %v475, %v731
  %v860 = vsub.f32 %v476, %v732
  %v861 = vsub.f32 %v477, %v733
  %v862 = vsub.f32 %v478, %v734
  %v863 = vsub.f32 %v479, %v735
  %v864 = vsub.f32 %v480, %v736
  %v865 = vsub.f32 %v481, %v737
  %v866 = vsub.f32 %v482, %v738
  %v867 = vsub.f32 %v483, %v739
  %v868 = vsub.f32 %v484, %v740
  %v869 = vsub.f32 %v485, %v741
  %v870 = vsub.f32 %v486, %v742
  %v871 = vsub.f32 %v487, %v743
  %v872 = vsub.f32 %v488, %v744
  %v873 = vsub.f32 %v489, %v745
  %v874 = vsub.f32 %v490, %v746
  %v875 = vsub.f32 %v491, %v747
  %v876 = vsub.f32 %v492, %v748
  %v877 = vsub.f32 %v493, %v749
  %v878 = vsub.f32 %v494, %v750
  %v879 = vsub.f32 %v495, %v751
  %v880 = vsub.f32 %v496, %v752
  %v881 = vsub.f32 %v497, %v753
  %v882 = vsub.f32 %v498, %v754
  %v883 = vsub.f32 %v499, %v755
  %v884 = vsub.f32 %v500, %v756
  %v885 = vsub.f32 %v501, %v757
  %v886 = vsub.f32 %v502, %v758
  %v887 = vsub.f32 %v503, %v759
  %v888 = vsub.f32 %v504, %v760
  %v889 = vsub.f32 %v505, %v761
  %v890 = vsub.f32 %v506, %v762
  %v891 = vsub.f32 %v507, %v763
  %v892 = vsub.f32 %v508, %v764
  %v893 = vsub.f32 %v509, %v765
  %v894 = vsub.f32 %v510, %v766
  %v895 = vsub.f32 %v511, %v767
  %v896 = vsub.f32 %v512, %v768
  %v897 = vsub.f32 %v513, %v769
  %v898 = vsub.f32 %v514, %v770
  %v899 = vsub.f32 %v515, %v771
  %v900 = vsub.f32 %v516, %v772
  %v901 = vsub.f32 %v517, %v773
  %v902 = vsub.f32 %v518, %v774
  %v903 = vsub.f32 %v519, %v775
  %v904 = vsub.f32 %v520, %v776
  %v905 = vsub.f32 %v521, %v777
  %v906 = vsub.f32 %v522, %v778
  %v907 = vsub.f32 %v523, %v779
  %v908 = vsub.f32 %v524, %v780
  %v909 = vsub.f32 %v525, %v781
  %v910 = vsub.f32 %v526, %v782
  %v911 = vsub.f32 %v527, %v783
  %v912 = vsub.f32 %v528, %v784
  %v913 = vsub.f32 %v529, %v785
  %v914 = vsub.f32 %v530, %v786
  %v915 = vsub.f32 %v531, %v787
  %v916 = vsub.f32 %v532, %v788
  %v917 = vsub.f32 %v533, %v789
  %v918 = vsub.f32 %v534, %v790
  %v919 = vsub.f32 %v535, %v791
  %v920 = vsub.f32 %v536, %v792
  %v921 = vsub.f32 %v537, %v793
  %v922 = vsub.f32 %v538, %v794
  %v923 = vsub.f32 %v539, %v795
  %v924 = vsub.f32 %v540, %v796
  %v925 = vsub.f32 %v541, %v797
  %v926 = vsub.f32 %v542, %v798
  %v927 = vsub.f32 %v543, %v799
  %v928 = vsub.f32 %v544, %v800
  %v929 = vsub.f32 %v545, %v801
  %v930 = vsub.f32 %v546, %v802
  %v931 = vsub.f32 %v547, %v803
  %v932 = vsub.f32 %v548, %v804
  %v933 = vsub.f32 %v549, %v805
  %v934 = vsub.f32 %v550, %v806
  %v935 = vsub.f32 %v551, %v807
  %v936 = vsub.f32 %v552, %v808
  %v937 = vsub.f32 %v553, %v809
  %v938 = vsub.f32 %v554, %v810
  %v939 = vsub.f32 %v555, %v811
  %v940 = vsub.f32 %v556, %v812
  %v941 = vsub.f32 %v557, %v813
  %v942 = vsub.f32 %v558, %v814
  %v943 = vsub.f32 %v559, %v815
  %v944 = vsub.f32 %v560, %v816
  %v945 = vsub.f32 %v561, %v817
  %v946 = vsub.f32 %v562, %v818
  %v947 = vsub.f32 %v563, %v819
  %v948 = vsub.f32 %v564, %v820
  %v949 = vsub.f32 %v565, %v821
  %v950 = vsub.f32 %v566, %v822
  %v951 = vsub.f32 %v567, %v823
  %v952 = vsub.f32 %v568, %v824
  %v953 = vsub.f32 %v569, %v825
  %v954 = vsub.f32 %v570, %v826
  %v955 = vsub.f32 %v571, %v827
  %v956 = vsub.f32 %v572, %v828
  %v957 = vsub.f32 %v573, %v829
  %v958 = vsub.f32 %v574, %v830
  %v959 = vsub.f32 %v575, %v831
  %v960 = vsub.f32 %v576, %v832
  %v961 = vsub.f32 %v577, %v833
  %v962 = vsub.f32 %v578, %v834
  %v963 = vsub.f32 %v579, %v835
  %v964 = vsub.f32 %v580, %v836
  %v965 = vsub.f32 %v581, %v837
  %v966 = vpack.c.bf16 %v839, %v838
  %v967 = vpack.c.bf16 %v841, %v840
  %v968 = vpack.c.bf16 %v843, %v842
  %v969 = vpack.c.bf16 %v845, %v844
  %v970 = vpack.c.bf16 %v847, %v846
  %v971 = vpack.c.bf16 %v849, %v848
  %v972 = vpack.c.bf16 %v851, %v850
  %v973 = vpack.c.bf16 %v853, %v852
  %v974 = vpack.c.bf16 %v855, %v854
  %v975 = vpack.c.bf16 %v857, %v856
  %v976 = vpack.c.bf16 %v859, %v858
  %v977 = vpack.c.bf16 %v861, %v860
  %v978 = vpack.c.bf16 %v863, %v862
  %v979 = vpack.c.bf16 %v865, %v864
  %v980 = vpack.c.bf16 %v867, %v866
  %v981 = vpack.c.bf16 %v869, %v868
  %v982 = vpack.c.bf16 %v871, %v870
  %v983 = vpack.c.bf16 %v873, %v872
  %v984 = vpack.c.bf16 %v875, %v874
  %v985 = vpack.c.bf16 %v877, %v876
  %v986 = vpack.c.bf16 %v879, %v878
  %v987 = vpack.c.bf16 %v881, %v880
  %v988 = vpack.c.bf16 %v883, %v882
  %v989 = vpack.c.bf16 %v885, %v884
  %v990 = vpack.c.bf16 %v887, %v886
  %v991 = vpack.c.bf16 %v889, %v888
  %v992 = vpack.c.bf16 %v891, %v890
  %v993 = vpack.c.bf16 %v893, %v892
  %v994 = vpack.c.bf16 %v895, %v894
  %v995 = vpack.c.bf16 %v897, %v896
  %v996 = vpack.c.bf16 %v899, %v898
  %v997 = vpack.c.bf16 %v901, %v900
  %v998 = vpack.c.bf16 %v903, %v902
  %v999 = vpack.c.bf16 %v905, %v904
  %v1000 = vpack.c.bf16 %v907, %v906
  %v1001 = vpack.c.bf16 %v909, %v908
  %v1002 = vpack.c.bf16 %v911, %v910
  %v1003 = vpack.c.bf16 %v913, %v912
  %v1004 = vpack.c.bf16 %v915, %v914
  %v1005 = vpack.c.bf16 %v917, %v916
  %v1006 = vpack.c.bf16 %v919, %v918
  %v1007 = vpack.c.bf16 %v921, %v920
  %v1008 = vpack.c.bf16 %v923, %v922
  %v1009 = vpack.c.bf16 %v925, %v924
  %v1010 = vpack.c.bf16 %v927, %v926
  %v1011 = vpack.c.bf16 %v929, %v928
  %v1012 = vpack.c.bf16 %v931, %v930
  %v1013 = vpack.c.bf16 %v933, %v932
  %v1014 = vpack.c.bf16 %v935, %v934
  %v1015 = vpack.c.bf16 %v937, %v936
  %v1016 = vpack.c.bf16 %v939, %v938
  %v1017 = vpack.c.bf16 %v941, %v940
  %v1018 = vpack.c.bf16 %v943, %v942
  %v1019 = vpack.c.bf16 %v945, %v944
  %v1020 = vpack.c.bf16 %v947, %v946
  %v1021 = vpack.c.bf16 %v949, %v948
  %v1022 = vpack.c.bf16 %v951, %v950
  %v1023 = vpack.c.bf16 %v953, %v952
  %v1024 = vpack.c.bf16 %v955, %v954
  %v1025 = vpack.c.bf16 %v957, %v956
  %v1026 = vpack.c.bf16 %v959, %v958
  %v1027 = vpack.c.bf16 %v961, %v960
  %v1028 = vpack.c.bf16 %v963, %v962
  %v1029 = vpack.c.bf16 %v965, %v964
  %v1158 = vunpack.c.l.b16 %v582
  %v1159 = vunpack.c.l.b16 %v583
  %v1160 = vunpack.c.l.b16 %v584
  %v1161 = vunpack.c.l.b16 %v585
  %v1162 = vunpack.c.l.b16 %v586
  %v1163 = vunpack.c.l.b16 %v587
  %v1164 = vunpack.c.l.b16 %v588
  %v1165 = vunpack.c.l.b16 %v589
  %v1166 = vunpack.c.l.b16 %v590
  %v1167 = vunpack.c.l.b16 %v591
  %v1168 = vunpack.c.l.b16 %v592
  %v1169 = vunpack.c.l.b16 %v593
  %v1170 = vunpack.c.l.b16 %v594
  %v1171 = vunpack.c.l.b16 %v595
  %v1172 = vunpack.c.l.b16 %v596
  %v1173 = vunpack.c.l.b16 %v597
  %v1174 = vunpack.c.l.b16 %v598
  %v1175 = vunpack.c.l.b16 %v599
  %v1176 = vunpack.c.l.b16 %v600
  %v1177 = vunpack.c.l.b16 %v601
  %v1178 = vunpack.c.l.b16 %v602
  %v1179 = vunpack.c.l.b16 %v603
  %v1180 = vunpack.c.l.b16 %v604
  %v1181 = vunpack.c.l.b16 %v605
  %v1182 = vunpack.c.l.b16 %v606
  %v1183 = vunpack.c.l.b16 %v607
  %v1184 = vunpack.c.l.b16 %v608
  %v1185 = vunpack.c.l.b16 %v609
  %v1186 = vunpack.c.l.b16 %v610
  %v1187 = vunpack.c.l.b16 %v611
  %v1188 = vunpack.c.l.b16 %v612
  %v1189 = vunpack.c.l.b16 %v613
  %v1190 = vunpack.c.l.b16 %v614
  %v1191 = vunpack.c.l.b16 %v615
  %v1192 = vunpack.c.l.b16 %v616
  %v1193 = vunpack.c.l.b16 %v617
  %v1194 = vunpack.c.l.b16 %v618
  %v1195 = vunpack.c.l.b16 %v619
  %v1196 = vunpack.c.l.b16 %v620
  %v1197 = vunpack.c.l.b16 %v621
  %v1198 = vunpack.c.l.b16 %v622
  %v1199 = vunpack.c.l.b16 %v623
  %v1200 = vunpack.c.l.b16 %v624
  %v1201 = vunpack.c.l.b16 %v625
  %v1202 = vunpack.c.l.b16 %v626
  %v1203 = vunpack.c.l.b16 %v627
  %v1204 = vunpack.c.l.b16 %v628
  %v1205 = vunpack.c.l.b16 %v629
  %v1206 = vunpack.c.l.b16 %v630
  %v1207 = vunpack.c.l.b16 %v631
  %v1208 = vunpack.c.l.b16 %v632
  %v1209 = vunpack.c.l.b16 %v633
  %v1210 = vunpack.c.l.b16 %v634
  %v1211 = vunpack.c.l.b16 %v635
  %v1212 = vunpack.c.l.b16 %v636
  %v1213 = vunpack.c.l.b16 %v637
  %v1214 = vunpack.c.l.b16 %v638
  %v1215 = vunpack.c.l.b16 %v639
  %v1216 = vunpack.c.l.b16 %v640
  %v1217 = vunpack.c.l.b16 %v641
  %v1218 = vunpack.c.l.b16 %v642
  %v1219 = vunpack.c.l.b16 %v643
  %v1220 = vunpack.c.l.b16 %v644
  %v1221 = vunpack.c.l.b16 %v645
  %v1222 = vunpack.c.l.b16 %v646
  %v1223 = vunpack.c.l.b16 %v647
  %v1224 = vunpack.c.l.b16 %v648
  %v1225 = vunpack.c.l.b16 %v649
  %v1226 = vunpack.c.l.b16 %v650
  %v1227 = vunpack.c.l.b16 %v651
  %v1228 = vunpack.c.l.b16 %v652
  %v1229 = vunpack.c.l.b16 %v653
  %v1230 = vunpack.c.l.b16 %v654
  %v1231 = vunpack.c.l.b16 %v655
  %v1232 = vunpack.c.l.b16 %v656
  %v1233 = vunpack.c.l.b16 %v657
  %v1234 = vunpack.c.l.b16 %v658
  %v1235 = vunpack.c.l.b16 %v659
  %v1236 = vunpack.c.l.b16 %v660
  %v1237 = vunpack.c.l.b16 %v661
  %v1238 = vunpack.c.l.b16 %v662
  %v1239 = vunpack.c.l.b16 %v663
  %v1240 = vunpack.c.l.b16 %v664
  %v1241 = vunpack.c.l.b16 %v665
  %v1242 = vunpack.c.l.b16 %v666
  %v1243 = vunpack.c.l.b16 %v667
  %v1244 = vunpack.c.l.b16 %v668
  %v1245 = vunpack.c.l.b16 %v669
  %v1246 = vunpack.c.l.b16 %v670
  %v1247 = vunpack.c.l.b16 %v671
  %v1248 = vunpack.c.l.b16 %v672
  %v1249 = vunpack.c.l.b16 %v673
  %v1250 = vunpack.c.l.b16 %v674
  %v1251 = vunpack.c.l.b16 %v675
  %v1252 = vunpack.c.l.b16 %v676
  %v1253 = vunpack.c.l.b16 %v677
  %v1254 = vunpack.c.l.b16 %v678
  %v1255 = vunpack.c.l.b16 %v679
  %v1256 = vunpack.c.l.b16 %v680
  %v1257 = vunpack.c.l.b16 %v681
  %v1258 = vunpack.c.l.b16 %v682
  %v1259 = vunpack.c.l.b16 %v683
  %v1260 = vunpack.c.l.b16 %v684
  %v1261 = vunpack.c.l.b16 %v685
  %v1262 = vunpack.c.l.b16 %v686
  %v1263 = vunpack.c.l.b16 %v687
  %v1264 = vunpack.c.l.b16 %v688
  %v1265 = vunpack.c.l.b16 %v689
  %v1266 = vunpack.c.l.b16 %v690
  %v1267 = vunpack.c.l.b16 %v691
  %v1268 = vunpack.c.l.b16 %v692
  %v1269 = vunpack.c.l.b16 %v693
  %v1270 = vunpack.c.l.b16 %v694
  %v1271 = vunpack.c.l.b16 %v695
  %v1272 = vunpack.c.l.b16 %v696
  %v1273 = vunpack.c.l.b16 %v697
  %v1274 = vunpack.c.l.b16 %v698
  %v1275 = vunpack.c.l.b16 %v699
  %v1276 = vunpack.c.l.b16 %v700
  %v1277 = vunpack.c.l.b16 %v701
  %v1278 = vunpack.c.l.b16 %v702
  %v1279 = vunpack.c.l.b16 %v703
  %v1280 = vunpack.c.l.b16 %v704
  %v1281 = vunpack.c.l.b16 %v705
  %v1282 = vunpack.c.l.b16 %v706
  %v1283 = vunpack.c.l.b16 %v707
  %v1284 = vunpack.c.l.b16 %v708
  %v1285 = vunpack.c.l.b16 %v709
  %v1286 = vpack.c.b16 %v1159, %v1158
  %v1287 = vpack.c.b16 %v1161, %v1160
  %v1288 = vpack.c.b16 %v1163, %v1162
  %v1289 = vpack.c.b16 %v1165, %v1164
  %v1290 = vpack.c.b16 %v1167, %v1166
  %v1291 = vpack.c.b16 %v1169, %v1168
  %v1292 = vpack.c.b16 %v1171, %v1170
  %v1293 = vpack.c.b16 %v1173, %v1172
  %v1294 = vpack.c.b16 %v1175, %v1174
  %v1295 = vpack.c.b16 %v1177, %v1176
  %v1296 = vpack.c.b16 %v1179, %v1178
  %v1297 = vpack.c.b16 %v1181, %v1180
  %v1298 = vpack.c.b16 %v1183, %v1182
  %v1299 = vpack.c.b16 %v1185, %v1184
  %v1300 = vpack.c.b16 %v1187, %v1186
  %v1301 = vpack.c.b16 %v1189, %v1188
  %v1302 = vpack.c.b16 %v1191, %v1190
  %v1303 = vpack.c.b16 %v1193, %v1192
  %v1304 = vpack.c.b16 %v1195, %v1194
  %v1305 = vpack.c.b16 %v1197, %v1196
  %v1306 = vpack.c.b16 %v1199, %v1198
  %v1307 = vpack.c.b16 %v1201, %v1200
  %v1308 = vpack.c.b16 %v1203, %v1202
  %v1309 = vpack.c.b16 %v1205, %v1204
  %v1310 = vpack.c.b16 %v1207, %v1206
  %v1311 = vpack.c.b16 %v1209, %v1208
  %v1312 = vpack.c.b16 %v1211, %v1210
  %v1313 = vpack.c.b16 %v1213, %v1212
  %v1314 = vpack.c.b16 %v1215, %v1214
  %v1315 = vpack.c.b16 %v1217, %v1216
  %v1316 = vpack.c.b16 %v1219, %v1218
  %v1317 = vpack.c.b16 %v1221, %v1220
  %v1318 = vpack.c.b16 %v1223, %v1222
  %v1319 = vpack.c.b16 %v1225, %v1224
  %v1320 = vpack.c.b16 %v1227, %v1226
  %v1321 = vpack.c.b16 %v1229, %v1228
  %v1322 = vpack.c.b16 %v1231, %v1230
  %v1323 = vpack.c.b16 %v1233, %v1232
  %v1324 = vpack.c.b16 %v1235, %v1234
  %v1325 = vpack.c.b16 %v1237, %v1236
  %v1326 = vpack.c.b16 %v1239, %v1238
  %v1327 = vpack.c.b16 %v1241, %v1240
  %v1328 = vpack.c.b16 %v1243, %v1242
  %v1329 = vpack.c.b16 %v1245, %v1244
  %v1330 = vpack.c.b16 %v1247, %v1246
  %v1331 = vpack.c.b16 %v1249, %v1248
  %v1332 = vpack.c.b16 %v1251, %v1250
  %v1333 = vpack.c.b16 %v1253, %v1252
  %v1334 = vpack.c.b16 %v1255, %v1254
  %v1335 = vpack.c.b16 %v1257, %v1256
  %v1336 = vpack.c.b16 %v1259, %v1258
  %v1337 = vpack.c.b16 %v1261, %v1260
  %v1338 = vpack.c.b16 %v1263, %v1262
  %v1339 = vpack.c.b16 %v1265, %v1264
  %v1340 = vpack.c.b16 %v1267, %v1266
  %v1341 = vpack.c.b16 %v1269, %v1268
  %v1342 = vpack.c.b16 %v1271, %v1270
  %v1343 = vpack.c.b16 %v1273, %v1272
  %v1344 = vpack.c.b16 %v1275, %v1274
  %v1345 = vpack.c.b16 %v1277, %v1276
  %v1346 = vpack.c.b16 %v1279, %v1278
  %v1347 = vpack.c.b16 %v1281, %v1280
  %v1348 = vpack.c.b16 %v1283, %v1282
  %v1349 = vpack.c.b16 %v1285, %v1284
  %v1430 = vunpack.c.l.b16 %v54
  %v1431 = vunpack.c.l.b16 %v55
  %v1432 = vunpack.c.l.b16 %v56
  %v1433 = vunpack.c.l.b16 %v57
  %v1434 = vunpack.c.l.b16 %v58
  %v1435 = vunpack.c.l.b16 %v59
  %v1436 = vunpack.c.l.b16 %v60
  %v1437 = vunpack.c.l.b16 %v61
  %v1438 = vunpack.c.l.b16 %v62
  %v1439 = vunpack.c.l.b16 %v63
  %v1440 = vunpack.c.l.b16 %v64
  %v1441 = vunpack.c.l.b16 %v65
  %v1442 = vunpack.c.l.b16 %v66
  %v1443 = vunpack.c.l.b16 %v67
  %v1444 = vunpack.c.l.b16 %v68
  %v1445 = vunpack.c.l.b16 %v69
  %v1446 = vpack.c.b16 %v1431, %v1430
  %v1447 = vpack.c.b16 %v1433, %v1432
  %v1448 = vpack.c.b16 %v1435, %v1434
  %v1449 = vpack.c.b16 %v1437, %v1436
  %v1450 = vpack.c.b16 %v1439, %v1438
  %v1451 = vpack.c.b16 %v1441, %v1440
  %v1452 = vpack.c.b16 %v1443, %v1442
  %v1453 = vpack.c.b16 %v1445, %v1444
  %1462 = vmatpush.bf16.msra.mxu0 %v1453
  %1463 = vmatpush.bf16.msra.mxu0 %v1452
  %1464 = vmatpush.bf16.msra.mxu0 %v1451
  %1465 = vmatpush.bf16.msra.mxu0 %v1450
  %1466 = vmatpush.bf16.msra.mxu0 %v1449
  %1467 = vmatpush.bf16.msra.mxu0 %v1448
  %1468 = vmatpush.bf16.msra.mxu0 %v1447
  %1469 = vmatpush.bf16.msra.mxu0 %v1446
  %1470 = vmatmul.bf16.gmra.mxu0 %v1286
  %v1471 = vpop.f32.mrf.mxu0
  %v1472 = vadd.f32 0.0, %v1471
  %v1473 = vpop.f32.mrf.mxu0
  %v1474 = vadd.f32 0.0, %v1473
  %1475 = vmatmul.bf16.gmra.mxu0 %v1287
  %v1476 = vpop.f32.mrf.mxu0
  %v1477 = vadd.f32 0.0, %v1476
  %v1478 = vpop.f32.mrf.mxu0
  %v1479 = vadd.f32 0.0, %v1478
  %1480 = vmatmul.bf16.gmra.mxu0 %v1288
  %v1481 = vpop.f32.mrf.mxu0
  %v1482 = vadd.f32 0.0, %v1481
  %v1483 = vpop.f32.mrf.mxu0
  %v1484 = vadd.f32 0.0, %v1483
  %1485 = vmatmul.bf16.gmra.mxu0 %v1289
  %v1486 = vpop.f32.mrf.mxu0
  %v1487 = vadd.f32 0.0, %v1486
  %v1488 = vpop.f32.mrf.mxu0
  %v1489 = vadd.f32 0.0, %v1488
  %1490 = vmatmul.bf16.gmra.mxu0 %v1290
  %v1491 = vpop.f32.mrf.mxu0
  %v1492 = vadd.f32 0.0, %v1491
  %v1493 = vpop.f32.mrf.mxu0
  %v1494 = vadd.f32 0.0, %v1493
  %1495 = vmatmul.bf16.gmra.mxu0 %v1291
  %v1496 = vpop.f32.mrf.mxu0
  %v1497 = vadd.f32 0.0, %v1496
  %v1498 = vpop.f32.mrf.mxu0
  %v1499 = vadd.f32 0.0, %v1498
  %1500 = vmatmul.bf16.gmra.mxu0 %v1292
  %v1501 = vpop.f32.mrf.mxu0
  %v1502 = vadd.f32 0.0, %v1501
  %v1503 = vpop.f32.mrf.mxu0
  %v1504 = vadd.f32 0.0, %v1503
  %1505 = vmatmul.bf16.gmra.mxu0 %v1293
  %v1506 = vpop.f32.mrf.mxu0
  %v1507 = vadd.f32 0.0, %v1506
  %v1508 = vpop.f32.mrf.mxu0
  %v1509 = vadd.f32 0.0, %v1508
  %1510 = vmatmul.bf16.gmra.mxu0 %v1294
  %v1511 = vpop.f32.mrf.mxu0
  %v1512 = vadd.f32 0.0, %v1511
  %v1513 = vpop.f32.mrf.mxu0
  %v1514 = vadd.f32 0.0, %v1513
  %1515 = vmatmul.bf16.gmra.mxu0 %v1295
  %v1516 = vpop.f32.mrf.mxu0
  %v1517 = vadd.f32 0.0, %v1516
  %v1518 = vpop.f32.mrf.mxu0
  %v1519 = vadd.f32 0.0, %v1518
  %1520 = vmatmul.bf16.gmra.mxu0 %v1296
  %v1521 = vpop.f32.mrf.mxu0
  %v1522 = vadd.f32 0.0, %v1521
  %v1523 = vpop.f32.mrf.mxu0
  %v1524 = vadd.f32 0.0, %v1523
  %1525 = vmatmul.bf16.gmra.mxu0 %v1297
  %v1526 = vpop.f32.mrf.mxu0
  %v1527 = vadd.f32 0.0, %v1526
  %v1528 = vpop.f32.mrf.mxu0
  %v1529 = vadd.f32 0.0, %v1528
  %1530 = vmatmul.bf16.gmra.mxu0 %v1298
  %v1531 = vpop.f32.mrf.mxu0
  %v1532 = vadd.f32 0.0, %v1531
  %v1533 = vpop.f32.mrf.mxu0
  %v1534 = vadd.f32 0.0, %v1533
  %1535 = vmatmul.bf16.gmra.mxu0 %v1299
  %v1536 = vpop.f32.mrf.mxu0
  %v1537 = vadd.f32 0.0, %v1536
  %v1538 = vpop.f32.mrf.mxu0
  %v1539 = vadd.f32 0.0, %v1538
  %1540 = vmatmul.bf16.gmra.mxu0 %v1300
  %v1541 = vpop.f32.mrf.mxu0
  %v1542 = vadd.f32 0.0, %v1541
  %v1543 = vpop.f32.mrf.mxu0
  %v1544 = vadd.f32 0.0, %v1543
  %1545 = vmatmul.bf16.gmra.mxu0 %v1301
  %v1546 = vpop.f32.mrf.mxu0
  %v1547 = vadd.f32 0.0, %v1546
  %v1548 = vpop.f32.mrf.mxu0
  %v1549 = vadd.f32 0.0, %v1548
  %1550 = vmatmul.bf16.gmra.mxu0 %v1302
  %v1551 = vpop.f32.mrf.mxu0
  %v1552 = vadd.f32 0.0, %v1551
  %v1553 = vpop.f32.mrf.mxu0
  %v1554 = vadd.f32 0.0, %v1553
  %1555 = vmatmul.bf16.gmra.mxu0 %v1303
  %v1556 = vpop.f32.mrf.mxu0
  %v1557 = vadd.f32 0.0, %v1556
  %v1558 = vpop.f32.mrf.mxu0
  %v1559 = vadd.f32 0.0, %v1558
  %1560 = vmatmul.bf16.gmra.mxu0 %v1304
  %v1561 = vpop.f32.mrf.mxu0
  %v1562 = vadd.f32 0.0, %v1561
  %v1563 = vpop.f32.mrf.mxu0
  %v1564 = vadd.f32 0.0, %v1563
  %1565 = vmatmul.bf16.gmra.mxu0 %v1305
  %v1566 = vpop.f32.mrf.mxu0
  %v1567 = vadd.f32 0.0, %v1566
  %v1568 = vpop.f32.mrf.mxu0
  %v1569 = vadd.f32 0.0, %v1568
  %1570 = vmatmul.bf16.gmra.mxu0 %v1306
  %v1571 = vpop.f32.mrf.mxu0
  %v1572 = vadd.f32 0.0, %v1571
  %v1573 = vpop.f32.mrf.mxu0
  %v1574 = vadd.f32 0.0, %v1573
  %1575 = vmatmul.bf16.gmra.mxu0 %v1307
  %v1576 = vpop.f32.mrf.mxu0
  %v1577 = vadd.f32 0.0, %v1576
  %v1578 = vpop.f32.mrf.mxu0
  %v1579 = vadd.f32 0.0, %v1578
  %1580 = vmatmul.bf16.gmra.mxu0 %v1308
  %v1581 = vpop.f32.mrf.mxu0
  %v1582 = vadd.f32 0.0, %v1581
  %v1583 = vpop.f32.mrf.mxu0
  %v1584 = vadd.f32 0.0, %v1583
  %1585 = vmatmul.bf16.gmra.mxu0 %v1309
  %v1586 = vpop.f32.mrf.mxu0
  %v1587 = vadd.f32 0.0, %v1586
  %v1588 = vpop.f32.mrf.mxu0
  %v1589 = vadd.f32 0.0, %v1588
  %1590 = vmatmul.bf16.gmra.mxu0 %v1310
  %v1591 = vpop.f32.mrf.mxu0
  %v1592 = vadd.f32 0.0, %v1591
  %v1593 = vpop.f32.mrf.mxu0
  %v1594 = vadd.f32 0.0, %v1593
  %1595 = vmatmul.bf16.gmra.mxu0 %v1311
  %v1596 = vpop.f32.mrf.mxu0
  %v1597 = vadd.f32 0.0, %v1596
  %v1598 = vpop.f32.mrf.mxu0
  %v1599 = vadd.f32 0.0, %v1598
  %1600 = vmatmul.bf16.gmra.mxu0 %v1312
  %v1601 = vpop.f32.mrf.mxu0
  %v1602 = vadd.f32 0.0, %v1601
  %v1603 = vpop.f32.mrf.mxu0
  %v1604 = vadd.f32 0.0, %v1603
  %1605 = vmatmul.bf16.gmra.mxu0 %v1313
  %v1606 = vpop.f32.mrf.mxu0
  %v1607 = vadd.f32 0.0, %v1606
  %v1608 = vpop.f32.mrf.mxu0
  %v1609 = vadd.f32 0.0, %v1608
  %1610 = vmatmul.bf16.gmra.mxu0 %v1314
  %v1611 = vpop.f32.mrf.mxu0
  %v1612 = vadd.f32 0.0, %v1611
  %v1613 = vpop.f32.mrf.mxu0
  %v1614 = vadd.f32 0.0, %v1613
  %1615 = vmatmul.bf16.gmra.mxu0 %v1315
  %v1616 = vpop.f32.mrf.mxu0
  %v1617 = vadd.f32 0.0, %v1616
  %v1618 = vpop.f32.mrf.mxu0
  %v1619 = vadd.f32 0.0, %v1618
  %1620 = vmatmul.bf16.gmra.mxu0 %v1316
  %v1621 = vpop.f32.mrf.mxu0
  %v1622 = vadd.f32 0.0, %v1621
  %v1623 = vpop.f32.mrf.mxu0
  %v1624 = vadd.f32 0.0, %v1623
  %1625 = vmatmul.bf16.gmra.mxu0 %v1317
  %v1626 = vpop.f32.mrf.mxu0
  %v1627 = vadd.f32 0.0, %v1626
  %v1628 = vpop.f32.mrf.mxu0
  %v1629 = vadd.f32 0.0, %v1628
  %1630 = vmatmul.bf16.gmra.mxu0 %v1318
  %v1631 = vpop.f32.mrf.mxu0
  %v1632 = vadd.f32 0.0, %v1631
  %v1633 = vpop.f32.mrf.mxu0
  %v1634 = vadd.f32 0.0, %v1633
  %1635 = vmatmul.bf16.gmra.mxu0 %v1319
  %v1636 = vpop.f32.mrf.mxu0
  %v1637 = vadd.f32 0.0, %v1636
  %v1638 = vpop.f32.mrf.mxu0
  %v1639 = vadd.f32 0.0, %v1638
  %1640 = vmatmul.bf16.gmra.mxu0 %v1320
  %v1641 = vpop.f32.mrf.mxu0
  %v1642 = vadd.f32 0.0, %v1641
  %v1643 = vpop.f32.mrf.mxu0
  %v1644 = vadd.f32 0.0, %v1643
  %1645 = vmatmul.bf16.gmra.mxu0 %v1321
  %v1646 = vpop.f32.mrf.mxu0
  %v1647 = vadd.f32 0.0, %v1646
  %v1648 = vpop.f32.mrf.mxu0
  %v1649 = vadd.f32 0.0, %v1648
  %1650 = vmatmul.bf16.gmra.mxu0 %v1322
  %v1651 = vpop.f32.mrf.mxu0
  %v1652 = vadd.f32 0.0, %v1651
  %v1653 = vpop.f32.mrf.mxu0
  %v1654 = vadd.f32 0.0, %v1653
  %1655 = vmatmul.bf16.gmra.mxu0 %v1323
  %v1656 = vpop.f32.mrf.mxu0
  %v1657 = vadd.f32 0.0, %v1656
  %v1658 = vpop.f32.mrf.mxu0
  %v1659 = vadd.f32 0.0, %v1658
  %1660 = vmatmul.bf16.gmra.mxu0 %v1324
  %v1661 = vpop.f32.mrf.mxu0
  %v1662 = vadd.f32 0.0, %v1661
  %v1663 = vpop.f32.mrf.mxu0
  %v1664 = vadd.f32 0.0, %v1663
  %1665 = vmatmul.bf16.gmra.mxu0 %v1325
  %v1666 = vpop.f32.mrf.mxu0
  %v1667 = vadd.f32 0.0, %v1666
  %v1668 = vpop.f32.mrf.mxu0
  %v1669 = vadd.f32 0.0, %v1668
  %1670 = vmatmul.bf16.gmra.mxu0 %v1326
  %v1671 = vpop.f32.mrf.mxu0
  %v1672 = vadd.f32 0.0, %v1671
  %v1673 = vpop.f32.mrf.mxu0
  %v1674 = vadd.f32 0.0, %v1673
  %1675 = vmatmul.bf16.gmra.mxu0 %v1327
  %v1676 = vpop.f32.mrf.mxu0
  %v1677 = vadd.f32 0.0, %v1676
  %v1678 = vpop.f32.mrf.mxu0
  %v1679 = vadd.f32 0.0, %v1678
  %1680 = vmatmul.bf16.gmra.mxu0 %v1328
  %v1681 = vpop.f32.mrf.mxu0
  %v1682 = vadd.f32 0.0, %v1681
  %v1683 = vpop.f32.mrf.mxu0
  %v1684 = vadd.f32 0.0, %v1683
  %1685 = vmatmul.bf16.gmra.mxu0 %v1329
  %v1686 = vpop.f32.mrf.mxu0
  %v1687 = vadd.f32 0.0, %v1686
  %v1688 = vpop.f32.mrf.mxu0
  %v1689 = vadd.f32 0.0, %v1688
  %1690 = vmatmul.bf16.gmra.mxu0 %v1330
  %v1691 = vpop.f32.mrf.mxu0
  %v1692 = vadd.f32 0.0, %v1691
  %v1693 = vpop.f32.mrf.mxu0
  %v1694 = vadd.f32 0.0, %v1693
  %1695 = vmatmul.bf16.gmra.mxu0 %v1331
  %v1696 = vpop.f32.mrf.mxu0
  %v1697 = vadd.f32 0.0, %v1696
  %v1698 = vpop.f32.mrf.mxu0
  %v1699 = vadd.f32 0.0, %v1698
  %1700 = vmatmul.bf16.gmra.mxu0 %v1332
  %v1701 = vpop.f32.mrf.mxu0
  %v1702 = vadd.f32 0.0, %v1701
  %v1703 = vpop.f32.mrf.mxu0
  %v1704 = vadd.f32 0.0, %v1703
  %1705 = vmatmul.bf16.gmra.mxu0 %v1333
  %v1706 = vpop.f32.mrf.mxu0
  %v1707 = vadd.f32 0.0, %v1706
  %v1708 = vpop.f32.mrf.mxu0
  %v1709 = vadd.f32 0.0, %v1708
  %1710 = vmatmul.bf16.gmra.mxu0 %v1334
  %v1711 = vpop.f32.mrf.mxu0
  %v1712 = vadd.f32 0.0, %v1711
  %v1713 = vpop.f32.mrf.mxu0
  %v1714 = vadd.f32 0.0, %v1713
  %1715 = vmatmul.bf16.gmra.mxu0 %v1335
  %v1716 = vpop.f32.mrf.mxu0
  %v1717 = vadd.f32 0.0, %v1716
  %v1718 = vpop.f32.mrf.mxu0
  %v1719 = vadd.f32 0.0, %v1718
  %1720 = vmatmul.bf16.gmra.mxu0 %v1336
  %v1721 = vpop.f32.mrf.mxu0
  %v1722 = vadd.f32 0.0, %v1721
  %v1723 = vpop.f32.mrf.mxu0
  %v1724 = vadd.f32 0.0, %v1723
  %1725 = vmatmul.bf16.gmra.mxu0 %v1337
  %v1726 = vpop.f32.mrf.mxu0
  %v1727 = vadd.f32 0.0, %v1726
  %v1728 = vpop.f32.mrf.mxu0
  %v1729 = vadd.f32 0.0, %v1728
  %1730 = vmatmul.bf16.gmra.mxu0 %v1338
  %v1731 = vpop.f32.mrf.mxu0
  %v1732 = vadd.f32 0.0, %v1731
  %v1733 = vpop.f32.mrf.mxu0
  %v1734 = vadd.f32 0.0, %v1733
  %1735 = vmatmul.bf16.gmra.mxu0 %v1339
  %v1736 = vpop.f32.mrf.mxu0
  %v1737 = vadd.f32 0.0, %v1736
  %v1738 = vpop.f32.mrf.mxu0
  %v1739 = vadd.f32 0.0, %v1738
  %1740 = vmatmul.bf16.gmra.mxu0 %v1340
  %v1741 = vpop.f32.mrf.mxu0
  %v1742 = vadd.f32 0.0, %v1741
  %v1743 = vpop.f32.mrf.mxu0
  %v1744 = vadd.f32 0.0, %v1743
  %1745 = vmatmul.bf16.gmra.mxu0 %v1341
  %v1746 = vpop.f32.mrf.mxu0
  %v1747 = vadd.f32 0.0, %v1746
  %v1748 = vpop.f32.mrf.mxu0
  %v1749 = vadd.f32 0.0, %v1748
  %1750 = vmatmul.bf16.gmra.mxu0 %v1342
  %v1751 = vpop.f32.mrf.mxu0
  %v1752 = vadd.f32 0.0, %v1751
  %v1753 = vpop.f32.mrf.mxu0
  %v1754 = vadd.f32 0.0, %v1753
  %1755 = vmatmul.bf16.gmra.mxu0 %v1343
  %v1756 = vpop.f32.mrf.mxu0
  %v1757 = vadd.f32 0.0, %v1756
  %v1758 = vpop.f32.mrf.mxu0
  %v1759 = vadd.f32 0.0, %v1758
  %1760 = vmatmul.bf16.gmra.mxu0 %v1344
  %v1761 = vpop.f32.mrf.mxu0
  %v1762 = vadd.f32 0.0, %v1761
  %v1763 = vpop.f32.mrf.mxu0
  %v1764 = vadd.f32 0.0, %v1763
  %1765 = vmatmul.bf16.gmra.mxu0 %v1345
  %v1766 = vpop.f32.mrf.mxu0
  %v1767 = vadd.f32 0.0, %v1766
  %v1768 = vpop.f32.mrf.mxu0
  %v1769 = vadd.f32 0.0, %v1768
  %1770 = vmatmul.bf16.gmra.mxu0 %v1346
  %v1771 = vpop.f32.mrf.mxu0
  %v1772 = vadd.f32 0.0, %v1771
  %v1773 = vpop.f32.mrf.mxu0
  %v1774 = vadd.f32 0.0, %v1773
  %1775 = vmatmul.bf16.gmra.mxu0 %v1347
  %v1776 = vpop.f32.mrf.mxu0
  %v1777 = vadd.f32 0.0, %v1776
  %v1778 = vpop.f32.mrf.mxu0
  %v1779 = vadd.f32 0.0, %v1778
  %1780 = vmatmul.bf16.gmra.mxu0 %v1348
  %v1781 = vpop.f32.mrf.mxu0
  %v1782 = vadd.f32 0.0, %v1781
  %v1783 = vpop.f32.mrf.mxu0
  %v1784 = vadd.f32 0.0, %v1783
  %1785 = vmatmul.bf16.gmra.mxu0 %v1349
  %v1786 = vpop.f32.mrf.mxu0
  %v1787 = vadd.f32 0.0, %v1786
  %v1788 = vpop.f32.mrf.mxu0
  %v1789 = vadd.f32 0.0, %v1788
  %1790 = vdwg.mxu0
  %v1919 = vunpack.c.l.b16 %v198
  %v1920 = vunpack.c.l.b16 %v199
  %v1921 = vunpack.c.l.b16 %v200
  %v1922 = vunpack.c.l.b16 %v201
  %v1923 = vunpack.c.l.b16 %v202
  %v1924 = vunpack.c.l.b16 %v203
  %v1925 = vunpack.c.l.b16 %v204
  %v1926 = vunpack.c.l.b16 %v205
  %v1927 = vunpack.c.l.b16 %v206
  %v1928 = vunpack.c.l.b16 %v207
  %v1929 = vunpack.c.l.b16 %v208
  %v1930 = vunpack.c.l.b16 %v209
  %v1931 = vunpack.c.l.b16 %v210
  %v1932 = vunpack.c.l.b16 %v211
  %v1933 = vunpack.c.l.b16 %v212
  %v1934 = vunpack.c.l.b16 %v213
  %v1935 = vunpack.c.l.b16 %v214
  %v1936 = vunpack.c.l.b16 %v215
  %v1937 = vunpack.c.l.b16 %v216
  %v1938 = vunpack.c.l.b16 %v217
  %v1939 = vunpack.c.l.b16 %v218
  %v1940 = vunpack.c.l.b16 %v219
  %v1941 = vunpack.c.l.b16 %v220
  %v1942 = vunpack.c.l.b16 %v221
  %v1943 = vunpack.c.l.b16 %v222
  %v1944 = vunpack.c.l.b16 %v223
  %v1945 = vunpack.c.l.b16 %v224
  %v1946 = vunpack.c.l.b16 %v225
  %v1947 = vunpack.c.l.b16 %v226
  %v1948 = vunpack.c.l.b16 %v227
  %v1949 = vunpack.c.l.b16 %v228
  %v1950 = vunpack.c.l.b16 %v229
  %v1951 = vunpack.c.l.b16 %v230
  %v1952 = vunpack.c.l.b16 %v231
  %v1953 = vunpack.c.l.b16 %v232
  %v1954 = vunpack.c.l.b16 %v233
  %v1955 = vunpack.c.l.b16 %v234
  %v1956 = vunpack.c.l.b16 %v235
  %v1957 = vunpack.c.l.b16 %v236
  %v1958 = vunpack.c.l.b16 %v237
  %v1959 = vunpack.c.l.b16 %v238
  %v1960 = vunpack.c.l.b16 %v239
  %v1961 = vunpack.c.l.b16 %v240
  %v1962 = vunpack.c.l.b16 %v241
  %v1963 = vunpack.c.l.b16 %v242
  %v1964 = vunpack.c.l.b16 %v243
  %v1965 = vunpack.c.l.b16 %v244
  %v1966 = vunpack.c.l.b16 %v245
  %v1967 = vunpack.c.l.b16 %v246
  %v1968 = vunpack.c.l.b16 %v247
  %v1969 = vunpack.c.l.b16 %v248
  %v1970 = vunpack.c.l.b16 %v249
  %v1971 = vunpack.c.l.b16 %v250
  %v1972 = vunpack.c.l.b16 %v251
  %v1973 = vunpack.c.l.b16 %v252
  %v1974 = vunpack.c.l.b16 %v253
  %v1975 = vunpack.c.l.b16 %v254
  %v1976 = vunpack.c.l.b16 %v255
  %v1977 = vunpack.c.l.b16 %v256
  %v1978 = vunpack.c.l.b16 %v257
  %v1979 = vunpack.c.l.b16 %v258
  %v1980 = vunpack.c.l.b16 %v259
  %v1981 = vunpack.c.l.b16 %v260
  %v1982 = vunpack.c.l.b16 %v261
  %v1983 = vunpack.c.l.b16 %v262
  %v1984 = vunpack.c.l.b16 %v263
  %v1985 = vunpack.c.l.b16 %v264
  %v1986 = vunpack.c.l.b16 %v265
  %v1987 = vunpack.c.l.b16 %v266
  %v1988 = vunpack.c.l.b16 %v267
  %v1989 = vunpack.c.l.b16 %v268
  %v1990 = vunpack.c.l.b16 %v269
  %v1991 = vunpack.c.l.b16 %v270
  %v1992 = vunpack.c.l.b16 %v271
  %v1993 = vunpack.c.l.b16 %v272
  %v1994 = vunpack.c.l.b16 %v273
  %v1995 = vunpack.c.l.b16 %v274
  %v1996 = vunpack.c.l.b16 %v275
  %v1997 = vunpack.c.l.b16 %v276
  %v1998 = vunpack.c.l.b16 %v277
  %v1999 = vunpack.c.l.b16 %v278
  %v2000 = vunpack.c.l.b16 %v279
  %v2001 = vunpack.c.l.b16 %v280
  %v2002 = vunpack.c.l.b16 %v281
  %v2003 = vunpack.c.l.b16 %v282
  %v2004 = vunpack.c.l.b16 %v283
  %v2005 = vunpack.c.l.b16 %v284
  %v2006 = vunpack.c.l.b16 %v285
  %v2007 = vunpack.c.l.b16 %v286
  %v2008 = vunpack.c.l.b16 %v287
  %v2009 = vunpack.c.l.b16 %v288
  %v2010 = vunpack.c.l.b16 %v289
  %v2011 = vunpack.c.l.b16 %v290
  %v2012 = vunpack.c.l.b16 %v291
  %v2013 = vunpack.c.l.b16 %v292
  %v2014 = vunpack.c.l.b16 %v293
  %v2015 = vunpack.c.l.b16 %v294
  %v2016 = vunpack.c.l.b16 %v295
  %v2017 = vunpack.c.l.b16 %v296
  %v2018 = vunpack.c.l.b16 %v297
  %v2019 = vunpack.c.l.b16 %v298
  %v2020 = vunpack.c.l.b16 %v299
  %v2021 = vunpack.c.l.b16 %v300
  %v2022 = vunpack.c.l.b16 %v301
  %v2023 = vunpack.c.l.b16 %v302
  %v2024 = vunpack.c.l.b16 %v303
  %v2025 = vunpack.c.l.b16 %v304
  %v2026 = vunpack.c.l.b16 %v305
  %v2027 = vunpack.c.l.b16 %v306
  %v2028 = vunpack.c.l.b16 %v307
  %v2029 = vunpack.c.l.b16 %v308
  %v2030 = vunpack.c.l.b16 %v309
  %v2031 = vunpack.c.l.b16 %v310
  %v2032 = vunpack.c.l.b16 %v311
  %v2033 = vunpack.c.l.b16 %v312
  %v2034 = vunpack.c.l.b16 %v313
  %v2035 = vunpack.c.l.b16 %v314
  %v2036 = vunpack.c.l.b16 %v315
  %v2037 = vunpack.c.l.b16 %v316
  %v2038 = vunpack.c.l.b16 %v317
  %v2039 = vunpack.c.l.b16 %v318
  %v2040 = vunpack.c.l.b16 %v319
  %v2041 = vunpack.c.l.b16 %v320
  %v2042 = vunpack.c.l.b16 %v321
  %v2043 = vunpack.c.l.b16 %v322
  %v2044 = vunpack.c.l.b16 %v323
  %v2045 = vunpack.c.l.b16 %v324
  %v2046 = vunpack.c.l.b16 %v325
  %v2047 = vpack.c.b16 %v1920, %v1919
  %v2048 = vpack.c.b16 %v1922, %v1921
  %v2049 = vpack.c.b16 %v1924, %v1923
  %v2050 = vpack.c.b16 %v1926, %v1925
  %v2051 = vpack.c.b16 %v1928, %v1927
  %v2052 = vpack.c.b16 %v1930, %v1929
  %v2053 = vpack.c.b16 %v1932, %v1931
  %v2054 = vpack.c.b16 %v1934, %v1933
  %v2055 = vpack.c.b16 %v1936, %v1935
  %v2056 = vpack.c.b16 %v1938, %v1937
  %v2057 = vpack.c.b16 %v1940, %v1939
  %v2058 = vpack.c.b16 %v1942, %v1941
  %v2059 = vpack.c.b16 %v1944, %v1943
  %v2060 = vpack.c.b16 %v1946, %v1945
  %v2061 = vpack.c.b16 %v1948, %v1947
  %v2062 = vpack.c.b16 %v1950, %v1949
  %v2063 = vpack.c.b16 %v1952, %v1951
  %v2064 = vpack.c.b16 %v1954, %v1953
  %v2065 = vpack.c.b16 %v1956, %v1955
  %v2066 = vpack.c.b16 %v1958, %v1957
  %v2067 = vpack.c.b16 %v1960, %v1959
  %v2068 = vpack.c.b16 %v1962, %v1961
  %v2069 = vpack.c.b16 %v1964, %v1963
  %v2070 = vpack.c.b16 %v1966, %v1965
  %v2071 = vpack.c.b16 %v1968, %v1967
  %v2072 = vpack.c.b16 %v1970, %v1969
  %v2073 = vpack.c.b16 %v1972, %v1971
  %v2074 = vpack.c.b16 %v1974, %v1973
  %v2075 = vpack.c.b16 %v1976, %v1975
  %v2076 = vpack.c.b16 %v1978, %v1977
  %v2077 = vpack.c.b16 %v1980, %v1979
  %v2078 = vpack.c.b16 %v1982, %v1981
  %v2079 = vpack.c.b16 %v1984, %v1983
  %v2080 = vpack.c.b16 %v1986, %v1985
  %v2081 = vpack.c.b16 %v1988, %v1987
  %v2082 = vpack.c.b16 %v1990, %v1989
  %v2083 = vpack.c.b16 %v1992, %v1991
  %v2084 = vpack.c.b16 %v1994, %v1993
  %v2085 = vpack.c.b16 %v1996, %v1995
  %v2086 = vpack.c.b16 %v1998, %v1997
  %v2087 = vpack.c.b16 %v2000, %v1999
  %v2088 = vpack.c.b16 %v2002, %v2001
  %v2089 = vpack.c.b16 %v2004, %v2003
  %v2090 = vpack.c.b16 %v2006, %v2005
  %v2091 = vpack.c.b16 %v2008, %v2007
  %v2092 = vpack.c.b16 %v2010, %v2009
  %v2093 = vpack.c.b16 %v2012, %v2011
  %v2094 = vpack.c.b16 %v2014, %v2013
  %v2095 = vpack.c.b16 %v2016, %v2015
  %v2096 = vpack.c.b16 %v2018, %v2017
  %v2097 = vpack.c.b16 %v2020, %v2019
  %v2098 = vpack.c.b16 %v2022, %v2021
  %v2099 = vpack.c.b16 %v2024, %v2023
  %v2100 = vpack.c.b16 %v2026, %v2025
  %v2101 = vpack.c.b16 %v2028, %v2027
  %v2102 = vpack.c.b16 %v2030, %v2029
  %v2103 = vpack.c.b16 %v2032, %v2031
  %v2104 = vpack.c.b16 %v2034, %v2033
  %v2105 = vpack.c.b16 %v2036, %v2035
  %v2106 = vpack.c.b16 %v2038, %v2037
  %v2107 = vpack.c.b16 %v2040, %v2039
  %v2108 = vpack.c.b16 %v2042, %v2041
  %v2109 = vpack.c.b16 %v2044, %v2043
  %v2110 = vpack.c.b16 %v2046, %v2045
  %2175 = vmatpush.bf16.msra.mxu0 %v1453
  %2176 = vmatpush.bf16.msra.mxu0 %v1452
  %2177 = vmatpush.bf16.msra.mxu0 %v1451
  %2178 = vmatpush.bf16.msra.mxu0 %v1450
  %2179 = vmatpush.bf16.msra.mxu0 %v1449
  %2180 = vmatpush.bf16.msra.mxu0 %v1448
  %2181 = vmatpush.bf16.msra.mxu0 %v1447
  %2182 = vmatpush.bf16.msra.mxu0 %v1446
  %2183 = vmatmul.bf16.gmra.mxu0 %v2047
  %v2184 = vpop.f32.mrf.mxu0
  %v2185 = vadd.f32 %v1472, %v2184
  %v2186 = vpop.f32.mrf.mxu0
  %v2187 = vadd.f32 %v1474, %v2186
  %2188 = vmatmul.bf16.gmra.mxu0 %v2048
  %v2189 = vpop.f32.mrf.mxu0
  %v2190 = vadd.f32 %v1477, %v2189
  %v2191 = vpop.f32.mrf.mxu0
  %v2192 = vadd.f32 %v1479, %v2191
  %2193 = vmatmul.bf16.gmra.mxu0 %v2049
  %v2194 = vpop.f32.mrf.mxu0
  %v2195 = vadd.f32 %v1482, %v2194
  %v2196 = vpop.f32.mrf.mxu0
  %v2197 = vadd.f32 %v1484, %v2196
  %2198 = vmatmul.bf16.gmra.mxu0 %v2050
  %v2199 = vpop.f32.mrf.mxu0
  %v2200 = vadd.f32 %v1487, %v2199
  %v2201 = vpop.f32.mrf.mxu0
  %v2202 = vadd.f32 %v1489, %v2201
  %2203 = vmatmul.bf16.gmra.mxu0 %v2051
  %v2204 = vpop.f32.mrf.mxu0
  %v2205 = vadd.f32 %v1492, %v2204
  %v2206 = vpop.f32.mrf.mxu0
  %v2207 = vadd.f32 %v1494, %v2206
  %2208 = vmatmul.bf16.gmra.mxu0 %v2052
  %v2209 = vpop.f32.mrf.mxu0
  %v2210 = vadd.f32 %v1497, %v2209
  %v2211 = vpop.f32.mrf.mxu0
  %v2212 = vadd.f32 %v1499, %v2211
  %2213 = vmatmul.bf16.gmra.mxu0 %v2053
  %v2214 = vpop.f32.mrf.mxu0
  %v2215 = vadd.f32 %v1502, %v2214
  %v2216 = vpop.f32.mrf.mxu0
  %v2217 = vadd.f32 %v1504, %v2216
  %2218 = vmatmul.bf16.gmra.mxu0 %v2054
  %v2219 = vpop.f32.mrf.mxu0
  %v2220 = vadd.f32 %v1507, %v2219
  %v2221 = vpop.f32.mrf.mxu0
  %v2222 = vadd.f32 %v1509, %v2221
  %2223 = vmatmul.bf16.gmra.mxu0 %v2055
  %v2224 = vpop.f32.mrf.mxu0
  %v2225 = vadd.f32 %v1512, %v2224
  %v2226 = vpop.f32.mrf.mxu0
  %v2227 = vadd.f32 %v1514, %v2226
  %2228 = vmatmul.bf16.gmra.mxu0 %v2056
  %v2229 = vpop.f32.mrf.mxu0
  %v2230 = vadd.f32 %v1517, %v2229
  %v2231 = vpop.f32.mrf.mxu0
  %v2232 = vadd.f32 %v1519, %v2231
  %2233 = vmatmul.bf16.gmra.mxu0 %v2057
  %v2234 = vpop.f32.mrf.mxu0
  %v2235 = vadd.f32 %v1522, %v2234
  %v2236 = vpop.f32.mrf.mxu0
  %v2237 = vadd.f32 %v1524, %v2236
  %2238 = vmatmul.bf16.gmra.mxu0 %v2058
  %v2239 = vpop.f32.mrf.mxu0
  %v2240 = vadd.f32 %v1527, %v2239
  %v2241 = vpop.f32.mrf.mxu0
  %v2242 = vadd.f32 %v1529, %v2241
  %2243 = vmatmul.bf16.gmra.mxu0 %v2059
  %v2244 = vpop.f32.mrf.mxu0
  %v2245 = vadd.f32 %v1532, %v2244
  %v2246 = vpop.f32.mrf.mxu0
  %v2247 = vadd.f32 %v1534, %v2246
  %2248 = vmatmul.bf16.gmra.mxu0 %v2060
  %v2249 = vpop.f32.mrf.mxu0
  %v2250 = vadd.f32 %v1537, %v2249
  %v2251 = vpop.f32.mrf.mxu0
  %v2252 = vadd.f32 %v1539, %v2251
  %2253 = vmatmul.bf16.gmra.mxu0 %v2061
  %v2254 = vpop.f32.mrf.mxu0
  %v2255 = vadd.f32 %v1542, %v2254
  %v2256 = vpop.f32.mrf.mxu0
  %v2257 = vadd.f32 %v1544, %v2256
  %2258 = vmatmul.bf16.gmra.mxu0 %v2062
  %v2259 = vpop.f32.mrf.mxu0
  %v2260 = vadd.f32 %v1547, %v2259
  %v2261 = vpop.f32.mrf.mxu0
  %v2262 = vadd.f32 %v1549, %v2261
  %2263 = vmatmul.bf16.gmra.mxu0 %v2063
  %v2264 = vpop.f32.mrf.mxu0
  %v2265 = vadd.f32 %v1552, %v2264
  %v2266 = vpop.f32.mrf.mxu0
  %v2267 = vadd.f32 %v1554, %v2266
  %2268 = vmatmul.bf16.gmra.mxu0 %v2064
  %v2269 = vpop.f32.mrf.mxu0
  %v2270 = vadd.f32 %v1557, %v2269
  %v2271 = vpop.f32.mrf.mxu0
  %v2272 = vadd.f32 %v1559, %v2271
  %2273 = vmatmul.bf16.gmra.mxu0 %v2065
  %v2274 = vpop.f32.mrf.mxu0
  %v2275 = vadd.f32 %v1562, %v2274
  %v2276 = vpop.f32.mrf.mxu0
  %v2277 = vadd.f32 %v1564, %v2276
  %2278 = vmatmul.bf16.gmra.mxu0 %v2066
  %v2279 = vpop.f32.mrf.mxu0
  %v2280 = vadd.f32 %v1567, %v2279
  %v2281 = vpop.f32.mrf.mxu0
  %v2282 = vadd.f32 %v1569, %v2281
  %2283 = vmatmul.bf16.gmra.mxu0 %v2067
  %v2284 = vpop.f32.mrf.mxu0
  %v2285 = vadd.f32 %v1572, %v2284
  %v2286 = vpop.f32.mrf.mxu0
  %v2287 = vadd.f32 %v1574, %v2286
  %2288 = vmatmul.bf16.gmra.mxu0 %v2068
  %v2289 = vpop.f32.mrf.mxu0
  %v2290 = vadd.f32 %v1577, %v2289
  %v2291 = vpop.f32.mrf.mxu0
  %v2292 = vadd.f32 %v1579, %v2291
  %2293 = vmatmul.bf16.gmra.mxu0 %v2069
  %v2294 = vpop.f32.mrf.mxu0
  %v2295 = vadd.f32 %v1582, %v2294
  %v2296 = vpop.f32.mrf.mxu0
  %v2297 = vadd.f32 %v1584, %v2296
  %2298 = vmatmul.bf16.gmra.mxu0 %v2070
  %v2299 = vpop.f32.mrf.mxu0
  %v2300 = vadd.f32 %v1587, %v2299
  %v2301 = vpop.f32.mrf.mxu0
  %v2302 = vadd.f32 %v1589, %v2301
  %2303 = vmatmul.bf16.gmra.mxu0 %v2071
  %v2304 = vpop.f32.mrf.mxu0
  %v2305 = vadd.f32 %v1592, %v2304
  %v2306 = vpop.f32.mrf.mxu0
  %v2307 = vadd.f32 %v1594, %v2306
  %2308 = vmatmul.bf16.gmra.mxu0 %v2072
  %v2309 = vpop.f32.mrf.mxu0
  %v2310 = vadd.f32 %v1597, %v2309
  %v2311 = vpop.f32.mrf.mxu0
  %v2312 = vadd.f32 %v1599, %v2311
  %2313 = vmatmul.bf16.gmra.mxu0 %v2073
  %v2314 = vpop.f32.mrf.mxu0
  %v2315 = vadd.f32 %v1602, %v2314
  %v2316 = vpop.f32.mrf.mxu0
  %v2317 = vadd.f32 %v1604, %v2316
  %2318 = vmatmul.bf16.gmra.mxu0 %v2074
  %v2319 = vpop.f32.mrf.mxu0
  %v2320 = vadd.f32 %v1607, %v2319
  %v2321 = vpop.f32.mrf.mxu0
  %v2322 = vadd.f32 %v1609, %v2321
  %2323 = vmatmul.bf16.gmra.mxu0 %v2075
  %v2324 = vpop.f32.mrf.mxu0
  %v2325 = vadd.f32 %v1612, %v2324
  %v2326 = vpop.f32.mrf.mxu0
  %v2327 = vadd.f32 %v1614, %v2326
  %2328 = vmatmul.bf16.gmra.mxu0 %v2076
  %v2329 = vpop.f32.mrf.mxu0
  %v2330 = vadd.f32 %v1617, %v2329
  %v2331 = vpop.f32.mrf.mxu0
  %v2332 = vadd.f32 %v1619, %v2331
  %2333 = vmatmul.bf16.gmra.mxu0 %v2077
  %v2334 = vpop.f32.mrf.mxu0
  %v2335 = vadd.f32 %v1622, %v2334
  %v2336 = vpop.f32.mrf.mxu0
  %v2337 = vadd.f32 %v1624, %v2336
  %2338 = vmatmul.bf16.gmra.mxu0 %v2078
  %v2339 = vpop.f32.mrf.mxu0
  %v2340 = vadd.f32 %v1627, %v2339
  %v2341 = vpop.f32.mrf.mxu0
  %v2342 = vadd.f32 %v1629, %v2341
  %2343 = vmatmul.bf16.gmra.mxu0 %v2079
  %v2344 = vpop.f32.mrf.mxu0
  %v2345 = vadd.f32 %v1632, %v2344
  %v2346 = vpop.f32.mrf.mxu0
  %v2347 = vadd.f32 %v1634, %v2346
  %2348 = vmatmul.bf16.gmra.mxu0 %v2080
  %v2349 = vpop.f32.mrf.mxu0
  %v2350 = vadd.f32 %v1637, %v2349
  %v2351 = vpop.f32.mrf.mxu0
  %v2352 = vadd.f32 %v1639, %v2351
  %2353 = vmatmul.bf16.gmra.mxu0 %v2081
  %v2354 = vpop.f32.mrf.mxu0
  %v2355 = vadd.f32 %v1642, %v2354
  %v2356 = vpop.f32.mrf.mxu0
  %v2357 = vadd.f32 %v1644, %v2356
  %2358 = vmatmul.bf16.gmra.mxu0 %v2082
  %v2359 = vpop.f32.mrf.mxu0
  %v2360 = vadd.f32 %v1647, %v2359
  %v2361 = vpop.f32.mrf.mxu0
  %v2362 = vadd.f32 %v1649, %v2361
  %2363 = vmatmul.bf16.gmra.mxu0 %v2083
  %v2364 = vpop.f32.mrf.mxu0
  %v2365 = vadd.f32 %v1652, %v2364
  %v2366 = vpop.f32.mrf.mxu0
  %v2367 = vadd.f32 %v1654, %v2366
  %2368 = vmatmul.bf16.gmra.mxu0 %v2084
  %v2369 = vpop.f32.mrf.mxu0
  %v2370 = vadd.f32 %v1657, %v2369
  %v2371 = vpop.f32.mrf.mxu0
  %v2372 = vadd.f32 %v1659, %v2371
  %2373 = vmatmul.bf16.gmra.mxu0 %v2085
  %v2374 = vpop.f32.mrf.mxu0
  %v2375 = vadd.f32 %v1662, %v2374
  %v2376 = vpop.f32.mrf.mxu0
  %v2377 = vadd.f32 %v1664, %v2376
  %2378 = vmatmul.bf16.gmra.mxu0 %v2086
  %v2379 = vpop.f32.mrf.mxu0
  %v2380 = vadd.f32 %v1667, %v2379
  %v2381 = vpop.f32.mrf.mxu0
  %v2382 = vadd.f32 %v1669, %v2381
  %2383 = vmatmul.bf16.gmra.mxu0 %v2087
  %v2384 = vpop.f32.mrf.mxu0
  %v2385 = vadd.f32 %v1672, %v2384
  %v2386 = vpop.f32.mrf.mxu0
  %v2387 = vadd.f32 %v1674, %v2386
  %2388 = vmatmul.bf16.gmra.mxu0 %v2088
  %v2389 = vpop.f32.mrf.mxu0
  %v2390 = vadd.f32 %v1677, %v2389
  %v2391 = vpop.f32.mrf.mxu0
  %v2392 = vadd.f32 %v1679, %v2391
  %2393 = vmatmul.bf16.gmra.mxu0 %v2089
  %v2394 = vpop.f32.mrf.mxu0
  %v2395 = vadd.f32 %v1682, %v2394
  %v2396 = vpop.f32.mrf.mxu0
  %v2397 = vadd.f32 %v1684, %v2396
  %2398 = vmatmul.bf16.gmra.mxu0 %v2090
  %v2399 = vpop.f32.mrf.mxu0
  %v2400 = vadd.f32 %v1687, %v2399
  %v2401 = vpop.f32.mrf.mxu0
  %v2402 = vadd.f32 %v1689, %v2401
  %2403 = vmatmul.bf16.gmra.mxu0 %v2091
  %v2404 = vpop.f32.mrf.mxu0
  %v2405 = vadd.f32 %v1692, %v2404
  %v2406 = vpop.f32.mrf.mxu0
  %v2407 = vadd.f32 %v1694, %v2406
  %2408 = vmatmul.bf16.gmra.mxu0 %v2092
  %v2409 = vpop.f32.mrf.mxu0
  %v2410 = vadd.f32 %v1697, %v2409
  %v2411 = vpop.f32.mrf.mxu0
  %v2412 = vadd.f32 %v1699, %v2411
  %2413 = vmatmul.bf16.gmra.mxu0 %v2093
  %v2414 = vpop.f32.mrf.mxu0
  %v2415 = vadd.f32 %v1702, %v2414
  %v2416 = vpop.f32.mrf.mxu0
  %v2417 = vadd.f32 %v1704, %v2416
  %2418 = vmatmul.bf16.gmra.mxu0 %v2094
  %v2419 = vpop.f32.mrf.mxu0
  %v2420 = vadd.f32 %v1707, %v2419
  %v2421 = vpop.f32.mrf.mxu0
  %v2422 = vadd.f32 %v1709, %v2421
  %2423 = vmatmul.bf16.gmra.mxu0 %v2095
  %v2424 = vpop.f32.mrf.mxu0
  %v2425 = vadd.f32 %v1712, %v2424
  %v2426 = vpop.f32.mrf.mxu0
  %v2427 = vadd.f32 %v1714, %v2426
  %2428 = vmatmul.bf16.gmra.mxu0 %v2096
  %v2429 = vpop.f32.mrf.mxu0
  %v2430 = vadd.f32 %v1717, %v2429
  %v2431 = vpop.f32.mrf.mxu0
  %v2432 = vadd.f32 %v1719, %v2431
  %2433 = vmatmul.bf16.gmra.mxu0 %v2097
  %v2434 = vpop.f32.mrf.mxu0
  %v2435 = vadd.f32 %v1722, %v2434
  %v2436 = vpop.f32.mrf.mxu0
  %v2437 = vadd.f32 %v1724, %v2436
  %2438 = vmatmul.bf16.gmra.mxu0 %v2098
  %v2439 = vpop.f32.mrf.mxu0
  %v2440 = vadd.f32 %v1727, %v2439
  %v2441 = vpop.f32.mrf.mxu0
  %v2442 = vadd.f32 %v1729, %v2441
  %2443 = vmatmul.bf16.gmra.mxu0 %v2099
  %v2444 = vpop.f32.mrf.mxu0
  %v2445 = vadd.f32 %v1732, %v2444
  %v2446 = vpop.f32.mrf.mxu0
  %v2447 = vadd.f32 %v1734, %v2446
  %2448 = vmatmul.bf16.gmra.mxu0 %v2100
  %v2449 = vpop.f32.mrf.mxu0
  %v2450 = vadd.f32 %v1737, %v2449
  %v2451 = vpop.f32.mrf.mxu0
  %v2452 = vadd.f32 %v1739, %v2451
  %2453 = vmatmul.bf16.gmra.mxu0 %v2101
  %v2454 = vpop.f32.mrf.mxu0
  %v2455 = vadd.f32 %v1742, %v2454
  %v2456 = vpop.f32.mrf.mxu0
  %v2457 = vadd.f32 %v1744, %v2456
  %2458 = vmatmul.bf16.gmra.mxu0 %v2102
  %v2459 = vpop.f32.mrf.mxu0
  %v2460 = vadd.f32 %v1747, %v2459
  %v2461 = vpop.f32.mrf.mxu0
  %v2462 = vadd.f32 %v1749, %v2461
  %2463 = vmatmul.bf16.gmra.mxu0 %v2103
  %v2464 = vpop.f32.mrf.mxu0
  %v2465 = vadd.f32 %v1752, %v2464
  %v2466 = vpop.f32.mrf.mxu0
  %v2467 = vadd.f32 %v1754, %v2466
  %2468 = vmatmul.bf16.gmra.mxu0 %v2104
  %v2469 = vpop.f32.mrf.mxu0
  %v2470 = vadd.f32 %v1757, %v2469
  %v2471 = vpop.f32.mrf.mxu0
  %v2472 = vadd.f32 %v1759, %v2471
  %2473 = vmatmul.bf16.gmra.mxu0 %v2105
  %v2474 = vpop.f32.mrf.mxu0
  %v2475 = vadd.f32 %v1762, %v2474
  %v2476 = vpop.f32.mrf.mxu0
  %v2477 = vadd.f32 %v1764, %v2476
  %2478 = vmatmul.bf16.gmra.mxu0 %v2106
  %v2479 = vpop.f32.mrf.mxu0
  %v2480 = vadd.f32 %v1767, %v2479
  %v2481 = vpop.f32.mrf.mxu0
  %v2482 = vadd.f32 %v1769, %v2481
  %2483 = vmatmul.bf16.gmra.mxu0 %v2107
  %v2484 = vpop.f32.mrf.mxu0
  %v2485 = vadd.f32 %v1772, %v2484
  %v2486 = vpop.f32.mrf.mxu0
  %v2487 = vadd.f32 %v1774, %v2486
  %2488 = vmatmul.bf16.gmra.mxu0 %v2108
  %v2489 = vpop.f32.mrf.mxu0
  %v2490 = vadd.f32 %v1777, %v2489
  %v2491 = vpop.f32.mrf.mxu0
  %v2492 = vadd.f32 %v1779, %v2491
  %2493 = vmatmul.bf16.gmra.mxu0 %v2109
  %v2494 = vpop.f32.mrf.mxu0
  %v2495 = vadd.f32 %v1782, %v2494
  %v2496 = vpop.f32.mrf.mxu0
  %v2497 = vadd.f32 %v1784, %v2496
  %2498 = vmatmul.bf16.gmra.mxu0 %v2110
  %v2499 = vpop.f32.mrf.mxu0
  %v2500 = vadd.f32 %v1787, %v2499
  %v2501 = vpop.f32.mrf.mxu0
  %v2502 = vadd.f32 %v1789, %v2501
  %2503 = vdwg.mxu0
  %2504 = vmatpush.bf16.msra.mxu0 %v1453
  %2505 = vmatpush.bf16.msra.mxu0 %v1452
  %2506 = vmatpush.bf16.msra.mxu0 %v1451
  %2507 = vmatpush.bf16.msra.mxu0 %v1450
  %2508 = vmatpush.bf16.msra.mxu0 %v1449
  %2509 = vmatpush.bf16.msra.mxu0 %v1448
  %2510 = vmatpush.bf16.msra.mxu0 %v1447
  %2511 = vmatpush.bf16.msra.mxu0 %v1446
  %2512 = vmatmul.bf16.gmra.mxu0 %v966
  %v2513 = vpop.f32.mrf.mxu0
  %v2514 = vadd.f32 0.0, %v2513
  %v2515 = vpop.f32.mrf.mxu0
  %v2516 = vadd.f32 0.0, %v2515
  %2517 = vmatmul.bf16.gmra.mxu0 %v967
  %v2518 = vpop.f32.mrf.mxu0
  %v2519 = vadd.f32 0.0, %v2518
  %v2520 = vpop.f32.mrf.mxu0
  %v2521 = vadd.f32 0.0, %v2520
  %2522 = vmatmul.bf16.gmra.mxu0 %v968
  %v2523 = vpop.f32.mrf.mxu0
  %v2524 = vadd.f32 0.0, %v2523
  %v2525 = vpop.f32.mrf.mxu0
  %v2526 = vadd.f32 0.0, %v2525
  %2527 = vmatmul.bf16.gmra.mxu0 %v969
  %v2528 = vpop.f32.mrf.mxu0
  %v2529 = vadd.f32 0.0, %v2528
  %v2530 = vpop.f32.mrf.mxu0
  %v2531 = vadd.f32 0.0, %v2530
  %2532 = vmatmul.bf16.gmra.mxu0 %v970
  %v2533 = vpop.f32.mrf.mxu0
  %v2534 = vadd.f32 0.0, %v2533
  %v2535 = vpop.f32.mrf.mxu0
  %v2536 = vadd.f32 0.0, %v2535
  %2537 = vmatmul.bf16.gmra.mxu0 %v971
  %v2538 = vpop.f32.mrf.mxu0
  %v2539 = vadd.f32 0.0, %v2538
  %v2540 = vpop.f32.mrf.mxu0
  %v2541 = vadd.f32 0.0, %v2540
  %2542 = vmatmul.bf16.gmra.mxu0 %v972
  %v2543 = vpop.f32.mrf.mxu0
  %v2544 = vadd.f32 0.0, %v2543
  %v2545 = vpop.f32.mrf.mxu0
  %v2546 = vadd.f32 0.0, %v2545
  %2547 = vmatmul.bf16.gmra.mxu0 %v973
  %v2548 = vpop.f32.mrf.mxu0
  %v2549 = vadd.f32 0.0, %v2548
  %v2550 = vpop.f32.mrf.mxu0
  %v2551 = vadd.f32 0.0, %v2550
  %2552 = vmatmul.bf16.gmra.mxu0 %v974
  %v2553 = vpop.f32.mrf.mxu0
  %v2554 = vadd.f32 0.0, %v2553
  %v2555 = vpop.f32.mrf.mxu0
  %v2556 = vadd.f32 0.0, %v2555
  %2557 = vmatmul.bf16.gmra.mxu0 %v975
  %v2558 = vpop.f32.mrf.mxu0
  %v2559 = vadd.f32 0.0, %v2558
  %v2560 = vpop.f32.mrf.mxu0
  %v2561 = vadd.f32 0.0, %v2560
  %2562 = vmatmul.bf16.gmra.mxu0 %v976
  %v2563 = vpop.f32.mrf.mxu0
  %v2564 = vadd.f32 0.0, %v2563
  %v2565 = vpop.f32.mrf.mxu0
  %v2566 = vadd.f32 0.0, %v2565
  %2567 = vmatmul.bf16.gmra.mxu0 %v977
  %v2568 = vpop.f32.mrf.mxu0
  %v2569 = vadd.f32 0.0, %v2568
  %v2570 = vpop.f32.mrf.mxu0
  %v2571 = vadd.f32 0.0, %v2570
  %2572 = vmatmul.bf16.gmra.mxu0 %v978
  %v2573 = vpop.f32.mrf.mxu0
  %v2574 = vadd.f32 0.0, %v2573
  %v2575 = vpop.f32.mrf.mxu0
  %v2576 = vadd.f32 0.0, %v2575
  %2577 = vmatmul.bf16.gmra.mxu0 %v979
  %v2578 = vpop.f32.mrf.mxu0
  %v2579 = vadd.f32 0.0, %v2578
  %v2580 = vpop.f32.mrf.mxu0
  %v2581 = vadd.f32 0.0, %v2580
  %2582 = vmatmul.bf16.gmra.mxu0 %v980
  %v2583 = vpop.f32.mrf.mxu0
  %v2584 = vadd.f32 0.0, %v2583
  %v2585 = vpop.f32.mrf.mxu0
  %v2586 = vadd.f32 0.0, %v2585
  %2587 = vmatmul.bf16.gmra.mxu0 %v981
  %v2588 = vpop.f32.mrf.mxu0
  %v2589 = vadd.f32 0.0, %v2588
  %v2590 = vpop.f32.mrf.mxu0
  %v2591 = vadd.f32 0.0, %v2590
  %2592 = vmatmul.bf16.gmra.mxu0 %v982
  %v2593 = vpop.f32.mrf.mxu0
  %v2594 = vadd.f32 0.0, %v2593
  %v2595 = vpop.f32.mrf.mxu0
  %v2596 = vadd.f32 0.0, %v2595
  %2597 = vmatmul.bf16.gmra.mxu0 %v983
  %v2598 = vpop.f32.mrf.mxu0
  %v2599 = vadd.f32 0.0, %v2598
  %v2600 = vpop.f32.mrf.mxu0
  %v2601 = vadd.f32 0.0, %v2600
  %2602 = vmatmul.bf16.gmra.mxu0 %v984
  %v2603 = vpop.f32.mrf.mxu0
  %v2604 = vadd.f32 0.0, %v2603
  %v2605 = vpop.f32.mrf.mxu0
  %v2606 = vadd.f32 0.0, %v2605
  %2607 = vmatmul.bf16.gmra.mxu0 %v985
  %v2608 = vpop.f32.mrf.mxu0
  %v2609 = vadd.f32 0.0, %v2608
  %v2610 = vpop.f32.mrf.mxu0
  %v2611 = vadd.f32 0.0, %v2610
  %2612 = vmatmul.bf16.gmra.mxu0 %v986
  %v2613 = vpop.f32.mrf.mxu0
  %v2614 = vadd.f32 0.0, %v2613
  %v2615 = vpop.f32.mrf.mxu0
  %v2616 = vadd.f32 0.0, %v2615
  %2617 = vmatmul.bf16.gmra.mxu0 %v987
  %v2618 = vpop.f32.mrf.mxu0
  %v2619 = vadd.f32 0.0, %v2618
  %v2620 = vpop.f32.mrf.mxu0
  %v2621 = vadd.f32 0.0, %v2620
  %2622 = vmatmul.bf16.gmra.mxu0 %v988
  %v2623 = vpop.f32.mrf.mxu0
  %v2624 = vadd.f32 0.0, %v2623
  %v2625 = vpop.f32.mrf.mxu0
  %v2626 = vadd.f32 0.0, %v2625
  %2627 = vmatmul.bf16.gmra.mxu0 %v989
  %v2628 = vpop.f32.mrf.mxu0
  %v2629 = vadd.f32 0.0, %v2628
  %v2630 = vpop.f32.mrf.mxu0
  %v2631 = vadd.f32 0.0, %v2630
  %2632 = vmatmul.bf16.gmra.mxu0 %v990
  %v2633 = vpop.f32.mrf.mxu0
  %v2634 = vadd.f32 0.0, %v2633
  %v2635 = vpop.f32.mrf.mxu0
  %v2636 = vadd.f32 0.0, %v2635
  %2637 = vmatmul.bf16.gmra.mxu0 %v991
  %v2638 = vpop.f32.mrf.mxu0
  %v2639 = vadd.f32 0.0, %v2638
  %v2640 = vpop.f32.mrf.mxu0
  %v2641 = vadd.f32 0.0, %v2640
  %2642 = vmatmul.bf16.gmra.mxu0 %v992
  %v2643 = vpop.f32.mrf.mxu0
  %v2644 = vadd.f32 0.0, %v2643
  %v2645 = vpop.f32.mrf.mxu0
  %v2646 = vadd.f32 0.0, %v2645
  %2647 = vmatmul.bf16.gmra.mxu0 %v993
  %v2648 = vpop.f32.mrf.mxu0
  %v2649 = vadd.f32 0.0, %v2648
  %v2650 = vpop.f32.mrf.mxu0
  %v2651 = vadd.f32 0.0, %v2650
  %2652 = vmatmul.bf16.gmra.mxu0 %v994
  %v2653 = vpop.f32.mrf.mxu0
  %v2654 = vadd.f32 0.0, %v2653
  %v2655 = vpop.f32.mrf.mxu0
  %v2656 = vadd.f32 0.0, %v2655
  %2657 = vmatmul.bf16.gmra.mxu0 %v995
  %v2658 = vpop.f32.mrf.mxu0
  %v2659 = vadd.f32 0.0, %v2658
  %v2660 = vpop.f32.mrf.mxu0
  %v2661 = vadd.f32 0.0, %v2660
  %2662 = vmatmul.bf16.gmra.mxu0 %v996
  %v2663 = vpop.f32.mrf.mxu0
  %v2664 = vadd.f32 0.0, %v2663
  %v2665 = vpop.f32.mrf.mxu0
  %v2666 = vadd.f32 0.0, %v2665
  %2667 = vmatmul.bf16.gmra.mxu0 %v997
  %v2668 = vpop.f32.mrf.mxu0
  %v2669 = vadd.f32 0.0, %v2668
  %v2670 = vpop.f32.mrf.mxu0
  %v2671 = vadd.f32 0.0, %v2670
  %2672 = vmatmul.bf16.gmra.mxu0 %v998
  %v2673 = vpop.f32.mrf.mxu0
  %v2674 = vadd.f32 0.0, %v2673
  %v2675 = vpop.f32.mrf.mxu0
  %v2676 = vadd.f32 0.0, %v2675
  %2677 = vmatmul.bf16.gmra.mxu0 %v999
  %v2678 = vpop.f32.mrf.mxu0
  %v2679 = vadd.f32 0.0, %v2678
  %v2680 = vpop.f32.mrf.mxu0
  %v2681 = vadd.f32 0.0, %v2680
  %2682 = vmatmul.bf16.gmra.mxu0 %v1000
  %v2683 = vpop.f32.mrf.mxu0
  %v2684 = vadd.f32 0.0, %v2683
  %v2685 = vpop.f32.mrf.mxu0
  %v2686 = vadd.f32 0.0, %v2685
  %2687 = vmatmul.bf16.gmra.mxu0 %v1001
  %v2688 = vpop.f32.mrf.mxu0
  %v2689 = vadd.f32 0.0, %v2688
  %v2690 = vpop.f32.mrf.mxu0
  %v2691 = vadd.f32 0.0, %v2690
  %2692 = vmatmul.bf16.gmra.mxu0 %v1002
  %v2693 = vpop.f32.mrf.mxu0
  %v2694 = vadd.f32 0.0, %v2693
  %v2695 = vpop.f32.mrf.mxu0
  %v2696 = vadd.f32 0.0, %v2695
  %2697 = vmatmul.bf16.gmra.mxu0 %v1003
  %v2698 = vpop.f32.mrf.mxu0
  %v2699 = vadd.f32 0.0, %v2698
  %v2700 = vpop.f32.mrf.mxu0
  %v2701 = vadd.f32 0.0, %v2700
  %2702 = vmatmul.bf16.gmra.mxu0 %v1004
  %v2703 = vpop.f32.mrf.mxu0
  %v2704 = vadd.f32 0.0, %v2703
  %v2705 = vpop.f32.mrf.mxu0
  %v2706 = vadd.f32 0.0, %v2705
  %2707 = vmatmul.bf16.gmra.mxu0 %v1005
  %v2708 = vpop.f32.mrf.mxu0
  %v2709 = vadd.f32 0.0, %v2708
  %v2710 = vpop.f32.mrf.mxu0
  %v2711 = vadd.f32 0.0, %v2710
  %2712 = vmatmul.bf16.gmra.mxu0 %v1006
  %v2713 = vpop.f32.mrf.mxu0
  %v2714 = vadd.f32 0.0, %v2713
  %v2715 = vpop.f32.mrf.mxu0
  %v2716 = vadd.f32 0.0, %v2715
  %2717 = vmatmul.bf16.gmra.mxu0 %v1007
  %v2718 = vpop.f32.mrf.mxu0
  %v2719 = vadd.f32 0.0, %v2718
  %v2720 = vpop.f32.mrf.mxu0
  %v2721 = vadd.f32 0.0, %v2720
  %2722 = vmatmul.bf16.gmra.mxu0 %v1008
  %v2723 = vpop.f32.mrf.mxu0
  %v2724 = vadd.f32 0.0, %v2723
  %v2725 = vpop.f32.mrf.mxu0
  %v2726 = vadd.f32 0.0, %v2725
  %2727 = vmatmul.bf16.gmra.mxu0 %v1009
  %v2728 = vpop.f32.mrf.mxu0
  %v2729 = vadd.f32 0.0, %v2728
  %v2730 = vpop.f32.mrf.mxu0
  %v2731 = vadd.f32 0.0, %v2730
  %2732 = vmatmul.bf16.gmra.mxu0 %v1010
  %v2733 = vpop.f32.mrf.mxu0
  %v2734 = vadd.f32 0.0, %v2733
  %v2735 = vpop.f32.mrf.mxu0
  %v2736 = vadd.f32 0.0, %v2735
  %2737 = vmatmul.bf16.gmra.mxu0 %v1011
  %v2738 = vpop.f32.mrf.mxu0
  %v2739 = vadd.f32 0.0, %v2738
  %v2740 = vpop.f32.mrf.mxu0
  %v2741 = vadd.f32 0.0, %v2740
  %2742 = vmatmul.bf16.gmra.mxu0 %v1012
  %v2743 = vpop.f32.mrf.mxu0
  %v2744 = vadd.f32 0.0, %v2743
  %v2745 = vpop.f32.mrf.mxu0
  %v2746 = vadd.f32 0.0, %v2745
  %2747 = vmatmul.bf16.gmra.mxu0 %v1013
  %v2748 = vpop.f32.mrf.mxu0
  %v2749 = vadd.f32 0.0, %v2748
  %v2750 = vpop.f32.mrf.mxu0
  %v2751 = vadd.f32 0.0, %v2750
  %2752 = vmatmul.bf16.gmra.mxu0 %v1014
  %v2753 = vpop.f32.mrf.mxu0
  %v2754 = vadd.f32 0.0, %v2753
  %v2755 = vpop.f32.mrf.mxu0
  %v2756 = vadd.f32 0.0, %v2755
  %2757 = vmatmul.bf16.gmra.mxu0 %v1015
  %v2758 = vpop.f32.mrf.mxu0
  %v2759 = vadd.f32 0.0, %v2758
  %v2760 = vpop.f32.mrf.mxu0
  %v2761 = vadd.f32 0.0, %v2760
  %2762 = vmatmul.bf16.gmra.mxu0 %v1016
  %v2763 = vpop.f32.mrf.mxu0
  %v2764 = vadd.f32 0.0, %v2763
  %v2765 = vpop.f32.mrf.mxu0
  %v2766 = vadd.f32 0.0, %v2765
  %2767 = vmatmul.bf16.gmra.mxu0 %v1017
  %v2768 = vpop.f32.mrf.mxu0
  %v2769 = vadd.f32 0.0, %v2768
  %v2770 = vpop.f32.mrf.mxu0
  %v2771 = vadd.f32 0.0, %v2770
  %2772 = vmatmul.bf16.gmra.mxu0 %v1018
  %v2773 = vpop.f32.mrf.mxu0
  %v2774 = vadd.f32 0.0, %v2773
  %v2775 = vpop.f32.mrf.mxu0
  %v2776 = vadd.f32 0.0, %v2775
  %2777 = vmatmul.bf16.gmra.mxu0 %v1019
  %v2778 = vpop.f32.mrf.mxu0
  %v2779 = vadd.f32 0.0, %v2778
  %v2780 = vpop.f32.mrf.mxu0
  %v2781 = vadd.f32 0.0, %v2780
  %2782 = vmatmul.bf16.gmra.mxu0 %v1020
  %v2783 = vpop.f32.mrf.mxu0
  %v2784 = vadd.f32 0.0, %v2783
  %v2785 = vpop.f32.mrf.mxu0
  %v2786 = vadd.f32 0.0, %v2785
  %2787 = vmatmul.bf16.gmra.mxu0 %v1021
  %v2788 = vpop.f32.mrf.mxu0
  %v2789 = vadd.f32 0.0, %v2788
  %v2790 = vpop.f32.mrf.mxu0
  %v2791 = vadd.f32 0.0, %v2790
  %2792 = vmatmul.bf16.gmra.mxu0 %v1022
  %v2793 = vpop.f32.mrf.mxu0
  %v2794 = vadd.f32 0.0, %v2793
  %v2795 = vpop.f32.mrf.mxu0
  %v2796 = vadd.f32 0.0, %v2795
  %2797 = vmatmul.bf16.gmra.mxu0 %v1023
  %v2798 = vpop.f32.mrf.mxu0
  %v2799 = vadd.f32 0.0, %v2798
  %v2800 = vpop.f32.mrf.mxu0
  %v2801 = vadd.f32 0.0, %v2800
  %2802 = vmatmul.bf16.gmra.mxu0 %v1024
  %v2803 = vpop.f32.mrf.mxu0
  %v2804 = vadd.f32 0.0, %v2803
  %v2805 = vpop.f32.mrf.mxu0
  %v2806 = vadd.f32 0.0, %v2805
  %2807 = vmatmul.bf16.gmra.mxu0 %v1025
  %v2808 = vpop.f32.mrf.mxu0
  %v2809 = vadd.f32 0.0, %v2808
  %v2810 = vpop.f32.mrf.mxu0
  %v2811 = vadd.f32 0.0, %v2810
  %2812 = vmatmul.bf16.gmra.mxu0 %v1026
  %v2813 = vpop.f32.mrf.mxu0
  %v2814 = vadd.f32 0.0, %v2813
  %v2815 = vpop.f32.mrf.mxu0
  %v2816 = vadd.f32 0.0, %v2815
  %2817 = vmatmul.bf16.gmra.mxu0 %v1027
  %v2818 = vpop.f32.mrf.mxu0
  %v2819 = vadd.f32 0.0, %v2818
  %v2820 = vpop.f32.mrf.mxu0
  %v2821 = vadd.f32 0.0, %v2820
  %2822 = vmatmul.bf16.gmra.mxu0 %v1028
  %v2823 = vpop.f32.mrf.mxu0
  %v2824 = vadd.f32 0.0, %v2823
  %v2825 = vpop.f32.mrf.mxu0
  %v2826 = vadd.f32 0.0, %v2825
  %2827 = vmatmul.bf16.gmra.mxu0 %v1029
  %v2828 = vpop.f32.mrf.mxu0
  %v2829 = vadd.f32 0.0, %v2828
  %v2830 = vpop.f32.mrf.mxu0
  %v2831 = vadd.f32 0.0, %v2830
  %2832 = vdwg.mxu0
  %v2833 = vadd.f32 %v2185, %v2514
  %v2834 = vadd.f32 %v2187, %v2516
  %v2835 = vadd.f32 %v2190, %v2519
  %v2836 = vadd.f32 %v2192, %v2521
  %v2837 = vadd.f32 %v2195, %v2524
  %v2838 = vadd.f32 %v2197, %v2526
  %v2839 = vadd.f32 %v2200, %v2529
  %v2840 = vadd.f32 %v2202, %v2531
  %v2841 = vadd.f32 %v2205, %v2534
  %v2842 = vadd.f32 %v2207, %v2536
  %v2843 = vadd.f32 %v2210, %v2539
  %v2844 = vadd.f32 %v2212, %v2541
  %v2845 = vadd.f32 %v2215, %v2544
  %v2846 = vadd.f32 %v2217, %v2546
  %v2847 = vadd.f32 %v2220, %v2549
  %v2848 = vadd.f32 %v2222, %v2551
  %v2849 = vadd.f32 %v2225, %v2554
  %v2850 = vadd.f32 %v2227, %v2556
  %v2851 = vadd.f32 %v2230, %v2559
  %v2852 = vadd.f32 %v2232, %v2561
  %v2853 = vadd.f32 %v2235, %v2564
  %v2854 = vadd.f32 %v2237, %v2566
  %v2855 = vadd.f32 %v2240, %v2569
  %v2856 = vadd.f32 %v2242, %v2571
  %v2857 = vadd.f32 %v2245, %v2574
  %v2858 = vadd.f32 %v2247, %v2576
  %v2859 = vadd.f32 %v2250, %v2579
  %v2860 = vadd.f32 %v2252, %v2581
  %v2861 = vadd.f32 %v2255, %v2584
  %v2862 = vadd.f32 %v2257, %v2586
  %v2863 = vadd.f32 %v2260, %v2589
  %v2864 = vadd.f32 %v2262, %v2591
  %v2865 = vadd.f32 %v2265, %v2594
  %v2866 = vadd.f32 %v2267, %v2596
  %v2867 = vadd.f32 %v2270, %v2599
  %v2868 = vadd.f32 %v2272, %v2601
  %v2869 = vadd.f32 %v2275, %v2604
  %v2870 = vadd.f32 %v2277, %v2606
  %v2871 = vadd.f32 %v2280, %v2609
  %v2872 = vadd.f32 %v2282, %v2611
  %v2873 = vadd.f32 %v2285, %v2614
  %v2874 = vadd.f32 %v2287, %v2616
  %v2875 = vadd.f32 %v2290, %v2619
  %v2876 = vadd.f32 %v2292, %v2621
  %v2877 = vadd.f32 %v2295, %v2624
  %v2878 = vadd.f32 %v2297, %v2626
  %v2879 = vadd.f32 %v2300, %v2629
  %v2880 = vadd.f32 %v2302, %v2631
  %v2881 = vadd.f32 %v2305, %v2634
  %v2882 = vadd.f32 %v2307, %v2636
  %v2883 = vadd.f32 %v2310, %v2639
  %v2884 = vadd.f32 %v2312, %v2641
  %v2885 = vadd.f32 %v2315, %v2644
  %v2886 = vadd.f32 %v2317, %v2646
  %v2887 = vadd.f32 %v2320, %v2649
  %v2888 = vadd.f32 %v2322, %v2651
  %v2889 = vadd.f32 %v2325, %v2654
  %v2890 = vadd.f32 %v2327, %v2656
  %v2891 = vadd.f32 %v2330, %v2659
  %v2892 = vadd.f32 %v2332, %v2661
  %v2893 = vadd.f32 %v2335, %v2664
  %v2894 = vadd.f32 %v2337, %v2666
  %v2895 = vadd.f32 %v2340, %v2669
  %v2896 = vadd.f32 %v2342, %v2671
  %v2897 = vadd.f32 %v2345, %v2674
  %v2898 = vadd.f32 %v2347, %v2676
  %v2899 = vadd.f32 %v2350, %v2679
  %v2900 = vadd.f32 %v2352, %v2681
  %v2901 = vadd.f32 %v2355, %v2684
  %v2902 = vadd.f32 %v2357, %v2686
  %v2903 = vadd.f32 %v2360, %v2689
  %v2904 = vadd.f32 %v2362, %v2691
  %v2905 = vadd.f32 %v2365, %v2694
  %v2906 = vadd.f32 %v2367, %v2696
  %v2907 = vadd.f32 %v2370, %v2699
  %v2908 = vadd.f32 %v2372, %v2701
  %v2909 = vadd.f32 %v2375, %v2704
  %v2910 = vadd.f32 %v2377, %v2706
  %v2911 = vadd.f32 %v2380, %v2709
  %v2912 = vadd.f32 %v2382, %v2711
  %v2913 = vadd.f32 %v2385, %v2714
  %v2914 = vadd.f32 %v2387, %v2716
  %v2915 = vadd.f32 %v2390, %v2719
  %v2916 = vadd.f32 %v2392, %v2721
  %v2917 = vadd.f32 %v2395, %v2724
  %v2918 = vadd.f32 %v2397, %v2726
  %v2919 = vadd.f32 %v2400, %v2729
  %v2920 = vadd.f32 %v2402, %v2731
  %v2921 = vadd.f32 %v2405, %v2734
  %v2922 = vadd.f32 %v2407, %v2736
  %v2923 = vadd.f32 %v2410, %v2739
  %v2924 = vadd.f32 %v2412, %v2741
  %v2925 = vadd.f32 %v2415, %v2744
  %v2926 = vadd.f32 %v2417, %v2746
  %v2927 = vadd.f32 %v2420, %v2749
  %v2928 = vadd.f32 %v2422, %v2751
  %v2929 = vadd.f32 %v2425, %v2754
  %v2930 = vadd.f32 %v2427, %v2756
  %v2931 = vadd.f32 %v2430, %v2759
  %v2932 = vadd.f32 %v2432, %v2761
  %v2933 = vadd.f32 %v2435, %v2764
  %v2934 = vadd.f32 %v2437, %v2766
  %v2935 = vadd.f32 %v2440, %v2769
  %v2936 = vadd.f32 %v2442, %v2771
  %v2937 = vadd.f32 %v2445, %v2774
  %v2938 = vadd.f32 %v2447, %v2776
  %v2939 = vadd.f32 %v2450, %v2779
  %v2940 = vadd.f32 %v2452, %v2781
  %v2941 = vadd.f32 %v2455, %v2784
  %v2942 = vadd.f32 %v2457, %v2786
  %v2943 = vadd.f32 %v2460, %v2789
  %v2944 = vadd.f32 %v2462, %v2791
  %v2945 = vadd.f32 %v2465, %v2794
  %v2946 = vadd.f32 %v2467, %v2796
  %v2947 = vadd.f32 %v2470, %v2799
  %v2948 = vadd.f32 %v2472, %v2801
  %v2949 = vadd.f32 %v2475, %v2804
  %v2950 = vadd.f32 %v2477, %v2806
  %v2951 = vadd.f32 %v2480, %v2809
  %v2952 = vadd.f32 %v2482, %v2811
  %v2953 = vadd.f32 %v2485, %v2814
  %v2954 = vadd.f32 %v2487, %v2816
  %v2955 = vadd.f32 %v2490, %v2819
  %v2956 = vadd.f32 %v2492, %v2821
  %v2957 = vadd.f32 %v2495, %v2824
  %v2958 = vadd.f32 %v2497, %v2826
  %v2959 = vadd.f32 %v2500, %v2829
  %v2960 = vadd.f32 %v2502, %v2831
  %2961 = vrot.lane.b32.xlu0 %v2833, 64
  %v2962 = vpop.permute.xlu0 %2961
  %2963 = vrot.lane.b32.xlu0 %v2834, 64
  %v2964 = vpop.permute.xlu0 %2963
  %2965 = vrot.lane.b32.xlu0 %v2835, 64
  %v2966 = vpop.permute.xlu0 %2965
  %2967 = vrot.lane.b32.xlu0 %v2836, 64
  %v2968 = vpop.permute.xlu0 %2967
  %2969 = vrot.lane.b32.xlu0 %v2837, 64
  %v2970 = vpop.permute.xlu0 %2969
  %2971 = vrot.lane.b32.xlu0 %v2838, 64
  %v2972 = vpop.permute.xlu0 %2971
  %2973 = vrot.lane.b32.xlu0 %v2839, 64
  %v2974 = vpop.permute.xlu0 %2973
  %2975 = vrot.lane.b32.xlu0 %v2840, 64
  %v2976 = vpop.permute.xlu0 %2975
  %2977 = vrot.lane.b32.xlu0 %v2841, 64
  %v2978 = vpop.permute.xlu0 %2977
  %2979 = vrot.lane.b32.xlu0 %v2842, 64
  %v2980 = vpop.permute.xlu0 %2979
  %2981 = vrot.lane.b32.xlu0 %v2843, 64
  %v2982 = vpop.permute.xlu0 %2981
  %2983 = vrot.lane.b32.xlu0 %v2844, 64
  %v2984 = vpop.permute.xlu0 %2983
  %2985 = vrot.lane.b32.xlu0 %v2845, 64
  %v2986 = vpop.permute.xlu0 %2985
  %2987 = vrot.lane.b32.xlu0 %v2846, 64
  %v2988 = vpop.permute.xlu0 %2987
  %2989 = vrot.lane.b32.xlu0 %v2847, 64
  %v2990 = vpop.permute.xlu0 %2989
  %2991 = vrot.lane.b32.xlu0 %v2848, 64
  %v2992 = vpop.permute.xlu0 %2991
  %2993 = vrot.lane.b32.xlu0 %v2849, 64
  %v2994 = vpop.permute.xlu0 %2993
  %2995 = vrot.lane.b32.xlu0 %v2850, 64
  %v2996 = vpop.permute.xlu0 %2995
  %2997 = vrot.lane.b32.xlu0 %v2851, 64
  %v2998 = vpop.permute.xlu0 %2997
  %2999 = vrot.lane.b32.xlu0 %v2852, 64
  %v3000 = vpop.permute.xlu0 %2999
  %3001 = vrot.lane.b32.xlu0 %v2853, 64
  %v3002 = vpop.permute.xlu0 %3001
  %3003 = vrot.lane.b32.xlu0 %v2854, 64
  %v3004 = vpop.permute.xlu0 %3003
  %3005 = vrot.lane.b32.xlu0 %v2855, 64
  %v3006 = vpop.permute.xlu0 %3005
  %3007 = vrot.lane.b32.xlu0 %v2856, 64
  %v3008 = vpop.permute.xlu0 %3007
  %3009 = vrot.lane.b32.xlu0 %v2857, 64
  %v3010 = vpop.permute.xlu0 %3009
  %3011 = vrot.lane.b32.xlu0 %v2858, 64
  %v3012 = vpop.permute.xlu0 %3011
  %3013 = vrot.lane.b32.xlu0 %v2859, 64
  %v3014 = vpop.permute.xlu0 %3013
  %3015 = vrot.lane.b32.xlu0 %v2860, 64
  %v3016 = vpop.permute.xlu0 %3015
  %3017 = vrot.lane.b32.xlu0 %v2861, 64
  %v3018 = vpop.permute.xlu0 %3017
  %3019 = vrot.lane.b32.xlu0 %v2862, 64
  %v3020 = vpop.permute.xlu0 %3019
  %3021 = vrot.lane.b32.xlu0 %v2863, 64
  %v3022 = vpop.permute.xlu0 %3021
  %3023 = vrot.lane.b32.xlu0 %v2864, 64
  %v3024 = vpop.permute.xlu0 %3023
  %3025 = vrot.lane.b32.xlu0 %v2865, 64
  %v3026 = vpop.permute.xlu0 %3025
  %3027 = vrot.lane.b32.xlu0 %v2866, 64
  %v3028 = vpop.permute.xlu0 %3027
  %3029 = vrot.lane.b32.xlu0 %v2867, 64
  %v3030 = vpop.permute.xlu0 %3029
  %3031 = vrot.lane.b32.xlu0 %v2868, 64
  %v3032 = vpop.permute.xlu0 %3031
  %3033 = vrot.lane.b32.xlu0 %v2869, 64
  %v3034 = vpop.permute.xlu0 %3033
  %3035 = vrot.lane.b32.xlu0 %v2870, 64
  %v3036 = vpop.permute.xlu0 %3035
  %3037 = vrot.lane.b32.xlu0 %v2871, 64
  %v3038 = vpop.permute.xlu0 %3037
  %3039 = vrot.lane.b32.xlu0 %v2872, 64
  %v3040 = vpop.permute.xlu0 %3039
  %3041 = vrot.lane.b32.xlu0 %v2873, 64
  %v3042 = vpop.permute.xlu0 %3041
  %3043 = vrot.lane.b32.xlu0 %v2874, 64
  %v3044 = vpop.permute.xlu0 %3043
  %3045 = vrot.lane.b32.xlu0 %v2875, 64
  %v3046 = vpop.permute.xlu0 %3045
  %3047 = vrot.lane.b32.xlu0 %v2876, 64
  %v3048 = vpop.permute.xlu0 %3047
  %3049 = vrot.lane.b32.xlu0 %v2877, 64
  %v3050 = vpop.permute.xlu0 %3049
  %3051 = vrot.lane.b32.xlu0 %v2878, 64
  %v3052 = vpop.permute.xlu0 %3051
  %3053 = vrot.lane.b32.xlu0 %v2879, 64
  %v3054 = vpop.permute.xlu0 %3053
  %3055 = vrot.lane.b32.xlu0 %v2880, 64
  %v3056 = vpop.permute.xlu0 %3055
  %3057 = vrot.lane.b32.xlu0 %v2881, 64
  %v3058 = vpop.permute.xlu0 %3057
  %3059 = vrot.lane.b32.xlu0 %v2882, 64
  %v3060 = vpop.permute.xlu0 %3059
  %3061 = vrot.lane.b32.xlu0 %v2883, 64
  %v3062 = vpop.permute.xlu0 %3061
  %3063 = vrot.lane.b32.xlu0 %v2884, 64
  %v3064 = vpop.permute.xlu0 %3063
  %3065 = vrot.lane.b32.xlu0 %v2885, 64
  %v3066 = vpop.permute.xlu0 %3065
  %3067 = vrot.lane.b32.xlu0 %v2886, 64
  %v3068 = vpop.permute.xlu0 %3067
  %3069 = vrot.lane.b32.xlu0 %v2887, 64
  %v3070 = vpop.permute.xlu0 %3069
  %3071 = vrot.lane.b32.xlu0 %v2888, 64
  %v3072 = vpop.permute.xlu0 %3071
  %3073 = vrot.lane.b32.xlu0 %v2889, 64
  %v3074 = vpop.permute.xlu0 %3073
  %3075 = vrot.lane.b32.xlu0 %v2890, 64
  %v3076 = vpop.permute.xlu0 %3075
  %3077 = vrot.lane.b32.xlu0 %v2891, 64
  %v3078 = vpop.permute.xlu0 %3077
  %3079 = vrot.lane.b32.xlu0 %v2892, 64
  %v3080 = vpop.permute.xlu0 %3079
  %3081 = vrot.lane.b32.xlu0 %v2893, 64
  %v3082 = vpop.permute.xlu0 %3081
  %3083 = vrot.lane.b32.xlu0 %v2894, 64
  %v3084 = vpop.permute.xlu0 %3083
  %3085 = vrot.lane.b32.xlu0 %v2895, 64
  %v3086 = vpop.permute.xlu0 %3085
  %3087 = vrot.lane.b32.xlu0 %v2896, 64
  %v3088 = vpop.permute.xlu0 %3087
  %3089 = vrot.lane.b32.xlu0 %v2897, 64
  %v3090 = vpop.permute.xlu0 %3089
  %3091 = vrot.lane.b32.xlu0 %v2898, 64
  %v3092 = vpop.permute.xlu0 %3091
  %3093 = vrot.lane.b32.xlu0 %v2899, 64
  %v3094 = vpop.permute.xlu0 %3093
  %3095 = vrot.lane.b32.xlu0 %v2900, 64
  %v3096 = vpop.permute.xlu0 %3095
  %3097 = vrot.lane.b32.xlu0 %v2901, 64
  %v3098 = vpop.permute.xlu0 %3097
  %3099 = vrot.lane.b32.xlu0 %v2902, 64
  %v3100 = vpop.permute.xlu0 %3099
  %3101 = vrot.lane.b32.xlu0 %v2903, 64
  %v3102 = vpop.permute.xlu0 %3101
  %3103 = vrot.lane.b32.xlu0 %v2904, 64
  %v3104 = vpop.permute.xlu0 %3103
  %3105 = vrot.lane.b32.xlu0 %v2905, 64
  %v3106 = vpop.permute.xlu0 %3105
  %3107 = vrot.lane.b32.xlu0 %v2906, 64
  %v3108 = vpop.permute.xlu0 %3107
  %3109 = vrot.lane.b32.xlu0 %v2907, 64
  %v3110 = vpop.permute.xlu0 %3109
  %3111 = vrot.lane.b32.xlu0 %v2908, 64
  %v3112 = vpop.permute.xlu0 %3111
  %3113 = vrot.lane.b32.xlu0 %v2909, 64
  %v3114 = vpop.permute.xlu0 %3113
  %3115 = vrot.lane.b32.xlu0 %v2910, 64
  %v3116 = vpop.permute.xlu0 %3115
  %3117 = vrot.lane.b32.xlu0 %v2911, 64
  %v3118 = vpop.permute.xlu0 %3117
  %3119 = vrot.lane.b32.xlu0 %v2912, 64
  %v3120 = vpop.permute.xlu0 %3119
  %3121 = vrot.lane.b32.xlu0 %v2913, 64
  %v3122 = vpop.permute.xlu0 %3121
  %3123 = vrot.lane.b32.xlu0 %v2914, 64
  %v3124 = vpop.permute.xlu0 %3123
  %3125 = vrot.lane.b32.xlu0 %v2915, 64
  %v3126 = vpop.permute.xlu0 %3125
  %3127 = vrot.lane.b32.xlu0 %v2916, 64
  %v3128 = vpop.permute.xlu0 %3127
  %3129 = vrot.lane.b32.xlu0 %v2917, 64
  %v3130 = vpop.permute.xlu0 %3129
  %3131 = vrot.lane.b32.xlu0 %v2918, 64
  %v3132 = vpop.permute.xlu0 %3131
  %3133 = vrot.lane.b32.xlu0 %v2919, 64
  %v3134 = vpop.permute.xlu0 %3133
  %3135 = vrot.lane.b32.xlu0 %v2920, 64
  %v3136 = vpop.permute.xlu0 %3135
  %3137 = vrot.lane.b32.xlu0 %v2921, 64
  %v3138 = vpop.permute.xlu0 %3137
  %3139 = vrot.lane.b32.xlu0 %v2922, 64
  %v3140 = vpop.permute.xlu0 %3139
  %3141 = vrot.lane.b32.xlu0 %v2923, 64
  %v3142 = vpop.permute.xlu0 %3141
  %3143 = vrot.lane.b32.xlu0 %v2924, 64
  %v3144 = vpop.permute.xlu0 %3143
  %3145 = vrot.lane.b32.xlu0 %v2925, 64
  %v3146 = vpop.permute.xlu0 %3145
  %3147 = vrot.lane.b32.xlu0 %v2926, 64
  %v3148 = vpop.permute.xlu0 %3147
  %3149 = vrot.lane.b32.xlu0 %v2927, 64
  %v3150 = vpop.permute.xlu0 %3149
  %3151 = vrot.lane.b32.xlu0 %v2928, 64
  %v3152 = vpop.permute.xlu0 %3151
  %3153 = vrot.lane.b32.xlu0 %v2929, 64
  %v3154 = vpop.permute.xlu0 %3153
  %3155 = vrot.lane.b32.xlu0 %v2930, 64
  %v3156 = vpop.permute.xlu0 %3155
  %3157 = vrot.lane.b32.xlu0 %v2931, 64
  %v3158 = vpop.permute.xlu0 %3157
  %3159 = vrot.lane.b32.xlu0 %v2932, 64
  %v3160 = vpop.permute.xlu0 %3159
  %3161 = vrot.lane.b32.xlu0 %v2933, 64
  %v3162 = vpop.permute.xlu0 %3161
  %3163 = vrot.lane.b32.xlu0 %v2934, 64
  %v3164 = vpop.permute.xlu0 %3163
  %3165 = vrot.lane.b32.xlu0 %v2935, 64
  %v3166 = vpop.permute.xlu0 %3165
  %3167 = vrot.lane.b32.xlu0 %v2936, 64
  %v3168 = vpop.permute.xlu0 %3167
  %3169 = vrot.lane.b32.xlu0 %v2937, 64
  %v3170 = vpop.permute.xlu0 %3169
  %3171 = vrot.lane.b32.xlu0 %v2938, 64
  %v3172 = vpop.permute.xlu0 %3171
  %3173 = vrot.lane.b32.xlu0 %v2939, 64
  %v3174 = vpop.permute.xlu0 %3173
  %3175 = vrot.lane.b32.xlu0 %v2940, 64
  %v3176 = vpop.permute.xlu0 %3175
  %3177 = vrot.lane.b32.xlu0 %v2941, 64
  %v3178 = vpop.permute.xlu0 %3177
  %3179 = vrot.lane.b32.xlu0 %v2942, 64
  %v3180 = vpop.permute.xlu0 %3179
  %3181 = vrot.lane.b32.xlu0 %v2943, 64
  %v3182 = vpop.permute.xlu0 %3181
  %3183 = vrot.lane.b32.xlu0 %v2944, 64
  %v3184 = vpop.permute.xlu0 %3183
  %3185 = vrot.lane.b32.xlu0 %v2945, 64
  %v3186 = vpop.permute.xlu0 %3185
  %3187 = vrot.lane.b32.xlu0 %v2946, 64
  %v3188 = vpop.permute.xlu0 %3187
  %3189 = vrot.lane.b32.xlu0 %v2947, 64
  %v3190 = vpop.permute.xlu0 %3189
  %3191 = vrot.lane.b32.xlu0 %v2948, 64
  %v3192 = vpop.permute.xlu0 %3191
  %3193 = vrot.lane.b32.xlu0 %v2949, 64
  %v3194 = vpop.permute.xlu0 %3193
  %3195 = vrot.lane.b32.xlu0 %v2950, 64
  %v3196 = vpop.permute.xlu0 %3195
  %3197 = vrot.lane.b32.xlu0 %v2951, 64
  %v3198 = vpop.permute.xlu0 %3197
  %3199 = vrot.lane.b32.xlu0 %v2952, 64
  %v3200 = vpop.permute.xlu0 %3199
  %3201 = vrot.lane.b32.xlu0 %v2953, 64
  %v3202 = vpop.permute.xlu0 %3201
  %3203 = vrot.lane.b32.xlu0 %v2954, 64
  %v3204 = vpop.permute.xlu0 %3203
  %3205 = vrot.lane.b32.xlu0 %v2955, 64
  %v3206 = vpop.permute.xlu0 %3205
  %3207 = vrot.lane.b32.xlu0 %v2956, 64
  %v3208 = vpop.permute.xlu0 %3207
  %3209 = vrot.lane.b32.xlu0 %v2957, 64
  %v3210 = vpop.permute.xlu0 %3209
  %3211 = vrot.lane.b32.xlu0 %v2958, 64
  %v3212 = vpop.permute.xlu0 %3211
  %3213 = vrot.lane.b32.xlu0 %v2959, 64
  %v3214 = vpop.permute.xlu0 %3213
  %3215 = vrot.lane.b32.xlu0 %v2960, 64
  %v3216 = vpop.permute.xlu0 %3215
  %v3217 = vmul.f32 %v2833, %v22
  %v3218 = vmul.f32 %v2834, %v23
  %v3219 = vmul.f32 %v2835, %v24
  %v3220 = vmul.f32 %v2836, %v25
  %v3221 = vmul.f32 %v2837, %v26
  %v3222 = vmul.f32 %v2838, %v27
  %v3223 = vmul.f32 %v2839, %v28
  %v3224 = vmul.f32 %v2840, %v29
  %v3225 = vmul.f32 %v2841, %v30
  %v3226 = vmul.f32 %v2842, %v31
  %v3227 = vmul.f32 %v2843, %v32
  %v3228 = vmul.f32 %v2844, %v33
  %v3229 = vmul.f32 %v2845, %v34
  %v3230 = vmul.f32 %v2846, %v35
  %v3231 = vmul.f32 %v2847, %v36
  %v3232 = vmul.f32 %v2848, %v37
  %v3233 = vmul.f32 %v2962, %v38
  %v3234 = vmul.f32 %v2964, %v39
  %v3235 = vmul.f32 %v2966, %v40
  %v3236 = vmul.f32 %v2968, %v41
  %v3237 = vmul.f32 %v2970, %v42
  %v3238 = vmul.f32 %v2972, %v43
  %v3239 = vmul.f32 %v2974, %v44
  %v3240 = vmul.f32 %v2976, %v45
  %v3241 = vmul.f32 %v2978, %v46
  %v3242 = vmul.f32 %v2980, %v47
  %v3243 = vmul.f32 %v2982, %v48
  %v3244 = vmul.f32 %v2984, %v49
  %v3245 = vmul.f32 %v2986, %v50
  %v3246 = vmul.f32 %v2988, %v51
  %v3247 = vmul.f32 %v2990, %v52
  %v3248 = vmul.f32 %v2992, %v53
  %v3249 = vadd.f32 %v3217, %v3233
  %v3250 = vadd.f32 %v3218, %v3234
  %v3251 = vadd.f32 %v3219, %v3235
  %v3252 = vadd.f32 %v3220, %v3236
  %v3253 = vadd.f32 %v3221, %v3237
  %v3254 = vadd.f32 %v3222, %v3238
  %v3255 = vadd.f32 %v3223, %v3239
  %v3256 = vadd.f32 %v3224, %v3240
  %v3257 = vadd.f32 %v3225, %v3241
  %v3258 = vadd.f32 %v3226, %v3242
  %v3259 = vadd.f32 %v3227, %v3243
  %v3260 = vadd.f32 %v3228, %v3244
  %v3261 = vadd.f32 %v3229, %v3245
  %v3262 = vadd.f32 %v3230, %v3246
  %v3263 = vadd.f32 %v3231, %v3247
  %v3264 = vadd.f32 %v3232, %v3248
  %3265 = vst [vmem:[%s5] sm:$0xff] %v3249
  %3266 = vst [vmem:[%s5 + $0x8] sm:$0xff] %v3250
  %3267 = vst [vmem:[%s5 + $0x10] sm:$0xff] %v3251
  %3268 = vst [vmem:[%s5 + $0x18] sm:$0xff] %v3252
  %3269 = vst [vmem:[%s5 + $0x20] sm:$0xff] %v3253
  %3270 = vst [vmem:[%s5 + $0x28] sm:$0xff] %v3254
  %3271 = vst [vmem:[%s5 + $0x30] sm:$0xff] %v3255
  %3272 = vst [vmem:[%s5 + $0x38] sm:$0xff] %v3256
  %3273 = vst [vmem:[%s5 + $0x40] sm:$0xff] %v3257
  %3274 = vst [vmem:[%s5 + $0x48] sm:$0xff] %v3258
  %3275 = vst [vmem:[%s5 + $0x50] sm:$0xff] %v3259
  %3276 = vst [vmem:[%s5 + $0x58] sm:$0xff] %v3260
  %3277 = vst [vmem:[%s5 + $0x60] sm:$0xff] %v3261
  %3278 = vst [vmem:[%s5 + $0x68] sm:$0xff] %v3262
  %3279 = vst [vmem:[%s5 + $0x70] sm:$0xff] %v3263
  %3280 = vst [vmem:[%s5 + $0x78] sm:$0xff] %v3264
  %v3281 = vmul.f32 %v2849, %v22
  %v3282 = vmul.f32 %v2850, %v23
  %v3283 = vmul.f32 %v2851, %v24
  %v3284 = vmul.f32 %v2852, %v25
  %v3285 = vmul.f32 %v2853, %v26
  %v3286 = vmul.f32 %v2854, %v27
  %v3287 = vmul.f32 %v2855, %v28
  %v3288 = vmul.f32 %v2856, %v29
  %v3289 = vmul.f32 %v2857, %v30
  %v3290 = vmul.f32 %v2858, %v31
  %v3291 = vmul.f32 %v2859, %v32
  %v3292 = vmul.f32 %v2860, %v33
  %v3293 = vmul.f32 %v2861, %v34
  %v3294 = vmul.f32 %v2862, %v35
  %v3295 = vmul.f32 %v2863, %v36
  %v3296 = vmul.f32 %v2864, %v37
  %v3297 = vmul.f32 %v2994, %v38
  %v3298 = vmul.f32 %v2996, %v39
  %v3299 = vmul.f32 %v2998, %v40
  %v3300 = vmul.f32 %v3000, %v41
  %v3301 = vmul.f32 %v3002, %v42
  %v3302 = vmul.f32 %v3004, %v43
  %v3303 = vmul.f32 %v3006, %v44
  %v3304 = vmul.f32 %v3008, %v45
  %v3305 = vmul.f32 %v3010, %v46
  %v3306 = vmul.f32 %v3012, %v47
  %v3307 = vmul.f32 %v3014, %v48
  %v3308 = vmul.f32 %v3016, %v49
  %v3309 = vmul.f32 %v3018, %v50
  %v3310 = vmul.f32 %v3020, %v51
  %v3311 = vmul.f32 %v3022, %v52
  %v3312 = vmul.f32 %v3024, %v53
  %v3313 = vadd.f32 %v3281, %v3297
  %v3314 = vadd.f32 %v3282, %v3298
  %v3315 = vadd.f32 %v3283, %v3299
  %v3316 = vadd.f32 %v3284, %v3300
  %v3317 = vadd.f32 %v3285, %v3301
  %v3318 = vadd.f32 %v3286, %v3302
  %v3319 = vadd.f32 %v3287, %v3303
  %v3320 = vadd.f32 %v3288, %v3304
  %v3321 = vadd.f32 %v3289, %v3305
  %v3322 = vadd.f32 %v3290, %v3306
  %v3323 = vadd.f32 %v3291, %v3307
  %v3324 = vadd.f32 %v3292, %v3308
  %v3325 = vadd.f32 %v3293, %v3309
  %v3326 = vadd.f32 %v3294, %v3310
  %v3327 = vadd.f32 %v3295, %v3311
  %v3328 = vadd.f32 %v3296, %v3312
  %s3329 = scalar_lea.vmem %s5, 128
  %3330 = vst [vmem:[%s3329] sm:$0xff] %v3313
  %3331 = vst [vmem:[%s3329 + $0x8] sm:$0xff] %v3314
  %3332 = vst [vmem:[%s3329 + $0x10] sm:$0xff] %v3315
  %3333 = vst [vmem:[%s3329 + $0x18] sm:$0xff] %v3316
  %3334 = vst [vmem:[%s3329 + $0x20] sm:$0xff] %v3317
  %3335 = vst [vmem:[%s3329 + $0x28] sm:$0xff] %v3318
  %3336 = vst [vmem:[%s3329 + $0x30] sm:$0xff] %v3319
  %3337 = vst [vmem:[%s3329 + $0x38] sm:$0xff] %v3320
  %3338 = vst [vmem:[%s3329 + $0x40] sm:$0xff] %v3321
  %3339 = vst [vmem:[%s3329 + $0x48] sm:$0xff] %v3322
  %3340 = vst [vmem:[%s3329 + $0x50] sm:$0xff] %v3323
  %3341 = vst [vmem:[%s3329 + $0x58] sm:$0xff] %v3324
  %3342 = vst [vmem:[%s3329 + $0x60] sm:$0xff] %v3325
  %3343 = vst [vmem:[%s3329 + $0x68] sm:$0xff] %v3326
  %3344 = vst [vmem:[%s3329 + $0x70] sm:$0xff] %v3327
  %3345 = vst [vmem:[%s3329 + $0x78] sm:$0xff] %v3328
  %v3346 = vmul.f32 %v2865, %v22
  %v3347 = vmul.f32 %v2866, %v23
  %v3348 = vmul.f32 %v2867, %v24
  %v3349 = vmul.f32 %v2868, %v25
  %v3350 = vmul.f32 %v2869, %v26
  %v3351 = vmul.f32 %v2870, %v27
  %v3352 = vmul.f32 %v2871, %v28
  %v3353 = vmul.f32 %v2872, %v29
  %v3354 = vmul.f32 %v2873, %v30
  %v3355 = vmul.f32 %v2874, %v31
  %v3356 = vmul.f32 %v2875, %v32
  %v3357 = vmul.f32 %v2876, %v33
  %v3358 = vmul.f32 %v2877, %v34
  %v3359 = vmul.f32 %v2878, %v35
  %v3360 = vmul.f32 %v2879, %v36
  %v3361 = vmul.f32 %v2880, %v37
  %v3362 = vmul.f32 %v3026, %v38
  %v3363 = vmul.f32 %v3028, %v39
  %v3364 = vmul.f32 %v3030, %v40
  %v3365 = vmul.f32 %v3032, %v41
  %v3366 = vmul.f32 %v3034, %v42
  %v3367 = vmul.f32 %v3036, %v43
  %v3368 = vmul.f32 %v3038, %v44
  %v3369 = vmul.f32 %v3040, %v45
  %v3370 = vmul.f32 %v3042, %v46
  %v3371 = vmul.f32 %v3044, %v47
  %v3372 = vmul.f32 %v3046, %v48
  %v3373 = vmul.f32 %v3048, %v49
  %v3374 = vmul.f32 %v3050, %v50
  %v3375 = vmul.f32 %v3052, %v51
  %v3376 = vmul.f32 %v3054, %v52
  %v3377 = vmul.f32 %v3056, %v53
  %v3378 = vadd.f32 %v3346, %v3362
  %v3379 = vadd.f32 %v3347, %v3363
  %v3380 = vadd.f32 %v3348, %v3364
  %v3381 = vadd.f32 %v3349, %v3365
  %v3382 = vadd.f32 %v3350, %v3366
  %v3383 = vadd.f32 %v3351, %v3367
  %v3384 = vadd.f32 %v3352, %v3368
  %v3385 = vadd.f32 %v3353, %v3369
  %v3386 = vadd.f32 %v3354, %v3370
  %v3387 = vadd.f32 %v3355, %v3371
  %v3388 = vadd.f32 %v3356, %v3372
  %v3389 = vadd.f32 %v3357, %v3373
  %v3390 = vadd.f32 %v3358, %v3374
  %v3391 = vadd.f32 %v3359, %v3375
  %v3392 = vadd.f32 %v3360, %v3376
  %v3393 = vadd.f32 %v3361, %v3377
  %s3394 = scalar_lea.vmem %s5, 256
  %3395 = vst [vmem:[%s3394] sm:$0xff] %v3378
  %3396 = vst [vmem:[%s3394 + $0x8] sm:$0xff] %v3379
  %3397 = vst [vmem:[%s3394 + $0x10] sm:$0xff] %v3380
  %3398 = vst [vmem:[%s3394 + $0x18] sm:$0xff] %v3381
  %3399 = vst [vmem:[%s3394 + $0x20] sm:$0xff] %v3382
  %3400 = vst [vmem:[%s3394 + $0x28] sm:$0xff] %v3383
  %3401 = vst [vmem:[%s3394 + $0x30] sm:$0xff] %v3384
  %3402 = vst [vmem:[%s3394 + $0x38] sm:$0xff] %v3385
  %3403 = vst [vmem:[%s3394 + $0x40] sm:$0xff] %v3386
  %3404 = vst [vmem:[%s3394 + $0x48] sm:$0xff] %v3387
  %3405 = vst [vmem:[%s3394 + $0x50] sm:$0xff] %v3388
  %3406 = vst [vmem:[%s3394 + $0x58] sm:$0xff] %v3389
  %3407 = vst [vmem:[%s3394 + $0x60] sm:$0xff] %v3390
  %3408 = vst [vmem:[%s3394 + $0x68] sm:$0xff] %v3391
  %3409 = vst [vmem:[%s3394 + $0x70] sm:$0xff] %v3392
  %3410 = vst [vmem:[%s3394 + $0x78] sm:$0xff] %v3393
  %v3411 = vmul.f32 %v2881, %v22
  %v3412 = vmul.f32 %v2882, %v23
  %v3413 = vmul.f32 %v2883, %v24
  %v3414 = vmul.f32 %v2884, %v25
  %v3415 = vmul.f32 %v2885, %v26
  %v3416 = vmul.f32 %v2886, %v27
  %v3417 = vmul.f32 %v2887, %v28
  %v3418 = vmul.f32 %v2888, %v29
  %v3419 = vmul.f32 %v2889, %v30
  %v3420 = vmul.f32 %v2890, %v31
  %v3421 = vmul.f32 %v2891, %v32
  %v3422 = vmul.f32 %v2892, %v33
  %v3423 = vmul.f32 %v2893, %v34
  %v3424 = vmul.f32 %v2894, %v35
  %v3425 = vmul.f32 %v2895, %v36
  %v3426 = vmul.f32 %v2896, %v37
  %v3427 = vmul.f32 %v3058, %v38
  %v3428 = vmul.f32 %v3060, %v39
  %v3429 = vmul.f32 %v3062, %v40
  %v3430 = vmul.f32 %v3064, %v41
  %v3431 = vmul.f32 %v3066, %v42
  %v3432 = vmul.f32 %v3068, %v43
  %v3433 = vmul.f32 %v3070, %v44
  %v3434 = vmul.f32 %v3072, %v45
  %v3435 = vmul.f32 %v3074, %v46
  %v3436 = vmul.f32 %v3076, %v47
  %v3437 = vmul.f32 %v3078, %v48
  %v3438 = vmul.f32 %v3080, %v49
  %v3439 = vmul.f32 %v3082, %v50
  %v3440 = vmul.f32 %v3084, %v51
  %v3441 = vmul.f32 %v3086, %v52
  %v3442 = vmul.f32 %v3088, %v53
  %v3443 = vadd.f32 %v3411, %v3427
  %v3444 = vadd.f32 %v3412, %v3428
  %v3445 = vadd.f32 %v3413, %v3429
  %v3446 = vadd.f32 %v3414, %v3430
  %v3447 = vadd.f32 %v3415, %v3431
  %v3448 = vadd.f32 %v3416, %v3432
  %v3449 = vadd.f32 %v3417, %v3433
  %v3450 = vadd.f32 %v3418, %v3434
  %v3451 = vadd.f32 %v3419, %v3435
  %v3452 = vadd.f32 %v3420, %v3436
  %v3453 = vadd.f32 %v3421, %v3437
  %v3454 = vadd.f32 %v3422, %v3438
  %v3455 = vadd.f32 %v3423, %v3439
  %v3456 = vadd.f32 %v3424, %v3440
  %v3457 = vadd.f32 %v3425, %v3441
  %v3458 = vadd.f32 %v3426, %v3442
  %s3459 = scalar_lea.vmem %s5, 384
  %3460 = vst [vmem:[%s3459] sm:$0xff] %v3443
  %3461 = vst [vmem:[%s3459 + $0x8] sm:$0xff] %v3444
  %3462 = vst [vmem:[%s3459 + $0x10] sm:$0xff] %v3445
  %3463 = vst [vmem:[%s3459 + $0x18] sm:$0xff] %v3446
  %3464 = vst [vmem:[%s3459 + $0x20] sm:$0xff] %v3447
  %3465 = vst [vmem:[%s3459 + $0x28] sm:$0xff] %v3448
  %3466 = vst [vmem:[%s3459 + $0x30] sm:$0xff] %v3449
  %3467 = vst [vmem:[%s3459 + $0x38] sm:$0xff] %v3450
  %3468 = vst [vmem:[%s3459 + $0x40] sm:$0xff] %v3451
  %3469 = vst [vmem:[%s3459 + $0x48] sm:$0xff] %v3452
  %3470 = vst [vmem:[%s3459 + $0x50] sm:$0xff] %v3453
  %3471 = vst [vmem:[%s3459 + $0x58] sm:$0xff] %v3454
  %3472 = vst [vmem:[%s3459 + $0x60] sm:$0xff] %v3455
  %3473 = vst [vmem:[%s3459 + $0x68] sm:$0xff] %v3456
  %3474 = vst [vmem:[%s3459 + $0x70] sm:$0xff] %v3457
  %3475 = vst [vmem:[%s3459 + $0x78] sm:$0xff] %v3458
  %v3476 = vmul.f32 %v2897, %v22
  %v3477 = vmul.f32 %v2898, %v23
  %v3478 = vmul.f32 %v2899, %v24
  %v3479 = vmul.f32 %v2900, %v25
  %v3480 = vmul.f32 %v2901, %v26
  %v3481 = vmul.f32 %v2902, %v27
  %v3482 = vmul.f32 %v2903, %v28
  %v3483 = vmul.f32 %v2904, %v29
  %v3484 = vmul.f32 %v2905, %v30
  %v3485 = vmul.f32 %v2906, %v31
  %v3486 = vmul.f32 %v2907, %v32
  %v3487 = vmul.f32 %v2908, %v33
  %v3488 = vmul.f32 %v2909, %v34
  %v3489 = vmul.f32 %v2910, %v35
  %v3490 = vmul.f32 %v2911, %v36
  %v3491 = vmul.f32 %v2912, %v37
  %v3492 = vmul.f32 %v3090, %v38
  %v3493 = vmul.f32 %v3092, %v39
  %v3494 = vmul.f32 %v3094, %v40
  %v3495 = vmul.f32 %v3096, %v41
  %v3496 = vmul.f32 %v3098, %v42
  %v3497 = vmul.f32 %v3100, %v43
  %v3498 = vmul.f32 %v3102, %v44
  %v3499 = vmul.f32 %v3104, %v45
  %v3500 = vmul.f32 %v3106, %v46
  %v3501 = vmul.f32 %v3108, %v47
  %v3502 = vmul.f32 %v3110, %v48
  %v3503 = vmul.f32 %v3112, %v49
  %v3504 = vmul.f32 %v3114, %v50
  %v3505 = vmul.f32 %v3116, %v51
  %v3506 = vmul.f32 %v3118, %v52
  %v3507 = vmul.f32 %v3120, %v53
  %v3508 = vadd.f32 %v3476, %v3492
  %v3509 = vadd.f32 %v3477, %v3493
  %v3510 = vadd.f32 %v3478, %v3494
  %v3511 = vadd.f32 %v3479, %v3495
  %v3512 = vadd.f32 %v3480, %v3496
  %v3513 = vadd.f32 %v3481, %v3497
  %v3514 = vadd.f32 %v3482, %v3498
  %v3515 = vadd.f32 %v3483, %v3499
  %v3516 = vadd.f32 %v3484, %v3500
  %v3517 = vadd.f32 %v3485, %v3501
  %v3518 = vadd.f32 %v3486, %v3502
  %v3519 = vadd.f32 %v3487, %v3503
  %v3520 = vadd.f32 %v3488, %v3504
  %v3521 = vadd.f32 %v3489, %v3505
  %v3522 = vadd.f32 %v3490, %v3506
  %v3523 = vadd.f32 %v3491, %v3507
  %s3524 = scalar_lea.vmem %s5, 512
  %3525 = vst [vmem:[%s3524] sm:$0xff] %v3508
  %3526 = vst [vmem:[%s3524 + $0x8] sm:$0xff] %v3509
  %3527 = vst [vmem:[%s3524 + $0x10] sm:$0xff] %v3510
  %3528 = vst [vmem:[%s3524 + $0x18] sm:$0xff] %v3511
  %3529 = vst [vmem:[%s3524 + $0x20] sm:$0xff] %v3512
  %3530 = vst [vmem:[%s3524 + $0x28] sm:$0xff] %v3513
  %3531 = vst [vmem:[%s3524 + $0x30] sm:$0xff] %v3514
  %3532 = vst [vmem:[%s3524 + $0x38] sm:$0xff] %v3515
  %3533 = vst [vmem:[%s3524 + $0x40] sm:$0xff] %v3516
  %3534 = vst [vmem:[%s3524 + $0x48] sm:$0xff] %v3517
  %3535 = vst [vmem:[%s3524 + $0x50] sm:$0xff] %v3518
  %3536 = vst [vmem:[%s3524 + $0x58] sm:$0xff] %v3519
  %3537 = vst [vmem:[%s3524 + $0x60] sm:$0xff] %v3520
  %3538 = vst [vmem:[%s3524 + $0x68] sm:$0xff] %v3521
  %3539 = vst [vmem:[%s3524 + $0x70] sm:$0xff] %v3522
  %3540 = vst [vmem:[%s3524 + $0x78] sm:$0xff] %v3523
  %v3541 = vmul.f32 %v2913, %v22
  %v3542 = vmul.f32 %v2914, %v23
  %v3543 = vmul.f32 %v2915, %v24
  %v3544 = vmul.f32 %v2916, %v25
  %v3545 = vmul.f32 %v2917, %v26
  %v3546 = vmul.f32 %v2918, %v27
  %v3547 = vmul.f32 %v2919, %v28
  %v3548 = vmul.f32 %v2920, %v29
  %v3549 = vmul.f32 %v2921, %v30
  %v3550 = vmul.f32 %v2922, %v31
  %v3551 = vmul.f32 %v2923, %v32
  %v3552 = vmul.f32 %v2924, %v33
  %v3553 = vmul.f32 %v2925, %v34
  %v3554 = vmul.f32 %v2926, %v35
  %v3555 = vmul.f32 %v2927, %v36
  %v3556 = vmul.f32 %v2928, %v37
  %v3557 = vmul.f32 %v3122, %v38
  %v3558 = vmul.f32 %v3124, %v39
  %v3559 = vmul.f32 %v3126, %v40
  %v3560 = vmul.f32 %v3128, %v41
  %v3561 = vmul.f32 %v3130, %v42
  %v3562 = vmul.f32 %v3132, %v43
  %v3563 = vmul.f32 %v3134, %v44
  %v3564 = vmul.f32 %v3136, %v45
  %v3565 = vmul.f32 %v3138, %v46
  %v3566 = vmul.f32 %v3140, %v47
  %v3567 = vmul.f32 %v3142, %v48
  %v3568 = vmul.f32 %v3144, %v49
  %v3569 = vmul.f32 %v3146, %v50
  %v3570 = vmul.f32 %v3148, %v51
  %v3571 = vmul.f32 %v3150, %v52
  %v3572 = vmul.f32 %v3152, %v53
  %v3573 = vadd.f32 %v3541, %v3557
  %v3574 = vadd.f32 %v3542, %v3558
  %v3575 = vadd.f32 %v3543, %v3559
  %v3576 = vadd.f32 %v3544, %v3560
  %v3577 = vadd.f32 %v3545, %v3561
  %v3578 = vadd.f32 %v3546, %v3562
  %v3579 = vadd.f32 %v3547, %v3563
  %v3580 = vadd.f32 %v3548, %v3564
  %v3581 = vadd.f32 %v3549, %v3565
  %v3582 = vadd.f32 %v3550, %v3566
  %v3583 = vadd.f32 %v3551, %v3567
  %v3584 = vadd.f32 %v3552, %v3568
  %v3585 = vadd.f32 %v3553, %v3569
  %v3586 = vadd.f32 %v3554, %v3570
  %v3587 = vadd.f32 %v3555, %v3571
  %v3588 = vadd.f32 %v3556, %v3572
  %s3589 = scalar_lea.vmem %s5, 640
  %3590 = vst [vmem:[%s3589] sm:$0xff] %v3573
  %3591 = vst [vmem:[%s3589 + $0x8] sm:$0xff] %v3574
  %3592 = vst [vmem:[%s3589 + $0x10] sm:$0xff] %v3575
  %3593 = vst [vmem:[%s3589 + $0x18] sm:$0xff] %v3576
  %3594 = vst [vmem:[%s3589 + $0x20] sm:$0xff] %v3577
  %3595 = vst [vmem:[%s3589 + $0x28] sm:$0xff] %v3578
  %3596 = vst [vmem:[%s3589 + $0x30] sm:$0xff] %v3579
  %3597 = vst [vmem:[%s3589 + $0x38] sm:$0xff] %v3580
  %3598 = vst [vmem:[%s3589 + $0x40] sm:$0xff] %v3581
  %3599 = vst [vmem:[%s3589 + $0x48] sm:$0xff] %v3582
  %3600 = vst [vmem:[%s3589 + $0x50] sm:$0xff] %v3583
  %3601 = vst [vmem:[%s3589 + $0x58] sm:$0xff] %v3584
  %3602 = vst [vmem:[%s3589 + $0x60] sm:$0xff] %v3585
  %3603 = vst [vmem:[%s3589 + $0x68] sm:$0xff] %v3586
  %3604 = vst [vmem:[%s3589 + $0x70] sm:$0xff] %v3587
  %3605 = vst [vmem:[%s3589 + $0x78] sm:$0xff] %v3588
  %v3606 = vmul.f32 %v2929, %v22
  %v3607 = vmul.f32 %v2930, %v23
  %v3608 = vmul.f32 %v2931, %v24
  %v3609 = vmul.f32 %v2932, %v25
  %v3610 = vmul.f32 %v2933, %v26
  %v3611 = vmul.f32 %v2934, %v27
  %v3612 = vmul.f32 %v2935, %v28
  %v3613 = vmul.f32 %v2936, %v29
  %v3614 = vmul.f32 %v2937, %v30
  %v3615 = vmul.f32 %v2938, %v31
  %v3616 = vmul.f32 %v2939, %v32
  %v3617 = vmul.f32 %v2940, %v33
  %v3618 = vmul.f32 %v2941, %v34
  %v3619 = vmul.f32 %v2942, %v35
  %v3620 = vmul.f32 %v2943, %v36
  %v3621 = vmul.f32 %v2944, %v37
  %v3622 = vmul.f32 %v3154, %v38
  %v3623 = vmul.f32 %v3156, %v39
  %v3624 = vmul.f32 %v3158, %v40
  %v3625 = vmul.f32 %v3160, %v41
  %v3626 = vmul.f32 %v3162, %v42
  %v3627 = vmul.f32 %v3164, %v43
  %v3628 = vmul.f32 %v3166, %v44
  %v3629 = vmul.f32 %v3168, %v45
  %v3630 = vmul.f32 %v3170, %v46
  %v3631 = vmul.f32 %v3172, %v47
  %v3632 = vmul.f32 %v3174, %v48
  %v3633 = vmul.f32 %v3176, %v49
  %v3634 = vmul.f32 %v3178, %v50
  %v3635 = vmul.f32 %v3180, %v51
  %v3636 = vmul.f32 %v3182, %v52
  %v3637 = vmul.f32 %v3184, %v53
  %v3638 = vadd.f32 %v3606, %v3622
  %v3639 = vadd.f32 %v3607, %v3623
  %v3640 = vadd.f32 %v3608, %v3624
  %v3641 = vadd.f32 %v3609, %v3625
  %v3642 = vadd.f32 %v3610, %v3626
  %v3643 = vadd.f32 %v3611, %v3627
  %v3644 = vadd.f32 %v3612, %v3628
  %v3645 = vadd.f32 %v3613, %v3629
  %v3646 = vadd.f32 %v3614, %v3630
  %v3647 = vadd.f32 %v3615, %v3631
  %v3648 = vadd.f32 %v3616, %v3632
  %v3649 = vadd.f32 %v3617, %v3633
  %v3650 = vadd.f32 %v3618, %v3634
  %v3651 = vadd.f32 %v3619, %v3635
  %v3652 = vadd.f32 %v3620, %v3636
  %v3653 = vadd.f32 %v3621, %v3637
  %s3654 = scalar_lea.vmem %s5, 768
  %3655 = vst [vmem:[%s3654] sm:$0xff] %v3638
  %3656 = vst [vmem:[%s3654 + $0x8] sm:$0xff] %v3639
  %3657 = vst [vmem:[%s3654 + $0x10] sm:$0xff] %v3640
  %3658 = vst [vmem:[%s3654 + $0x18] sm:$0xff] %v3641
  %3659 = vst [vmem:[%s3654 + $0x20] sm:$0xff] %v3642
  %3660 = vst [vmem:[%s3654 + $0x28] sm:$0xff] %v3643
  %3661 = vst [vmem:[%s3654 + $0x30] sm:$0xff] %v3644
  %3662 = vst [vmem:[%s3654 + $0x38] sm:$0xff] %v3645
  %3663 = vst [vmem:[%s3654 + $0x40] sm:$0xff] %v3646
  %3664 = vst [vmem:[%s3654 + $0x48] sm:$0xff] %v3647
  %3665 = vst [vmem:[%s3654 + $0x50] sm:$0xff] %v3648
  %3666 = vst [vmem:[%s3654 + $0x58] sm:$0xff] %v3649
  %3667 = vst [vmem:[%s3654 + $0x60] sm:$0xff] %v3650
  %3668 = vst [vmem:[%s3654 + $0x68] sm:$0xff] %v3651
  %3669 = vst [vmem:[%s3654 + $0x70] sm:$0xff] %v3652
  %3670 = vst [vmem:[%s3654 + $0x78] sm:$0xff] %v3653
  %v3671 = vmul.f32 %v2945, %v22
  %v3672 = vmul.f32 %v2946, %v23
  %v3673 = vmul.f32 %v2947, %v24
  %v3674 = vmul.f32 %v2948, %v25
  %v3675 = vmul.f32 %v2949, %v26
  %v3676 = vmul.f32 %v2950, %v27
  %v3677 = vmul.f32 %v2951, %v28
  %v3678 = vmul.f32 %v2952, %v29
  %v3679 = vmul.f32 %v2953, %v30
  %v3680 = vmul.f32 %v2954, %v31
  %v3681 = vmul.f32 %v2955, %v32
  %v3682 = vmul.f32 %v2956, %v33
  %v3683 = vmul.f32 %v2957, %v34
  %v3684 = vmul.f32 %v2958, %v35
  %v3685 = vmul.f32 %v2959, %v36
  %v3686 = vmul.f32 %v2960, %v37
  %v3687 = vmul.f32 %v3186, %v38
  %v3688 = vmul.f32 %v3188, %v39
  %v3689 = vmul.f32 %v3190, %v40
  %v3690 = vmul.f32 %v3192, %v41
  %v3691 = vmul.f32 %v3194, %v42
  %v3692 = vmul.f32 %v3196, %v43
  %v3693 = vmul.f32 %v3198, %v44
  %v3694 = vmul.f32 %v3200, %v45
  %v3695 = vmul.f32 %v3202, %v46
  %v3696 = vmul.f32 %v3204, %v47
  %v3697 = vmul.f32 %v3206, %v48
  %v3698 = vmul.f32 %v3208, %v49
  %v3699 = vmul.f32 %v3210, %v50
  %v3700 = vmul.f32 %v3212, %v51
  %v3701 = vmul.f32 %v3214, %v52
  %v3702 = vmul.f32 %v3216, %v53
  %v3703 = vadd.f32 %v3671, %v3687
  %v3704 = vadd.f32 %v3672, %v3688
  %v3705 = vadd.f32 %v3673, %v3689
  %v3706 = vadd.f32 %v3674, %v3690
  %v3707 = vadd.f32 %v3675, %v3691
  %v3708 = vadd.f32 %v3676, %v3692
  %v3709 = vadd.f32 %v3677, %v3693
  %v3710 = vadd.f32 %v3678, %v3694
  %v3711 = vadd.f32 %v3679, %v3695
  %v3712 = vadd.f32 %v3680, %v3696
  %v3713 = vadd.f32 %v3681, %v3697
  %v3714 = vadd.f32 %v3682, %v3698
  %v3715 = vadd.f32 %v3683, %v3699
  %v3716 = vadd.f32 %v3684, %v3700
  %v3717 = vadd.f32 %v3685, %v3701
  %v3718 = vadd.f32 %v3686, %v3702
  %s3719 = scalar_lea.vmem %s5, 896
  %3720 = vst [vmem:[%s3719] sm:$0xff] %v3703
  %3721 = vst [vmem:[%s3719 + $0x8] sm:$0xff] %v3704
  %3722 = vst [vmem:[%s3719 + $0x10] sm:$0xff] %v3705
  %3723 = vst [vmem:[%s3719 + $0x18] sm:$0xff] %v3706
  %3724 = vst [vmem:[%s3719 + $0x20] sm:$0xff] %v3707
  %3725 = vst [vmem:[%s3719 + $0x28] sm:$0xff] %v3708
  %3726 = vst [vmem:[%s3719 + $0x30] sm:$0xff] %v3709
  %3727 = vst [vmem:[%s3719 + $0x38] sm:$0xff] %v3710
  %3728 = vst [vmem:[%s3719 + $0x40] sm:$0xff] %v3711
  %3729 = vst [vmem:[%s3719 + $0x48] sm:$0xff] %v3712
  %3730 = vst [vmem:[%s3719 + $0x50] sm:$0xff] %v3713
  %3731 = vst [vmem:[%s3719 + $0x58] sm:$0xff] %v3714
  %3732 = vst [vmem:[%s3719 + $0x60] sm:$0xff] %v3715
  %3733 = vst [vmem:[%s3719 + $0x68] sm:$0xff] %v3716
  %3734 = vst [vmem:[%s3719 + $0x70] sm:$0xff] %v3717
  %3735 = vst [vmem:[%s3719 + $0x78] sm:$0xff] %v3718
  %v3736 = vld [vmem:[%s4] sm:$0xff]
  %v3737 = vld [vmem:[%s4 + $0x8] sm:$0xff]
  %v3738 = vld [vmem:[%s4 + $0x10] sm:$0xff]
  %v3739 = vld [vmem:[%s4 + $0x18] sm:$0xff]
  %v3740 = vld [vmem:[%s4 + $0x20] sm:$0xff]
  %v3741 = vld [vmem:[%s4 + $0x28] sm:$0xff]
  %v3742 = vld [vmem:[%s4 + $0x30] sm:$0xff]
  %v3743 = vld [vmem:[%s4 + $0x38] sm:$0xff]
  %v3744 = vld [vmem:[%s4 + $0x40] sm:$0xff]
  %v3745 = vld [vmem:[%s4 + $0x48] sm:$0xff]
  %v3746 = vld [vmem:[%s4 + $0x50] sm:$0xff]
  %v3747 = vld [vmem:[%s4 + $0x58] sm:$0xff]
  %v3748 = vld [vmem:[%s4 + $0x60] sm:$0xff]
  %v3749 = vld [vmem:[%s4 + $0x68] sm:$0xff]
  %v3750 = vld [vmem:[%s4 + $0x70] sm:$0xff]
  %v3751 = vld [vmem:[%s4 + $0x78] sm:$0xff]
  %v3752 = vld [vmem:[%s4 + $0x80] sm:$0xff]
  %v3753 = vld [vmem:[%s4 + $0x88] sm:$0xff]
  %v3754 = vld [vmem:[%s4 + $0x90] sm:$0xff]
  %v3755 = vld [vmem:[%s4 + $0x98] sm:$0xff]
  %v3756 = vld [vmem:[%s4 + $0xa0] sm:$0xff]
  %v3757 = vld [vmem:[%s4 + $0xa8] sm:$0xff]
  %v3758 = vld [vmem:[%s4 + $0xb0] sm:$0xff]
  %v3759 = vld [vmem:[%s4 + $0xb8] sm:$0xff]
  %v3760 = vld [vmem:[%s4 + $0xc0] sm:$0xff]
  %v3761 = vld [vmem:[%s4 + $0xc8] sm:$0xff]
  %v3762 = vld [vmem:[%s4 + $0xd0] sm:$0xff]
  %v3763 = vld [vmem:[%s4 + $0xd8] sm:$0xff]
  %v3764 = vld [vmem:[%s4 + $0xe0] sm:$0xff]
  %v3765 = vld [vmem:[%s4 + $0xe8] sm:$0xff]
  %v3766 = vld [vmem:[%s4 + $0xf0] sm:$0xff]
  %v3767 = vld [vmem:[%s4 + $0xf8] sm:$0xff]
  %v3768 = vld [vmem:[%s4 + $0x100] sm:$0xff]
  %v3769 = vld [vmem:[%s4 + $0x108] sm:$0xff]
  %v3770 = vld [vmem:[%s4 + $0x110] sm:$0xff]
  %v3771 = vld [vmem:[%s4 + $0x118] sm:$0xff]
  %v3772 = vld [vmem:[%s4 + $0x120] sm:$0xff]
  %v3773 = vld [vmem:[%s4 + $0x128] sm:$0xff]
  %v3774 = vld [vmem:[%s4 + $0x130] sm:$0xff]
  %v3775 = vld [vmem:[%s4 + $0x138] sm:$0xff]
  %v3776 = vld [vmem:[%s4 + $0x140] sm:$0xff]
  %v3777 = vld [vmem:[%s4 + $0x148] sm:$0xff]
  %v3778 = vld [vmem:[%s4 + $0x150] sm:$0xff]
  %v3779 = vld [vmem:[%s4 + $0x158] sm:$0xff]
  %v3780 = vld [vmem:[%s4 + $0x160] sm:$0xff]
  %v3781 = vld [vmem:[%s4 + $0x168] sm:$0xff]
  %v3782 = vld [vmem:[%s4 + $0x170] sm:$0xff]
  %v3783 = vld [vmem:[%s4 + $0x178] sm:$0xff]
  %v3784 = vld [vmem:[%s4 + $0x180] sm:$0xff]
  %v3785 = vld [vmem:[%s4 + $0x188] sm:$0xff]
  %v3786 = vld [vmem:[%s4 + $0x190] sm:$0xff]
  %v3787 = vld [vmem:[%s4 + $0x198] sm:$0xff]
  %v3788 = vld [vmem:[%s4 + $0x1a0] sm:$0xff]
  %v3789 = vld [vmem:[%s4 + $0x1a8] sm:$0xff]
  %v3790 = vld [vmem:[%s4 + $0x1b0] sm:$0xff]
  %v3791 = vld [vmem:[%s4 + $0x1b8] sm:$0xff]
  %v3792 = vld [vmem:[%s4 + $0x1c0] sm:$0xff]
  %v3793 = vld [vmem:[%s4 + $0x1c8] sm:$0xff]
  %v3794 = vld [vmem:[%s4 + $0x1d0] sm:$0xff]
  %v3795 = vld [vmem:[%s4 + $0x1d8] sm:$0xff]
  %v3796 = vld [vmem:[%s4 + $0x1e0] sm:$0xff]
  %v3797 = vld [vmem:[%s4 + $0x1e8] sm:$0xff]
  %v3798 = vld [vmem:[%s4 + $0x1f0] sm:$0xff]
  %v3799 = vld [vmem:[%s4 + $0x1f8] sm:$0xff]
  %v3800 = vld [vmem:[%s4 + $0x200] sm:$0xff]
  %v3801 = vld [vmem:[%s4 + $0x208] sm:$0xff]
  %v3802 = vld [vmem:[%s4 + $0x210] sm:$0xff]
  %v3803 = vld [vmem:[%s4 + $0x218] sm:$0xff]
  %v3804 = vld [vmem:[%s4 + $0x220] sm:$0xff]
  %v3805 = vld [vmem:[%s4 + $0x228] sm:$0xff]
  %v3806 = vld [vmem:[%s4 + $0x230] sm:$0xff]
  %v3807 = vld [vmem:[%s4 + $0x238] sm:$0xff]
  %v3808 = vld [vmem:[%s4 + $0x240] sm:$0xff]
  %v3809 = vld [vmem:[%s4 + $0x248] sm:$0xff]
  %v3810 = vld [vmem:[%s4 + $0x250] sm:$0xff]
  %v3811 = vld [vmem:[%s4 + $0x258] sm:$0xff]
  %v3812 = vld [vmem:[%s4 + $0x260] sm:$0xff]
  %v3813 = vld [vmem:[%s4 + $0x268] sm:$0xff]
  %v3814 = vld [vmem:[%s4 + $0x270] sm:$0xff]
  %v3815 = vld [vmem:[%s4 + $0x278] sm:$0xff]
  %v3816 = vld [vmem:[%s4 + $0x280] sm:$0xff]
  %v3817 = vld [vmem:[%s4 + $0x288] sm:$0xff]
  %v3818 = vld [vmem:[%s4 + $0x290] sm:$0xff]
  %v3819 = vld [vmem:[%s4 + $0x298] sm:$0xff]
  %v3820 = vld [vmem:[%s4 + $0x2a0] sm:$0xff]
  %v3821 = vld [vmem:[%s4 + $0x2a8] sm:$0xff]
  %v3822 = vld [vmem:[%s4 + $0x2b0] sm:$0xff]
  %v3823 = vld [vmem:[%s4 + $0x2b8] sm:$0xff]
  %v3824 = vld [vmem:[%s4 + $0x2c0] sm:$0xff]
  %v3825 = vld [vmem:[%s4 + $0x2c8] sm:$0xff]
  %v3826 = vld [vmem:[%s4 + $0x2d0] sm:$0xff]
  %v3827 = vld [vmem:[%s4 + $0x2d8] sm:$0xff]
  %v3828 = vld [vmem:[%s4 + $0x2e0] sm:$0xff]
  %v3829 = vld [vmem:[%s4 + $0x2e8] sm:$0xff]
  %v3830 = vld [vmem:[%s4 + $0x2f0] sm:$0xff]
  %v3831 = vld [vmem:[%s4 + $0x2f8] sm:$0xff]
  %v3832 = vld [vmem:[%s4 + $0x300] sm:$0xff]
  %v3833 = vld [vmem:[%s4 + $0x308] sm:$0xff]
  %v3834 = vld [vmem:[%s4 + $0x310] sm:$0xff]
  %v3835 = vld [vmem:[%s4 + $0x318] sm:$0xff]
  %v3836 = vld [vmem:[%s4 + $0x320] sm:$0xff]
  %v3837 = vld [vmem:[%s4 + $0x328] sm:$0xff]
  %v3838 = vld [vmem:[%s4 + $0x330] sm:$0xff]
  %v3839 = vld [vmem:[%s4 + $0x338] sm:$0xff]
  %v3840 = vld [vmem:[%s4 + $0x340] sm:$0xff]
  %v3841 = vld [vmem:[%s4 + $0x348] sm:$0xff]
  %v3842 = vld [vmem:[%s4 + $0x350] sm:$0xff]
  %v3843 = vld [vmem:[%s4 + $0x358] sm:$0xff]
  %v3844 = vld [vmem:[%s4 + $0x360] sm:$0xff]
  %v3845 = vld [vmem:[%s4 + $0x368] sm:$0xff]
  %v3846 = vld [vmem:[%s4 + $0x370] sm:$0xff]
  %v3847 = vld [vmem:[%s4 + $0x378] sm:$0xff]
  %v3848 = vld [vmem:[%s4 + $0x380] sm:$0xff]
  %v3849 = vld [vmem:[%s4 + $0x388] sm:$0xff]
  %v3850 = vld [vmem:[%s4 + $0x390] sm:$0xff]
  %v3851 = vld [vmem:[%s4 + $0x398] sm:$0xff]
  %v3852 = vld [vmem:[%s4 + $0x3a0] sm:$0xff]
  %v3853 = vld [vmem:[%s4 + $0x3a8] sm:$0xff]
  %v3854 = vld [vmem:[%s4 + $0x3b0] sm:$0xff]
  %v3855 = vld [vmem:[%s4 + $0x3b8] sm:$0xff]
  %v3856 = vld [vmem:[%s4 + $0x3c0] sm:$0xff]
  %v3857 = vld [vmem:[%s4 + $0x3c8] sm:$0xff]
  %v3858 = vld [vmem:[%s4 + $0x3d0] sm:$0xff]
  %v3859 = vld [vmem:[%s4 + $0x3d8] sm:$0xff]
  %v3860 = vld [vmem:[%s4 + $0x3e0] sm:$0xff]
  %v3861 = vld [vmem:[%s4 + $0x3e8] sm:$0xff]
  %v3862 = vld [vmem:[%s4 + $0x3f0] sm:$0xff]
  %v3863 = vld [vmem:[%s4 + $0x3f8] sm:$0xff]
  %v3864 = vpack.c.bf16 %v3736, %v3736
  %v3865 = vpack.c.bf16 %v3737, %v3737
  %v3866 = vpack.c.bf16 %v3738, %v3738
  %v3867 = vpack.c.bf16 %v3739, %v3739
  %v3868 = vpack.c.bf16 %v3740, %v3740
  %v3869 = vpack.c.bf16 %v3741, %v3741
  %v3870 = vpack.c.bf16 %v3742, %v3742
  %v3871 = vpack.c.bf16 %v3743, %v3743
  %v3872 = vpack.c.bf16 %v3744, %v3744
  %v3873 = vpack.c.bf16 %v3745, %v3745
  %v3874 = vpack.c.bf16 %v3746, %v3746
  %v3875 = vpack.c.bf16 %v3747, %v3747
  %v3876 = vpack.c.bf16 %v3748, %v3748
  %v3877 = vpack.c.bf16 %v3749, %v3749
  %v3878 = vpack.c.bf16 %v3750, %v3750
  %v3879 = vpack.c.bf16 %v3751, %v3751
  %v3880 = vpack.c.bf16 %v3752, %v3752
  %v3881 = vpack.c.bf16 %v3753, %v3753
  %v3882 = vpack.c.bf16 %v3754, %v3754
  %v3883 = vpack.c.bf16 %v3755, %v3755
  %v3884 = vpack.c.bf16 %v3756, %v3756
  %v3885 = vpack.c.bf16 %v3757, %v3757
  %v3886 = vpack.c.bf16 %v3758, %v3758
  %v3887 = vpack.c.bf16 %v3759, %v3759
  %v3888 = vpack.c.bf16 %v3760, %v3760
  %v3889 = vpack.c.bf16 %v3761, %v3761
  %v3890 = vpack.c.bf16 %v3762, %v3762
  %v3891 = vpack.c.bf16 %v3763, %v3763
  %v3892 = vpack.c.bf16 %v3764, %v3764
  %v3893 = vpack.c.bf16 %v3765, %v3765
  %v3894 = vpack.c.bf16 %v3766, %v3766
  %v3895 = vpack.c.bf16 %v3767, %v3767
  %v3896 = vpack.c.bf16 %v3768, %v3768
  %v3897 = vpack.c.bf16 %v3769, %v3769
  %v3898 = vpack.c.bf16 %v3770, %v3770
  %v3899 = vpack.c.bf16 %v3771, %v3771
  %v3900 = vpack.c.bf16 %v3772, %v3772
  %v3901 = vpack.c.bf16 %v3773, %v3773
  %v3902 = vpack.c.bf16 %v3774, %v3774
  %v3903 = vpack.c.bf16 %v3775, %v3775
  %v3904 = vpack.c.bf16 %v3776, %v3776
  %v3905 = vpack.c.bf16 %v3777, %v3777
  %v3906 = vpack.c.bf16 %v3778, %v3778
  %v3907 = vpack.c.bf16 %v3779, %v3779
  %v3908 = vpack.c.bf16 %v3780, %v3780
  %v3909 = vpack.c.bf16 %v3781, %v3781
  %v3910 = vpack.c.bf16 %v3782, %v3782
  %v3911 = vpack.c.bf16 %v3783, %v3783
  %v3912 = vpack.c.bf16 %v3784, %v3784
  %v3913 = vpack.c.bf16 %v3785, %v3785
  %v3914 = vpack.c.bf16 %v3786, %v3786
  %v3915 = vpack.c.bf16 %v3787, %v3787
  %v3916 = vpack.c.bf16 %v3788, %v3788
  %v3917 = vpack.c.bf16 %v3789, %v3789
  %v3918 = vpack.c.bf16 %v3790, %v3790
  %v3919 = vpack.c.bf16 %v3791, %v3791
  %v3920 = vpack.c.bf16 %v3792, %v3792
  %v3921 = vpack.c.bf16 %v3793, %v3793
  %v3922 = vpack.c.bf16 %v3794, %v3794
  %v3923 = vpack.c.bf16 %v3795, %v3795
  %v3924 = vpack.c.bf16 %v3796, %v3796
  %v3925 = vpack.c.bf16 %v3797, %v3797
  %v3926 = vpack.c.bf16 %v3798, %v3798
  %v3927 = vpack.c.bf16 %v3799, %v3799
  %v3928 = vpack.c.bf16 %v3800, %v3800
  %v3929 = vpack.c.bf16 %v3801, %v3801
  %v3930 = vpack.c.bf16 %v3802, %v3802
  %v3931 = vpack.c.bf16 %v3803, %v3803
  %v3932 = vpack.c.bf16 %v3804, %v3804
  %v3933 = vpack.c.bf16 %v3805, %v3805
  %v3934 = vpack.c.bf16 %v3806, %v3806
  %v3935 = vpack.c.bf16 %v3807, %v3807
  %v3936 = vpack.c.bf16 %v3808, %v3808
  %v3937 = vpack.c.bf16 %v3809, %v3809
  %v3938 = vpack.c.bf16 %v3810, %v3810
  %v3939 = vpack.c.bf16 %v3811, %v3811
  %v3940 = vpack.c.bf16 %v3812, %v3812
  %v3941 = vpack.c.bf16 %v3813, %v3813
  %v3942 = vpack.c.bf16 %v3814, %v3814
  %v3943 = vpack.c.bf16 %v3815, %v3815
  %v3944 = vpack.c.bf16 %v3816, %v3816
  %v3945 = vpack.c.bf16 %v3817, %v3817
  %v3946 = vpack.c.bf16 %v3818, %v3818
  %v3947 = vpack.c.bf16 %v3819, %v3819
  %v3948 = vpack.c.bf16 %v3820, %v3820
  %v3949 = vpack.c.bf16 %v3821, %v3821
  %v3950 = vpack.c.bf16 %v3822, %v3822
  %v3951 = vpack.c.bf16 %v3823, %v3823
  %v3952 = vpack.c.bf16 %v3824, %v3824
  %v3953 = vpack.c.bf16 %v3825, %v3825
  %v3954 = vpack.c.bf16 %v3826, %v3826
  %v3955 = vpack.c.bf16 %v3827, %v3827
  %v3956 = vpack.c.bf16 %v3828, %v3828
  %v3957 = vpack.c.bf16 %v3829, %v3829
  %v3958 = vpack.c.bf16 %v3830, %v3830
  %v3959 = vpack.c.bf16 %v3831, %v3831
  %v3960 = vpack.c.bf16 %v3832, %v3832
  %v3961 = vpack.c.bf16 %v3833, %v3833
  %v3962 = vpack.c.bf16 %v3834, %v3834
  %v3963 = vpack.c.bf16 %v3835, %v3835
  %v3964 = vpack.c.bf16 %v3836, %v3836
  %v3965 = vpack.c.bf16 %v3837, %v3837
  %v3966 = vpack.c.bf16 %v3838, %v3838
  %v3967 = vpack.c.bf16 %v3839, %v3839
  %v3968 = vpack.c.bf16 %v3840, %v3840
  %v3969 = vpack.c.bf16 %v3841, %v3841
  %v3970 = vpack.c.bf16 %v3842, %v3842
  %v3971 = vpack.c.bf16 %v3843, %v3843
  %v3972 = vpack.c.bf16 %v3844, %v3844
  %v3973 = vpack.c.bf16 %v3845, %v3845
  %v3974 = vpack.c.bf16 %v3846, %v3846
  %v3975 = vpack.c.bf16 %v3847, %v3847
  %v3976 = vpack.c.bf16 %v3848, %v3848
  %v3977 = vpack.c.bf16 %v3849, %v3849
  %v3978 = vpack.c.bf16 %v3850, %v3850
  %v3979 = vpack.c.bf16 %v3851, %v3851
  %v3980 = vpack.c.bf16 %v3852, %v3852
  %v3981 = vpack.c.bf16 %v3853, %v3853
  %v3982 = vpack.c.bf16 %v3854, %v3854
  %v3983 = vpack.c.bf16 %v3855, %v3855
  %v3984 = vpack.c.bf16 %v3856, %v3856
  %v3985 = vpack.c.bf16 %v3857, %v3857
  %v3986 = vpack.c.bf16 %v3858, %v3858
  %v3987 = vpack.c.bf16 %v3859, %v3859
  %v3988 = vpack.c.bf16 %v3860, %v3860
  %v3989 = vpack.c.bf16 %v3861, %v3861
  %v3990 = vpack.c.bf16 %v3862, %v3862
  %v3991 = vpack.c.bf16 %v3863, %v3863
  %v3992 = vunpack.c.l.bf16 %v3864
  %v3993 = vunpack.c.l.bf16 %v3865
  %v3994 = vunpack.c.l.bf16 %v3866
  %v3995 = vunpack.c.l.bf16 %v3867
  %v3996 = vunpack.c.l.bf16 %v3868
  %v3997 = vunpack.c.l.bf16 %v3869
  %v3998 = vunpack.c.l.bf16 %v3870
  %v3999 = vunpack.c.l.bf16 %v3871
  %v4000 = vunpack.c.l.bf16 %v3872
  %v4001 = vunpack.c.l.bf16 %v3873
  %v4002 = vunpack.c.l.bf16 %v3874
  %v4003 = vunpack.c.l.bf16 %v3875
  %v4004 = vunpack.c.l.bf16 %v3876
  %v4005 = vunpack.c.l.bf16 %v3877
  %v4006 = vunpack.c.l.bf16 %v3878
  %v4007 = vunpack.c.l.bf16 %v3879
  %v4008 = vunpack.c.l.bf16 %v3880
  %v4009 = vunpack.c.l.bf16 %v3881
  %v4010 = vunpack.c.l.bf16 %v3882
  %v4011 = vunpack.c.l.bf16 %v3883
  %v4012 = vunpack.c.l.bf16 %v3884
  %v4013 = vunpack.c.l.bf16 %v3885
  %v4014 = vunpack.c.l.bf16 %v3886
  %v4015 = vunpack.c.l.bf16 %v3887
  %v4016 = vunpack.c.l.bf16 %v3888
  %v4017 = vunpack.c.l.bf16 %v3889
  %v4018 = vunpack.c.l.bf16 %v3890
  %v4019 = vunpack.c.l.bf16 %v3891
  %v4020 = vunpack.c.l.bf16 %v3892
  %v4021 = vunpack.c.l.bf16 %v3893
  %v4022 = vunpack.c.l.bf16 %v3894
  %v4023 = vunpack.c.l.bf16 %v3895
  %v4024 = vunpack.c.l.bf16 %v3896
  %v4025 = vunpack.c.l.bf16 %v3897
  %v4026 = vunpack.c.l.bf16 %v3898
  %v4027 = vunpack.c.l.bf16 %v3899
  %v4028 = vunpack.c.l.bf16 %v3900
  %v4029 = vunpack.c.l.bf16 %v3901
  %v4030 = vunpack.c.l.bf16 %v3902
  %v4031 = vunpack.c.l.bf16 %v3903
  %v4032 = vunpack.c.l.bf16 %v3904
  %v4033 = vunpack.c.l.bf16 %v3905
  %v4034 = vunpack.c.l.bf16 %v3906
  %v4035 = vunpack.c.l.bf16 %v3907
  %v4036 = vunpack.c.l.bf16 %v3908
  %v4037 = vunpack.c.l.bf16 %v3909
  %v4038 = vunpack.c.l.bf16 %v3910
  %v4039 = vunpack.c.l.bf16 %v3911
  %v4040 = vunpack.c.l.bf16 %v3912
  %v4041 = vunpack.c.l.bf16 %v3913
  %v4042 = vunpack.c.l.bf16 %v3914
  %v4043 = vunpack.c.l.bf16 %v3915
  %v4044 = vunpack.c.l.bf16 %v3916
  %v4045 = vunpack.c.l.bf16 %v3917
  %v4046 = vunpack.c.l.bf16 %v3918
  %v4047 = vunpack.c.l.bf16 %v3919
  %v4048 = vunpack.c.l.bf16 %v3920
  %v4049 = vunpack.c.l.bf16 %v3921
  %v4050 = vunpack.c.l.bf16 %v3922
  %v4051 = vunpack.c.l.bf16 %v3923
  %v4052 = vunpack.c.l.bf16 %v3924
  %v4053 = vunpack.c.l.bf16 %v3925
  %v4054 = vunpack.c.l.bf16 %v3926
  %v4055 = vunpack.c.l.bf16 %v3927
  %v4056 = vunpack.c.l.bf16 %v3928
  %v4057 = vunpack.c.l.bf16 %v3929
  %v4058 = vunpack.c.l.bf16 %v3930
  %v4059 = vunpack.c.l.bf16 %v3931
  %v4060 = vunpack.c.l.bf16 %v3932
  %v4061 = vunpack.c.l.bf16 %v3933
  %v4062 = vunpack.c.l.bf16 %v3934
  %v4063 = vunpack.c.l.bf16 %v3935
  %v4064 = vunpack.c.l.bf16 %v3936
  %v4065 = vunpack.c.l.bf16 %v3937
  %v4066 = vunpack.c.l.bf16 %v3938
  %v4067 = vunpack.c.l.bf16 %v3939
  %v4068 = vunpack.c.l.bf16 %v3940
  %v4069 = vunpack.c.l.bf16 %v3941
  %v4070 = vunpack.c.l.bf16 %v3942
  %v4071 = vunpack.c.l.bf16 %v3943
  %v4072 = vunpack.c.l.bf16 %v3944
  %v4073 = vunpack.c.l.bf16 %v3945
  %v4074 = vunpack.c.l.bf16 %v3946
  %v4075 = vunpack.c.l.bf16 %v3947
  %v4076 = vunpack.c.l.bf16 %v3948
  %v4077 = vunpack.c.l.bf16 %v3949
  %v4078 = vunpack.c.l.bf16 %v3950
  %v4079 = vunpack.c.l.bf16 %v3951
  %v4080 = vunpack.c.l.bf16 %v3952
  %v4081 = vunpack.c.l.bf16 %v3953
  %v4082 = vunpack.c.l.bf16 %v3954
  %v4083 = vunpack.c.l.bf16 %v3955
  %v4084 = vunpack.c.l.bf16 %v3956
  %v4085 = vunpack.c.l.bf16 %v3957
  %v4086 = vunpack.c.l.bf16 %v3958
  %v4087 = vunpack.c.l.bf16 %v3959
  %v4088 = vunpack.c.l.bf16 %v3960
  %v4089 = vunpack.c.l.bf16 %v3961
  %v4090 = vunpack.c.l.bf16 %v3962
  %v4091 = vunpack.c.l.bf16 %v3963
  %v4092 = vunpack.c.l.bf16 %v3964
  %v4093 = vunpack.c.l.bf16 %v3965
  %v4094 = vunpack.c.l.bf16 %v3966
  %v4095 = vunpack.c.l.bf16 %v3967
  %v4096 = vunpack.c.l.bf16 %v3968
  %v4097 = vunpack.c.l.bf16 %v3969
  %v4098 = vunpack.c.l.bf16 %v3970
  %v4099 = vunpack.c.l.bf16 %v3971
  %v4100 = vunpack.c.l.bf16 %v3972
  %v4101 = vunpack.c.l.bf16 %v3973
  %v4102 = vunpack.c.l.bf16 %v3974
  %v4103 = vunpack.c.l.bf16 %v3975
  %v4104 = vunpack.c.l.bf16 %v3976
  %v4105 = vunpack.c.l.bf16 %v3977
  %v4106 = vunpack.c.l.bf16 %v3978
  %v4107 = vunpack.c.l.bf16 %v3979
  %v4108 = vunpack.c.l.bf16 %v3980
  %v4109 = vunpack.c.l.bf16 %v3981
  %v4110 = vunpack.c.l.bf16 %v3982
  %v4111 = vunpack.c.l.bf16 %v3983
  %v4112 = vunpack.c.l.bf16 %v3984
  %v4113 = vunpack.c.l.bf16 %v3985
  %v4114 = vunpack.c.l.bf16 %v3986
  %v4115 = vunpack.c.l.bf16 %v3987
  %v4116 = vunpack.c.l.bf16 %v3988
  %v4117 = vunpack.c.l.bf16 %v3989
  %v4118 = vunpack.c.l.bf16 %v3990
  %v4119 = vunpack.c.l.bf16 %v3991
  %v4120 = vsub.f32 %v3736, %v3992
  %v4121 = vsub.f32 %v3737, %v3993
  %v4122 = vsub.f32 %v3738, %v3994
  %v4123 = vsub.f32 %v3739, %v3995
  %v4124 = vsub.f32 %v3740, %v3996
  %v4125 = vsub.f32 %v3741, %v3997
  %v4126 = vsub.f32 %v3742, %v3998
  %v4127 = vsub.f32 %v3743, %v3999
  %v4128 = vsub.f32 %v3744, %v4000
  %v4129 = vsub.f32 %v3745, %v4001
  %v4130 = vsub.f32 %v3746, %v4002
  %v4131 = vsub.f32 %v3747, %v4003
  %v4132 = vsub.f32 %v3748, %v4004
  %v4133 = vsub.f32 %v3749, %v4005
  %v4134 = vsub.f32 %v3750, %v4006
  %v4135 = vsub.f32 %v3751, %v4007
  %v4136 = vsub.f32 %v3752, %v4008
  %v4137 = vsub.f32 %v3753, %v4009
  %v4138 = vsub.f32 %v3754, %v4010
  %v4139 = vsub.f32 %v3755, %v4011
  %v4140 = vsub.f32 %v3756, %v4012
  %v4141 = vsub.f32 %v3757, %v4013
  %v4142 = vsub.f32 %v3758, %v4014
  %v4143 = vsub.f32 %v3759, %v4015
  %v4144 = vsub.f32 %v3760, %v4016
  %v4145 = vsub.f32 %v3761, %v4017
  %v4146 = vsub.f32 %v3762, %v4018
  %v4147 = vsub.f32 %v3763, %v4019
  %v4148 = vsub.f32 %v3764, %v4020
  %v4149 = vsub.f32 %v3765, %v4021
  %v4150 = vsub.f32 %v3766, %v4022
  %v4151 = vsub.f32 %v3767, %v4023
  %v4152 = vsub.f32 %v3768, %v4024
  %v4153 = vsub.f32 %v3769, %v4025
  %v4154 = vsub.f32 %v3770, %v4026
  %v4155 = vsub.f32 %v3771, %v4027
  %v4156 = vsub.f32 %v3772, %v4028
  %v4157 = vsub.f32 %v3773, %v4029
  %v4158 = vsub.f32 %v3774, %v4030
  %v4159 = vsub.f32 %v3775, %v4031
  %v4160 = vsub.f32 %v3776, %v4032
  %v4161 = vsub.f32 %v3777, %v4033
  %v4162 = vsub.f32 %v3778, %v4034
  %v4163 = vsub.f32 %v3779, %v4035
  %v4164 = vsub.f32 %v3780, %v4036
  %v4165 = vsub.f32 %v3781, %v4037
  %v4166 = vsub.f32 %v3782, %v4038
  %v4167 = vsub.f32 %v3783, %v4039
  %v4168 = vsub.f32 %v3784, %v4040
  %v4169 = vsub.f32 %v3785, %v4041
  %v4170 = vsub.f32 %v3786, %v4042
  %v4171 = vsub.f32 %v3787, %v4043
  %v4172 = vsub.f32 %v3788, %v4044
  %v4173 = vsub.f32 %v3789, %v4045
  %v4174 = vsub.f32 %v3790, %v4046
  %v4175 = vsub.f32 %v3791, %v4047
  %v4176 = vsub.f32 %v3792, %v4048
  %v4177 = vsub.f32 %v3793, %v4049
  %v4178 = vsub.f32 %v3794, %v4050
  %v4179 = vsub.f32 %v3795, %v4051
  %v4180 = vsub.f32 %v3796, %v4052
  %v4181 = vsub.f32 %v3797, %v4053
  %v4182 = vsub.f32 %v3798, %v4054
  %v4183 = vsub.f32 %v3799, %v4055
  %v4184 = vsub.f32 %v3800, %v4056
  %v4185 = vsub.f32 %v3801, %v4057
  %v4186 = vsub.f32 %v3802, %v4058
  %v4187 = vsub.f32 %v3803, %v4059
  %v4188 = vsub.f32 %v3804, %v4060
  %v4189 = vsub.f32 %v3805, %v4061
  %v4190 = vsub.f32 %v3806, %v4062
  %v4191 = vsub.f32 %v3807, %v4063
  %v4192 = vsub.f32 %v3808, %v4064
  %v4193 = vsub.f32 %v3809, %v4065
  %v4194 = vsub.f32 %v3810, %v4066
  %v4195 = vsub.f32 %v3811, %v4067
  %v4196 = vsub.f32 %v3812, %v4068
  %v4197 = vsub.f32 %v3813, %v4069
  %v4198 = vsub.f32 %v3814, %v4070
  %v4199 = vsub.f32 %v3815, %v4071
  %v4200 = vsub.f32 %v3816, %v4072
  %v4201 = vsub.f32 %v3817, %v4073
  %v4202 = vsub.f32 %v3818, %v4074
  %v4203 = vsub.f32 %v3819, %v4075
  %v4204 = vsub.f32 %v3820, %v4076
  %v4205 = vsub.f32 %v3821, %v4077
  %v4206 = vsub.f32 %v3822, %v4078
  %v4207 = vsub.f32 %v3823, %v4079
  %v4208 = vsub.f32 %v3824, %v4080
  %v4209 = vsub.f32 %v3825, %v4081
  %v4210 = vsub.f32 %v3826, %v4082
  %v4211 = vsub.f32 %v3827, %v4083
  %v4212 = vsub.f32 %v3828, %v4084
  %v4213 = vsub.f32 %v3829, %v4085
  %v4214 = vsub.f32 %v3830, %v4086
  %v4215 = vsub.f32 %v3831, %v4087
  %v4216 = vsub.f32 %v3832, %v4088
  %v4217 = vsub.f32 %v3833, %v4089
  %v4218 = vsub.f32 %v3834, %v4090
  %v4219 = vsub.f32 %v3835, %v4091
  %v4220 = vsub.f32 %v3836, %v4092
  %v4221 = vsub.f32 %v3837, %v4093
  %v4222 = vsub.f32 %v3838, %v4094
  %v4223 = vsub.f32 %v3839, %v4095
  %v4224 = vsub.f32 %v3840, %v4096
  %v4225 = vsub.f32 %v3841, %v4097
  %v4226 = vsub.f32 %v3842, %v4098
  %v4227 = vsub.f32 %v3843, %v4099
  %v4228 = vsub.f32 %v3844, %v4100
  %v4229 = vsub.f32 %v3845, %v4101
  %v4230 = vsub.f32 %v3846, %v4102
  %v4231 = vsub.f32 %v3847, %v4103
  %v4232 = vsub.f32 %v3848, %v4104
  %v4233 = vsub.f32 %v3849, %v4105
  %v4234 = vsub.f32 %v3850, %v4106
  %v4235 = vsub.f32 %v3851, %v4107
  %v4236 = vsub.f32 %v3852, %v4108
  %v4237 = vsub.f32 %v3853, %v4109
  %v4238 = vsub.f32 %v3854, %v4110
  %v4239 = vsub.f32 %v3855, %v4111
  %v4240 = vsub.f32 %v3856, %v4112
  %v4241 = vsub.f32 %v3857, %v4113
  %v4242 = vsub.f32 %v3858, %v4114
  %v4243 = vsub.f32 %v3859, %v4115
  %v4244 = vsub.f32 %v3860, %v4116
  %v4245 = vsub.f32 %v3861, %v4117
  %v4246 = vsub.f32 %v3862, %v4118
  %v4247 = vsub.f32 %v3863, %v4119
  %v4248 = vpack.c.bf16 %v4120, %v4120
  %v4249 = vpack.c.bf16 %v4121, %v4121
  %v4250 = vpack.c.bf16 %v4122, %v4122
  %v4251 = vpack.c.bf16 %v4123, %v4123
  %v4252 = vpack.c.bf16 %v4124, %v4124
  %v4253 = vpack.c.bf16 %v4125, %v4125
  %v4254 = vpack.c.bf16 %v4126, %v4126
  %v4255 = vpack.c.bf16 %v4127, %v4127
  %v4256 = vpack.c.bf16 %v4128, %v4128
  %v4257 = vpack.c.bf16 %v4129, %v4129
  %v4258 = vpack.c.bf16 %v4130, %v4130
  %v4259 = vpack.c.bf16 %v4131, %v4131
  %v4260 = vpack.c.bf16 %v4132, %v4132
  %v4261 = vpack.c.bf16 %v4133, %v4133
  %v4262 = vpack.c.bf16 %v4134, %v4134
  %v4263 = vpack.c.bf16 %v4135, %v4135
  %v4264 = vpack.c.bf16 %v4136, %v4136
  %v4265 = vpack.c.bf16 %v4137, %v4137
  %v4266 = vpack.c.bf16 %v4138, %v4138
  %v4267 = vpack.c.bf16 %v4139, %v4139
  %v4268 = vpack.c.bf16 %v4140, %v4140
  %v4269 = vpack.c.bf16 %v4141, %v4141
  %v4270 = vpack.c.bf16 %v4142, %v4142
  %v4271 = vpack.c.bf16 %v4143, %v4143
  %v4272 = vpack.c.bf16 %v4144, %v4144
  %v4273 = vpack.c.bf16 %v4145, %v4145
  %v4274 = vpack.c.bf16 %v4146, %v4146
  %v4275 = vpack.c.bf16 %v4147, %v4147
  %v4276 = vpack.c.bf16 %v4148, %v4148
  %v4277 = vpack.c.bf16 %v4149, %v4149
  %v4278 = vpack.c.bf16 %v4150, %v4150
  %v4279 = vpack.c.bf16 %v4151, %v4151
  %v4280 = vpack.c.bf16 %v4152, %v4152
  %v4281 = vpack.c.bf16 %v4153, %v4153
  %v4282 = vpack.c.bf16 %v4154, %v4154
  %v4283 = vpack.c.bf16 %v4155, %v4155
  %v4284 = vpack.c.bf16 %v4156, %v4156
  %v4285 = vpack.c.bf16 %v4157, %v4157
  %v4286 = vpack.c.bf16 %v4158, %v4158
  %v4287 = vpack.c.bf16 %v4159, %v4159
  %v4288 = vpack.c.bf16 %v4160, %v4160
  %v4289 = vpack.c.bf16 %v4161, %v4161
  %v4290 = vpack.c.bf16 %v4162, %v4162
  %v4291 = vpack.c.bf16 %v4163, %v4163
  %v4292 = vpack.c.bf16 %v4164, %v4164
  %v4293 = vpack.c.bf16 %v4165, %v4165
  %v4294 = vpack.c.bf16 %v4166, %v4166
  %v4295 = vpack.c.bf16 %v4167, %v4167
  %v4296 = vpack.c.bf16 %v4168, %v4168
  %v4297 = vpack.c.bf16 %v4169, %v4169
  %v4298 = vpack.c.bf16 %v4170, %v4170
  %v4299 = vpack.c.bf16 %v4171, %v4171
  %v4300 = vpack.c.bf16 %v4172, %v4172
  %v4301 = vpack.c.bf16 %v4173, %v4173
  %v4302 = vpack.c.bf16 %v4174, %v4174
  %v4303 = vpack.c.bf16 %v4175, %v4175
  %v4304 = vpack.c.bf16 %v4176, %v4176
  %v4305 = vpack.c.bf16 %v4177, %v4177
  %v4306 = vpack.c.bf16 %v4178, %v4178
  %v4307 = vpack.c.bf16 %v4179, %v4179
  %v4308 = vpack.c.bf16 %v4180, %v4180
  %v4309 = vpack.c.bf16 %v4181, %v4181
  %v4310 = vpack.c.bf16 %v4182, %v4182
  %v4311 = vpack.c.bf16 %v4183, %v4183
  %v4312 = vpack.c.bf16 %v4184, %v4184
  %v4313 = vpack.c.bf16 %v4185, %v4185
  %v4314 = vpack.c.bf16 %v4186, %v4186
  %v4315 = vpack.c.bf16 %v4187, %v4187
  %v4316 = vpack.c.bf16 %v4188, %v4188
  %v4317 = vpack.c.bf16 %v4189, %v4189
  %v4318 = vpack.c.bf16 %v4190, %v4190
  %v4319 = vpack.c.bf16 %v4191, %v4191
  %v4320 = vpack.c.bf16 %v4192, %v4192
  %v4321 = vpack.c.bf16 %v4193, %v4193
  %v4322 = vpack.c.bf16 %v4194, %v4194
  %v4323 = vpack.c.bf16 %v4195, %v4195
  %v4324 = vpack.c.bf16 %v4196, %v4196
  %v4325 = vpack.c.bf16 %v4197, %v4197
  %v4326 = vpack.c.bf16 %v4198, %v4198
  %v4327 = vpack.c.bf16 %v4199, %v4199
  %v4328 = vpack.c.bf16 %v4200, %v4200
  %v4329 = vpack.c.bf16 %v4201, %v4201
  %v4330 = vpack.c.bf16 %v4202, %v4202
  %v4331 = vpack.c.bf16 %v4203, %v4203
  %v4332 = vpack.c.bf16 %v4204, %v4204
  %v4333 = vpack.c.bf16 %v4205, %v4205
  %v4334 = vpack.c.bf16 %v4206, %v4206
  %v4335 = vpack.c.bf16 %v4207, %v4207
  %v4336 = vpack.c.bf16 %v4208, %v4208
  %v4337 = vpack.c.bf16 %v4209, %v4209
  %v4338 = vpack.c.bf16 %v4210, %v4210
  %v4339 = vpack.c.bf16 %v4211, %v4211
  %v4340 = vpack.c.bf16 %v4212, %v4212
  %v4341 = vpack.c.bf16 %v4213, %v4213
  %v4342 = vpack.c.bf16 %v4214, %v4214
  %v4343 = vpack.c.bf16 %v4215, %v4215
  %v4344 = vpack.c.bf16 %v4216, %v4216
  %v4345 = vpack.c.bf16 %v4217, %v4217
  %v4346 = vpack.c.bf16 %v4218, %v4218
  %v4347 = vpack.c.bf16 %v4219, %v4219
  %v4348 = vpack.c.bf16 %v4220, %v4220
  %v4349 = vpack.c.bf16 %v4221, %v4221
  %v4350 = vpack.c.bf16 %v4222, %v4222
  %v4351 = vpack.c.bf16 %v4223, %v4223
  %v4352 = vpack.c.bf16 %v4224, %v4224
  %v4353 = vpack.c.bf16 %v4225, %v4225
  %v4354 = vpack.c.bf16 %v4226, %v4226
  %v4355 = vpack.c.bf16 %v4227, %v4227
  %v4356 = vpack.c.bf16 %v4228, %v4228
  %v4357 = vpack.c.bf16 %v4229, %v4229
  %v4358 = vpack.c.bf16 %v4230, %v4230
  %v4359 = vpack.c.bf16 %v4231, %v4231
  %v4360 = vpack.c.bf16 %v4232, %v4232
  %v4361 = vpack.c.bf16 %v4233, %v4233
  %v4362 = vpack.c.bf16 %v4234, %v4234
  %v4363 = vpack.c.bf16 %v4235, %v4235
  %v4364 = vpack.c.bf16 %v4236, %v4236
  %v4365 = vpack.c.bf16 %v4237, %v4237
  %v4366 = vpack.c.bf16 %v4238, %v4238
  %v4367 = vpack.c.bf16 %v4239, %v4239
  %v4368 = vpack.c.bf16 %v4240, %v4240
  %v4369 = vpack.c.bf16 %v4241, %v4241
  %v4370 = vpack.c.bf16 %v4242, %v4242
  %v4371 = vpack.c.bf16 %v4243, %v4243
  %v4372 = vpack.c.bf16 %v4244, %v4244
  %v4373 = vpack.c.bf16 %v4245, %v4245
  %v4374 = vpack.c.bf16 %v4246, %v4246
  %v4375 = vpack.c.bf16 %v4247, %v4247
  %v4376 = vunpack.c.l.bf16 %v4248
  %v4377 = vunpack.c.l.bf16 %v4249
  %v4378 = vunpack.c.l.bf16 %v4250
  %v4379 = vunpack.c.l.bf16 %v4251
  %v4380 = vunpack.c.l.bf16 %v4252
  %v4381 = vunpack.c.l.bf16 %v4253
  %v4382 = vunpack.c.l.bf16 %v4254
  %v4383 = vunpack.c.l.bf16 %v4255
  %v4384 = vunpack.c.l.bf16 %v4256
  %v4385 = vunpack.c.l.bf16 %v4257
  %v4386 = vunpack.c.l.bf16 %v4258
  %v4387 = vunpack.c.l.bf16 %v4259
  %v4388 = vunpack.c.l.bf16 %v4260
  %v4389 = vunpack.c.l.bf16 %v4261
  %v4390 = vunpack.c.l.bf16 %v4262
  %v4391 = vunpack.c.l.bf16 %v4263
  %v4392 = vunpack.c.l.bf16 %v4264
  %v4393 = vunpack.c.l.bf16 %v4265
  %v4394 = vunpack.c.l.bf16 %v4266
  %v4395 = vunpack.c.l.bf16 %v4267
  %v4396 = vunpack.c.l.bf16 %v4268
  %v4397 = vunpack.c.l.bf16 %v4269
  %v4398 = vunpack.c.l.bf16 %v4270
  %v4399 = vunpack.c.l.bf16 %v4271
  %v4400 = vunpack.c.l.bf16 %v4272
  %v4401 = vunpack.c.l.bf16 %v4273
  %v4402 = vunpack.c.l.bf16 %v4274
  %v4403 = vunpack.c.l.bf16 %v4275
  %v4404 = vunpack.c.l.bf16 %v4276
  %v4405 = vunpack.c.l.bf16 %v4277
  %v4406 = vunpack.c.l.bf16 %v4278
  %v4407 = vunpack.c.l.bf16 %v4279
  %v4408 = vunpack.c.l.bf16 %v4280
  %v4409 = vunpack.c.l.bf16 %v4281
  %v4410 = vunpack.c.l.bf16 %v4282
  %v4411 = vunpack.c.l.bf16 %v4283
  %v4412 = vunpack.c.l.bf16 %v4284
  %v4413 = vunpack.c.l.bf16 %v4285
  %v4414 = vunpack.c.l.bf16 %v4286
  %v4415 = vunpack.c.l.bf16 %v4287
  %v4416 = vunpack.c.l.bf16 %v4288
  %v4417 = vunpack.c.l.bf16 %v4289
  %v4418 = vunpack.c.l.bf16 %v4290
  %v4419 = vunpack.c.l.bf16 %v4291
  %v4420 = vunpack.c.l.bf16 %v4292
  %v4421 = vunpack.c.l.bf16 %v4293
  %v4422 = vunpack.c.l.bf16 %v4294
  %v4423 = vunpack.c.l.bf16 %v4295
  %v4424 = vunpack.c.l.bf16 %v4296
  %v4425 = vunpack.c.l.bf16 %v4297
  %v4426 = vunpack.c.l.bf16 %v4298
  %v4427 = vunpack.c.l.bf16 %v4299
  %v4428 = vunpack.c.l.bf16 %v4300
  %v4429 = vunpack.c.l.bf16 %v4301
  %v4430 = vunpack.c.l.bf16 %v4302
  %v4431 = vunpack.c.l.bf16 %v4303
  %v4432 = vunpack.c.l.bf16 %v4304
  %v4433 = vunpack.c.l.bf16 %v4305
  %v4434 = vunpack.c.l.bf16 %v4306
  %v4435 = vunpack.c.l.bf16 %v4307
  %v4436 = vunpack.c.l.bf16 %v4308
  %v4437 = vunpack.c.l.bf16 %v4309
  %v4438 = vunpack.c.l.bf16 %v4310
  %v4439 = vunpack.c.l.bf16 %v4311
  %v4440 = vunpack.c.l.bf16 %v4312
  %v4441 = vunpack.c.l.bf16 %v4313
  %v4442 = vunpack.c.l.bf16 %v4314
  %v4443 = vunpack.c.l.bf16 %v4315
  %v4444 = vunpack.c.l.bf16 %v4316
  %v4445 = vunpack.c.l.bf16 %v4317
  %v4446 = vunpack.c.l.bf16 %v4318
  %v4447 = vunpack.c.l.bf16 %v4319
  %v4448 = vunpack.c.l.bf16 %v4320
  %v4449 = vunpack.c.l.bf16 %v4321
  %v4450 = vunpack.c.l.bf16 %v4322
  %v4451 = vunpack.c.l.bf16 %v4323
  %v4452 = vunpack.c.l.bf16 %v4324
  %v4453 = vunpack.c.l.bf16 %v4325
  %v4454 = vunpack.c.l.bf16 %v4326
  %v4455 = vunpack.c.l.bf16 %v4327
  %v4456 = vunpack.c.l.bf16 %v4328
  %v4457 = vunpack.c.l.bf16 %v4329
  %v4458 = vunpack.c.l.bf16 %v4330
  %v4459 = vunpack.c.l.bf16 %v4331
  %v4460 = vunpack.c.l.bf16 %v4332
  %v4461 = vunpack.c.l.bf16 %v4333
  %v4462 = vunpack.c.l.bf16 %v4334
  %v4463 = vunpack.c.l.bf16 %v4335
  %v4464 = vunpack.c.l.bf16 %v4336
  %v4465 = vunpack.c.l.bf16 %v4337
  %v4466 = vunpack.c.l.bf16 %v4338
  %v4467 = vunpack.c.l.bf16 %v4339
  %v4468 = vunpack.c.l.bf16 %v4340
  %v4469 = vunpack.c.l.bf16 %v4341
  %v4470 = vunpack.c.l.bf16 %v4342
  %v4471 = vunpack.c.l.bf16 %v4343
  %v4472 = vunpack.c.l.bf16 %v4344
  %v4473 = vunpack.c.l.bf16 %v4345
  %v4474 = vunpack.c.l.bf16 %v4346
  %v4475 = vunpack.c.l.bf16 %v4347
  %v4476 = vunpack.c.l.bf16 %v4348
  %v4477 = vunpack.c.l.bf16 %v4349
  %v4478 = vunpack.c.l.bf16 %v4350
  %v4479 = vunpack.c.l.bf16 %v4351
  %v4480 = vunpack.c.l.bf16 %v4352
  %v4481 = vunpack.c.l.bf16 %v4353
  %v4482 = vunpack.c.l.bf16 %v4354
  %v4483 = vunpack.c.l.bf16 %v4355
  %v4484 = vunpack.c.l.bf16 %v4356
  %v4485 = vunpack.c.l.bf16 %v4357
  %v4486 = vunpack.c.l.bf16 %v4358
  %v4487 = vunpack.c.l.bf16 %v4359
  %v4488 = vunpack.c.l.bf16 %v4360
  %v4489 = vunpack.c.l.bf16 %v4361
  %v4490 = vunpack.c.l.bf16 %v4362
  %v4491 = vunpack.c.l.bf16 %v4363
  %v4492 = vunpack.c.l.bf16 %v4364
  %v4493 = vunpack.c.l.bf16 %v4365
  %v4494 = vunpack.c.l.bf16 %v4366
  %v4495 = vunpack.c.l.bf16 %v4367
  %v4496 = vunpack.c.l.bf16 %v4368
  %v4497 = vunpack.c.l.bf16 %v4369
  %v4498 = vunpack.c.l.bf16 %v4370
  %v4499 = vunpack.c.l.bf16 %v4371
  %v4500 = vunpack.c.l.bf16 %v4372
  %v4501 = vunpack.c.l.bf16 %v4373
  %v4502 = vunpack.c.l.bf16 %v4374
  %v4503 = vunpack.c.l.bf16 %v4375
  %v4504 = vsub.f32 %v4120, %v4376
  %v4505 = vsub.f32 %v4121, %v4377
  %v4506 = vsub.f32 %v4122, %v4378
  %v4507 = vsub.f32 %v4123, %v4379
  %v4508 = vsub.f32 %v4124, %v4380
  %v4509 = vsub.f32 %v4125, %v4381
  %v4510 = vsub.f32 %v4126, %v4382
  %v4511 = vsub.f32 %v4127, %v4383
  %v4512 = vsub.f32 %v4128, %v4384
  %v4513 = vsub.f32 %v4129, %v4385
  %v4514 = vsub.f32 %v4130, %v4386
  %v4515 = vsub.f32 %v4131, %v4387
  %v4516 = vsub.f32 %v4132, %v4388
  %v4517 = vsub.f32 %v4133, %v4389
  %v4518 = vsub.f32 %v4134, %v4390
  %v4519 = vsub.f32 %v4135, %v4391
  %v4520 = vsub.f32 %v4136, %v4392
  %v4521 = vsub.f32 %v4137, %v4393
  %v4522 = vsub.f32 %v4138, %v4394
  %v4523 = vsub.f32 %v4139, %v4395
  %v4524 = vsub.f32 %v4140, %v4396
  %v4525 = vsub.f32 %v4141, %v4397
  %v4526 = vsub.f32 %v4142, %v4398
  %v4527 = vsub.f32 %v4143, %v4399
  %v4528 = vsub.f32 %v4144, %v4400
  %v4529 = vsub.f32 %v4145, %v4401
  %v4530 = vsub.f32 %v4146, %v4402
  %v4531 = vsub.f32 %v4147, %v4403
  %v4532 = vsub.f32 %v4148, %v4404
  %v4533 = vsub.f32 %v4149, %v4405
  %v4534 = vsub.f32 %v4150, %v4406
  %v4535 = vsub.f32 %v4151, %v4407
  %v4536 = vsub.f32 %v4152, %v4408
  %v4537 = vsub.f32 %v4153, %v4409
  %v4538 = vsub.f32 %v4154, %v4410
  %v4539 = vsub.f32 %v4155, %v4411
  %v4540 = vsub.f32 %v4156, %v4412
  %v4541 = vsub.f32 %v4157, %v4413
  %v4542 = vsub.f32 %v4158, %v4414
  %v4543 = vsub.f32 %v4159, %v4415
  %v4544 = vsub.f32 %v4160, %v4416
  %v4545 = vsub.f32 %v4161, %v4417
  %v4546 = vsub.f32 %v4162, %v4418
  %v4547 = vsub.f32 %v4163, %v4419
  %v4548 = vsub.f32 %v4164, %v4420
  %v4549 = vsub.f32 %v4165, %v4421
  %v4550 = vsub.f32 %v4166, %v4422
  %v4551 = vsub.f32 %v4167, %v4423
  %v4552 = vsub.f32 %v4168, %v4424
  %v4553 = vsub.f32 %v4169, %v4425
  %v4554 = vsub.f32 %v4170, %v4426
  %v4555 = vsub.f32 %v4171, %v4427
  %v4556 = vsub.f32 %v4172, %v4428
  %v4557 = vsub.f32 %v4173, %v4429
  %v4558 = vsub.f32 %v4174, %v4430
  %v4559 = vsub.f32 %v4175, %v4431
  %v4560 = vsub.f32 %v4176, %v4432
  %v4561 = vsub.f32 %v4177, %v4433
  %v4562 = vsub.f32 %v4178, %v4434
  %v4563 = vsub.f32 %v4179, %v4435
  %v4564 = vsub.f32 %v4180, %v4436
  %v4565 = vsub.f32 %v4181, %v4437
  %v4566 = vsub.f32 %v4182, %v4438
  %v4567 = vsub.f32 %v4183, %v4439
  %v4568 = vsub.f32 %v4184, %v4440
  %v4569 = vsub.f32 %v4185, %v4441
  %v4570 = vsub.f32 %v4186, %v4442
  %v4571 = vsub.f32 %v4187, %v4443
  %v4572 = vsub.f32 %v4188, %v4444
  %v4573 = vsub.f32 %v4189, %v4445
  %v4574 = vsub.f32 %v4190, %v4446
  %v4575 = vsub.f32 %v4191, %v4447
  %v4576 = vsub.f32 %v4192, %v4448
  %v4577 = vsub.f32 %v4193, %v4449
  %v4578 = vsub.f32 %v4194, %v4450
  %v4579 = vsub.f32 %v4195, %v4451
  %v4580 = vsub.f32 %v4196, %v4452
  %v4581 = vsub.f32 %v4197, %v4453
  %v4582 = vsub.f32 %v4198, %v4454
  %v4583 = vsub.f32 %v4199, %v4455
  %v4584 = vsub.f32 %v4200, %v4456
  %v4585 = vsub.f32 %v4201, %v4457
  %v4586 = vsub.f32 %v4202, %v4458
  %v4587 = vsub.f32 %v4203, %v4459
  %v4588 = vsub.f32 %v4204, %v4460
  %v4589 = vsub.f32 %v4205, %v4461
  %v4590 = vsub.f32 %v4206, %v4462
  %v4591 = vsub.f32 %v4207, %v4463
  %v4592 = vsub.f32 %v4208, %v4464
  %v4593 = vsub.f32 %v4209, %v4465
  %v4594 = vsub.f32 %v4210, %v4466
  %v4595 = vsub.f32 %v4211, %v4467
  %v4596 = vsub.f32 %v4212, %v4468
  %v4597 = vsub.f32 %v4213, %v4469
  %v4598 = vsub.f32 %v4214, %v4470
  %v4599 = vsub.f32 %v4215, %v4471
  %v4600 = vsub.f32 %v4216, %v4472
  %v4601 = vsub.f32 %v4217, %v4473
  %v4602 = vsub.f32 %v4218, %v4474
  %v4603 = vsub.f32 %v4219, %v4475
  %v4604 = vsub.f32 %v4220, %v4476
  %v4605 = vsub.f32 %v4221, %v4477
  %v4606 = vsub.f32 %v4222, %v4478
  %v4607 = vsub.f32 %v4223, %v4479
  %v4608 = vsub.f32 %v4224, %v4480
  %v4609 = vsub.f32 %v4225, %v4481
  %v4610 = vsub.f32 %v4226, %v4482
  %v4611 = vsub.f32 %v4227, %v4483
  %v4612 = vsub.f32 %v4228, %v4484
  %v4613 = vsub.f32 %v4229, %v4485
  %v4614 = vsub.f32 %v4230, %v4486
  %v4615 = vsub.f32 %v4231, %v4487
  %v4616 = vsub.f32 %v4232, %v4488
  %v4617 = vsub.f32 %v4233, %v4489
  %v4618 = vsub.f32 %v4234, %v4490
  %v4619 = vsub.f32 %v4235, %v4491
  %v4620 = vsub.f32 %v4236, %v4492
  %v4621 = vsub.f32 %v4237, %v4493
  %v4622 = vsub.f32 %v4238, %v4494
  %v4623 = vsub.f32 %v4239, %v4495
  %v4624 = vsub.f32 %v4240, %v4496
  %v4625 = vsub.f32 %v4241, %v4497
  %v4626 = vsub.f32 %v4242, %v4498
  %v4627 = vsub.f32 %v4243, %v4499
  %v4628 = vsub.f32 %v4244, %v4500
  %v4629 = vsub.f32 %v4245, %v4501
  %v4630 = vsub.f32 %v4246, %v4502
  %v4631 = vsub.f32 %v4247, %v4503
  %v4632 = vpack.c.bf16 %v4505, %v4504
  %v4633 = vpack.c.bf16 %v4507, %v4506
  %v4634 = vpack.c.bf16 %v4509, %v4508
  %v4635 = vpack.c.bf16 %v4511, %v4510
  %v4636 = vpack.c.bf16 %v4513, %v4512
  %v4637 = vpack.c.bf16 %v4515, %v4514
  %v4638 = vpack.c.bf16 %v4517, %v4516
  %v4639 = vpack.c.bf16 %v4519, %v4518
  %v4640 = vpack.c.bf16 %v4521, %v4520
  %v4641 = vpack.c.bf16 %v4523, %v4522
  %v4642 = vpack.c.bf16 %v4525, %v4524
  %v4643 = vpack.c.bf16 %v4527, %v4526
  %v4644 = vpack.c.bf16 %v4529, %v4528
  %v4645 = vpack.c.bf16 %v4531, %v4530
  %v4646 = vpack.c.bf16 %v4533, %v4532
  %v4647 = vpack.c.bf16 %v4535, %v4534
  %v4648 = vpack.c.bf16 %v4537, %v4536
  %v4649 = vpack.c.bf16 %v4539, %v4538
  %v4650 = vpack.c.bf16 %v4541, %v4540
  %v4651 = vpack.c.bf16 %v4543, %v4542
  %v4652 = vpack.c.bf16 %v4545, %v4544
  %v4653 = vpack.c.bf16 %v4547, %v4546
  %v4654 = vpack.c.bf16 %v4549, %v4548
  %v4655 = vpack.c.bf16 %v4551, %v4550
  %v4656 = vpack.c.bf16 %v4553, %v4552
  %v4657 = vpack.c.bf16 %v4555, %v4554
  %v4658 = vpack.c.bf16 %v4557, %v4556
  %v4659 = vpack.c.bf16 %v4559, %v4558
  %v4660 = vpack.c.bf16 %v4561, %v4560
  %v4661 = vpack.c.bf16 %v4563, %v4562
  %v4662 = vpack.c.bf16 %v4565, %v4564
  %v4663 = vpack.c.bf16 %v4567, %v4566
  %v4664 = vpack.c.bf16 %v4569, %v4568
  %v4665 = vpack.c.bf16 %v4571, %v4570
  %v4666 = vpack.c.bf16 %v4573, %v4572
  %v4667 = vpack.c.bf16 %v4575, %v4574
  %v4668 = vpack.c.bf16 %v4577, %v4576
  %v4669 = vpack.c.bf16 %v4579, %v4578
  %v4670 = vpack.c.bf16 %v4581, %v4580
  %v4671 = vpack.c.bf16 %v4583, %v4582
  %v4672 = vpack.c.bf16 %v4585, %v4584
  %v4673 = vpack.c.bf16 %v4587, %v4586
  %v4674 = vpack.c.bf16 %v4589, %v4588
  %v4675 = vpack.c.bf16 %v4591, %v4590
  %v4676 = vpack.c.bf16 %v4593, %v4592
  %v4677 = vpack.c.bf16 %v4595, %v4594
  %v4678 = vpack.c.bf16 %v4597, %v4596
  %v4679 = vpack.c.bf16 %v4599, %v4598
  %v4680 = vpack.c.bf16 %v4601, %v4600
  %v4681 = vpack.c.bf16 %v4603, %v4602
  %v4682 = vpack.c.bf16 %v4605, %v4604
  %v4683 = vpack.c.bf16 %v4607, %v4606
  %v4684 = vpack.c.bf16 %v4609, %v4608
  %v4685 = vpack.c.bf16 %v4611, %v4610
  %v4686 = vpack.c.bf16 %v4613, %v4612
  %v4687 = vpack.c.bf16 %v4615, %v4614
  %v4688 = vpack.c.bf16 %v4617, %v4616
  %v4689 = vpack.c.bf16 %v4619, %v4618
  %v4690 = vpack.c.bf16 %v4621, %v4620
  %v4691 = vpack.c.bf16 %v4623, %v4622
  %v4692 = vpack.c.bf16 %v4625, %v4624
  %v4693 = vpack.c.bf16 %v4627, %v4626
  %v4694 = vpack.c.bf16 %v4629, %v4628
  %v4695 = vpack.c.bf16 %v4631, %v4630
  %v4824 = vunpack.c.l.b16 %v4248
  %v4825 = vunpack.c.l.b16 %v4249
  %v4826 = vunpack.c.l.b16 %v4250
  %v4827 = vunpack.c.l.b16 %v4251
  %v4828 = vunpack.c.l.b16 %v4252
  %v4829 = vunpack.c.l.b16 %v4253
  %v4830 = vunpack.c.l.b16 %v4254
  %v4831 = vunpack.c.l.b16 %v4255
  %v4832 = vunpack.c.l.b16 %v4256
  %v4833 = vunpack.c.l.b16 %v4257
  %v4834 = vunpack.c.l.b16 %v4258
  %v4835 = vunpack.c.l.b16 %v4259
  %v4836 = vunpack.c.l.b16 %v4260
  %v4837 = vunpack.c.l.b16 %v4261
  %v4838 = vunpack.c.l.b16 %v4262
  %v4839 = vunpack.c.l.b16 %v4263
  %v4840 = vunpack.c.l.b16 %v4264
  %v4841 = vunpack.c.l.b16 %v4265
  %v4842 = vunpack.c.l.b16 %v4266
  %v4843 = vunpack.c.l.b16 %v4267
  %v4844 = vunpack.c.l.b16 %v4268
  %v4845 = vunpack.c.l.b16 %v4269
  %v4846 = vunpack.c.l.b16 %v4270
  %v4847 = vunpack.c.l.b16 %v4271
  %v4848 = vunpack.c.l.b16 %v4272
  %v4849 = vunpack.c.l.b16 %v4273
  %v4850 = vunpack.c.l.b16 %v4274
  %v4851 = vunpack.c.l.b16 %v4275
  %v4852 = vunpack.c.l.b16 %v4276
  %v4853 = vunpack.c.l.b16 %v4277
  %v4854 = vunpack.c.l.b16 %v4278
  %v4855 = vunpack.c.l.b16 %v4279
  %v4856 = vunpack.c.l.b16 %v4280
  %v4857 = vunpack.c.l.b16 %v4281
  %v4858 = vunpack.c.l.b16 %v4282
  %v4859 = vunpack.c.l.b16 %v4283
  %v4860 = vunpack.c.l.b16 %v4284
  %v4861 = vunpack.c.l.b16 %v4285
  %v4862 = vunpack.c.l.b16 %v4286
  %v4863 = vunpack.c.l.b16 %v4287
  %v4864 = vunpack.c.l.b16 %v4288
  %v4865 = vunpack.c.l.b16 %v4289
  %v4866 = vunpack.c.l.b16 %v4290
  %v4867 = vunpack.c.l.b16 %v4291
  %v4868 = vunpack.c.l.b16 %v4292
  %v4869 = vunpack.c.l.b16 %v4293
  %v4870 = vunpack.c.l.b16 %v4294
  %v4871 = vunpack.c.l.b16 %v4295
  %v4872 = vunpack.c.l.b16 %v4296
  %v4873 = vunpack.c.l.b16 %v4297
  %v4874 = vunpack.c.l.b16 %v4298
  %v4875 = vunpack.c.l.b16 %v4299
  %v4876 = vunpack.c.l.b16 %v4300
  %v4877 = vunpack.c.l.b16 %v4301
  %v4878 = vunpack.c.l.b16 %v4302
  %v4879 = vunpack.c.l.b16 %v4303
  %v4880 = vunpack.c.l.b16 %v4304
  %v4881 = vunpack.c.l.b16 %v4305
  %v4882 = vunpack.c.l.b16 %v4306
  %v4883 = vunpack.c.l.b16 %v4307
  %v4884 = vunpack.c.l.b16 %v4308
  %v4885 = vunpack.c.l.b16 %v4309
  %v4886 = vunpack.c.l.b16 %v4310
  %v4887 = vunpack.c.l.b16 %v4311
  %v4888 = vunpack.c.l.b16 %v4312
  %v4889 = vunpack.c.l.b16 %v4313
  %v4890 = vunpack.c.l.b16 %v4314
  %v4891 = vunpack.c.l.b16 %v4315
  %v4892 = vunpack.c.l.b16 %v4316
  %v4893 = vunpack.c.l.b16 %v4317
  %v4894 = vunpack.c.l.b16 %v4318
  %v4895 = vunpack.c.l.b16 %v4319
  %v4896 = vunpack.c.l.b16 %v4320
  %v4897 = vunpack.c.l.b16 %v4321
  %v4898 = vunpack.c.l.b16 %v4322
  %v4899 = vunpack.c.l.b16 %v4323
  %v4900 = vunpack.c.l.b16 %v4324
  %v4901 = vunpack.c.l.b16 %v4325
  %v4902 = vunpack.c.l.b16 %v4326
  %v4903 = vunpack.c.l.b16 %v4327
  %v4904 = vunpack.c.l.b16 %v4328
  %v4905 = vunpack.c.l.b16 %v4329
  %v4906 = vunpack.c.l.b16 %v4330
  %v4907 = vunpack.c.l.b16 %v4331
  %v4908 = vunpack.c.l.b16 %v4332
  %v4909 = vunpack.c.l.b16 %v4333
  %v4910 = vunpack.c.l.b16 %v4334
  %v4911 = vunpack.c.l.b16 %v4335
  %v4912 = vunpack.c.l.b16 %v4336
  %v4913 = vunpack.c.l.b16 %v4337
  %v4914 = vunpack.c.l.b16 %v4338
  %v4915 = vunpack.c.l.b16 %v4339
  %v4916 = vunpack.c.l.b16 %v4340
  %v4917 = vunpack.c.l.b16 %v4341
  %v4918 = vunpack.c.l.b16 %v4342
  %v4919 = vunpack.c.l.b16 %v4343
  %v4920 = vunpack.c.l.b16 %v4344
  %v4921 = vunpack.c.l.b16 %v4345
  %v4922 = vunpack.c.l.b16 %v4346
  %v4923 = vunpack.c.l.b16 %v4347
  %v4924 = vunpack.c.l.b16 %v4348
  %v4925 = vunpack.c.l.b16 %v4349
  %v4926 = vunpack.c.l.b16 %v4350
  %v4927 = vunpack.c.l.b16 %v4351
  %v4928 = vunpack.c.l.b16 %v4352
  %v4929 = vunpack.c.l.b16 %v4353
  %v4930 = vunpack.c.l.b16 %v4354
  %v4931 = vunpack.c.l.b16 %v4355
  %v4932 = vunpack.c.l.b16 %v4356
  %v4933 = vunpack.c.l.b16 %v4357
  %v4934 = vunpack.c.l.b16 %v4358
  %v4935 = vunpack.c.l.b16 %v4359
  %v4936 = vunpack.c.l.b16 %v4360
  %v4937 = vunpack.c.l.b16 %v4361
  %v4938 = vunpack.c.l.b16 %v4362
  %v4939 = vunpack.c.l.b16 %v4363
  %v4940 = vunpack.c.l.b16 %v4364
  %v4941 = vunpack.c.l.b16 %v4365
  %v4942 = vunpack.c.l.b16 %v4366
  %v4943 = vunpack.c.l.b16 %v4367
  %v4944 = vunpack.c.l.b16 %v4368
  %v4945 = vunpack.c.l.b16 %v4369
  %v4946 = vunpack.c.l.b16 %v4370
  %v4947 = vunpack.c.l.b16 %v4371
  %v4948 = vunpack.c.l.b16 %v4372
  %v4949 = vunpack.c.l.b16 %v4373
  %v4950 = vunpack.c.l.b16 %v4374
  %v4951 = vunpack.c.l.b16 %v4375
  %v4952 = vpack.c.b16 %v4825, %v4824
  %v4953 = vpack.c.b16 %v4827, %v4826
  %v4954 = vpack.c.b16 %v4829, %v4828
  %v4955 = vpack.c.b16 %v4831, %v4830
  %v4956 = vpack.c.b16 %v4833, %v4832
  %v4957 = vpack.c.b16 %v4835, %v4834
  %v4958 = vpack.c.b16 %v4837, %v4836
  %v4959 = vpack.c.b16 %v4839, %v4838
  %v4960 = vpack.c.b16 %v4841, %v4840
  %v4961 = vpack.c.b16 %v4843, %v4842
  %v4962 = vpack.c.b16 %v4845, %v4844
  %v4963 = vpack.c.b16 %v4847, %v4846
  %v4964 = vpack.c.b16 %v4849, %v4848
  %v4965 = vpack.c.b16 %v4851, %v4850
  %v4966 = vpack.c.b16 %v4853, %v4852
  %v4967 = vpack.c.b16 %v4855, %v4854
  %v4968 = vpack.c.b16 %v4857, %v4856
  %v4969 = vpack.c.b16 %v4859, %v4858
  %v4970 = vpack.c.b16 %v4861, %v4860
  %v4971 = vpack.c.b16 %v4863, %v4862
  %v4972 = vpack.c.b16 %v4865, %v4864
  %v4973 = vpack.c.b16 %v4867, %v4866
  %v4974 = vpack.c.b16 %v4869, %v4868
  %v4975 = vpack.c.b16 %v4871, %v4870
  %v4976 = vpack.c.b16 %v4873, %v4872
  %v4977 = vpack.c.b16 %v4875, %v4874
  %v4978 = vpack.c.b16 %v4877, %v4876
  %v4979 = vpack.c.b16 %v4879, %v4878
  %v4980 = vpack.c.b16 %v4881, %v4880
  %v4981 = vpack.c.b16 %v4883, %v4882
  %v4982 = vpack.c.b16 %v4885, %v4884
  %v4983 = vpack.c.b16 %v4887, %v4886
  %v4984 = vpack.c.b16 %v4889, %v4888
  %v4985 = vpack.c.b16 %v4891, %v4890
  %v4986 = vpack.c.b16 %v4893, %v4892
  %v4987 = vpack.c.b16 %v4895, %v4894
  %v4988 = vpack.c.b16 %v4897, %v4896
  %v4989 = vpack.c.b16 %v4899, %v4898
  %v4990 = vpack.c.b16 %v4901, %v4900
  %v4991 = vpack.c.b16 %v4903, %v4902
  %v4992 = vpack.c.b16 %v4905, %v4904
  %v4993 = vpack.c.b16 %v4907, %v4906
  %v4994 = vpack.c.b16 %v4909, %v4908
  %v4995 = vpack.c.b16 %v4911, %v4910
  %v4996 = vpack.c.b16 %v4913, %v4912
  %v4997 = vpack.c.b16 %v4915, %v4914
  %v4998 = vpack.c.b16 %v4917, %v4916
  %v4999 = vpack.c.b16 %v4919, %v4918
  %v5000 = vpack.c.b16 %v4921, %v4920
  %v5001 = vpack.c.b16 %v4923, %v4922
  %v5002 = vpack.c.b16 %v4925, %v4924
  %v5003 = vpack.c.b16 %v4927, %v4926
  %v5004 = vpack.c.b16 %v4929, %v4928
  %v5005 = vpack.c.b16 %v4931, %v4930
  %v5006 = vpack.c.b16 %v4933, %v4932
  %v5007 = vpack.c.b16 %v4935, %v4934
  %v5008 = vpack.c.b16 %v4937, %v4936
  %v5009 = vpack.c.b16 %v4939, %v4938
  %v5010 = vpack.c.b16 %v4941, %v4940
  %v5011 = vpack.c.b16 %v4943, %v4942
  %v5012 = vpack.c.b16 %v4945, %v4944
  %v5013 = vpack.c.b16 %v4947, %v4946
  %v5014 = vpack.c.b16 %v4949, %v4948
  %v5015 = vpack.c.b16 %v4951, %v4950
  %5080 = vmatpush.bf16.msra.mxu0 %v1453
  %5081 = vmatpush.bf16.msra.mxu0 %v1452
  %5082 = vmatpush.bf16.msra.mxu0 %v1451
  %5083 = vmatpush.bf16.msra.mxu0 %v1450
  %5084 = vmatpush.bf16.msra.mxu0 %v1449
  %5085 = vmatpush.bf16.msra.mxu0 %v1448
  %5086 = vmatpush.bf16.msra.mxu0 %v1447
  %5087 = vmatpush.bf16.msra.mxu0 %v1446
  %5088 = vmatmul.bf16.gmra.mxu0 %v4952
  %v5089 = vpop.f32.mrf.mxu0
  %v5090 = vadd.f32 0.0, %v5089
  %v5091 = vpop.f32.mrf.mxu0
  %v5092 = vadd.f32 0.0, %v5091
  %5093 = vmatmul.bf16.gmra.mxu0 %v4953
  %v5094 = vpop.f32.mrf.mxu0
  %v5095 = vadd.f32 0.0, %v5094
  %v5096 = vpop.f32.mrf.mxu0
  %v5097 = vadd.f32 0.0, %v5096
  %5098 = vmatmul.bf16.gmra.mxu0 %v4954
  %v5099 = vpop.f32.mrf.mxu0
  %v5100 = vadd.f32 0.0, %v5099
  %v5101 = vpop.f32.mrf.mxu0
  %v5102 = vadd.f32 0.0, %v5101
  %5103 = vmatmul.bf16.gmra.mxu0 %v4955
  %v5104 = vpop.f32.mrf.mxu0
  %v5105 = vadd.f32 0.0, %v5104
  %v5106 = vpop.f32.mrf.mxu0
  %v5107 = vadd.f32 0.0, %v5106
  %5108 = vmatmul.bf16.gmra.mxu0 %v4956
  %v5109 = vpop.f32.mrf.mxu0
  %v5110 = vadd.f32 0.0, %v5109
  %v5111 = vpop.f32.mrf.mxu0
  %v5112 = vadd.f32 0.0, %v5111
  %5113 = vmatmul.bf16.gmra.mxu0 %v4957
  %v5114 = vpop.f32.mrf.mxu0
  %v5115 = vadd.f32 0.0, %v5114
  %v5116 = vpop.f32.mrf.mxu0
  %v5117 = vadd.f32 0.0, %v5116
  %5118 = vmatmul.bf16.gmra.mxu0 %v4958
  %v5119 = vpop.f32.mrf.mxu0
  %v5120 = vadd.f32 0.0, %v5119
  %v5121 = vpop.f32.mrf.mxu0
  %v5122 = vadd.f32 0.0, %v5121
  %5123 = vmatmul.bf16.gmra.mxu0 %v4959
  %v5124 = vpop.f32.mrf.mxu0
  %v5125 = vadd.f32 0.0, %v5124
  %v5126 = vpop.f32.mrf.mxu0
  %v5127 = vadd.f32 0.0, %v5126
  %5128 = vmatmul.bf16.gmra.mxu0 %v4960
  %v5129 = vpop.f32.mrf.mxu0
  %v5130 = vadd.f32 0.0, %v5129
  %v5131 = vpop.f32.mrf.mxu0
  %v5132 = vadd.f32 0.0, %v5131
  %5133 = vmatmul.bf16.gmra.mxu0 %v4961
  %v5134 = vpop.f32.mrf.mxu0
  %v5135 = vadd.f32 0.0, %v5134
  %v5136 = vpop.f32.mrf.mxu0
  %v5137 = vadd.f32 0.0, %v5136
  %5138 = vmatmul.bf16.gmra.mxu0 %v4962
  %v5139 = vpop.f32.mrf.mxu0
  %v5140 = vadd.f32 0.0, %v5139
  %v5141 = vpop.f32.mrf.mxu0
  %v5142 = vadd.f32 0.0, %v5141
  %5143 = vmatmul.bf16.gmra.mxu0 %v4963
  %v5144 = vpop.f32.mrf.mxu0
  %v5145 = vadd.f32 0.0, %v5144
  %v5146 = vpop.f32.mrf.mxu0
  %v5147 = vadd.f32 0.0, %v5146
  %5148 = vmatmul.bf16.gmra.mxu0 %v4964
  %v5149 = vpop.f32.mrf.mxu0
  %v5150 = vadd.f32 0.0, %v5149
  %v5151 = vpop.f32.mrf.mxu0
  %v5152 = vadd.f32 0.0, %v5151
  %5153 = vmatmul.bf16.gmra.mxu0 %v4965
  %v5154 = vpop.f32.mrf.mxu0
  %v5155 = vadd.f32 0.0, %v5154
  %v5156 = vpop.f32.mrf.mxu0
  %v5157 = vadd.f32 0.0, %v5156
  %5158 = vmatmul.bf16.gmra.mxu0 %v4966
  %v5159 = vpop.f32.mrf.mxu0
  %v5160 = vadd.f32 0.0, %v5159
  %v5161 = vpop.f32.mrf.mxu0
  %v5162 = vadd.f32 0.0, %v5161
  %5163 = vmatmul.bf16.gmra.mxu0 %v4967
  %v5164 = vpop.f32.mrf.mxu0
  %v5165 = vadd.f32 0.0, %v5164
  %v5166 = vpop.f32.mrf.mxu0
  %v5167 = vadd.f32 0.0, %v5166
  %5168 = vmatmul.bf16.gmra.mxu0 %v4968
  %v5169 = vpop.f32.mrf.mxu0
  %v5170 = vadd.f32 0.0, %v5169
  %v5171 = vpop.f32.mrf.mxu0
  %v5172 = vadd.f32 0.0, %v5171
  %5173 = vmatmul.bf16.gmra.mxu0 %v4969
  %v5174 = vpop.f32.mrf.mxu0
  %v5175 = vadd.f32 0.0, %v5174
  %v5176 = vpop.f32.mrf.mxu0
  %v5177 = vadd.f32 0.0, %v5176
  %5178 = vmatmul.bf16.gmra.mxu0 %v4970
  %v5179 = vpop.f32.mrf.mxu0
  %v5180 = vadd.f32 0.0, %v5179
  %v5181 = vpop.f32.mrf.mxu0
  %v5182 = vadd.f32 0.0, %v5181
  %5183 = vmatmul.bf16.gmra.mxu0 %v4971
  %v5184 = vpop.f32.mrf.mxu0
  %v5185 = vadd.f32 0.0, %v5184
  %v5186 = vpop.f32.mrf.mxu0
  %v5187 = vadd.f32 0.0, %v5186
  %5188 = vmatmul.bf16.gmra.mxu0 %v4972
  %v5189 = vpop.f32.mrf.mxu0
  %v5190 = vadd.f32 0.0, %v5189
  %v5191 = vpop.f32.mrf.mxu0
  %v5192 = vadd.f32 0.0, %v5191
  %5193 = vmatmul.bf16.gmra.mxu0 %v4973
  %v5194 = vpop.f32.mrf.mxu0
  %v5195 = vadd.f32 0.0, %v5194
  %v5196 = vpop.f32.mrf.mxu0
  %v5197 = vadd.f32 0.0, %v5196
  %5198 = vmatmul.bf16.gmra.mxu0 %v4974
  %v5199 = vpop.f32.mrf.mxu0
  %v5200 = vadd.f32 0.0, %v5199
  %v5201 = vpop.f32.mrf.mxu0
  %v5202 = vadd.f32 0.0, %v5201
  %5203 = vmatmul.bf16.gmra.mxu0 %v4975
  %v5204 = vpop.f32.mrf.mxu0
  %v5205 = vadd.f32 0.0, %v5204
  %v5206 = vpop.f32.mrf.mxu0
  %v5207 = vadd.f32 0.0, %v5206
  %5208 = vmatmul.bf16.gmra.mxu0 %v4976
  %v5209 = vpop.f32.mrf.mxu0
  %v5210 = vadd.f32 0.0, %v5209
  %v5211 = vpop.f32.mrf.mxu0
  %v5212 = vadd.f32 0.0, %v5211
  %5213 = vmatmul.bf16.gmra.mxu0 %v4977
  %v5214 = vpop.f32.mrf.mxu0
  %v5215 = vadd.f32 0.0, %v5214
  %v5216 = vpop.f32.mrf.mxu0
  %v5217 = vadd.f32 0.0, %v5216
  %5218 = vmatmul.bf16.gmra.mxu0 %v4978
  %v5219 = vpop.f32.mrf.mxu0
  %v5220 = vadd.f32 0.0, %v5219
  %v5221 = vpop.f32.mrf.mxu0
  %v5222 = vadd.f32 0.0, %v5221
  %5223 = vmatmul.bf16.gmra.mxu0 %v4979
  %v5224 = vpop.f32.mrf.mxu0
  %v5225 = vadd.f32 0.0, %v5224
  %v5226 = vpop.f32.mrf.mxu0
  %v5227 = vadd.f32 0.0, %v5226
  %5228 = vmatmul.bf16.gmra.mxu0 %v4980
  %v5229 = vpop.f32.mrf.mxu0
  %v5230 = vadd.f32 0.0, %v5229
  %v5231 = vpop.f32.mrf.mxu0
  %v5232 = vadd.f32 0.0, %v5231
  %5233 = vmatmul.bf16.gmra.mxu0 %v4981
  %v5234 = vpop.f32.mrf.mxu0
  %v5235 = vadd.f32 0.0, %v5234
  %v5236 = vpop.f32.mrf.mxu0
  %v5237 = vadd.f32 0.0, %v5236
  %5238 = vmatmul.bf16.gmra.mxu0 %v4982
  %v5239 = vpop.f32.mrf.mxu0
  %v5240 = vadd.f32 0.0, %v5239
  %v5241 = vpop.f32.mrf.mxu0
  %v5242 = vadd.f32 0.0, %v5241
  %5243 = vmatmul.bf16.gmra.mxu0 %v4983
  %v5244 = vpop.f32.mrf.mxu0
  %v5245 = vadd.f32 0.0, %v5244
  %v5246 = vpop.f32.mrf.mxu0
  %v5247 = vadd.f32 0.0, %v5246
  %5248 = vmatmul.bf16.gmra.mxu0 %v4984
  %v5249 = vpop.f32.mrf.mxu0
  %v5250 = vadd.f32 0.0, %v5249
  %v5251 = vpop.f32.mrf.mxu0
  %v5252 = vadd.f32 0.0, %v5251
  %5253 = vmatmul.bf16.gmra.mxu0 %v4985
  %v5254 = vpop.f32.mrf.mxu0
  %v5255 = vadd.f32 0.0, %v5254
  %v5256 = vpop.f32.mrf.mxu0
  %v5257 = vadd.f32 0.0, %v5256
  %5258 = vmatmul.bf16.gmra.mxu0 %v4986
  %v5259 = vpop.f32.mrf.mxu0
  %v5260 = vadd.f32 0.0, %v5259
  %v5261 = vpop.f32.mrf.mxu0
  %v5262 = vadd.f32 0.0, %v5261
  %5263 = vmatmul.bf16.gmra.mxu0 %v4987
  %v5264 = vpop.f32.mrf.mxu0
  %v5265 = vadd.f32 0.0, %v5264
  %v5266 = vpop.f32.mrf.mxu0
  %v5267 = vadd.f32 0.0, %v5266
  %5268 = vmatmul.bf16.gmra.mxu0 %v4988
  %v5269 = vpop.f32.mrf.mxu0
  %v5270 = vadd.f32 0.0, %v5269
  %v5271 = vpop.f32.mrf.mxu0
  %v5272 = vadd.f32 0.0, %v5271
  %5273 = vmatmul.bf16.gmra.mxu0 %v4989
  %v5274 = vpop.f32.mrf.mxu0
  %v5275 = vadd.f32 0.0, %v5274
  %v5276 = vpop.f32.mrf.mxu0
  %v5277 = vadd.f32 0.0, %v5276
  %5278 = vmatmul.bf16.gmra.mxu0 %v4990
  %v5279 = vpop.f32.mrf.mxu0
  %v5280 = vadd.f32 0.0, %v5279
  %v5281 = vpop.f32.mrf.mxu0
  %v5282 = vadd.f32 0.0, %v5281
  %5283 = vmatmul.bf16.gmra.mxu0 %v4991
  %v5284 = vpop.f32.mrf.mxu0
  %v5285 = vadd.f32 0.0, %v5284
  %v5286 = vpop.f32.mrf.mxu0
  %v5287 = vadd.f32 0.0, %v5286
  %5288 = vmatmul.bf16.gmra.mxu0 %v4992
  %v5289 = vpop.f32.mrf.mxu0
  %v5290 = vadd.f32 0.0, %v5289
  %v5291 = vpop.f32.mrf.mxu0
  %v5292 = vadd.f32 0.0, %v5291
  %5293 = vmatmul.bf16.gmra.mxu0 %v4993
  %v5294 = vpop.f32.mrf.mxu0
  %v5295 = vadd.f32 0.0, %v5294
  %v5296 = vpop.f32.mrf.mxu0
  %v5297 = vadd.f32 0.0, %v5296
  %5298 = vmatmul.bf16.gmra.mxu0 %v4994
  %v5299 = vpop.f32.mrf.mxu0
  %v5300 = vadd.f32 0.0, %v5299
  %v5301 = vpop.f32.mrf.mxu0
  %v5302 = vadd.f32 0.0, %v5301
  %5303 = vmatmul.bf16.gmra.mxu0 %v4995
  %v5304 = vpop.f32.mrf.mxu0
  %v5305 = vadd.f32 0.0, %v5304
  %v5306 = vpop.f32.mrf.mxu0
  %v5307 = vadd.f32 0.0, %v5306
  %5308 = vmatmul.bf16.gmra.mxu0 %v4996
  %v5309 = vpop.f32.mrf.mxu0
  %v5310 = vadd.f32 0.0, %v5309
  %v5311 = vpop.f32.mrf.mxu0
  %v5312 = vadd.f32 0.0, %v5311
  %5313 = vmatmul.bf16.gmra.mxu0 %v4997
  %v5314 = vpop.f32.mrf.mxu0
  %v5315 = vadd.f32 0.0, %v5314
  %v5316 = vpop.f32.mrf.mxu0
  %v5317 = vadd.f32 0.0, %v5316
  %5318 = vmatmul.bf16.gmra.mxu0 %v4998
  %v5319 = vpop.f32.mrf.mxu0
  %v5320 = vadd.f32 0.0, %v5319
  %v5321 = vpop.f32.mrf.mxu0
  %v5322 = vadd.f32 0.0, %v5321
  %5323 = vmatmul.bf16.gmra.mxu0 %v4999
  %v5324 = vpop.f32.mrf.mxu0
  %v5325 = vadd.f32 0.0, %v5324
  %v5326 = vpop.f32.mrf.mxu0
  %v5327 = vadd.f32 0.0, %v5326
  %5328 = vmatmul.bf16.gmra.mxu0 %v5000
  %v5329 = vpop.f32.mrf.mxu0
  %v5330 = vadd.f32 0.0, %v5329
  %v5331 = vpop.f32.mrf.mxu0
  %v5332 = vadd.f32 0.0, %v5331
  %5333 = vmatmul.bf16.gmra.mxu0 %v5001
  %v5334 = vpop.f32.mrf.mxu0
  %v5335 = vadd.f32 0.0, %v5334
  %v5336 = vpop.f32.mrf.mxu0
  %v5337 = vadd.f32 0.0, %v5336
  %5338 = vmatmul.bf16.gmra.mxu0 %v5002
  %v5339 = vpop.f32.mrf.mxu0
  %v5340 = vadd.f32 0.0, %v5339
  %v5341 = vpop.f32.mrf.mxu0
  %v5342 = vadd.f32 0.0, %v5341
  %5343 = vmatmul.bf16.gmra.mxu0 %v5003
  %v5344 = vpop.f32.mrf.mxu0
  %v5345 = vadd.f32 0.0, %v5344
  %v5346 = vpop.f32.mrf.mxu0
  %v5347 = vadd.f32 0.0, %v5346
  %5348 = vmatmul.bf16.gmra.mxu0 %v5004
  %v5349 = vpop.f32.mrf.mxu0
  %v5350 = vadd.f32 0.0, %v5349
  %v5351 = vpop.f32.mrf.mxu0
  %v5352 = vadd.f32 0.0, %v5351
  %5353 = vmatmul.bf16.gmra.mxu0 %v5005
  %v5354 = vpop.f32.mrf.mxu0
  %v5355 = vadd.f32 0.0, %v5354
  %v5356 = vpop.f32.mrf.mxu0
  %v5357 = vadd.f32 0.0, %v5356
  %5358 = vmatmul.bf16.gmra.mxu0 %v5006
  %v5359 = vpop.f32.mrf.mxu0
  %v5360 = vadd.f32 0.0, %v5359
  %v5361 = vpop.f32.mrf.mxu0
  %v5362 = vadd.f32 0.0, %v5361
  %5363 = vmatmul.bf16.gmra.mxu0 %v5007
  %v5364 = vpop.f32.mrf.mxu0
  %v5365 = vadd.f32 0.0, %v5364
  %v5366 = vpop.f32.mrf.mxu0
  %v5367 = vadd.f32 0.0, %v5366
  %5368 = vmatmul.bf16.gmra.mxu0 %v5008
  %v5369 = vpop.f32.mrf.mxu0
  %v5370 = vadd.f32 0.0, %v5369
  %v5371 = vpop.f32.mrf.mxu0
  %v5372 = vadd.f32 0.0, %v5371
  %5373 = vmatmul.bf16.gmra.mxu0 %v5009
  %v5374 = vpop.f32.mrf.mxu0
  %v5375 = vadd.f32 0.0, %v5374
  %v5376 = vpop.f32.mrf.mxu0
  %v5377 = vadd.f32 0.0, %v5376
  %5378 = vmatmul.bf16.gmra.mxu0 %v5010
  %v5379 = vpop.f32.mrf.mxu0
  %v5380 = vadd.f32 0.0, %v5379
  %v5381 = vpop.f32.mrf.mxu0
  %v5382 = vadd.f32 0.0, %v5381
  %5383 = vmatmul.bf16.gmra.mxu0 %v5011
  %v5384 = vpop.f32.mrf.mxu0
  %v5385 = vadd.f32 0.0, %v5384
  %v5386 = vpop.f32.mrf.mxu0
  %v5387 = vadd.f32 0.0, %v5386
  %5388 = vmatmul.bf16.gmra.mxu0 %v5012
  %v5389 = vpop.f32.mrf.mxu0
  %v5390 = vadd.f32 0.0, %v5389
  %v5391 = vpop.f32.mrf.mxu0
  %v5392 = vadd.f32 0.0, %v5391
  %5393 = vmatmul.bf16.gmra.mxu0 %v5013
  %v5394 = vpop.f32.mrf.mxu0
  %v5395 = vadd.f32 0.0, %v5394
  %v5396 = vpop.f32.mrf.mxu0
  %v5397 = vadd.f32 0.0, %v5396
  %5398 = vmatmul.bf16.gmra.mxu0 %v5014
  %v5399 = vpop.f32.mrf.mxu0
  %v5400 = vadd.f32 0.0, %v5399
  %v5401 = vpop.f32.mrf.mxu0
  %v5402 = vadd.f32 0.0, %v5401
  %5403 = vmatmul.bf16.gmra.mxu0 %v5015
  %v5404 = vpop.f32.mrf.mxu0
  %v5405 = vadd.f32 0.0, %v5404
  %v5406 = vpop.f32.mrf.mxu0
  %v5407 = vadd.f32 0.0, %v5406
  %5408 = vdwg.mxu0
  %v5537 = vunpack.c.l.b16 %v3864
  %v5538 = vunpack.c.l.b16 %v3865
  %v5539 = vunpack.c.l.b16 %v3866
  %v5540 = vunpack.c.l.b16 %v3867
  %v5541 = vunpack.c.l.b16 %v3868
  %v5542 = vunpack.c.l.b16 %v3869
  %v5543 = vunpack.c.l.b16 %v3870
  %v5544 = vunpack.c.l.b16 %v3871
  %v5545 = vunpack.c.l.b16 %v3872
  %v5546 = vunpack.c.l.b16 %v3873
  %v5547 = vunpack.c.l.b16 %v3874
  %v5548 = vunpack.c.l.b16 %v3875
  %v5549 = vunpack.c.l.b16 %v3876
  %v5550 = vunpack.c.l.b16 %v3877
  %v5551 = vunpack.c.l.b16 %v3878
  %v5552 = vunpack.c.l.b16 %v3879
  %v5553 = vunpack.c.l.b16 %v3880
  %v5554 = vunpack.c.l.b16 %v3881
  %v5555 = vunpack.c.l.b16 %v3882
  %v5556 = vunpack.c.l.b16 %v3883
  %v5557 = vunpack.c.l.b16 %v3884
  %v5558 = vunpack.c.l.b16 %v3885
  %v5559 = vunpack.c.l.b16 %v3886
  %v5560 = vunpack.c.l.b16 %v3887
  %v5561 = vunpack.c.l.b16 %v3888
  %v5562 = vunpack.c.l.b16 %v3889
  %v5563 = vunpack.c.l.b16 %v3890
  %v5564 = vunpack.c.l.b16 %v3891
  %v5565 = vunpack.c.l.b16 %v3892
  %v5566 = vunpack.c.l.b16 %v3893
  %v5567 = vunpack.c.l.b16 %v3894
  %v5568 = vunpack.c.l.b16 %v3895
  %v5569 = vunpack.c.l.b16 %v3896
  %v5570 = vunpack.c.l.b16 %v3897
  %v5571 = vunpack.c.l.b16 %v3898
  %v5572 = vunpack.c.l.b16 %v3899
  %v5573 = vunpack.c.l.b16 %v3900
  %v5574 = vunpack.c.l.b16 %v3901
  %v5575 = vunpack.c.l.b16 %v3902
  %v5576 = vunpack.c.l.b16 %v3903
  %v5577 = vunpack.c.l.b16 %v3904
  %v5578 = vunpack.c.l.b16 %v3905
  %v5579 = vunpack.c.l.b16 %v3906
  %v5580 = vunpack.c.l.b16 %v3907
  %v5581 = vunpack.c.l.b16 %v3908
  %v5582 = vunpack.c.l.b16 %v3909
  %v5583 = vunpack.c.l.b16 %v3910
  %v5584 = vunpack.c.l.b16 %v3911
  %v5585 = vunpack.c.l.b16 %v3912
  %v5586 = vunpack.c.l.b16 %v3913
  %v5587 = vunpack.c.l.b16 %v3914
  %v5588 = vunpack.c.l.b16 %v3915
  %v5589 = vunpack.c.l.b16 %v3916
  %v5590 = vunpack.c.l.b16 %v3917
  %v5591 = vunpack.c.l.b16 %v3918
  %v5592 = vunpack.c.l.b16 %v3919
  %v5593 = vunpack.c.l.b16 %v3920
  %v5594 = vunpack.c.l.b16 %v3921
  %v5595 = vunpack.c.l.b16 %v3922
  %v5596 = vunpack.c.l.b16 %v3923
  %v5597 = vunpack.c.l.b16 %v3924
  %v5598 = vunpack.c.l.b16 %v3925
  %v5599 = vunpack.c.l.b16 %v3926
  %v5600 = vunpack.c.l.b16 %v3927
  %v5601 = vunpack.c.l.b16 %v3928
  %v5602 = vunpack.c.l.b16 %v3929
  %v5603 = vunpack.c.l.b16 %v3930
  %v5604 = vunpack.c.l.b16 %v3931
  %v5605 = vunpack.c.l.b16 %v3932
  %v5606 = vunpack.c.l.b16 %v3933
  %v5607 = vunpack.c.l.b16 %v3934
  %v5608 = vunpack.c.l.b16 %v3935
  %v5609 = vunpack.c.l.b16 %v3936
  %v5610 = vunpack.c.l.b16 %v3937
  %v5611 = vunpack.c.l.b16 %v3938
  %v5612 = vunpack.c.l.b16 %v3939
  %v5613 = vunpack.c.l.b16 %v3940
  %v5614 = vunpack.c.l.b16 %v3941
  %v5615 = vunpack.c.l.b16 %v3942
  %v5616 = vunpack.c.l.b16 %v3943
  %v5617 = vunpack.c.l.b16 %v3944
  %v5618 = vunpack.c.l.b16 %v3945
  %v5619 = vunpack.c.l.b16 %v3946
  %v5620 = vunpack.c.l.b16 %v3947
  %v5621 = vunpack.c.l.b16 %v3948
  %v5622 = vunpack.c.l.b16 %v3949
  %v5623 = vunpack.c.l.b16 %v3950
  %v5624 = vunpack.c.l.b16 %v3951
  %v5625 = vunpack.c.l.b16 %v3952
  %v5626 = vunpack.c.l.b16 %v3953
  %v5627 = vunpack.c.l.b16 %v3954
  %v5628 = vunpack.c.l.b16 %v3955
  %v5629 = vunpack.c.l.b16 %v3956
  %v5630 = vunpack.c.l.b16 %v3957
  %v5631 = vunpack.c.l.b16 %v3958
  %v5632 = vunpack.c.l.b16 %v3959
  %v5633 = vunpack.c.l.b16 %v3960
  %v5634 = vunpack.c.l.b16 %v3961
  %v5635 = vunpack.c.l.b16 %v3962
  %v5636 = vunpack.c.l.b16 %v3963
  %v5637 = vunpack.c.l.b16 %v3964
  %v5638 = vunpack.c.l.b16 %v3965
  %v5639 = vunpack.c.l.b16 %v3966
  %v5640 = vunpack.c.l.b16 %v3967
  %v5641 = vunpack.c.l.b16 %v3968
  %v5642 = vunpack.c.l.b16 %v3969
  %v5643 = vunpack.c.l.b16 %v3970
  %v5644 = vunpack.c.l.b16 %v3971
  %v5645 = vunpack.c.l.b16 %v3972
  %v5646 = vunpack.c.l.b16 %v3973
  %v5647 = vunpack.c.l.b16 %v3974
  %v5648 = vunpack.c.l.b16 %v3975
  %v5649 = vunpack.c.l.b16 %v3976
  %v5650 = vunpack.c.l.b16 %v3977
  %v5651 = vunpack.c.l.b16 %v3978
  %v5652 = vunpack.c.l.b16 %v3979
  %v5653 = vunpack.c.l.b16 %v3980
  %v5654 = vunpack.c.l.b16 %v3981
  %v5655 = vunpack.c.l.b16 %v3982
  %v5656 = vunpack.c.l.b16 %v3983
  %v5657 = vunpack.c.l.b16 %v3984
  %v5658 = vunpack.c.l.b16 %v3985
  %v5659 = vunpack.c.l.b16 %v3986
  %v5660 = vunpack.c.l.b16 %v3987
  %v5661 = vunpack.c.l.b16 %v3988
  %v5662 = vunpack.c.l.b16 %v3989
  %v5663 = vunpack.c.l.b16 %v3990
  %v5664 = vunpack.c.l.b16 %v3991
  %v5665 = vpack.c.b16 %v5538, %v5537
  %v5666 = vpack.c.b16 %v5540, %v5539
  %v5667 = vpack.c.b16 %v5542, %v5541
  %v5668 = vpack.c.b16 %v5544, %v5543
  %v5669 = vpack.c.b16 %v5546, %v5545
  %v5670 = vpack.c.b16 %v5548, %v5547
  %v5671 = vpack.c.b16 %v5550, %v5549
  %v5672 = vpack.c.b16 %v5552, %v5551
  %v5673 = vpack.c.b16 %v5554, %v5553
  %v5674 = vpack.c.b16 %v5556, %v5555
  %v5675 = vpack.c.b16 %v5558, %v5557
  %v5676 = vpack.c.b16 %v5560, %v5559
  %v5677 = vpack.c.b16 %v5562, %v5561
  %v5678 = vpack.c.b16 %v5564, %v5563
  %v5679 = vpack.c.b16 %v5566, %v5565
  %v5680 = vpack.c.b16 %v5568, %v5567
  %v5681 = vpack.c.b16 %v5570, %v5569
  %v5682 = vpack.c.b16 %v5572, %v5571
  %v5683 = vpack.c.b16 %v5574, %v5573
  %v5684 = vpack.c.b16 %v5576, %v5575
  %v5685 = vpack.c.b16 %v5578, %v5577
  %v5686 = vpack.c.b16 %v5580, %v5579
  %v5687 = vpack.c.b16 %v5582, %v5581
  %v5688 = vpack.c.b16 %v5584, %v5583
  %v5689 = vpack.c.b16 %v5586, %v5585
  %v5690 = vpack.c.b16 %v5588, %v5587
  %v5691 = vpack.c.b16 %v5590, %v5589
  %v5692 = vpack.c.b16 %v5592, %v5591
  %v5693 = vpack.c.b16 %v5594, %v5593
  %v5694 = vpack.c.b16 %v5596, %v5595
  %v5695 = vpack.c.b16 %v5598, %v5597
  %v5696 = vpack.c.b16 %v5600, %v5599
  %v5697 = vpack.c.b16 %v5602, %v5601
  %v5698 = vpack.c.b16 %v5604, %v5603
  %v5699 = vpack.c.b16 %v5606, %v5605
  %v5700 = vpack.c.b16 %v5608, %v5607
  %v5701 = vpack.c.b16 %v5610, %v5609
  %v5702 = vpack.c.b16 %v5612, %v5611
  %v5703 = vpack.c.b16 %v5614, %v5613
  %v5704 = vpack.c.b16 %v5616, %v5615
  %v5705 = vpack.c.b16 %v5618, %v5617
  %v5706 = vpack.c.b16 %v5620, %v5619
  %v5707 = vpack.c.b16 %v5622, %v5621
  %v5708 = vpack.c.b16 %v5624, %v5623
  %v5709 = vpack.c.b16 %v5626, %v5625
  %v5710 = vpack.c.b16 %v5628, %v5627
  %v5711 = vpack.c.b16 %v5630, %v5629
  %v5712 = vpack.c.b16 %v5632, %v5631
  %v5713 = vpack.c.b16 %v5634, %v5633
  %v5714 = vpack.c.b16 %v5636, %v5635
  %v5715 = vpack.c.b16 %v5638, %v5637
  %v5716 = vpack.c.b16 %v5640, %v5639
  %v5717 = vpack.c.b16 %v5642, %v5641
  %v5718 = vpack.c.b16 %v5644, %v5643
  %v5719 = vpack.c.b16 %v5646, %v5645
  %v5720 = vpack.c.b16 %v5648, %v5647
  %v5721 = vpack.c.b16 %v5650, %v5649
  %v5722 = vpack.c.b16 %v5652, %v5651
  %v5723 = vpack.c.b16 %v5654, %v5653
  %v5724 = vpack.c.b16 %v5656, %v5655
  %v5725 = vpack.c.b16 %v5658, %v5657
  %v5726 = vpack.c.b16 %v5660, %v5659
  %v5727 = vpack.c.b16 %v5662, %v5661
  %v5728 = vpack.c.b16 %v5664, %v5663
  %5793 = vmatpush.bf16.msra.mxu0 %v1453
  %5794 = vmatpush.bf16.msra.mxu0 %v1452
  %5795 = vmatpush.bf16.msra.mxu0 %v1451
  %5796 = vmatpush.bf16.msra.mxu0 %v1450
  %5797 = vmatpush.bf16.msra.mxu0 %v1449
  %5798 = vmatpush.bf16.msra.mxu0 %v1448
  %5799 = vmatpush.bf16.msra.mxu0 %v1447
  %5800 = vmatpush.bf16.msra.mxu0 %v1446
  %5801 = vmatmul.bf16.gmra.mxu0 %v5665
  %v5802 = vpop.f32.mrf.mxu0
  %v5803 = vadd.f32 %v5090, %v5802
  %v5804 = vpop.f32.mrf.mxu0
  %v5805 = vadd.f32 %v5092, %v5804
  %5806 = vmatmul.bf16.gmra.mxu0 %v5666
  %v5807 = vpop.f32.mrf.mxu0
  %v5808 = vadd.f32 %v5095, %v5807
  %v5809 = vpop.f32.mrf.mxu0
  %v5810 = vadd.f32 %v5097, %v5809
  %5811 = vmatmul.bf16.gmra.mxu0 %v5667
  %v5812 = vpop.f32.mrf.mxu0
  %v5813 = vadd.f32 %v5100, %v5812
  %v5814 = vpop.f32.mrf.mxu0
  %v5815 = vadd.f32 %v5102, %v5814
  %5816 = vmatmul.bf16.gmra.mxu0 %v5668
  %v5817 = vpop.f32.mrf.mxu0
  %v5818 = vadd.f32 %v5105, %v5817
  %v5819 = vpop.f32.mrf.mxu0
  %v5820 = vadd.f32 %v5107, %v5819
  %5821 = vmatmul.bf16.gmra.mxu0 %v5669
  %v5822 = vpop.f32.mrf.mxu0
  %v5823 = vadd.f32 %v5110, %v5822
  %v5824 = vpop.f32.mrf.mxu0
  %v5825 = vadd.f32 %v5112, %v5824
  %5826 = vmatmul.bf16.gmra.mxu0 %v5670
  %v5827 = vpop.f32.mrf.mxu0
  %v5828 = vadd.f32 %v5115, %v5827
  %v5829 = vpop.f32.mrf.mxu0
  %v5830 = vadd.f32 %v5117, %v5829
  %5831 = vmatmul.bf16.gmra.mxu0 %v5671
  %v5832 = vpop.f32.mrf.mxu0
  %v5833 = vadd.f32 %v5120, %v5832
  %v5834 = vpop.f32.mrf.mxu0
  %v5835 = vadd.f32 %v5122, %v5834
  %5836 = vmatmul.bf16.gmra.mxu0 %v5672
  %v5837 = vpop.f32.mrf.mxu0
  %v5838 = vadd.f32 %v5125, %v5837
  %v5839 = vpop.f32.mrf.mxu0
  %v5840 = vadd.f32 %v5127, %v5839
  %5841 = vmatmul.bf16.gmra.mxu0 %v5673
  %v5842 = vpop.f32.mrf.mxu0
  %v5843 = vadd.f32 %v5130, %v5842
  %v5844 = vpop.f32.mrf.mxu0
  %v5845 = vadd.f32 %v5132, %v5844
  %5846 = vmatmul.bf16.gmra.mxu0 %v5674
  %v5847 = vpop.f32.mrf.mxu0
  %v5848 = vadd.f32 %v5135, %v5847
  %v5849 = vpop.f32.mrf.mxu0
  %v5850 = vadd.f32 %v5137, %v5849
  %5851 = vmatmul.bf16.gmra.mxu0 %v5675
  %v5852 = vpop.f32.mrf.mxu0
  %v5853 = vadd.f32 %v5140, %v5852
  %v5854 = vpop.f32.mrf.mxu0
  %v5855 = vadd.f32 %v5142, %v5854
  %5856 = vmatmul.bf16.gmra.mxu0 %v5676
  %v5857 = vpop.f32.mrf.mxu0
  %v5858 = vadd.f32 %v5145, %v5857
  %v5859 = vpop.f32.mrf.mxu0
  %v5860 = vadd.f32 %v5147, %v5859
  %5861 = vmatmul.bf16.gmra.mxu0 %v5677
  %v5862 = vpop.f32.mrf.mxu0
  %v5863 = vadd.f32 %v5150, %v5862
  %v5864 = vpop.f32.mrf.mxu0
  %v5865 = vadd.f32 %v5152, %v5864
  %5866 = vmatmul.bf16.gmra.mxu0 %v5678
  %v5867 = vpop.f32.mrf.mxu0
  %v5868 = vadd.f32 %v5155, %v5867
  %v5869 = vpop.f32.mrf.mxu0
  %v5870 = vadd.f32 %v5157, %v5869
  %5871 = vmatmul.bf16.gmra.mxu0 %v5679
  %v5872 = vpop.f32.mrf.mxu0
  %v5873 = vadd.f32 %v5160, %v5872
  %v5874 = vpop.f32.mrf.mxu0
  %v5875 = vadd.f32 %v5162, %v5874
  %5876 = vmatmul.bf16.gmra.mxu0 %v5680
  %v5877 = vpop.f32.mrf.mxu0
  %v5878 = vadd.f32 %v5165, %v5877
  %v5879 = vpop.f32.mrf.mxu0
  %v5880 = vadd.f32 %v5167, %v5879
  %5881 = vmatmul.bf16.gmra.mxu0 %v5681
  %v5882 = vpop.f32.mrf.mxu0
  %v5883 = vadd.f32 %v5170, %v5882
  %v5884 = vpop.f32.mrf.mxu0
  %v5885 = vadd.f32 %v5172, %v5884
  %5886 = vmatmul.bf16.gmra.mxu0 %v5682
  %v5887 = vpop.f32.mrf.mxu0
  %v5888 = vadd.f32 %v5175, %v5887
  %v5889 = vpop.f32.mrf.mxu0
  %v5890 = vadd.f32 %v5177, %v5889
  %5891 = vmatmul.bf16.gmra.mxu0 %v5683
  %v5892 = vpop.f32.mrf.mxu0
  %v5893 = vadd.f32 %v5180, %v5892
  %v5894 = vpop.f32.mrf.mxu0
  %v5895 = vadd.f32 %v5182, %v5894
  %5896 = vmatmul.bf16.gmra.mxu0 %v5684
  %v5897 = vpop.f32.mrf.mxu0
  %v5898 = vadd.f32 %v5185, %v5897
  %v5899 = vpop.f32.mrf.mxu0
  %v5900 = vadd.f32 %v5187, %v5899
  %5901 = vmatmul.bf16.gmra.mxu0 %v5685
  %v5902 = vpop.f32.mrf.mxu0
  %v5903 = vadd.f32 %v5190, %v5902
  %v5904 = vpop.f32.mrf.mxu0
  %v5905 = vadd.f32 %v5192, %v5904
  %5906 = vmatmul.bf16.gmra.mxu0 %v5686
  %v5907 = vpop.f32.mrf.mxu0
  %v5908 = vadd.f32 %v5195, %v5907
  %v5909 = vpop.f32.mrf.mxu0
  %v5910 = vadd.f32 %v5197, %v5909
  %5911 = vmatmul.bf16.gmra.mxu0 %v5687
  %v5912 = vpop.f32.mrf.mxu0
  %v5913 = vadd.f32 %v5200, %v5912
  %v5914 = vpop.f32.mrf.mxu0
  %v5915 = vadd.f32 %v5202, %v5914
  %5916 = vmatmul.bf16.gmra.mxu0 %v5688
  %v5917 = vpop.f32.mrf.mxu0
  %v5918 = vadd.f32 %v5205, %v5917
  %v5919 = vpop.f32.mrf.mxu0
  %v5920 = vadd.f32 %v5207, %v5919
  %5921 = vmatmul.bf16.gmra.mxu0 %v5689
  %v5922 = vpop.f32.mrf.mxu0
  %v5923 = vadd.f32 %v5210, %v5922
  %v5924 = vpop.f32.mrf.mxu0
  %v5925 = vadd.f32 %v5212, %v5924
  %5926 = vmatmul.bf16.gmra.mxu0 %v5690
  %v5927 = vpop.f32.mrf.mxu0
  %v5928 = vadd.f32 %v5215, %v5927
  %v5929 = vpop.f32.mrf.mxu0
  %v5930 = vadd.f32 %v5217, %v5929
  %5931 = vmatmul.bf16.gmra.mxu0 %v5691
  %v5932 = vpop.f32.mrf.mxu0
  %v5933 = vadd.f32 %v5220, %v5932
  %v5934 = vpop.f32.mrf.mxu0
  %v5935 = vadd.f32 %v5222, %v5934
  %5936 = vmatmul.bf16.gmra.mxu0 %v5692
  %v5937 = vpop.f32.mrf.mxu0
  %v5938 = vadd.f32 %v5225, %v5937
  %v5939 = vpop.f32.mrf.mxu0
  %v5940 = vadd.f32 %v5227, %v5939
  %5941 = vmatmul.bf16.gmra.mxu0 %v5693
  %v5942 = vpop.f32.mrf.mxu0
  %v5943 = vadd.f32 %v5230, %v5942
  %v5944 = vpop.f32.mrf.mxu0
  %v5945 = vadd.f32 %v5232, %v5944
  %5946 = vmatmul.bf16.gmra.mxu0 %v5694
  %v5947 = vpop.f32.mrf.mxu0
  %v5948 = vadd.f32 %v5235, %v5947
  %v5949 = vpop.f32.mrf.mxu0
  %v5950 = vadd.f32 %v5237, %v5949
  %5951 = vmatmul.bf16.gmra.mxu0 %v5695
  %v5952 = vpop.f32.mrf.mxu0
  %v5953 = vadd.f32 %v5240, %v5952
  %v5954 = vpop.f32.mrf.mxu0
  %v5955 = vadd.f32 %v5242, %v5954
  %5956 = vmatmul.bf16.gmra.mxu0 %v5696
  %v5957 = vpop.f32.mrf.mxu0
  %v5958 = vadd.f32 %v5245, %v5957
  %v5959 = vpop.f32.mrf.mxu0
  %v5960 = vadd.f32 %v5247, %v5959
  %5961 = vmatmul.bf16.gmra.mxu0 %v5697
  %v5962 = vpop.f32.mrf.mxu0
  %v5963 = vadd.f32 %v5250, %v5962
  %v5964 = vpop.f32.mrf.mxu0
  %v5965 = vadd.f32 %v5252, %v5964
  %5966 = vmatmul.bf16.gmra.mxu0 %v5698
  %v5967 = vpop.f32.mrf.mxu0
  %v5968 = vadd.f32 %v5255, %v5967
  %v5969 = vpop.f32.mrf.mxu0
  %v5970 = vadd.f32 %v5257, %v5969
  %5971 = vmatmul.bf16.gmra.mxu0 %v5699
  %v5972 = vpop.f32.mrf.mxu0
  %v5973 = vadd.f32 %v5260, %v5972
  %v5974 = vpop.f32.mrf.mxu0
  %v5975 = vadd.f32 %v5262, %v5974
  %5976 = vmatmul.bf16.gmra.mxu0 %v5700
  %v5977 = vpop.f32.mrf.mxu0
  %v5978 = vadd.f32 %v5265, %v5977
  %v5979 = vpop.f32.mrf.mxu0
  %v5980 = vadd.f32 %v5267, %v5979
  %5981 = vmatmul.bf16.gmra.mxu0 %v5701
  %v5982 = vpop.f32.mrf.mxu0
  %v5983 = vadd.f32 %v5270, %v5982
  %v5984 = vpop.f32.mrf.mxu0
  %v5985 = vadd.f32 %v5272, %v5984
  %5986 = vmatmul.bf16.gmra.mxu0 %v5702
  %v5987 = vpop.f32.mrf.mxu0
  %v5988 = vadd.f32 %v5275, %v5987
  %v5989 = vpop.f32.mrf.mxu0
  %v5990 = vadd.f32 %v5277, %v5989
  %5991 = vmatmul.bf16.gmra.mxu0 %v5703
  %v5992 = vpop.f32.mrf.mxu0
  %v5993 = vadd.f32 %v5280, %v5992
  %v5994 = vpop.f32.mrf.mxu0
  %v5995 = vadd.f32 %v5282, %v5994
  %5996 = vmatmul.bf16.gmra.mxu0 %v5704
  %v5997 = vpop.f32.mrf.mxu0
  %v5998 = vadd.f32 %v5285, %v5997
  %v5999 = vpop.f32.mrf.mxu0
  %v6000 = vadd.f32 %v5287, %v5999
  %6001 = vmatmul.bf16.gmra.mxu0 %v5705
  %v6002 = vpop.f32.mrf.mxu0
  %v6003 = vadd.f32 %v5290, %v6002
  %v6004 = vpop.f32.mrf.mxu0
  %v6005 = vadd.f32 %v5292, %v6004
  %6006 = vmatmul.bf16.gmra.mxu0 %v5706
  %v6007 = vpop.f32.mrf.mxu0
  %v6008 = vadd.f32 %v5295, %v6007
  %v6009 = vpop.f32.mrf.mxu0
  %v6010 = vadd.f32 %v5297, %v6009
  %6011 = vmatmul.bf16.gmra.mxu0 %v5707
  %v6012 = vpop.f32.mrf.mxu0
  %v6013 = vadd.f32 %v5300, %v6012
  %v6014 = vpop.f32.mrf.mxu0
  %v6015 = vadd.f32 %v5302, %v6014
  %6016 = vmatmul.bf16.gmra.mxu0 %v5708
  %v6017 = vpop.f32.mrf.mxu0
  %v6018 = vadd.f32 %v5305, %v6017
  %v6019 = vpop.f32.mrf.mxu0
  %v6020 = vadd.f32 %v5307, %v6019
  %6021 = vmatmul.bf16.gmra.mxu0 %v5709
  %v6022 = vpop.f32.mrf.mxu0
  %v6023 = vadd.f32 %v5310, %v6022
  %v6024 = vpop.f32.mrf.mxu0
  %v6025 = vadd.f32 %v5312, %v6024
  %6026 = vmatmul.bf16.gmra.mxu0 %v5710
  %v6027 = vpop.f32.mrf.mxu0
  %v6028 = vadd.f32 %v5315, %v6027
  %v6029 = vpop.f32.mrf.mxu0
  %v6030 = vadd.f32 %v5317, %v6029
  %6031 = vmatmul.bf16.gmra.mxu0 %v5711
  %v6032 = vpop.f32.mrf.mxu0
  %v6033 = vadd.f32 %v5320, %v6032
  %v6034 = vpop.f32.mrf.mxu0
  %v6035 = vadd.f32 %v5322, %v6034
  %6036 = vmatmul.bf16.gmra.mxu0 %v5712
  %v6037 = vpop.f32.mrf.mxu0
  %v6038 = vadd.f32 %v5325, %v6037
  %v6039 = vpop.f32.mrf.mxu0
  %v6040 = vadd.f32 %v5327, %v6039
  %6041 = vmatmul.bf16.gmra.mxu0 %v5713
  %v6042 = vpop.f32.mrf.mxu0
  %v6043 = vadd.f32 %v5330, %v6042
  %v6044 = vpop.f32.mrf.mxu0
  %v6045 = vadd.f32 %v5332, %v6044
  %6046 = vmatmul.bf16.gmra.mxu0 %v5714
  %v6047 = vpop.f32.mrf.mxu0
  %v6048 = vadd.f32 %v5335, %v6047
  %v6049 = vpop.f32.mrf.mxu0
  %v6050 = vadd.f32 %v5337, %v6049
  %6051 = vmatmul.bf16.gmra.mxu0 %v5715
  %v6052 = vpop.f32.mrf.mxu0
  %v6053 = vadd.f32 %v5340, %v6052
  %v6054 = vpop.f32.mrf.mxu0
  %v6055 = vadd.f32 %v5342, %v6054
  %6056 = vmatmul.bf16.gmra.mxu0 %v5716
  %v6057 = vpop.f32.mrf.mxu0
  %v6058 = vadd.f32 %v5345, %v6057
  %v6059 = vpop.f32.mrf.mxu0
  %v6060 = vadd.f32 %v5347, %v6059
  %6061 = vmatmul.bf16.gmra.mxu0 %v5717
  %v6062 = vpop.f32.mrf.mxu0
  %v6063 = vadd.f32 %v5350, %v6062
  %v6064 = vpop.f32.mrf.mxu0
  %v6065 = vadd.f32 %v5352, %v6064
  %6066 = vmatmul.bf16.gmra.mxu0 %v5718
  %v6067 = vpop.f32.mrf.mxu0
  %v6068 = vadd.f32 %v5355, %v6067
  %v6069 = vpop.f32.mrf.mxu0
  %v6070 = vadd.f32 %v5357, %v6069
  %6071 = vmatmul.bf16.gmra.mxu0 %v5719
  %v6072 = vpop.f32.mrf.mxu0
  %v6073 = vadd.f32 %v5360, %v6072
  %v6074 = vpop.f32.mrf.mxu0
  %v6075 = vadd.f32 %v5362, %v6074
  %6076 = vmatmul.bf16.gmra.mxu0 %v5720
  %v6077 = vpop.f32.mrf.mxu0
  %v6078 = vadd.f32 %v5365, %v6077
  %v6079 = vpop.f32.mrf.mxu0
  %v6080 = vadd.f32 %v5367, %v6079
  %6081 = vmatmul.bf16.gmra.mxu0 %v5721
  %v6082 = vpop.f32.mrf.mxu0
  %v6083 = vadd.f32 %v5370, %v6082
  %v6084 = vpop.f32.mrf.mxu0
  %v6085 = vadd.f32 %v5372, %v6084
  %6086 = vmatmul.bf16.gmra.mxu0 %v5722
  %v6087 = vpop.f32.mrf.mxu0
  %v6088 = vadd.f32 %v5375, %v6087
  %v6089 = vpop.f32.mrf.mxu0
  %v6090 = vadd.f32 %v5377, %v6089
  %6091 = vmatmul.bf16.gmra.mxu0 %v5723
  %v6092 = vpop.f32.mrf.mxu0
  %v6093 = vadd.f32 %v5380, %v6092
  %v6094 = vpop.f32.mrf.mxu0
  %v6095 = vadd.f32 %v5382, %v6094
  %6096 = vmatmul.bf16.gmra.mxu0 %v5724
  %v6097 = vpop.f32.mrf.mxu0
  %v6098 = vadd.f32 %v5385, %v6097
  %v6099 = vpop.f32.mrf.mxu0
  %v6100 = vadd.f32 %v5387, %v6099
  %6101 = vmatmul.bf16.gmra.mxu0 %v5725
  %v6102 = vpop.f32.mrf.mxu0
  %v6103 = vadd.f32 %v5390, %v6102
  %v6104 = vpop.f32.mrf.mxu0
  %v6105 = vadd.f32 %v5392, %v6104
  %6106 = vmatmul.bf16.gmra.mxu0 %v5726
  %v6107 = vpop.f32.mrf.mxu0
  %v6108 = vadd.f32 %v5395, %v6107
  %v6109 = vpop.f32.mrf.mxu0
  %v6110 = vadd.f32 %v5397, %v6109
  %6111 = vmatmul.bf16.gmra.mxu0 %v5727
  %v6112 = vpop.f32.mrf.mxu0
  %v6113 = vadd.f32 %v5400, %v6112
  %v6114 = vpop.f32.mrf.mxu0
  %v6115 = vadd.f32 %v5402, %v6114
  %6116 = vmatmul.bf16.gmra.mxu0 %v5728
  %v6117 = vpop.f32.mrf.mxu0
  %v6118 = vadd.f32 %v5405, %v6117
  %v6119 = vpop.f32.mrf.mxu0
  %v6120 = vadd.f32 %v5407, %v6119
  %6121 = vdwg.mxu0
  %6122 = vmatpush.bf16.msra.mxu0 %v1453
  %6123 = vmatpush.bf16.msra.mxu0 %v1452
  %6124 = vmatpush.bf16.msra.mxu0 %v1451
  %6125 = vmatpush.bf16.msra.mxu0 %v1450
  %6126 = vmatpush.bf16.msra.mxu0 %v1449
  %6127 = vmatpush.bf16.msra.mxu0 %v1448
  %6128 = vmatpush.bf16.msra.mxu0 %v1447
  %6129 = vmatpush.bf16.msra.mxu0 %v1446
  %6130 = vmatmul.bf16.gmra.mxu0 %v4632
  %v6131 = vpop.f32.mrf.mxu0
  %v6132 = vadd.f32 0.0, %v6131
  %v6133 = vpop.f32.mrf.mxu0
  %v6134 = vadd.f32 0.0, %v6133
  %6135 = vmatmul.bf16.gmra.mxu0 %v4633
  %v6136 = vpop.f32.mrf.mxu0
  %v6137 = vadd.f32 0.0, %v6136
  %v6138 = vpop.f32.mrf.mxu0
  %v6139 = vadd.f32 0.0, %v6138
  %6140 = vmatmul.bf16.gmra.mxu0 %v4634
  %v6141 = vpop.f32.mrf.mxu0
  %v6142 = vadd.f32 0.0, %v6141
  %v6143 = vpop.f32.mrf.mxu0
  %v6144 = vadd.f32 0.0, %v6143
  %6145 = vmatmul.bf16.gmra.mxu0 %v4635
  %v6146 = vpop.f32.mrf.mxu0
  %v6147 = vadd.f32 0.0, %v6146
  %v6148 = vpop.f32.mrf.mxu0
  %v6149 = vadd.f32 0.0, %v6148
  %6150 = vmatmul.bf16.gmra.mxu0 %v4636
  %v6151 = vpop.f32.mrf.mxu0
  %v6152 = vadd.f32 0.0, %v6151
  %v6153 = vpop.f32.mrf.mxu0
  %v6154 = vadd.f32 0.0, %v6153
  %6155 = vmatmul.bf16.gmra.mxu0 %v4637
  %v6156 = vpop.f32.mrf.mxu0
  %v6157 = vadd.f32 0.0, %v6156
  %v6158 = vpop.f32.mrf.mxu0
  %v6159 = vadd.f32 0.0, %v6158
  %6160 = vmatmul.bf16.gmra.mxu0 %v4638
  %v6161 = vpop.f32.mrf.mxu0
  %v6162 = vadd.f32 0.0, %v6161
  %v6163 = vpop.f32.mrf.mxu0
  %v6164 = vadd.f32 0.0, %v6163
  %6165 = vmatmul.bf16.gmra.mxu0 %v4639
  %v6166 = vpop.f32.mrf.mxu0
  %v6167 = vadd.f32 0.0, %v6166
  %v6168 = vpop.f32.mrf.mxu0
  %v6169 = vadd.f32 0.0, %v6168
  %6170 = vmatmul.bf16.gmra.mxu0 %v4640
  %v6171 = vpop.f32.mrf.mxu0
  %v6172 = vadd.f32 0.0, %v6171
  %v6173 = vpop.f32.mrf.mxu0
  %v6174 = vadd.f32 0.0, %v6173
  %6175 = vmatmul.bf16.gmra.mxu0 %v4641
  %v6176 = vpop.f32.mrf.mxu0
  %v6177 = vadd.f32 0.0, %v6176
  %v6178 = vpop.f32.mrf.mxu0
  %v6179 = vadd.f32 0.0, %v6178
  %6180 = vmatmul.bf16.gmra.mxu0 %v4642
  %v6181 = vpop.f32.mrf.mxu0
  %v6182 = vadd.f32 0.0, %v6181
  %v6183 = vpop.f32.mrf.mxu0
  %v6184 = vadd.f32 0.0, %v6183
  %6185 = vmatmul.bf16.gmra.mxu0 %v4643
  %v6186 = vpop.f32.mrf.mxu0
  %v6187 = vadd.f32 0.0, %v6186
  %v6188 = vpop.f32.mrf.mxu0
  %v6189 = vadd.f32 0.0, %v6188
  %6190 = vmatmul.bf16.gmra.mxu0 %v4644
  %v6191 = vpop.f32.mrf.mxu0
  %v6192 = vadd.f32 0.0, %v6191
  %v6193 = vpop.f32.mrf.mxu0
  %v6194 = vadd.f32 0.0, %v6193
  %6195 = vmatmul.bf16.gmra.mxu0 %v4645
  %v6196 = vpop.f32.mrf.mxu0
  %v6197 = vadd.f32 0.0, %v6196
  %v6198 = vpop.f32.mrf.mxu0
  %v6199 = vadd.f32 0.0, %v6198
  %6200 = vmatmul.bf16.gmra.mxu0 %v4646
  %v6201 = vpop.f32.mrf.mxu0
  %v6202 = vadd.f32 0.0, %v6201
  %v6203 = vpop.f32.mrf.mxu0
  %v6204 = vadd.f32 0.0, %v6203
  %6205 = vmatmul.bf16.gmra.mxu0 %v4647
  %v6206 = vpop.f32.mrf.mxu0
  %v6207 = vadd.f32 0.0, %v6206
  %v6208 = vpop.f32.mrf.mxu0
  %v6209 = vadd.f32 0.0, %v6208
  %6210 = vmatmul.bf16.gmra.mxu0 %v4648
  %v6211 = vpop.f32.mrf.mxu0
  %v6212 = vadd.f32 0.0, %v6211
  %v6213 = vpop.f32.mrf.mxu0
  %v6214 = vadd.f32 0.0, %v6213
  %6215 = vmatmul.bf16.gmra.mxu0 %v4649
  %v6216 = vpop.f32.mrf.mxu0
  %v6217 = vadd.f32 0.0, %v6216
  %v6218 = vpop.f32.mrf.mxu0
  %v6219 = vadd.f32 0.0, %v6218
  %6220 = vmatmul.bf16.gmra.mxu0 %v4650
  %v6221 = vpop.f32.mrf.mxu0
  %v6222 = vadd.f32 0.0, %v6221
  %v6223 = vpop.f32.mrf.mxu0
  %v6224 = vadd.f32 0.0, %v6223
  %6225 = vmatmul.bf16.gmra.mxu0 %v4651
  %v6226 = vpop.f32.mrf.mxu0
  %v6227 = vadd.f32 0.0, %v6226
  %v6228 = vpop.f32.mrf.mxu0
  %v6229 = vadd.f32 0.0, %v6228
  %6230 = vmatmul.bf16.gmra.mxu0 %v4652
  %v6231 = vpop.f32.mrf.mxu0
  %v6232 = vadd.f32 0.0, %v6231
  %v6233 = vpop.f32.mrf.mxu0
  %v6234 = vadd.f32 0.0, %v6233
  %6235 = vmatmul.bf16.gmra.mxu0 %v4653
  %v6236 = vpop.f32.mrf.mxu0
  %v6237 = vadd.f32 0.0, %v6236
  %v6238 = vpop.f32.mrf.mxu0
  %v6239 = vadd.f32 0.0, %v6238
  %6240 = vmatmul.bf16.gmra.mxu0 %v4654
  %v6241 = vpop.f32.mrf.mxu0
  %v6242 = vadd.f32 0.0, %v6241
  %v6243 = vpop.f32.mrf.mxu0
  %v6244 = vadd.f32 0.0, %v6243
  %6245 = vmatmul.bf16.gmra.mxu0 %v4655
  %v6246 = vpop.f32.mrf.mxu0
  %v6247 = vadd.f32 0.0, %v6246
  %v6248 = vpop.f32.mrf.mxu0
  %v6249 = vadd.f32 0.0, %v6248
  %6250 = vmatmul.bf16.gmra.mxu0 %v4656
  %v6251 = vpop.f32.mrf.mxu0
  %v6252 = vadd.f32 0.0, %v6251
  %v6253 = vpop.f32.mrf.mxu0
  %v6254 = vadd.f32 0.0, %v6253
  %6255 = vmatmul.bf16.gmra.mxu0 %v4657
  %v6256 = vpop.f32.mrf.mxu0
  %v6257 = vadd.f32 0.0, %v6256
  %v6258 = vpop.f32.mrf.mxu0
  %v6259 = vadd.f32 0.0, %v6258
  %6260 = vmatmul.bf16.gmra.mxu0 %v4658
  %v6261 = vpop.f32.mrf.mxu0
  %v6262 = vadd.f32 0.0, %v6261
  %v6263 = vpop.f32.mrf.mxu0
  %v6264 = vadd.f32 0.0, %v6263
  %6265 = vmatmul.bf16.gmra.mxu0 %v4659
  %v6266 = vpop.f32.mrf.mxu0
  %v6267 = vadd.f32 0.0, %v6266
  %v6268 = vpop.f32.mrf.mxu0
  %v6269 = vadd.f32 0.0, %v6268
  %6270 = vmatmul.bf16.gmra.mxu0 %v4660
  %v6271 = vpop.f32.mrf.mxu0
  %v6272 = vadd.f32 0.0, %v6271
  %v6273 = vpop.f32.mrf.mxu0
  %v6274 = vadd.f32 0.0, %v6273
  %6275 = vmatmul.bf16.gmra.mxu0 %v4661
  %v6276 = vpop.f32.mrf.mxu0
  %v6277 = vadd.f32 0.0, %v6276
  %v6278 = vpop.f32.mrf.mxu0
  %v6279 = vadd.f32 0.0, %v6278
  %6280 = vmatmul.bf16.gmra.mxu0 %v4662
  %v6281 = vpop.f32.mrf.mxu0
  %v6282 = vadd.f32 0.0, %v6281
  %v6283 = vpop.f32.mrf.mxu0
  %v6284 = vadd.f32 0.0, %v6283
  %6285 = vmatmul.bf16.gmra.mxu0 %v4663
  %v6286 = vpop.f32.mrf.mxu0
  %v6287 = vadd.f32 0.0, %v6286
  %v6288 = vpop.f32.mrf.mxu0
  %v6289 = vadd.f32 0.0, %v6288
  %6290 = vmatmul.bf16.gmra.mxu0 %v4664
  %v6291 = vpop.f32.mrf.mxu0
  %v6292 = vadd.f32 0.0, %v6291
  %v6293 = vpop.f32.mrf.mxu0
  %v6294 = vadd.f32 0.0, %v6293
  %6295 = vmatmul.bf16.gmra.mxu0 %v4665
  %v6296 = vpop.f32.mrf.mxu0
  %v6297 = vadd.f32 0.0, %v6296
  %v6298 = vpop.f32.mrf.mxu0
  %v6299 = vadd.f32 0.0, %v6298
  %6300 = vmatmul.bf16.gmra.mxu0 %v4666
  %v6301 = vpop.f32.mrf.mxu0
  %v6302 = vadd.f32 0.0, %v6301
  %v6303 = vpop.f32.mrf.mxu0
  %v6304 = vadd.f32 0.0, %v6303
  %6305 = vmatmul.bf16.gmra.mxu0 %v4667
  %v6306 = vpop.f32.mrf.mxu0
  %v6307 = vadd.f32 0.0, %v6306
  %v6308 = vpop.f32.mrf.mxu0
  %v6309 = vadd.f32 0.0, %v6308
  %6310 = vmatmul.bf16.gmra.mxu0 %v4668
  %v6311 = vpop.f32.mrf.mxu0
  %v6312 = vadd.f32 0.0, %v6311
  %v6313 = vpop.f32.mrf.mxu0
  %v6314 = vadd.f32 0.0, %v6313
  %6315 = vmatmul.bf16.gmra.mxu0 %v4669
  %v6316 = vpop.f32.mrf.mxu0
  %v6317 = vadd.f32 0.0, %v6316
  %v6318 = vpop.f32.mrf.mxu0
  %v6319 = vadd.f32 0.0, %v6318
  %6320 = vmatmul.bf16.gmra.mxu0 %v4670
  %v6321 = vpop.f32.mrf.mxu0
  %v6322 = vadd.f32 0.0, %v6321
  %v6323 = vpop.f32.mrf.mxu0
  %v6324 = vadd.f32 0.0, %v6323
  %6325 = vmatmul.bf16.gmra.mxu0 %v4671
  %v6326 = vpop.f32.mrf.mxu0
  %v6327 = vadd.f32 0.0, %v6326
  %v6328 = vpop.f32.mrf.mxu0
  %v6329 = vadd.f32 0.0, %v6328
  %6330 = vmatmul.bf16.gmra.mxu0 %v4672
  %v6331 = vpop.f32.mrf.mxu0
  %v6332 = vadd.f32 0.0, %v6331
  %v6333 = vpop.f32.mrf.mxu0
  %v6334 = vadd.f32 0.0, %v6333
  %6335 = vmatmul.bf16.gmra.mxu0 %v4673
  %v6336 = vpop.f32.mrf.mxu0
  %v6337 = vadd.f32 0.0, %v6336
  %v6338 = vpop.f32.mrf.mxu0
  %v6339 = vadd.f32 0.0, %v6338
  %6340 = vmatmul.bf16.gmra.mxu0 %v4674
  %v6341 = vpop.f32.mrf.mxu0
  %v6342 = vadd.f32 0.0, %v6341
  %v6343 = vpop.f32.mrf.mxu0
  %v6344 = vadd.f32 0.0, %v6343
  %6345 = vmatmul.bf16.gmra.mxu0 %v4675
  %v6346 = vpop.f32.mrf.mxu0
  %v6347 = vadd.f32 0.0, %v6346
  %v6348 = vpop.f32.mrf.mxu0
  %v6349 = vadd.f32 0.0, %v6348
  %6350 = vmatmul.bf16.gmra.mxu0 %v4676
  %v6351 = vpop.f32.mrf.mxu0
  %v6352 = vadd.f32 0.0, %v6351
  %v6353 = vpop.f32.mrf.mxu0
  %v6354 = vadd.f32 0.0, %v6353
  %6355 = vmatmul.bf16.gmra.mxu0 %v4677
  %v6356 = vpop.f32.mrf.mxu0
  %v6357 = vadd.f32 0.0, %v6356
  %v6358 = vpop.f32.mrf.mxu0
  %v6359 = vadd.f32 0.0, %v6358
  %6360 = vmatmul.bf16.gmra.mxu0 %v4678
  %v6361 = vpop.f32.mrf.mxu0
  %v6362 = vadd.f32 0.0, %v6361
  %v6363 = vpop.f32.mrf.mxu0
  %v6364 = vadd.f32 0.0, %v6363
  %6365 = vmatmul.bf16.gmra.mxu0 %v4679
  %v6366 = vpop.f32.mrf.mxu0
  %v6367 = vadd.f32 0.0, %v6366
  %v6368 = vpop.f32.mrf.mxu0
  %v6369 = vadd.f32 0.0, %v6368
  %6370 = vmatmul.bf16.gmra.mxu0 %v4680
  %v6371 = vpop.f32.mrf.mxu0
  %v6372 = vadd.f32 0.0, %v6371
  %v6373 = vpop.f32.mrf.mxu0
  %v6374 = vadd.f32 0.0, %v6373
  %6375 = vmatmul.bf16.gmra.mxu0 %v4681
  %v6376 = vpop.f32.mrf.mxu0
  %v6377 = vadd.f32 0.0, %v6376
  %v6378 = vpop.f32.mrf.mxu0
  %v6379 = vadd.f32 0.0, %v6378
  %6380 = vmatmul.bf16.gmra.mxu0 %v4682
  %v6381 = vpop.f32.mrf.mxu0
  %v6382 = vadd.f32 0.0, %v6381
  %v6383 = vpop.f32.mrf.mxu0
  %v6384 = vadd.f32 0.0, %v6383
  %6385 = vmatmul.bf16.gmra.mxu0 %v4683
  %v6386 = vpop.f32.mrf.mxu0
  %v6387 = vadd.f32 0.0, %v6386
  %v6388 = vpop.f32.mrf.mxu0
  %v6389 = vadd.f32 0.0, %v6388
  %6390 = vmatmul.bf16.gmra.mxu0 %v4684
  %v6391 = vpop.f32.mrf.mxu0
  %v6392 = vadd.f32 0.0, %v6391
  %v6393 = vpop.f32.mrf.mxu0
  %v6394 = vadd.f32 0.0, %v6393
  %6395 = vmatmul.bf16.gmra.mxu0 %v4685
  %v6396 = vpop.f32.mrf.mxu0
  %v6397 = vadd.f32 0.0, %v6396
  %v6398 = vpop.f32.mrf.mxu0
  %v6399 = vadd.f32 0.0, %v6398
  %6400 = vmatmul.bf16.gmra.mxu0 %v4686
  %v6401 = vpop.f32.mrf.mxu0
  %v6402 = vadd.f32 0.0, %v6401
  %v6403 = vpop.f32.mrf.mxu0
  %v6404 = vadd.f32 0.0, %v6403
  %6405 = vmatmul.bf16.gmra.mxu0 %v4687
  %v6406 = vpop.f32.mrf.mxu0
  %v6407 = vadd.f32 0.0, %v6406
  %v6408 = vpop.f32.mrf.mxu0
  %v6409 = vadd.f32 0.0, %v6408
  %6410 = vmatmul.bf16.gmra.mxu0 %v4688
  %v6411 = vpop.f32.mrf.mxu0
  %v6412 = vadd.f32 0.0, %v6411
  %v6413 = vpop.f32.mrf.mxu0
  %v6414 = vadd.f32 0.0, %v6413
  %6415 = vmatmul.bf16.gmra.mxu0 %v4689
  %v6416 = vpop.f32.mrf.mxu0
  %v6417 = vadd.f32 0.0, %v6416
  %v6418 = vpop.f32.mrf.mxu0
  %v6419 = vadd.f32 0.0, %v6418
  %6420 = vmatmul.bf16.gmra.mxu0 %v4690
  %v6421 = vpop.f32.mrf.mxu0
  %v6422 = vadd.f32 0.0, %v6421
  %v6423 = vpop.f32.mrf.mxu0
  %v6424 = vadd.f32 0.0, %v6423
  %6425 = vmatmul.bf16.gmra.mxu0 %v4691
  %v6426 = vpop.f32.mrf.mxu0
  %v6427 = vadd.f32 0.0, %v6426
  %v6428 = vpop.f32.mrf.mxu0
  %v6429 = vadd.f32 0.0, %v6428
  %6430 = vmatmul.bf16.gmra.mxu0 %v4692
  %v6431 = vpop.f32.mrf.mxu0
  %v6432 = vadd.f32 0.0, %v6431
  %v6433 = vpop.f32.mrf.mxu0
  %v6434 = vadd.f32 0.0, %v6433
  %6435 = vmatmul.bf16.gmra.mxu0 %v4693
  %v6436 = vpop.f32.mrf.mxu0
  %v6437 = vadd.f32 0.0, %v6436
  %v6438 = vpop.f32.mrf.mxu0
  %v6439 = vadd.f32 0.0, %v6438
  %6440 = vmatmul.bf16.gmra.mxu0 %v4694
  %v6441 = vpop.f32.mrf.mxu0
  %v6442 = vadd.f32 0.0, %v6441
  %v6443 = vpop.f32.mrf.mxu0
  %v6444 = vadd.f32 0.0, %v6443
  %6445 = vmatmul.bf16.gmra.mxu0 %v4695
  %v6446 = vpop.f32.mrf.mxu0
  %v6447 = vadd.f32 0.0, %v6446
  %v6448 = vpop.f32.mrf.mxu0
  %v6449 = vadd.f32 0.0, %v6448
  %6450 = vdwg.mxu0
  %v6451 = vadd.f32 %v5803, %v6132
  %v6452 = vadd.f32 %v5805, %v6134
  %v6453 = vadd.f32 %v5808, %v6137
  %v6454 = vadd.f32 %v5810, %v6139
  %v6455 = vadd.f32 %v5813, %v6142
  %v6456 = vadd.f32 %v5815, %v6144
  %v6457 = vadd.f32 %v5818, %v6147
  %v6458 = vadd.f32 %v5820, %v6149
  %v6459 = vadd.f32 %v5823, %v6152
  %v6460 = vadd.f32 %v5825, %v6154
  %v6461 = vadd.f32 %v5828, %v6157
  %v6462 = vadd.f32 %v5830, %v6159
  %v6463 = vadd.f32 %v5833, %v6162
  %v6464 = vadd.f32 %v5835, %v6164
  %v6465 = vadd.f32 %v5838, %v6167
  %v6466 = vadd.f32 %v5840, %v6169
  %v6467 = vadd.f32 %v5843, %v6172
  %v6468 = vadd.f32 %v5845, %v6174
  %v6469 = vadd.f32 %v5848, %v6177
  %v6470 = vadd.f32 %v5850, %v6179
  %v6471 = vadd.f32 %v5853, %v6182
  %v6472 = vadd.f32 %v5855, %v6184
  %v6473 = vadd.f32 %v5858, %v6187
  %v6474 = vadd.f32 %v5860, %v6189
  %v6475 = vadd.f32 %v5863, %v6192
  %v6476 = vadd.f32 %v5865, %v6194
  %v6477 = vadd.f32 %v5868, %v6197
  %v6478 = vadd.f32 %v5870, %v6199
  %v6479 = vadd.f32 %v5873, %v6202
  %v6480 = vadd.f32 %v5875, %v6204
  %v6481 = vadd.f32 %v5878, %v6207
  %v6482 = vadd.f32 %v5880, %v6209
  %v6483 = vadd.f32 %v5883, %v6212
  %v6484 = vadd.f32 %v5885, %v6214
  %v6485 = vadd.f32 %v5888, %v6217
  %v6486 = vadd.f32 %v5890, %v6219
  %v6487 = vadd.f32 %v5893, %v6222
  %v6488 = vadd.f32 %v5895, %v6224
  %v6489 = vadd.f32 %v5898, %v6227
  %v6490 = vadd.f32 %v5900, %v6229
  %v6491 = vadd.f32 %v5903, %v6232
  %v6492 = vadd.f32 %v5905, %v6234
  %v6493 = vadd.f32 %v5908, %v6237
  %v6494 = vadd.f32 %v5910, %v6239
  %v6495 = vadd.f32 %v5913, %v6242
  %v6496 = vadd.f32 %v5915, %v6244
  %v6497 = vadd.f32 %v5918, %v6247
  %v6498 = vadd.f32 %v5920, %v6249
  %v6499 = vadd.f32 %v5923, %v6252
  %v6500 = vadd.f32 %v5925, %v6254
  %v6501 = vadd.f32 %v5928, %v6257
  %v6502 = vadd.f32 %v5930, %v6259
  %v6503 = vadd.f32 %v5933, %v6262
  %v6504 = vadd.f32 %v5935, %v6264
  %v6505 = vadd.f32 %v5938, %v6267
  %v6506 = vadd.f32 %v5940, %v6269
  %v6507 = vadd.f32 %v5943, %v6272
  %v6508 = vadd.f32 %v5945, %v6274
  %v6509 = vadd.f32 %v5948, %v6277
  %v6510 = vadd.f32 %v5950, %v6279
  %v6511 = vadd.f32 %v5953, %v6282
  %v6512 = vadd.f32 %v5955, %v6284
  %v6513 = vadd.f32 %v5958, %v6287
  %v6514 = vadd.f32 %v5960, %v6289
  %v6515 = vadd.f32 %v5963, %v6292
  %v6516 = vadd.f32 %v5965, %v6294
  %v6517 = vadd.f32 %v5968, %v6297
  %v6518 = vadd.f32 %v5970, %v6299
  %v6519 = vadd.f32 %v5973, %v6302
  %v6520 = vadd.f32 %v5975, %v6304
  %v6521 = vadd.f32 %v5978, %v6307
  %v6522 = vadd.f32 %v5980, %v6309
  %v6523 = vadd.f32 %v5983, %v6312
  %v6524 = vadd.f32 %v5985, %v6314
  %v6525 = vadd.f32 %v5988, %v6317
  %v6526 = vadd.f32 %v5990, %v6319
  %v6527 = vadd.f32 %v5993, %v6322
  %v6528 = vadd.f32 %v5995, %v6324
  %v6529 = vadd.f32 %v5998, %v6327
  %v6530 = vadd.f32 %v6000, %v6329
  %v6531 = vadd.f32 %v6003, %v6332
  %v6532 = vadd.f32 %v6005, %v6334
  %v6533 = vadd.f32 %v6008, %v6337
  %v6534 = vadd.f32 %v6010, %v6339
  %v6535 = vadd.f32 %v6013, %v6342
  %v6536 = vadd.f32 %v6015, %v6344
  %v6537 = vadd.f32 %v6018, %v6347
  %v6538 = vadd.f32 %v6020, %v6349
  %v6539 = vadd.f32 %v6023, %v6352
  %v6540 = vadd.f32 %v6025, %v6354
  %v6541 = vadd.f32 %v6028, %v6357
  %v6542 = vadd.f32 %v6030, %v6359
  %v6543 = vadd.f32 %v6033, %v6362
  %v6544 = vadd.f32 %v6035, %v6364
  %v6545 = vadd.f32 %v6038, %v6367
  %v6546 = vadd.f32 %v6040, %v6369
  %v6547 = vadd.f32 %v6043, %v6372
  %v6548 = vadd.f32 %v6045, %v6374
  %v6549 = vadd.f32 %v6048, %v6377
  %v6550 = vadd.f32 %v6050, %v6379
  %v6551 = vadd.f32 %v6053, %v6382
  %v6552 = vadd.f32 %v6055, %v6384
  %v6553 = vadd.f32 %v6058, %v6387
  %v6554 = vadd.f32 %v6060, %v6389
  %v6555 = vadd.f32 %v6063, %v6392
  %v6556 = vadd.f32 %v6065, %v6394
  %v6557 = vadd.f32 %v6068, %v6397
  %v6558 = vadd.f32 %v6070, %v6399
  %v6559 = vadd.f32 %v6073, %v6402
  %v6560 = vadd.f32 %v6075, %v6404
  %v6561 = vadd.f32 %v6078, %v6407
  %v6562 = vadd.f32 %v6080, %v6409
  %v6563 = vadd.f32 %v6083, %v6412
  %v6564 = vadd.f32 %v6085, %v6414
  %v6565 = vadd.f32 %v6088, %v6417
  %v6566 = vadd.f32 %v6090, %v6419
  %v6567 = vadd.f32 %v6093, %v6422
  %v6568 = vadd.f32 %v6095, %v6424
  %v6569 = vadd.f32 %v6098, %v6427
  %v6570 = vadd.f32 %v6100, %v6429
  %v6571 = vadd.f32 %v6103, %v6432
  %v6572 = vadd.f32 %v6105, %v6434
  %v6573 = vadd.f32 %v6108, %v6437
  %v6574 = vadd.f32 %v6110, %v6439
  %v6575 = vadd.f32 %v6113, %v6442
  %v6576 = vadd.f32 %v6115, %v6444
  %v6577 = vadd.f32 %v6118, %v6447
  %v6578 = vadd.f32 %v6120, %v6449
  %6579 = vrot.lane.b32.xlu0 %v6451, 64
  %v6580 = vpop.permute.xlu0 %6579
  %6581 = vrot.lane.b32.xlu0 %v6452, 64
  %v6582 = vpop.permute.xlu0 %6581
  %6583 = vrot.lane.b32.xlu0 %v6453, 64
  %v6584 = vpop.permute.xlu0 %6583
  %6585 = vrot.lane.b32.xlu0 %v6454, 64
  %v6586 = vpop.permute.xlu0 %6585
  %6587 = vrot.lane.b32.xlu0 %v6455, 64
  %v6588 = vpop.permute.xlu0 %6587
  %6589 = vrot.lane.b32.xlu0 %v6456, 64
  %v6590 = vpop.permute.xlu0 %6589
  %6591 = vrot.lane.b32.xlu0 %v6457, 64
  %v6592 = vpop.permute.xlu0 %6591
  %6593 = vrot.lane.b32.xlu0 %v6458, 64
  %v6594 = vpop.permute.xlu0 %6593
  %6595 = vrot.lane.b32.xlu0 %v6459, 64
  %v6596 = vpop.permute.xlu0 %6595
  %6597 = vrot.lane.b32.xlu0 %v6460, 64
  %v6598 = vpop.permute.xlu0 %6597
  %6599 = vrot.lane.b32.xlu0 %v6461, 64
  %v6600 = vpop.permute.xlu0 %6599
  %6601 = vrot.lane.b32.xlu0 %v6462, 64
  %v6602 = vpop.permute.xlu0 %6601
  %6603 = vrot.lane.b32.xlu0 %v6463, 64
  %v6604 = vpop.permute.xlu0 %6603
  %6605 = vrot.lane.b32.xlu0 %v6464, 64
  %v6606 = vpop.permute.xlu0 %6605
  %6607 = vrot.lane.b32.xlu0 %v6465, 64
  %v6608 = vpop.permute.xlu0 %6607
  %6609 = vrot.lane.b32.xlu0 %v6466, 64
  %v6610 = vpop.permute.xlu0 %6609
  %6611 = vrot.lane.b32.xlu0 %v6467, 64
  %v6612 = vpop.permute.xlu0 %6611
  %6613 = vrot.lane.b32.xlu0 %v6468, 64
  %v6614 = vpop.permute.xlu0 %6613
  %6615 = vrot.lane.b32.xlu0 %v6469, 64
  %v6616 = vpop.permute.xlu0 %6615
  %6617 = vrot.lane.b32.xlu0 %v6470, 64
  %v6618 = vpop.permute.xlu0 %6617
  %6619 = vrot.lane.b32.xlu0 %v6471, 64
  %v6620 = vpop.permute.xlu0 %6619
  %6621 = vrot.lane.b32.xlu0 %v6472, 64
  %v6622 = vpop.permute.xlu0 %6621
  %6623 = vrot.lane.b32.xlu0 %v6473, 64
  %v6624 = vpop.permute.xlu0 %6623
  %6625 = vrot.lane.b32.xlu0 %v6474, 64
  %v6626 = vpop.permute.xlu0 %6625
  %6627 = vrot.lane.b32.xlu0 %v6475, 64
  %v6628 = vpop.permute.xlu0 %6627
  %6629 = vrot.lane.b32.xlu0 %v6476, 64
  %v6630 = vpop.permute.xlu0 %6629
  %6631 = vrot.lane.b32.xlu0 %v6477, 64
  %v6632 = vpop.permute.xlu0 %6631
  %6633 = vrot.lane.b32.xlu0 %v6478, 64
  %v6634 = vpop.permute.xlu0 %6633
  %6635 = vrot.lane.b32.xlu0 %v6479, 64
  %v6636 = vpop.permute.xlu0 %6635
  %6637 = vrot.lane.b32.xlu0 %v6480, 64
  %v6638 = vpop.permute.xlu0 %6637
  %6639 = vrot.lane.b32.xlu0 %v6481, 64
  %v6640 = vpop.permute.xlu0 %6639
  %6641 = vrot.lane.b32.xlu0 %v6482, 64
  %v6642 = vpop.permute.xlu0 %6641
  %6643 = vrot.lane.b32.xlu0 %v6483, 64
  %v6644 = vpop.permute.xlu0 %6643
  %6645 = vrot.lane.b32.xlu0 %v6484, 64
  %v6646 = vpop.permute.xlu0 %6645
  %6647 = vrot.lane.b32.xlu0 %v6485, 64
  %v6648 = vpop.permute.xlu0 %6647
  %6649 = vrot.lane.b32.xlu0 %v6486, 64
  %v6650 = vpop.permute.xlu0 %6649
  %6651 = vrot.lane.b32.xlu0 %v6487, 64
  %v6652 = vpop.permute.xlu0 %6651
  %6653 = vrot.lane.b32.xlu0 %v6488, 64
  %v6654 = vpop.permute.xlu0 %6653
  %6655 = vrot.lane.b32.xlu0 %v6489, 64
  %v6656 = vpop.permute.xlu0 %6655
  %6657 = vrot.lane.b32.xlu0 %v6490, 64
  %v6658 = vpop.permute.xlu0 %6657
  %6659 = vrot.lane.b32.xlu0 %v6491, 64
  %v6660 = vpop.permute.xlu0 %6659
  %6661 = vrot.lane.b32.xlu0 %v6492, 64
  %v6662 = vpop.permute.xlu0 %6661
  %6663 = vrot.lane.b32.xlu0 %v6493, 64
  %v6664 = vpop.permute.xlu0 %6663
  %6665 = vrot.lane.b32.xlu0 %v6494, 64
  %v6666 = vpop.permute.xlu0 %6665
  %6667 = vrot.lane.b32.xlu0 %v6495, 64
  %v6668 = vpop.permute.xlu0 %6667
  %6669 = vrot.lane.b32.xlu0 %v6496, 64
  %v6670 = vpop.permute.xlu0 %6669
  %6671 = vrot.lane.b32.xlu0 %v6497, 64
  %v6672 = vpop.permute.xlu0 %6671
  %6673 = vrot.lane.b32.xlu0 %v6498, 64
  %v6674 = vpop.permute.xlu0 %6673
  %6675 = vrot.lane.b32.xlu0 %v6499, 64
  %v6676 = vpop.permute.xlu0 %6675
  %6677 = vrot.lane.b32.xlu0 %v6500, 64
  %v6678 = vpop.permute.xlu0 %6677
  %6679 = vrot.lane.b32.xlu0 %v6501, 64
  %v6680 = vpop.permute.xlu0 %6679
  %6681 = vrot.lane.b32.xlu0 %v6502, 64
  %v6682 = vpop.permute.xlu0 %6681
  %6683 = vrot.lane.b32.xlu0 %v6503, 64
  %v6684 = vpop.permute.xlu0 %6683
  %6685 = vrot.lane.b32.xlu0 %v6504, 64
  %v6686 = vpop.permute.xlu0 %6685
  %6687 = vrot.lane.b32.xlu0 %v6505, 64
  %v6688 = vpop.permute.xlu0 %6687
  %6689 = vrot.lane.b32.xlu0 %v6506, 64
  %v6690 = vpop.permute.xlu0 %6689
  %6691 = vrot.lane.b32.xlu0 %v6507, 64
  %v6692 = vpop.permute.xlu0 %6691
  %6693 = vrot.lane.b32.xlu0 %v6508, 64
  %v6694 = vpop.permute.xlu0 %6693
  %6695 = vrot.lane.b32.xlu0 %v6509, 64
  %v6696 = vpop.permute.xlu0 %6695
  %6697 = vrot.lane.b32.xlu0 %v6510, 64
  %v6698 = vpop.permute.xlu0 %6697
  %6699 = vrot.lane.b32.xlu0 %v6511, 64
  %v6700 = vpop.permute.xlu0 %6699
  %6701 = vrot.lane.b32.xlu0 %v6512, 64
  %v6702 = vpop.permute.xlu0 %6701
  %6703 = vrot.lane.b32.xlu0 %v6513, 64
  %v6704 = vpop.permute.xlu0 %6703
  %6705 = vrot.lane.b32.xlu0 %v6514, 64
  %v6706 = vpop.permute.xlu0 %6705
  %6707 = vrot.lane.b32.xlu0 %v6515, 64
  %v6708 = vpop.permute.xlu0 %6707
  %6709 = vrot.lane.b32.xlu0 %v6516, 64
  %v6710 = vpop.permute.xlu0 %6709
  %6711 = vrot.lane.b32.xlu0 %v6517, 64
  %v6712 = vpop.permute.xlu0 %6711
  %6713 = vrot.lane.b32.xlu0 %v6518, 64
  %v6714 = vpop.permute.xlu0 %6713
  %6715 = vrot.lane.b32.xlu0 %v6519, 64
  %v6716 = vpop.permute.xlu0 %6715
  %6717 = vrot.lane.b32.xlu0 %v6520, 64
  %v6718 = vpop.permute.xlu0 %6717
  %6719 = vrot.lane.b32.xlu0 %v6521, 64
  %v6720 = vpop.permute.xlu0 %6719
  %6721 = vrot.lane.b32.xlu0 %v6522, 64
  %v6722 = vpop.permute.xlu0 %6721
  %6723 = vrot.lane.b32.xlu0 %v6523, 64
  %v6724 = vpop.permute.xlu0 %6723
  %6725 = vrot.lane.b32.xlu0 %v6524, 64
  %v6726 = vpop.permute.xlu0 %6725
  %6727 = vrot.lane.b32.xlu0 %v6525, 64
  %v6728 = vpop.permute.xlu0 %6727
  %6729 = vrot.lane.b32.xlu0 %v6526, 64
  %v6730 = vpop.permute.xlu0 %6729
  %6731 = vrot.lane.b32.xlu0 %v6527, 64
  %v6732 = vpop.permute.xlu0 %6731
  %6733 = vrot.lane.b32.xlu0 %v6528, 64
  %v6734 = vpop.permute.xlu0 %6733
  %6735 = vrot.lane.b32.xlu0 %v6529, 64
  %v6736 = vpop.permute.xlu0 %6735
  %6737 = vrot.lane.b32.xlu0 %v6530, 64
  %v6738 = vpop.permute.xlu0 %6737
  %6739 = vrot.lane.b32.xlu0 %v6531, 64
  %v6740 = vpop.permute.xlu0 %6739
  %6741 = vrot.lane.b32.xlu0 %v6532, 64
  %v6742 = vpop.permute.xlu0 %6741
  %6743 = vrot.lane.b32.xlu0 %v6533, 64
  %v6744 = vpop.permute.xlu0 %6743
  %6745 = vrot.lane.b32.xlu0 %v6534, 64
  %v6746 = vpop.permute.xlu0 %6745
  %6747 = vrot.lane.b32.xlu0 %v6535, 64
  %v6748 = vpop.permute.xlu0 %6747
  %6749 = vrot.lane.b32.xlu0 %v6536, 64
  %v6750 = vpop.permute.xlu0 %6749
  %6751 = vrot.lane.b32.xlu0 %v6537, 64
  %v6752 = vpop.permute.xlu0 %6751
  %6753 = vrot.lane.b32.xlu0 %v6538, 64
  %v6754 = vpop.permute.xlu0 %6753
  %6755 = vrot.lane.b32.xlu0 %v6539, 64
  %v6756 = vpop.permute.xlu0 %6755
  %6757 = vrot.lane.b32.xlu0 %v6540, 64
  %v6758 = vpop.permute.xlu0 %6757
  %6759 = vrot.lane.b32.xlu0 %v6541, 64
  %v6760 = vpop.permute.xlu0 %6759
  %6761 = vrot.lane.b32.xlu0 %v6542, 64
  %v6762 = vpop.permute.xlu0 %6761
  %6763 = vrot.lane.b32.xlu0 %v6543, 64
  %v6764 = vpop.permute.xlu0 %6763
  %6765 = vrot.lane.b32.xlu0 %v6544, 64
  %v6766 = vpop.permute.xlu0 %6765
  %6767 = vrot.lane.b32.xlu0 %v6545, 64
  %v6768 = vpop.permute.xlu0 %6767
  %6769 = vrot.lane.b32.xlu0 %v6546, 64
  %v6770 = vpop.permute.xlu0 %6769
  %6771 = vrot.lane.b32.xlu0 %v6547, 64
  %v6772 = vpop.permute.xlu0 %6771
  %6773 = vrot.lane.b32.xlu0 %v6548, 64
  %v6774 = vpop.permute.xlu0 %6773
  %6775 = vrot.lane.b32.xlu0 %v6549, 64
  %v6776 = vpop.permute.xlu0 %6775
  %6777 = vrot.lane.b32.xlu0 %v6550, 64
  %v6778 = vpop.permute.xlu0 %6777
  %6779 = vrot.lane.b32.xlu0 %v6551, 64
  %v6780 = vpop.permute.xlu0 %6779
  %6781 = vrot.lane.b32.xlu0 %v6552, 64
  %v6782 = vpop.permute.xlu0 %6781
  %6783 = vrot.lane.b32.xlu0 %v6553, 64
  %v6784 = vpop.permute.xlu0 %6783
  %6785 = vrot.lane.b32.xlu0 %v6554, 64
  %v6786 = vpop.permute.xlu0 %6785
  %6787 = vrot.lane.b32.xlu0 %v6555, 64
  %v6788 = vpop.permute.xlu0 %6787
  %6789 = vrot.lane.b32.xlu0 %v6556, 64
  %v6790 = vpop.permute.xlu0 %6789
  %6791 = vrot.lane.b32.xlu0 %v6557, 64
  %v6792 = vpop.permute.xlu0 %6791
  %6793 = vrot.lane.b32.xlu0 %v6558, 64
  %v6794 = vpop.permute.xlu0 %6793
  %6795 = vrot.lane.b32.xlu0 %v6559, 64
  %v6796 = vpop.permute.xlu0 %6795
  %6797 = vrot.lane.b32.xlu0 %v6560, 64
  %v6798 = vpop.permute.xlu0 %6797
  %6799 = vrot.lane.b32.xlu0 %v6561, 64
  %v6800 = vpop.permute.xlu0 %6799
  %6801 = vrot.lane.b32.xlu0 %v6562, 64
  %v6802 = vpop.permute.xlu0 %6801
  %6803 = vrot.lane.b32.xlu0 %v6563, 64
  %v6804 = vpop.permute.xlu0 %6803
  %6805 = vrot.lane.b32.xlu0 %v6564, 64
  %v6806 = vpop.permute.xlu0 %6805
  %6807 = vrot.lane.b32.xlu0 %v6565, 64
  %v6808 = vpop.permute.xlu0 %6807
  %6809 = vrot.lane.b32.xlu0 %v6566, 64
  %v6810 = vpop.permute.xlu0 %6809
  %6811 = vrot.lane.b32.xlu0 %v6567, 64
  %v6812 = vpop.permute.xlu0 %6811
  %6813 = vrot.lane.b32.xlu0 %v6568, 64
  %v6814 = vpop.permute.xlu0 %6813
  %6815 = vrot.lane.b32.xlu0 %v6569, 64
  %v6816 = vpop.permute.xlu0 %6815
  %6817 = vrot.lane.b32.xlu0 %v6570, 64
  %v6818 = vpop.permute.xlu0 %6817
  %6819 = vrot.lane.b32.xlu0 %v6571, 64
  %v6820 = vpop.permute.xlu0 %6819
  %6821 = vrot.lane.b32.xlu0 %v6572, 64
  %v6822 = vpop.permute.xlu0 %6821
  %6823 = vrot.lane.b32.xlu0 %v6573, 64
  %v6824 = vpop.permute.xlu0 %6823
  %6825 = vrot.lane.b32.xlu0 %v6574, 64
  %v6826 = vpop.permute.xlu0 %6825
  %6827 = vrot.lane.b32.xlu0 %v6575, 64
  %v6828 = vpop.permute.xlu0 %6827
  %6829 = vrot.lane.b32.xlu0 %v6576, 64
  %v6830 = vpop.permute.xlu0 %6829
  %6831 = vrot.lane.b32.xlu0 %v6577, 64
  %v6832 = vpop.permute.xlu0 %6831
  %6833 = vrot.lane.b32.xlu0 %v6578, 64
  %v6834 = vpop.permute.xlu0 %6833
  %v6835 = vmul.f32 %v6451, %v22
  %v6836 = vmul.f32 %v6452, %v23
  %v6837 = vmul.f32 %v6453, %v24
  %v6838 = vmul.f32 %v6454, %v25
  %v6839 = vmul.f32 %v6455, %v26
  %v6840 = vmul.f32 %v6456, %v27
  %v6841 = vmul.f32 %v6457, %v28
  %v6842 = vmul.f32 %v6458, %v29
  %v6843 = vmul.f32 %v6459, %v30
  %v6844 = vmul.f32 %v6460, %v31
  %v6845 = vmul.f32 %v6461, %v32
  %v6846 = vmul.f32 %v6462, %v33
  %v6847 = vmul.f32 %v6463, %v34
  %v6848 = vmul.f32 %v6464, %v35
  %v6849 = vmul.f32 %v6465, %v36
  %v6850 = vmul.f32 %v6466, %v37
  %v6851 = vmul.f32 %v6580, %v38
  %v6852 = vmul.f32 %v6582, %v39
  %v6853 = vmul.f32 %v6584, %v40
  %v6854 = vmul.f32 %v6586, %v41
  %v6855 = vmul.f32 %v6588, %v42
  %v6856 = vmul.f32 %v6590, %v43
  %v6857 = vmul.f32 %v6592, %v44
  %v6858 = vmul.f32 %v6594, %v45
  %v6859 = vmul.f32 %v6596, %v46
  %v6860 = vmul.f32 %v6598, %v47
  %v6861 = vmul.f32 %v6600, %v48
  %v6862 = vmul.f32 %v6602, %v49
  %v6863 = vmul.f32 %v6604, %v50
  %v6864 = vmul.f32 %v6606, %v51
  %v6865 = vmul.f32 %v6608, %v52
  %v6866 = vmul.f32 %v6610, %v53
  %v6867 = vadd.f32 %v6835, %v6851
  %v6868 = vadd.f32 %v6836, %v6852
  %v6869 = vadd.f32 %v6837, %v6853
  %v6870 = vadd.f32 %v6838, %v6854
  %v6871 = vadd.f32 %v6839, %v6855
  %v6872 = vadd.f32 %v6840, %v6856
  %v6873 = vadd.f32 %v6841, %v6857
  %v6874 = vadd.f32 %v6842, %v6858
  %v6875 = vadd.f32 %v6843, %v6859
  %v6876 = vadd.f32 %v6844, %v6860
  %v6877 = vadd.f32 %v6845, %v6861
  %v6878 = vadd.f32 %v6846, %v6862
  %v6879 = vadd.f32 %v6847, %v6863
  %v6880 = vadd.f32 %v6848, %v6864
  %v6881 = vadd.f32 %v6849, %v6865
  %v6882 = vadd.f32 %v6850, %v6866
  %6883 = vst [vmem:[%s6] sm:$0xff] %v6867
  %6884 = vst [vmem:[%s6 + $0x8] sm:$0xff] %v6868
  %6885 = vst [vmem:[%s6 + $0x10] sm:$0xff] %v6869
  %6886 = vst [vmem:[%s6 + $0x18] sm:$0xff] %v6870
  %6887 = vst [vmem:[%s6 + $0x20] sm:$0xff] %v6871
  %6888 = vst [vmem:[%s6 + $0x28] sm:$0xff] %v6872
  %6889 = vst [vmem:[%s6 + $0x30] sm:$0xff] %v6873
  %6890 = vst [vmem:[%s6 + $0x38] sm:$0xff] %v6874
  %6891 = vst [vmem:[%s6 + $0x40] sm:$0xff] %v6875
  %6892 = vst [vmem:[%s6 + $0x48] sm:$0xff] %v6876
  %6893 = vst [vmem:[%s6 + $0x50] sm:$0xff] %v6877
  %6894 = vst [vmem:[%s6 + $0x58] sm:$0xff] %v6878
  %6895 = vst [vmem:[%s6 + $0x60] sm:$0xff] %v6879
  %6896 = vst [vmem:[%s6 + $0x68] sm:$0xff] %v6880
  %6897 = vst [vmem:[%s6 + $0x70] sm:$0xff] %v6881
  %6898 = vst [vmem:[%s6 + $0x78] sm:$0xff] %v6882
  %v6899 = vmul.f32 %v6467, %v22
  %v6900 = vmul.f32 %v6468, %v23
  %v6901 = vmul.f32 %v6469, %v24
  %v6902 = vmul.f32 %v6470, %v25
  %v6903 = vmul.f32 %v6471, %v26
  %v6904 = vmul.f32 %v6472, %v27
  %v6905 = vmul.f32 %v6473, %v28
  %v6906 = vmul.f32 %v6474, %v29
  %v6907 = vmul.f32 %v6475, %v30
  %v6908 = vmul.f32 %v6476, %v31
  %v6909 = vmul.f32 %v6477, %v32
  %v6910 = vmul.f32 %v6478, %v33
  %v6911 = vmul.f32 %v6479, %v34
  %v6912 = vmul.f32 %v6480, %v35
  %v6913 = vmul.f32 %v6481, %v36
  %v6914 = vmul.f32 %v6482, %v37
  %v6915 = vmul.f32 %v6612, %v38
  %v6916 = vmul.f32 %v6614, %v39
  %v6917 = vmul.f32 %v6616, %v40
  %v6918 = vmul.f32 %v6618, %v41
  %v6919 = vmul.f32 %v6620, %v42
  %v6920 = vmul.f32 %v6622, %v43
  %v6921 = vmul.f32 %v6624, %v44
  %v6922 = vmul.f32 %v6626, %v45
  %v6923 = vmul.f32 %v6628, %v46
  %v6924 = vmul.f32 %v6630, %v47
  %v6925 = vmul.f32 %v6632, %v48
  %v6926 = vmul.f32 %v6634, %v49
  %v6927 = vmul.f32 %v6636, %v50
  %v6928 = vmul.f32 %v6638, %v51
  %v6929 = vmul.f32 %v6640, %v52
  %v6930 = vmul.f32 %v6642, %v53
  %v6931 = vadd.f32 %v6899, %v6915
  %v6932 = vadd.f32 %v6900, %v6916
  %v6933 = vadd.f32 %v6901, %v6917
  %v6934 = vadd.f32 %v6902, %v6918
  %v6935 = vadd.f32 %v6903, %v6919
  %v6936 = vadd.f32 %v6904, %v6920
  %v6937 = vadd.f32 %v6905, %v6921
  %v6938 = vadd.f32 %v6906, %v6922
  %v6939 = vadd.f32 %v6907, %v6923
  %v6940 = vadd.f32 %v6908, %v6924
  %v6941 = vadd.f32 %v6909, %v6925
  %v6942 = vadd.f32 %v6910, %v6926
  %v6943 = vadd.f32 %v6911, %v6927
  %v6944 = vadd.f32 %v6912, %v6928
  %v6945 = vadd.f32 %v6913, %v6929
  %v6946 = vadd.f32 %v6914, %v6930
  %s6947 = scalar_lea.vmem %s6, 128
  %6948 = vst [vmem:[%s6947] sm:$0xff] %v6931
  %6949 = vst [vmem:[%s6947 + $0x8] sm:$0xff] %v6932
  %6950 = vst [vmem:[%s6947 + $0x10] sm:$0xff] %v6933
  %6951 = vst [vmem:[%s6947 + $0x18] sm:$0xff] %v6934
  %6952 = vst [vmem:[%s6947 + $0x20] sm:$0xff] %v6935
  %6953 = vst [vmem:[%s6947 + $0x28] sm:$0xff] %v6936
  %6954 = vst [vmem:[%s6947 + $0x30] sm:$0xff] %v6937
  %6955 = vst [vmem:[%s6947 + $0x38] sm:$0xff] %v6938
  %6956 = vst [vmem:[%s6947 + $0x40] sm:$0xff] %v6939
  %6957 = vst [vmem:[%s6947 + $0x48] sm:$0xff] %v6940
  %6958 = vst [vmem:[%s6947 + $0x50] sm:$0xff] %v6941
  %6959 = vst [vmem:[%s6947 + $0x58] sm:$0xff] %v6942
  %6960 = vst [vmem:[%s6947 + $0x60] sm:$0xff] %v6943
  %6961 = vst [vmem:[%s6947 + $0x68] sm:$0xff] %v6944
  %6962 = vst [vmem:[%s6947 + $0x70] sm:$0xff] %v6945
  %6963 = vst [vmem:[%s6947 + $0x78] sm:$0xff] %v6946
  %v6964 = vmul.f32 %v6483, %v22
  %v6965 = vmul.f32 %v6484, %v23
  %v6966 = vmul.f32 %v6485, %v24
  %v6967 = vmul.f32 %v6486, %v25
  %v6968 = vmul.f32 %v6487, %v26
  %v6969 = vmul.f32 %v6488, %v27
  %v6970 = vmul.f32 %v6489, %v28
  %v6971 = vmul.f32 %v6490, %v29
  %v6972 = vmul.f32 %v6491, %v30
  %v6973 = vmul.f32 %v6492, %v31
  %v6974 = vmul.f32 %v6493, %v32
  %v6975 = vmul.f32 %v6494, %v33
  %v6976 = vmul.f32 %v6495, %v34
  %v6977 = vmul.f32 %v6496, %v35
  %v6978 = vmul.f32 %v6497, %v36
  %v6979 = vmul.f32 %v6498, %v37
  %v6980 = vmul.f32 %v6644, %v38
  %v6981 = vmul.f32 %v6646, %v39
  %v6982 = vmul.f32 %v6648, %v40
  %v6983 = vmul.f32 %v6650, %v41
  %v6984 = vmul.f32 %v6652, %v42
  %v6985 = vmul.f32 %v6654, %v43
  %v6986 = vmul.f32 %v6656, %v44
  %v6987 = vmul.f32 %v6658, %v45
  %v6988 = vmul.f32 %v6660, %v46
  %v6989 = vmul.f32 %v6662, %v47
  %v6990 = vmul.f32 %v6664, %v48
  %v6991 = vmul.f32 %v6666, %v49
  %v6992 = vmul.f32 %v6668, %v50
  %v6993 = vmul.f32 %v6670, %v51
  %v6994 = vmul.f32 %v6672, %v52
  %v6995 = vmul.f32 %v6674, %v53
  %v6996 = vadd.f32 %v6964, %v6980
  %v6997 = vadd.f32 %v6965, %v6981
  %v6998 = vadd.f32 %v6966, %v6982
  %v6999 = vadd.f32 %v6967, %v6983
  %v7000 = vadd.f32 %v6968, %v6984
  %v7001 = vadd.f32 %v6969, %v6985
  %v7002 = vadd.f32 %v6970, %v6986
  %v7003 = vadd.f32 %v6971, %v6987
  %v7004 = vadd.f32 %v6972, %v6988
  %v7005 = vadd.f32 %v6973, %v6989
  %v7006 = vadd.f32 %v6974, %v6990
  %v7007 = vadd.f32 %v6975, %v6991
  %v7008 = vadd.f32 %v6976, %v6992
  %v7009 = vadd.f32 %v6977, %v6993
  %v7010 = vadd.f32 %v6978, %v6994
  %v7011 = vadd.f32 %v6979, %v6995
  %s7012 = scalar_lea.vmem %s6, 256
  %7013 = vst [vmem:[%s7012] sm:$0xff] %v6996
  %7014 = vst [vmem:[%s7012 + $0x8] sm:$0xff] %v6997
  %7015 = vst [vmem:[%s7012 + $0x10] sm:$0xff] %v6998
  %7016 = vst [vmem:[%s7012 + $0x18] sm:$0xff] %v6999
  %7017 = vst [vmem:[%s7012 + $0x20] sm:$0xff] %v7000
  %7018 = vst [vmem:[%s7012 + $0x28] sm:$0xff] %v7001
  %7019 = vst [vmem:[%s7012 + $0x30] sm:$0xff] %v7002
  %7020 = vst [vmem:[%s7012 + $0x38] sm:$0xff] %v7003
  %7021 = vst [vmem:[%s7012 + $0x40] sm:$0xff] %v7004
  %7022 = vst [vmem:[%s7012 + $0x48] sm:$0xff] %v7005
  %7023 = vst [vmem:[%s7012 + $0x50] sm:$0xff] %v7006
  %7024 = vst [vmem:[%s7012 + $0x58] sm:$0xff] %v7007
  %7025 = vst [vmem:[%s7012 + $0x60] sm:$0xff] %v7008
  %7026 = vst [vmem:[%s7012 + $0x68] sm:$0xff] %v7009
  %7027 = vst [vmem:[%s7012 + $0x70] sm:$0xff] %v7010
  %7028 = vst [vmem:[%s7012 + $0x78] sm:$0xff] %v7011
  %v7029 = vmul.f32 %v6499, %v22
  %v7030 = vmul.f32 %v6500, %v23
  %v7031 = vmul.f32 %v6501, %v24
  %v7032 = vmul.f32 %v6502, %v25
  %v7033 = vmul.f32 %v6503, %v26
  %v7034 = vmul.f32 %v6504, %v27
  %v7035 = vmul.f32 %v6505, %v28
  %v7036 = vmul.f32 %v6506, %v29
  %v7037 = vmul.f32 %v6507, %v30
  %v7038 = vmul.f32 %v6508, %v31
  %v7039 = vmul.f32 %v6509, %v32
  %v7040 = vmul.f32 %v6510, %v33
  %v7041 = vmul.f32 %v6511, %v34
  %v7042 = vmul.f32 %v6512, %v35
  %v7043 = vmul.f32 %v6513, %v36
  %v7044 = vmul.f32 %v6514, %v37
  %v7045 = vmul.f32 %v6676, %v38
  %v7046 = vmul.f32 %v6678, %v39
  %v7047 = vmul.f32 %v6680, %v40
  %v7048 = vmul.f32 %v6682, %v41
  %v7049 = vmul.f32 %v6684, %v42
  %v7050 = vmul.f32 %v6686, %v43
  %v7051 = vmul.f32 %v6688, %v44
  %v7052 = vmul.f32 %v6690, %v45
  %v7053 = vmul.f32 %v6692, %v46
  %v7054 = vmul.f32 %v6694, %v47
  %v7055 = vmul.f32 %v6696, %v48
  %v7056 = vmul.f32 %v6698, %v49
  %v7057 = vmul.f32 %v6700, %v50
  %v7058 = vmul.f32 %v6702, %v51
  %v7059 = vmul.f32 %v6704, %v52
  %v7060 = vmul.f32 %v6706, %v53
  %v7061 = vadd.f32 %v7029, %v7045
  %v7062 = vadd.f32 %v7030, %v7046
  %v7063 = vadd.f32 %v7031, %v7047
  %v7064 = vadd.f32 %v7032, %v7048
  %v7065 = vadd.f32 %v7033, %v7049
  %v7066 = vadd.f32 %v7034, %v7050
  %v7067 = vadd.f32 %v7035, %v7051
  %v7068 = vadd.f32 %v7036, %v7052
  %v7069 = vadd.f32 %v7037, %v7053
  %v7070 = vadd.f32 %v7038, %v7054
  %v7071 = vadd.f32 %v7039, %v7055
  %v7072 = vadd.f32 %v7040, %v7056
  %v7073 = vadd.f32 %v7041, %v7057
  %v7074 = vadd.f32 %v7042, %v7058
  %v7075 = vadd.f32 %v7043, %v7059
  %v7076 = vadd.f32 %v7044, %v7060
  %s7077 = scalar_lea.vmem %s6, 384
  %7078 = vst [vmem:[%s7077] sm:$0xff] %v7061
  %7079 = vst [vmem:[%s7077 + $0x8] sm:$0xff] %v7062
  %7080 = vst [vmem:[%s7077 + $0x10] sm:$0xff] %v7063
  %7081 = vst [vmem:[%s7077 + $0x18] sm:$0xff] %v7064
  %7082 = vst [vmem:[%s7077 + $0x20] sm:$0xff] %v7065
  %7083 = vst [vmem:[%s7077 + $0x28] sm:$0xff] %v7066
  %7084 = vst [vmem:[%s7077 + $0x30] sm:$0xff] %v7067
  %7085 = vst [vmem:[%s7077 + $0x38] sm:$0xff] %v7068
  %7086 = vst [vmem:[%s7077 + $0x40] sm:$0xff] %v7069
  %7087 = vst [vmem:[%s7077 + $0x48] sm:$0xff] %v7070
  %7088 = vst [vmem:[%s7077 + $0x50] sm:$0xff] %v7071
  %7089 = vst [vmem:[%s7077 + $0x58] sm:$0xff] %v7072
  %7090 = vst [vmem:[%s7077 + $0x60] sm:$0xff] %v7073
  %7091 = vst [vmem:[%s7077 + $0x68] sm:$0xff] %v7074
  %7092 = vst [vmem:[%s7077 + $0x70] sm:$0xff] %v7075
  %7093 = vst [vmem:[%s7077 + $0x78] sm:$0xff] %v7076
  %v7094 = vmul.f32 %v6515, %v22
  %v7095 = vmul.f32 %v6516, %v23
  %v7096 = vmul.f32 %v6517, %v24
  %v7097 = vmul.f32 %v6518, %v25
  %v7098 = vmul.f32 %v6519, %v26
  %v7099 = vmul.f32 %v6520, %v27
  %v7100 = vmul.f32 %v6521, %v28
  %v7101 = vmul.f32 %v6522, %v29
  %v7102 = vmul.f32 %v6523, %v30
  %v7103 = vmul.f32 %v6524, %v31
  %v7104 = vmul.f32 %v6525, %v32
  %v7105 = vmul.f32 %v6526, %v33
  %v7106 = vmul.f32 %v6527, %v34
  %v7107 = vmul.f32 %v6528, %v35
  %v7108 = vmul.f32 %v6529, %v36
  %v7109 = vmul.f32 %v6530, %v37
  %v7110 = vmul.f32 %v6708, %v38
  %v7111 = vmul.f32 %v6710, %v39
  %v7112 = vmul.f32 %v6712, %v40
  %v7113 = vmul.f32 %v6714, %v41
  %v7114 = vmul.f32 %v6716, %v42
  %v7115 = vmul.f32 %v6718, %v43
  %v7116 = vmul.f32 %v6720, %v44
  %v7117 = vmul.f32 %v6722, %v45
  %v7118 = vmul.f32 %v6724, %v46
  %v7119 = vmul.f32 %v6726, %v47
  %v7120 = vmul.f32 %v6728, %v48
  %v7121 = vmul.f32 %v6730, %v49
  %v7122 = vmul.f32 %v6732, %v50
  %v7123 = vmul.f32 %v6734, %v51
  %v7124 = vmul.f32 %v6736, %v52
  %v7125 = vmul.f32 %v6738, %v53
  %v7126 = vadd.f32 %v7094, %v7110
  %v7127 = vadd.f32 %v7095, %v7111
  %v7128 = vadd.f32 %v7096, %v7112
  %v7129 = vadd.f32 %v7097, %v7113
  %v7130 = vadd.f32 %v7098, %v7114
  %v7131 = vadd.f32 %v7099, %v7115
  %v7132 = vadd.f32 %v7100, %v7116
  %v7133 = vadd.f32 %v7101, %v7117
  %v7134 = vadd.f32 %v7102, %v7118
  %v7135 = vadd.f32 %v7103, %v7119
  %v7136 = vadd.f32 %v7104, %v7120
  %v7137 = vadd.f32 %v7105, %v7121
  %v7138 = vadd.f32 %v7106, %v7122
  %v7139 = vadd.f32 %v7107, %v7123
  %v7140 = vadd.f32 %v7108, %v7124
  %v7141 = vadd.f32 %v7109, %v7125
  %s7142 = scalar_lea.vmem %s6, 512
  %7143 = vst [vmem:[%s7142] sm:$0xff] %v7126
  %7144 = vst [vmem:[%s7142 + $0x8] sm:$0xff] %v7127
  %7145 = vst [vmem:[%s7142 + $0x10] sm:$0xff] %v7128
  %7146 = vst [vmem:[%s7142 + $0x18] sm:$0xff] %v7129
  %7147 = vst [vmem:[%s7142 + $0x20] sm:$0xff] %v7130
  %7148 = vst [vmem:[%s7142 + $0x28] sm:$0xff] %v7131
  %7149 = vst [vmem:[%s7142 + $0x30] sm:$0xff] %v7132
  %7150 = vst [vmem:[%s7142 + $0x38] sm:$0xff] %v7133
  %7151 = vst [vmem:[%s7142 + $0x40] sm:$0xff] %v7134
  %7152 = vst [vmem:[%s7142 + $0x48] sm:$0xff] %v7135
  %7153 = vst [vmem:[%s7142 + $0x50] sm:$0xff] %v7136
  %7154 = vst [vmem:[%s7142 + $0x58] sm:$0xff] %v7137
  %7155 = vst [vmem:[%s7142 + $0x60] sm:$0xff] %v7138
  %7156 = vst [vmem:[%s7142 + $0x68] sm:$0xff] %v7139
  %7157 = vst [vmem:[%s7142 + $0x70] sm:$0xff] %v7140
  %7158 = vst [vmem:[%s7142 + $0x78] sm:$0xff] %v7141
  %v7159 = vmul.f32 %v6531, %v22
  %v7160 = vmul.f32 %v6532, %v23
  %v7161 = vmul.f32 %v6533, %v24
  %v7162 = vmul.f32 %v6534, %v25
  %v7163 = vmul.f32 %v6535, %v26
  %v7164 = vmul.f32 %v6536, %v27
  %v7165 = vmul.f32 %v6537, %v28
  %v7166 = vmul.f32 %v6538, %v29
  %v7167 = vmul.f32 %v6539, %v30
  %v7168 = vmul.f32 %v6540, %v31
  %v7169 = vmul.f32 %v6541, %v32
  %v7170 = vmul.f32 %v6542, %v33
  %v7171 = vmul.f32 %v6543, %v34
  %v7172 = vmul.f32 %v6544, %v35
  %v7173 = vmul.f32 %v6545, %v36
  %v7174 = vmul.f32 %v6546, %v37
  %v7175 = vmul.f32 %v6740, %v38
  %v7176 = vmul.f32 %v6742, %v39
  %v7177 = vmul.f32 %v6744, %v40
  %v7178 = vmul.f32 %v6746, %v41
  %v7179 = vmul.f32 %v6748, %v42
  %v7180 = vmul.f32 %v6750, %v43
  %v7181 = vmul.f32 %v6752, %v44
  %v7182 = vmul.f32 %v6754, %v45
  %v7183 = vmul.f32 %v6756, %v46
  %v7184 = vmul.f32 %v6758, %v47
  %v7185 = vmul.f32 %v6760, %v48
  %v7186 = vmul.f32 %v6762, %v49
  %v7187 = vmul.f32 %v6764, %v50
  %v7188 = vmul.f32 %v6766, %v51
  %v7189 = vmul.f32 %v6768, %v52
  %v7190 = vmul.f32 %v6770, %v53
  %v7191 = vadd.f32 %v7159, %v7175
  %v7192 = vadd.f32 %v7160, %v7176
  %v7193 = vadd.f32 %v7161, %v7177
  %v7194 = vadd.f32 %v7162, %v7178
  %v7195 = vadd.f32 %v7163, %v7179
  %v7196 = vadd.f32 %v7164, %v7180
  %v7197 = vadd.f32 %v7165, %v7181
  %v7198 = vadd.f32 %v7166, %v7182
  %v7199 = vadd.f32 %v7167, %v7183
  %v7200 = vadd.f32 %v7168, %v7184
  %v7201 = vadd.f32 %v7169, %v7185
  %v7202 = vadd.f32 %v7170, %v7186
  %v7203 = vadd.f32 %v7171, %v7187
  %v7204 = vadd.f32 %v7172, %v7188
  %v7205 = vadd.f32 %v7173, %v7189
  %v7206 = vadd.f32 %v7174, %v7190
  %s7207 = scalar_lea.vmem %s6, 640
  %7208 = vst [vmem:[%s7207] sm:$0xff] %v7191
  %7209 = vst [vmem:[%s7207 + $0x8] sm:$0xff] %v7192
  %7210 = vst [vmem:[%s7207 + $0x10] sm:$0xff] %v7193
  %7211 = vst [vmem:[%s7207 + $0x18] sm:$0xff] %v7194
  %7212 = vst [vmem:[%s7207 + $0x20] sm:$0xff] %v7195
  %7213 = vst [vmem:[%s7207 + $0x28] sm:$0xff] %v7196
  %7214 = vst [vmem:[%s7207 + $0x30] sm:$0xff] %v7197
  %7215 = vst [vmem:[%s7207 + $0x38] sm:$0xff] %v7198
  %7216 = vst [vmem:[%s7207 + $0x40] sm:$0xff] %v7199
  %7217 = vst [vmem:[%s7207 + $0x48] sm:$0xff] %v7200
  %7218 = vst [vmem:[%s7207 + $0x50] sm:$0xff] %v7201
  %7219 = vst [vmem:[%s7207 + $0x58] sm:$0xff] %v7202
  %7220 = vst [vmem:[%s7207 + $0x60] sm:$0xff] %v7203
  %7221 = vst [vmem:[%s7207 + $0x68] sm:$0xff] %v7204
  %7222 = vst [vmem:[%s7207 + $0x70] sm:$0xff] %v7205
  %7223 = vst [vmem:[%s7207 + $0x78] sm:$0xff] %v7206
  %v7224 = vmul.f32 %v6547, %v22
  %v7225 = vmul.f32 %v6548, %v23
  %v7226 = vmul.f32 %v6549, %v24
  %v7227 = vmul.f32 %v6550, %v25
  %v7228 = vmul.f32 %v6551, %v26
  %v7229 = vmul.f32 %v6552, %v27
  %v7230 = vmul.f32 %v6553, %v28
  %v7231 = vmul.f32 %v6554, %v29
  %v7232 = vmul.f32 %v6555, %v30
  %v7233 = vmul.f32 %v6556, %v31
  %v7234 = vmul.f32 %v6557, %v32
  %v7235 = vmul.f32 %v6558, %v33
  %v7236 = vmul.f32 %v6559, %v34
  %v7237 = vmul.f32 %v6560, %v35
  %v7238 = vmul.f32 %v6561, %v36
  %v7239 = vmul.f32 %v6562, %v37
  %v7240 = vmul.f32 %v6772, %v38
  %v7241 = vmul.f32 %v6774, %v39
  %v7242 = vmul.f32 %v6776, %v40
  %v7243 = vmul.f32 %v6778, %v41
  %v7244 = vmul.f32 %v6780, %v42
  %v7245 = vmul.f32 %v6782, %v43
  %v7246 = vmul.f32 %v6784, %v44
  %v7247 = vmul.f32 %v6786, %v45
  %v7248 = vmul.f32 %v6788, %v46
  %v7249 = vmul.f32 %v6790, %v47
  %v7250 = vmul.f32 %v6792, %v48
  %v7251 = vmul.f32 %v6794, %v49
  %v7252 = vmul.f32 %v6796, %v50
  %v7253 = vmul.f32 %v6798, %v51
  %v7254 = vmul.f32 %v6800, %v52
  %v7255 = vmul.f32 %v6802, %v53
  %v7256 = vadd.f32 %v7224, %v7240
  %v7257 = vadd.f32 %v7225, %v7241
  %v7258 = vadd.f32 %v7226, %v7242
  %v7259 = vadd.f32 %v7227, %v7243
  %v7260 = vadd.f32 %v7228, %v7244
  %v7261 = vadd.f32 %v7229, %v7245
  %v7262 = vadd.f32 %v7230, %v7246
  %v7263 = vadd.f32 %v7231, %v7247
  %v7264 = vadd.f32 %v7232, %v7248
  %v7265 = vadd.f32 %v7233, %v7249
  %v7266 = vadd.f32 %v7234, %v7250
  %v7267 = vadd.f32 %v7235, %v7251
  %v7268 = vadd.f32 %v7236, %v7252
  %v7269 = vadd.f32 %v7237, %v7253
  %v7270 = vadd.f32 %v7238, %v7254
  %v7271 = vadd.f32 %v7239, %v7255
  %s7272 = scalar_lea.vmem %s6, 768
  %7273 = vst [vmem:[%s7272] sm:$0xff] %v7256
  %7274 = vst [vmem:[%s7272 + $0x8] sm:$0xff] %v7257
  %7275 = vst [vmem:[%s7272 + $0x10] sm:$0xff] %v7258
  %7276 = vst [vmem:[%s7272 + $0x18] sm:$0xff] %v7259
  %7277 = vst [vmem:[%s7272 + $0x20] sm:$0xff] %v7260
  %7278 = vst [vmem:[%s7272 + $0x28] sm:$0xff] %v7261
  %7279 = vst [vmem:[%s7272 + $0x30] sm:$0xff] %v7262
  %7280 = vst [vmem:[%s7272 + $0x38] sm:$0xff] %v7263
  %7281 = vst [vmem:[%s7272 + $0x40] sm:$0xff] %v7264
  %7282 = vst [vmem:[%s7272 + $0x48] sm:$0xff] %v7265
  %7283 = vst [vmem:[%s7272 + $0x50] sm:$0xff] %v7266
  %7284 = vst [vmem:[%s7272 + $0x58] sm:$0xff] %v7267
  %7285 = vst [vmem:[%s7272 + $0x60] sm:$0xff] %v7268
  %7286 = vst [vmem:[%s7272 + $0x68] sm:$0xff] %v7269
  %7287 = vst [vmem:[%s7272 + $0x70] sm:$0xff] %v7270
  %7288 = vst [vmem:[%s7272 + $0x78] sm:$0xff] %v7271
  %v7289 = vmul.f32 %v6563, %v22
  %v7290 = vmul.f32 %v6564, %v23
  %v7291 = vmul.f32 %v6565, %v24
  %v7292 = vmul.f32 %v6566, %v25
  %v7293 = vmul.f32 %v6567, %v26
  %v7294 = vmul.f32 %v6568, %v27
  %v7295 = vmul.f32 %v6569, %v28
  %v7296 = vmul.f32 %v6570, %v29
  %v7297 = vmul.f32 %v6571, %v30
  %v7298 = vmul.f32 %v6572, %v31
  %v7299 = vmul.f32 %v6573, %v32
  %v7300 = vmul.f32 %v6574, %v33
  %v7301 = vmul.f32 %v6575, %v34
  %v7302 = vmul.f32 %v6576, %v35
  %v7303 = vmul.f32 %v6577, %v36
  %v7304 = vmul.f32 %v6578, %v37
  %v7305 = vmul.f32 %v6804, %v38
  %v7306 = vmul.f32 %v6806, %v39
  %v7307 = vmul.f32 %v6808, %v40
  %v7308 = vmul.f32 %v6810, %v41
  %v7309 = vmul.f32 %v6812, %v42
  %v7310 = vmul.f32 %v6814, %v43
  %v7311 = vmul.f32 %v6816, %v44
  %v7312 = vmul.f32 %v6818, %v45
  %v7313 = vmul.f32 %v6820, %v46
  %v7314 = vmul.f32 %v6822, %v47
  %v7315 = vmul.f32 %v6824, %v48
  %v7316 = vmul.f32 %v6826, %v49
  %v7317 = vmul.f32 %v6828, %v50
  %v7318 = vmul.f32 %v6830, %v51
  %v7319 = vmul.f32 %v6832, %v52
  %v7320 = vmul.f32 %v6834, %v53
  %v7321 = vadd.f32 %v7289, %v7305
  %v7322 = vadd.f32 %v7290, %v7306
  %v7323 = vadd.f32 %v7291, %v7307
  %v7324 = vadd.f32 %v7292, %v7308
  %v7325 = vadd.f32 %v7293, %v7309
  %v7326 = vadd.f32 %v7294, %v7310
  %v7327 = vadd.f32 %v7295, %v7311
  %v7328 = vadd.f32 %v7296, %v7312
  %v7329 = vadd.f32 %v7297, %v7313
  %v7330 = vadd.f32 %v7298, %v7314
  %v7331 = vadd.f32 %v7299, %v7315
  %v7332 = vadd.f32 %v7300, %v7316
  %v7333 = vadd.f32 %v7301, %v7317
  %v7334 = vadd.f32 %v7302, %v7318
  %v7335 = vadd.f32 %v7303, %v7319
  %v7336 = vadd.f32 %v7304, %v7320
  %s7337 = scalar_lea.vmem %s6, 896
  %7338 = vst [vmem:[%s7337] sm:$0xff] %v7321
  %7339 = vst [vmem:[%s7337 + $0x8] sm:$0xff] %v7322
  %7340 = vst [vmem:[%s7337 + $0x10] sm:$0xff] %v7323
  %7341 = vst [vmem:[%s7337 + $0x18] sm:$0xff] %v7324
  %7342 = vst [vmem:[%s7337 + $0x20] sm:$0xff] %v7325
  %7343 = vst [vmem:[%s7337 + $0x28] sm:$0xff] %v7326
  %7344 = vst [vmem:[%s7337 + $0x30] sm:$0xff] %v7327
  %7345 = vst [vmem:[%s7337 + $0x38] sm:$0xff] %v7328
  %7346 = vst [vmem:[%s7337 + $0x40] sm:$0xff] %v7329
  %7347 = vst [vmem:[%s7337 + $0x48] sm:$0xff] %v7330
  %7348 = vst [vmem:[%s7337 + $0x50] sm:$0xff] %v7331
  %7349 = vst [vmem:[%s7337 + $0x58] sm:$0xff] %v7332
  %7350 = vst [vmem:[%s7337 + $0x60] sm:$0xff] %v7333
  %7351 = vst [vmem:[%s7337 + $0x68] sm:$0xff] %v7334
  %7352 = vst [vmem:[%s7337 + $0x70] sm:$0xff] %v7335
  %7353 = vst [vmem:[%s7337 + $0x78] sm:$0xff] %v7336
  // Predicated region
  $region22: #{apply_rotary.1} parent=0 // pred_check
    _
  $region23: #{apply_rotary.1} parent=0 // pred_check_branch
    %7355 = sbr.rel (0) target = $region25
  $region24: #{apply_rotary.1} parent=0 // pred_region
    _
  $region25: #{apply_rotary.1} parent=0 // pred_fallthru
    _
  // Predicated region
  $region26: #{apply_rotary.1} parent=0 // pred_check
    _
  $region27: #{apply_rotary.1} parent=0 // pred_check_branch
    %7357 = sbr.rel (0) target = $region29
  $region28: #{apply_rotary.1} parent=0 // pred_region
    _
  $region29: #{apply_rotary.1} parent=0 // pred_fallthru
    _
  // Predicated region
  $region30: #{apply_rotary.1} parent=0 // pred_check
    _
  $region31: #{apply_rotary.1} parent=0 // pred_check_branch
    %7359 = sbr.rel (0) target = $region33
  $region32: #{apply_rotary.1} parent=0 // pred_region
    _
  $region33: #{apply_rotary.1} parent=0 // pred_fallthru
    _
  // Predicated region
  $region34: #{apply_rotary.1} parent=0 // pred_check
    _
  $region35: #{apply_rotary.1} parent=0 // pred_check_branch
    %7361 = sbr.rel (0) target = $region37
  $region36: #{apply_rotary.1} parent=0 // pred_region
    _
  $region37: #{apply_rotary.1} parent=0 // pred_fallthru
    _

</llo_original>
